<compile_context>
chip_gen: v7x
topology: tpu7x:2x2x1
jax: 0.10.0
libtpu: 0.0.40
codegen_flags: <defaults>
</compile_context>

<pallas_src>
import functools

import jax
import jax.numpy as jnp
from jax.experimental import pallas as pl
from jax.experimental.pallas import tpu as pltpu


# ----------------------------------------------------------------------------
# Grouped matmul + bias + optional ReLU Pallas kernel
# ----------------------------------------------------------------------------
def _gmm_kernel(a_ref, w_ref, b_ref, o_ref, *, relu, transposed):
    if transposed:
        # a: (K, TL) bf16, w: (Cout, K) bf16 -> (Cout, TL) f32  (lane-dense output)
        acc = jnp.dot(w_ref[0], a_ref[0], preferred_element_type=jnp.float32)
    else:
        # a: (TM, K) bf16, w: (K, Cout) bf16 -> (TM, Cout) f32
        acc = jnp.dot(a_ref[0], w_ref[0], preferred_element_type=jnp.float32)
    acc = acc + b_ref[...]
    if relu:
        acc = jnp.maximum(acc, 0.0)
    o_ref[0] = acc.astype(o_ref.dtype)


def _pick_tile(M, K, elem_bytes, max_tile, align, cap_bytes=2 * 1024 * 1024):
    """Largest tile of the M dim: <= max_tile, block <= cap_bytes, align-friendly."""
    t = max(align, min(max_tile, cap_bytes // max(1, K * elem_bytes)))
    t = (t // align) * align
    if M <= t:
        return M            # full extent: always a legal block shape
    return max(align, t)    # multiple of `align`; ragged tail handled via cdiv grid


def grouped_matmul_bias_act(a, w, bias2d, relu, transposed):
    """Batched-by-group matmul + bias + optional ReLU.

    transposed=False: a (G, M, K), w (G, K, Cout), bias2d (1, Cout)  -> (G, M, Cout)
    transposed=True : a (G, K, M), w (G, Cout, K), bias2d (Cout, 1)  -> (G, Cout, M)
    """
    G = a.shape[0]
    if transposed:
        _, K, M = a.shape
        Cout = w.shape[1]
        tile = _pick_tile(M, K, 2, max_tile=4096, align=128)
        grid = (G, pl.cdiv(M, tile))
        in_specs = [
            pl.BlockSpec((1, K, tile), lambda g, i: (g, 0, i)),
            pl.BlockSpec((1, Cout, K), lambda g, i: (g, 0, 0)),
            pl.BlockSpec((Cout, 1), lambda g, i: (0, 0)),
        ]
        out_specs = pl.BlockSpec((1, Cout, tile), lambda g, i: (g, 0, i))
        out_shape = jax.ShapeDtypeStruct((G, Cout, M), jnp.float32)
    else:
        _, M, K = a.shape
        Cout = w.shape[2]
        tile = _pick_tile(M, K, 2, max_tile=1024, align=8)
        grid = (G, pl.cdiv(M, tile))
        in_specs = [
            pl.BlockSpec((1, tile, K), lambda g, i: (g, i, 0)),
            pl.BlockSpec((1, K, Cout), lambda g, i: (g, 0, 0)),
            pl.BlockSpec((1, Cout), lambda g, i: (0, 0)),
        ]
        out_specs = pl.BlockSpec((1, tile, Cout), lambda g, i: (g, i, 0))
        out_shape = jax.ShapeDtypeStruct((G, M, Cout), jnp.float32)

    return pl.pallas_call(
        functools.partial(_gmm_kernel, relu=relu, transposed=transposed),
        out_shape=out_shape,
        grid_spec=pltpu.PrefetchScalarGridSpec(
            num_scalar_prefetch=0,
            grid=grid,
            in_specs=in_specs,
            out_specs=out_specs,
        ),
        compiler_params=pltpu.CompilerParams(
            dimension_semantics=("parallel", "parallel")),
    )(a, w, bias2d)


# ----------------------------------------------------------------------------
# Fused latent path: mean-pool -> (mu || logvar) linear -> reparameterize -> dec fc
# ----------------------------------------------------------------------------
def _latent_kernel(h_ref, eps_ref, wml_ref, bml_ref, wfc_ref, bfc_ref,
                   mu_ref, lv_ref, d_ref, *, emb):
    latent = jnp.mean(h_ref[...], axis=1)                       # (N, emb)  avg-pool
    stats = jnp.dot(latent, wml_ref[...],
                    preferred_element_type=jnp.float32) + bml_ref[...]   # (N, 2*emb)
    mu = stats[:, :emb]
    logvar = stats[:, emb:]
    z = mu + eps_ref[...] * jnp.exp(0.5 * logvar)                # reparameterize
    d = jnp.dot(z, wfc_ref[...],
                preferred_element_type=jnp.float32) + bfc_ref[...]       # decoder fc
    mu_ref[...] = mu
    lv_ref[...] = logvar
    d_ref[...] = d


def latent_pipeline(h_nhwc, eps, params, emb):
    N, H, W, C = h_nhwc.shape
    h = h_nhwc.reshape(N, H * W, C)
    wml = jnp.concatenate([params["mu_w"].T, params["lv_w"].T], axis=1)   # (emb, 2emb)
    bml = jnp.concatenate([params["mu_b"], params["lv_b"]]).reshape(1, 2 * emb)
    wfc = params["dfc_w"].T                                               # (emb, emb*16)
    bfc = params["dfc_b"].reshape(1, emb * 16)
    mu, logvar, d = pl.pallas_call(
        functools.partial(_latent_kernel, emb=emb),
        out_shape=(jax.ShapeDtypeStruct((N, emb), jnp.float32),
                   jax.ShapeDtypeStruct((N, emb), jnp.float32),
                   jax.ShapeDtypeStruct((N, emb * 16), jnp.float32)),
    )(h, eps, wml, bml, wfc, bfc)
    return mu, logvar, d


# ----------------------------------------------------------------------------
# Conv2d via im2col + Pallas matmul
# ----------------------------------------------------------------------------
def _im2col(x, kh, kw, stride, pad):
    # x: NHWC
    N, H, W, C = x.shape
    xp = jnp.pad(x, ((0, 0), (pad, pad), (pad, pad), (0, 0)))
    ho = (H + 2 * pad - kh) // stride + 1
    wo = (W + 2 * pad - kw) // stride + 1
    cols = []
    for i in range(kh):
        for j in range(kw):
            cols.append(xp[:, i:i + stride * ho:stride, j:j + stride * wo:stride, :])
    patches = jnp.concatenate(cols, axis=-1)  # (N, ho, wo, kh*kw*C)
    return patches.reshape(N * ho * wo, kh * kw * C), ho, wo


def conv2d(x_nhwc, w_torch, b, stride, pad, relu):
    # w_torch: (Cout, Cin, KH, KW)  (PyTorch Conv2d layout)
    Cout, Cin, KH, KW = w_torch.shape
    N = x_nhwc.shape[0]
    if Cin < 8:  # pad channels (3 -> 8) so K is sublane/lane friendly (zeros are inert)
        cpad = 8 - Cin
        x_nhwc = jnp.pad(x_nhwc, ((0, 0), (0, 0), (0, 0), (0, cpad)))
        w_torch = jnp.pad(w_torch, ((0, 0), (0, cpad), (0, 0), (0, 0)))
        Cin = 8
    patches, ho, wo = _im2col(x_nhwc, KH, KW, stride, pad)        # (M, KH*KW*Cin)
    wm = jnp.transpose(w_torch, (2, 3, 1, 0)).reshape(KH * KW * Cin, Cout)
    a = patches.astype(jnp.bfloat16)[None]                        # (1, M, K)
    wmat = wm.astype(jnp.bfloat16)[None]                          # (1, K, Cout)
    y = grouped_matmul_bias_act(a, wmat, b.reshape(1, Cout), relu, transposed=False)
    return y[0].reshape(N, ho, wo, Cout)


# ----------------------------------------------------------------------------
# ConvTranspose2d(k=4, s=2, p=1) via subpixel (phase) decomposition
# ----------------------------------------------------------------------------
def conv_transpose2d(x_nhwc, w_torch, b, relu, to_nchw=False):
    # w_torch: (Cin, Cout, 4, 4)  (PyTorch ConvTranspose2d layout); stride=2, pad=1.
    # Output phase (r, s) at (2p+r, 2q+s) is a stride-1 conv with a 2x2 kernel:
    #   tap (dh, dw) reads xpad[p + r + dh, q + s + dw] with original kernel index
    #   kh = 3 - 2*dh (r == 0) or 2 - 2*dh (r == 1), and likewise for kw with s.
    Cin, Cout, KH, KW = w_torch.shape
    N, H, W, _ = x_nhwc.shape
    M = N * H * W
    xp = jnp.pad(x_nhwc, ((0, 0), (1, 1), (1, 1), (0, 0)))        # (N, H+2, W+2, Cin)
    kidx = [[3, 1], [2, 0]]                                       # [phase][tap]

    # lane-dense (Cout, M) output when spatial M is the wider dim
    transposed = (M >= 128) and (M >= Cout)
    if transposed:
        xc = jnp.transpose(xp, (3, 0, 1, 2))                      # (Cin, N, H+2, W+2)

    phases_a, phases_w = [], []
    for r in (0, 1):
        for s in (0, 1):
            taps_a, taps_w = [], []
            for dh in (0, 1):
                for dw in (0, 1):
                    if transposed:
                        sl = xc[:, :, r + dh:r + dh + H, s + dw:s + dw + W]
                        taps_a.append(sl.reshape(Cin, M))
                    else:
                        sl = xp[:, r + dh:r + dh + H, s + dw:s + dw + W, :]
                        taps_a.append(sl.reshape(M, Cin))
                    taps_w.append(w_torch[:, :, kidx[r][dh], kidx[s][dw]])  # (Cin, Cout)
            wt = jnp.stack(taps_w, axis=0)                        # (4, Cin, Cout)
            if transposed:
                phases_a.append(jnp.concatenate(taps_a, axis=0))  # (4*Cin, M)
                phases_w.append(jnp.transpose(wt, (2, 0, 1)).reshape(Cout, 4 * Cin))
            else:
                phases_a.append(jnp.concatenate(taps_a, axis=1))  # (M, 4*Cin)
                phases_w.append(wt.reshape(4 * Cin, Cout))

    a = jnp.stack(phases_a, axis=0).astype(jnp.bfloat16)          # (4, ., .)
    wmat = jnp.stack(phases_w, axis=0).astype(jnp.bfloat16)

    if transposed:
        y = grouped_matmul_bias_act(a, wmat, b.reshape(Cout, 1), relu, transposed=True)
        y = y.reshape(2, 2, Cout, N, H, W)                        # [r, s, c, n, p, q]
        if to_nchw:
            return jnp.transpose(y, (3, 2, 4, 0, 5, 1)).reshape(N, Cout, 2 * H, 2 * W)
        return jnp.transpose(y, (3, 4, 0, 5, 1, 2)).reshape(N, 2 * H, 2 * W, Cout)
    else:
        y = grouped_matmul_bias_act(a, wmat, b.reshape(1, Cout), relu, transposed=False)
        y = y.reshape(2, 2, N, H, W, Cout)                        # [r, s, n, p, q, c]
        if to_nchw:
            return jnp.transpose(y, (2, 5, 3, 0, 4, 1)).reshape(N, Cout, 2 * H, 2 * W)
        return jnp.transpose(y, (2, 3, 0, 4, 1, 5)).reshape(N, 2 * H, 2 * W, Cout)


# ----------------------------------------------------------------------------
# Parameters (deterministic synthetic init) and forward pass
# ----------------------------------------------------------------------------
def init_params(key, emb=64):
    ks = jax.random.split(key, 20)
    n = lambda k, s, sc=0.05: jax.random.normal(k, s, jnp.float32) * sc
    z = lambda s: jnp.zeros(s, jnp.float32)
    p = {
        # encoder Conv2d weights: (Cout, Cin, 4, 4)
        "ew1": n(ks[0], (32, 3, 4, 4)),    "eb1": z((32,)),
        "ew2": n(ks[1], (64, 32, 4, 4)),   "eb2": z((64,)),
        "ew3": n(ks[2], (128, 64, 4, 4)),  "eb3": z((128,)),
        "ew4": n(ks[3], (emb, 128, 4, 4)), "eb4": z((emb,)),
        # latent heads: (out, in)
        "mu_w": n(ks[4], (emb, emb)),      "mu_b": z((emb,)),
        "lv_w": n(ks[5], (emb, emb)),      "lv_b": z((emb,)),
        # decoder fc: (emb*4*4, emb)
        "dfc_w": n(ks[6], (emb * 16, emb)), "dfc_b": z((emb * 16,)),
        # decoder ConvTranspose2d weights: (Cin, Cout, 4, 4)
        "dw1": n(ks[7], (emb, 128, 4, 4)), "db1": z((128,)),
        "dw2": n(ks[8], (128, 64, 4, 4)),  "db2": z((64,)),
        "dw3": n(ks[9], (64, 32, 4, 4)),   "db3": z((32,)),
        "dw4": n(ks[10], (32, 16, 4, 4)),  "db4": z((16,)),
        "dw5": n(ks[11], (16, 3, 4, 4)),   "db5": z((3,)),
    }
    return p


def retina_forward(x_nchw, params, eps, emb=64):
    x = jnp.transpose(x_nchw, (0, 2, 3, 1)).astype(jnp.float32)   # NHWC

    # ---- encoder ----
    h = conv2d(x, params["ew1"], params["eb1"], 2, 1, relu=True)
    h = conv2d(h, params["ew2"], params["eb2"], 2, 1, relu=True)
    h = conv2d(h, params["ew3"], params["eb3"], 2, 1, relu=True)
    h = conv2d(h, params["ew4"], params["eb4"], 2, 1, relu=True)

    # ---- fused latent path (pool + mu/logvar + reparameterize + decoder fc) ----
    # TODO(synk): eps is supplied by the host (torch.randn_like in the reference);
    #             it could be drawn in-kernel with pltpu.prng_* instead.
    mu, logvar, d = latent_pipeline(h, eps, params, emb)

    # ---- decoder ----
    N = d.shape[0]
    dmap = jnp.transpose(d.reshape(N, emb, 4, 4), (0, 2, 3, 1))   # Unflatten -> NHWC
    dmap = conv_transpose2d(dmap, params["dw1"], params["db1"], relu=True)
    dmap = conv_transpose2d(dmap, params["dw2"], params["db2"], relu=True)
    dmap = conv_transpose2d(dmap, params["dw3"], params["db3"], relu=True)
    dmap = conv_transpose2d(dmap, params["dw4"], params["db4"], relu=True)
    recon = conv_transpose2d(dmap, params["dw5"], params["db5"], relu=False,
                             to_nchw=True)                        # (N, 3, 2H, 2W) NCHW
    return recon, mu, logvar


# ----------------------------------------------------------------------------
if __name__ == "__main__":
    emb_dim = 64
    key = jax.random.PRNGKey(0)
    k_x, k_p, k_eps = jax.random.split(key, 3)

    # small input: batch=2, 3 channels, 32x32 spatial (encoder -> 2x2 -> pool)
    x = jax.random.normal(k_x, (2, 3, 32, 32), jnp.float32)
    params = init_params(k_p, emb_dim)
    eps = jax.random.normal(k_eps, (2, emb_dim), jnp.float32)     # torch.randn_like(std)

    fwd = jax.jit(functools.partial(retina_forward, emb=emb_dim))
    recon, mu, logvar = fwd(x, params, eps)
    jax.block_until_ready((recon, mu, logvar))

    assert recon.shape == (2, 3, 128, 128)   # decoder always upsamples 4x4 -> 128x128
    assert mu.shape == (2, emb_dim) and logvar.shape == (2, emb_dim)
    print("KERNEL_OK")
</pallas_src>

<mosaic_0001>
module attributes {stable_mosaic.version = 11 : i64} {
  func.func @_gmm_kernel(%arg0: i32, %arg1: i32, %arg2: memref<1x512x128xbf16, #tpu.memory_space<vmem>>, %arg3: memref<1x128x32xbf16, #tpu.memory_space<vmem>>, %arg4: memref<1x32xf32, #tpu.memory_space<vmem>>, %arg5: memref<1x512x32xf32, #tpu.memory_space<vmem>>) attributes {dimension_semantics = [#tpu.dimension_semantics<parallel>, #tpu.dimension_semantics<parallel>], iteration_bounds = array<i64: 1, 1>, scalar_prefetch = 0 : i64, scratch_operands = 0 : i64, tpu.core_type = #tpu.core_type<tc>, window_params = [{transform_indices = @transform_0, window_bounds = array<i64: 1, 512, 128>}, {transform_indices = @transform_1, window_bounds = array<i64: 1, 128, 32>}, {pipeline_mode = #tpu.pipeline_mode<synchronous>, transform_indices = @transform_2, window_bounds = array<i64: 1, 32>}, {transform_indices = @transform_3, window_bounds = array<i64: 1, 512, 32>}]} {
    %c0 = arith.constant 0 : index
    %c0_0 = arith.constant 0 : index
    %c0_1 = arith.constant 0 : index
    %0 = vector.load %arg2[%c0, %c0_0, %c0_1] : memref<1x512x128xbf16, #tpu.memory_space<vmem>>, vector<1x512x128xbf16>
    %1 = vector.shape_cast %0 : vector<1x512x128xbf16> to vector<512x128xbf16>
    %c0_2 = arith.constant 0 : index
    %c0_3 = arith.constant 0 : index
    %c0_4 = arith.constant 0 : index
    %2 = vector.load %arg3[%c0_2, %c0_3, %c0_4] : memref<1x128x32xbf16, #tpu.memory_space<vmem>>, vector<1x128x32xbf16>
    %3 = vector.shape_cast %2 : vector<1x128x32xbf16> to vector<128x32xbf16>
    %cst = arith.constant dense<0.000000e+00> : vector<512x32xf32>
    %4 = tpu.matmul %1, %3, %cst {dimension_numbers = #tpu.dot_dimension_numbers<[1], [0], [0], [1], [0, 0, 1, 1], [], []>} : vector<512x128xbf16>, vector<128x32xbf16>, vector<512x32xf32> -> vector<512x32xf32>
    %c0_5 = arith.constant 0 : index
    %c0_6 = arith.constant 0 : index
    %5 = vector.load %arg4[%c0_5, %c0_6] : memref<1x32xf32, #tpu.memory_space<vmem>>, vector<1x32xf32>
    %6 = vector.broadcast %5 : vector<1x32xf32> to vector<512x32xf32>
    %7 = arith.addf %4, %6 : vector<512x32xf32>
    %cst_7 = arith.constant 0.000000e+00 : f32
    %8 = vector.broadcast %cst_7 : f32 to vector<512x32xf32>
    %9 = arith.maximumf %7, %8 : vector<512x32xf32>
    %c0_8 = arith.constant 0 : index
    %c0_9 = arith.constant 0 : index
    %c0_10 = arith.constant 0 : index
    %10 = vector.load %arg5[%c0_8, %c0_9, %c0_10] : memref<1x512x32xf32, #tpu.memory_space<vmem>>, vector<1x512x32xf32>
    %11 = vector.shape_cast %10 : vector<1x512x32xf32> to vector<512x32xf32>
    %12 = vector.shape_cast %9 : vector<512x32xf32> to vector<1x512x32xf32>
    tpu.vector_store %arg5[%c0_8, %c0_9, %c0_10], %12 {strides = array<i32>} : memref<1x512x32xf32, #tpu.memory_space<vmem>>, vector<1x512x32xf32>,
    return
  }
  func.func @transform_0(%arg0: i32, %arg1: i32) -> (i32, i32, i32) {
    %c0_i32 = arith.constant 0 : i32
    %c0_i32_0 = arith.constant 0 : i32
    return %arg0, %arg1, %c0_i32 : i32, i32, i32
  }
  func.func @transform_1(%arg0: i32, %arg1: i32) -> (i32, i32, i32) {
    %c0_i32 = arith.constant 0 : i32
    %c0_i32_0 = arith.constant 0 : i32
    %c0_i32_1 = arith.constant 0 : i32
    return %arg0, %c0_i32, %c0_i32_0 : i32, i32, i32
  }
  func.func @transform_2(%arg0: i32, %arg1: i32) -> (i32, i32) {
    %c0_i32 = arith.constant 0 : i32
    %c0_i32_0 = arith.constant 0 : i32
    %c0_i32_1 = arith.constant 0 : i32
    return %c0_i32, %c0_i32_0 : i32, i32
  }
  func.func @transform_3(%arg0: i32, %arg1: i32) -> (i32, i32, i32) {
    %c0_i32 = arith.constant 0 : i32
    %c0_i32_0 = arith.constant 0 : i32
    return %arg0, %arg1, %c0_i32 : i32, i32, i32
  }
}

module attributes {stable_mosaic.version = 11 : i64} {
  func.func @_gmm_kernel(%arg0: i32, %arg1: i32, %arg2: memref<1x128x512xbf16, #tpu.memory_space<vmem>>, %arg3: memref<1x512x64xbf16, #tpu.memory_space<vmem>>, %arg4: memref<1x64xf32, #tpu.memory_space<vmem>>, %arg5: memref<1x128x64xf32, #tpu.memory_space<vmem>>) attributes {dimension_semantics = [#tpu.dimension_semantics<parallel>, #tpu.dimension_semantics<parallel>], iteration_bounds = array<i64: 1, 1>, scalar_prefetch = 0 : i64, scratch_operands = 0 : i64, tpu.core_type = #tpu.core_type<tc>, window_params = [{transform_indices = @transform_0, window_bounds = array<i64: 1, 128, 512>}, {transform_indices = @transform_1, window_bounds = array<i64: 1, 512, 64>}, {pipeline_mode = #tpu.pipeline_mode<synchronous>, transform_indices = @transform_2, window_bounds = array<i64: 1, 64>}, {transform_indices = @transform_3, window_bounds = array<i64: 1, 128, 64>}]} {
    %c0 = arith.constant 0 : index
    %c0_0 = arith.constant 0 : index
    %c0_1 = arith.constant 0 : index
    %0 = vector.load %arg2[%c0, %c0_0, %c0_1] : memref<1x128x512xbf16, #tpu.memory_space<vmem>>, vector<1x128x512xbf16>
    %1 = vector.shape_cast %0 : vector<1x128x512xbf16> to vector<128x512xbf16>
    %c0_2 = arith.constant 0 : index
    %c0_3 = arith.constant 0 : index
    %c0_4 = arith.constant 0 : index
    %2 = vector.load %arg3[%c0_2, %c0_3, %c0_4] : memref<1x512x64xbf16, #tpu.memory_space<vmem>>, vector<1x512x64xbf16>
    %3 = vector.shape_cast %2 : vector<1x512x64xbf16> to vector<512x64xbf16>
    %cst = arith.constant dense<0.000000e+00> : vector<128x64xf32>
    %4 = tpu.matmul %1, %3, %cst {dimension_numbers = #tpu.dot_dimension_numbers<[1], [0], [0], [1], [0, 0, 1, 1], [], []>} : vector<128x512xbf16>, vector<512x64xbf16>, vector<128x64xf32> -> vector<128x64xf32>
    %c0_5 = arith.constant 0 : index
    %c0_6 = arith.constant 0 : index
    %5 = vector.load %arg4[%c0_5, %c0_6] : memref<1x64xf32, #tpu.memory_space<vmem>>, vector<1x64xf32>
    %6 = vector.broadcast %5 : vector<1x64xf32> to vector<128x64xf32>
    %7 = arith.addf %4, %6 : vector<128x64xf32>
    %cst_7 = arith.constant 0.000000e+00 : f32
    %8 = vector.broadcast %cst_7 : f32 to vector<128x64xf32>
    %9 = arith.maximumf %7, %8 : vector<128x64xf32>
    %c0_8 = arith.constant 0 : index
    %c0_9 = arith.constant 0 : index
    %c0_10 = arith.constant 0 : index
    %10 = vector.load %arg5[%c0_8, %c0_9, %c0_10] : memref<1x128x64xf32, #tpu.memory_space<vmem>>, vector<1x128x64xf32>
    %11 = vector.shape_cast %10 : vector<1x128x64xf32> to vector<128x64xf32>
    %12 = vector.shape_cast %9 : vector<128x64xf32> to vector<1x128x64xf32>
    tpu.vector_store %arg5[%c0_8, %c0_9, %c0_10], %12 {strides = array<i32>} : memref<1x128x64xf32, #tpu.memory_space<vmem>>, vector<1x128x64xf32>,
    return
  }
  func.func @transform_0(%arg0: i32, %arg1: i32) -> (i32, i32, i32) {
    %c0_i32 = arith.constant 0 : i32
    %c0_i32_0 = arith.constant 0 : i32
    return %arg0, %arg1, %c0_i32 : i32, i32, i32
  }
  func.func @transform_1(%arg0: i32, %arg1: i32) -> (i32, i32, i32) {
    %c0_i32 = arith.constant 0 : i32
    %c0_i32_0 = arith.constant 0 : i32
    %c0_i32_1 = arith.constant 0 : i32
    return %arg0, %c0_i32, %c0_i32_0 : i32, i32, i32
  }
  func.func @transform_2(%arg0: i32, %arg1: i32) -> (i32, i32) {
    %c0_i32 = arith.constant 0 : i32
    %c0_i32_0 = arith.constant 0 : i32
    %c0_i32_1 = arith.constant 0 : i32
    return %c0_i32, %c0_i32_0 : i32, i32
  }
  func.func @transform_3(%arg0: i32, %arg1: i32) -> (i32, i32, i32) {
    %c0_i32 = arith.constant 0 : i32
    %c0_i32_0 = arith.constant 0 : i32
    return %arg0, %arg1, %c0_i32 : i32, i32, i32
  }
}

module attributes {stable_mosaic.version = 11 : i64} {
  func.func @_gmm_kernel(%arg0: i32, %arg1: i32, %arg2: memref<1x32x1024xbf16, #tpu.memory_space<vmem>>, %arg3: memref<1x1024x128xbf16, #tpu.memory_space<vmem>>, %arg4: memref<1x128xf32, #tpu.memory_space<vmem>>, %arg5: memref<1x32x128xf32, #tpu.memory_space<vmem>>) attributes {dimension_semantics = [#tpu.dimension_semantics<parallel>, #tpu.dimension_semantics<parallel>], iteration_bounds = array<i64: 1, 1>, scalar_prefetch = 0 : i64, scratch_operands = 0 : i64, tpu.core_type = #tpu.core_type<tc>, window_params = [{transform_indices = @transform_0, window_bounds = array<i64: 1, 32, 1024>}, {transform_indices = @transform_1, window_bounds = array<i64: 1, 1024, 128>}, {pipeline_mode = #tpu.pipeline_mode<synchronous>, transform_indices = @transform_2, window_bounds = array<i64: 1, 128>}, {transform_indices = @transform_3, window_bounds = array<i64: 1, 32, 128>}]} {
    %c0 = arith.constant 0 : index
    %c0_0 = arith.constant 0 : index
    %c0_1 = arith.constant 0 : index
    %0 = vector.load %arg2[%c0, %c0_0, %c0_1] : memref<1x32x1024xbf16, #tpu.memory_space<vmem>>, vector<1x32x1024xbf16>
    %1 = vector.shape_cast %0 : vector<1x32x1024xbf16> to vector<32x1024xbf16>
    %c0_2 = arith.constant 0 : index
    %c0_3 = arith.constant 0 : index
    %c0_4 = arith.constant 0 : index
    %2 = vector.load %arg3[%c0_2, %c0_3, %c0_4] : memref<1x1024x128xbf16, #tpu.memory_space<vmem>>, vector<1x1024x128xbf16>
    %3 = vector.shape_cast %2 : vector<1x1024x128xbf16> to vector<1024x128xbf16>
    %cst = arith.constant dense<0.000000e+00> : vector<32x128xf32>
    %4 = tpu.matmul %1, %3, %cst {dimension_numbers = #tpu.dot_dimension_numbers<[1], [0], [0], [1], [0, 0, 1, 1], [], []>} : vector<32x1024xbf16>, vector<1024x128xbf16>, vector<32x128xf32> -> vector<32x128xf32>
    %c0_5 = arith.constant 0 : index
    %c0_6 = arith.constant 0 : index
    %5 = vector.load %arg4[%c0_5, %c0_6] : memref<1x128xf32, #tpu.memory_space<vmem>>, vector<1x128xf32>
    %6 = vector.broadcast %5 : vector<1x128xf32> to vector<32x128xf32>
    %7 = arith.addf %4, %6 : vector<32x128xf32>
    %cst_7 = arith.constant 0.000000e+00 : f32
    %8 = vector.broadcast %cst_7 : f32 to vector<32x128xf32>
    %9 = arith.maximumf %7, %8 : vector<32x128xf32>
    %c0_8 = arith.constant 0 : index
    %c0_9 = arith.constant 0 : index
    %c0_10 = arith.constant 0 : index
    %10 = vector.load %arg5[%c0_8, %c0_9, %c0_10] : memref<1x32x128xf32, #tpu.memory_space<vmem>>, vector<1x32x128xf32>
    %11 = vector.shape_cast %10 : vector<1x32x128xf32> to vector<32x128xf32>
    %12 = vector.shape_cast %9 : vector<32x128xf32> to vector<1x32x128xf32>
    tpu.vector_store %arg5[%c0_8, %c0_9, %c0_10], %12 {strides = array<i32>} : memref<1x32x128xf32, #tpu.memory_space<vmem>>, vector<1x32x128xf32>,
    return
  }
  func.func @transform_0(%arg0: i32, %arg1: i32) -> (i32, i32, i32) {
    %c0_i32 = arith.constant 0 : i32
    %c0_i32_0 = arith.constant 0 : i32
    return %arg0, %arg1, %c0_i32 : i32, i32, i32
  }
  func.func @transform_1(%arg0: i32, %arg1: i32) -> (i32, i32, i32) {
    %c0_i32 = arith.constant 0 : i32
    %c0_i32_0 = arith.constant 0 : i32
    %c0_i32_1 = arith.constant 0 : i32
    return %arg0, %c0_i32, %c0_i32_0 : i32, i32, i32
  }
  func.func @transform_2(%arg0: i32, %arg1: i32) -> (i32, i32) {
    %c0_i32 = arith.constant 0 : i32
    %c0_i32_0 = arith.constant 0 : i32
    %c0_i32_1 = arith.constant 0 : i32
    return %c0_i32, %c0_i32_0 : i32, i32
  }
  func.func @transform_3(%arg0: i32, %arg1: i32) -> (i32, i32, i32) {
    %c0_i32 = arith.constant 0 : i32
    %c0_i32_0 = arith.constant 0 : i32
    return %arg0, %arg1, %c0_i32 : i32, i32, i32
  }
}

module attributes {stable_mosaic.version = 11 : i64} {
  func.func @_gmm_kernel(%arg0: i32, %arg1: i32, %arg2: memref<1x8x2048xbf16, #tpu.memory_space<vmem>>, %arg3: memref<1x2048x64xbf16, #tpu.memory_space<vmem>>, %arg4: memref<1x64xf32, #tpu.memory_space<vmem>>, %arg5: memref<1x8x64xf32, #tpu.memory_space<vmem>>) attributes {dimension_semantics = [#tpu.dimension_semantics<parallel>, #tpu.dimension_semantics<parallel>], iteration_bounds = array<i64: 1, 1>, scalar_prefetch = 0 : i64, scratch_operands = 0 : i64, tpu.core_type = #tpu.core_type<tc>, window_params = [{transform_indices = @transform_0, window_bounds = array<i64: 1, 8, 2048>}, {transform_indices = @transform_1, window_bounds = array<i64: 1, 2048, 64>}, {pipeline_mode = #tpu.pipeline_mode<synchronous>, transform_indices = @transform_2, window_bounds = array<i64: 1, 64>}, {transform_indices = @transform_3, window_bounds = array<i64: 1, 8, 64>}]} {
    %c0 = arith.constant 0 : index
    %c0_0 = arith.constant 0 : index
    %c0_1 = arith.constant 0 : index
    %0 = vector.load %arg2[%c0, %c0_0, %c0_1] : memref<1x8x2048xbf16, #tpu.memory_space<vmem>>, vector<1x8x2048xbf16>
    %1 = vector.shape_cast %0 : vector<1x8x2048xbf16> to vector<8x2048xbf16>
    %c0_2 = arith.constant 0 : index
    %c0_3 = arith.constant 0 : index
    %c0_4 = arith.constant 0 : index
    %2 = vector.load %arg3[%c0_2, %c0_3, %c0_4] : memref<1x2048x64xbf16, #tpu.memory_space<vmem>>, vector<1x2048x64xbf16>
    %3 = vector.shape_cast %2 : vector<1x2048x64xbf16> to vector<2048x64xbf16>
    %cst = arith.constant dense<0.000000e+00> : vector<8x64xf32>
    %4 = tpu.matmul %1, %3, %cst {dimension_numbers = #tpu.dot_dimension_numbers<[1], [0], [0], [1], [0, 0, 1, 1], [], []>} : vector<8x2048xbf16>, vector<2048x64xbf16>, vector<8x64xf32> -> vector<8x64xf32>
    %c0_5 = arith.constant 0 : index
    %c0_6 = arith.constant 0 : index
    %5 = vector.load %arg4[%c0_5, %c0_6] : memref<1x64xf32, #tpu.memory_space<vmem>>, vector<1x64xf32>
    %6 = vector.broadcast %5 : vector<1x64xf32> to vector<8x64xf32>
    %7 = arith.addf %4, %6 : vector<8x64xf32>
    %cst_7 = arith.constant 0.000000e+00 : f32
    %8 = vector.broadcast %cst_7 : f32 to vector<8x64xf32>
    %9 = arith.maximumf %7, %8 : vector<8x64xf32>
    %c0_8 = arith.constant 0 : index
    %c0_9 = arith.constant 0 : index
    %c0_10 = arith.constant 0 : index
    %10 = vector.load %arg5[%c0_8, %c0_9, %c0_10] : memref<1x8x64xf32, #tpu.memory_space<vmem>>, vector<1x8x64xf32>
    %11 = vector.shape_cast %10 : vector<1x8x64xf32> to vector<8x64xf32>
    %12 = vector.shape_cast %9 : vector<8x64xf32> to vector<1x8x64xf32>
    tpu.vector_store %arg5[%c0_8, %c0_9, %c0_10], %12 {strides = array<i32>} : memref<1x8x64xf32, #tpu.memory_space<vmem>>, vector<1x8x64xf32>,
    return
  }
  func.func @transform_0(%arg0: i32, %arg1: i32) -> (i32, i32, i32) {
    %c0_i32 = arith.constant 0 : i32
    %c0_i32_0 = arith.constant 0 : i32
    return %arg0, %arg1, %c0_i32 : i32, i32, i32
  }
  func.func @transform_1(%arg0: i32, %arg1: i32) -> (i32, i32, i32) {
    %c0_i32 = arith.constant 0 : i32
    %c0_i32_0 = arith.constant 0 : i32
    %c0_i32_1 = arith.constant 0 : i32
    return %arg0, %c0_i32, %c0_i32_0 : i32, i32, i32
  }
  func.func @transform_2(%arg0: i32, %arg1: i32) -> (i32, i32) {
    %c0_i32 = arith.constant 0 : i32
    %c0_i32_0 = arith.constant 0 : i32
    %c0_i32_1 = arith.constant 0 : i32
    return %c0_i32, %c0_i32_0 : i32, i32
  }
  func.func @transform_3(%arg0: i32, %arg1: i32) -> (i32, i32, i32) {
    %c0_i32 = arith.constant 0 : i32
    %c0_i32_0 = arith.constant 0 : i32
    return %arg0, %arg1, %c0_i32 : i32, i32, i32
  }
}

module attributes {stable_mosaic.version = 11 : i64} {
  func.func @_latent_kernel(%arg0: memref<2x4x64xf32, #tpu.memory_space<vmem>>, %arg1: memref<2x64xf32, #tpu.memory_space<vmem>>, %arg2: memref<64x128xf32, #tpu.memory_space<vmem>>, %arg3: memref<1x128xf32, #tpu.memory_space<vmem>>, %arg4: memref<64x1024xf32, #tpu.memory_space<vmem>>, %arg5: memref<1x1024xf32, #tpu.memory_space<vmem>>, %arg6: memref<2x64xf32, #tpu.memory_space<vmem>>, %arg7: memref<2x64xf32, #tpu.memory_space<vmem>>, %arg8: memref<2x1024xf32, #tpu.memory_space<vmem>>) attributes {dimension_semantics = [], scalar_prefetch = 0 : i64, scratch_operands = 0 : i64, tpu.core_type = #tpu.core_type<tc>} {
    %c0 = arith.constant 0 : index
    %c0_0 = arith.constant 0 : index
    %c0_1 = arith.constant 0 : index
    %0 = vector.load %arg0[%c0, %c0_0, %c0_1] : memref<2x4x64xf32, #tpu.memory_space<vmem>>, vector<2x4x64xf32>
    %cst = arith.constant dense<0.000000e+00> : vector<2x64xf32>
    %1 = vector.multi_reduction <add>, %0, %cst [1] : vector<2x4x64xf32> to vector<2x64xf32>
    %cst_2 = arith.constant 4.000000e+00 : f32
    %2 = vector.broadcast %cst_2 : f32 to vector<2x64xf32>
    %3 = arith.divf %1, %2 : vector<2x64xf32>
    %c0_3 = arith.constant 0 : index
    %c0_4 = arith.constant 0 : index
    %4 = vector.load %arg2[%c0_3, %c0_4] : memref<64x128xf32, #tpu.memory_space<vmem>>, vector<64x128xf32>
    %cst_5 = arith.constant dense<0.000000e+00> : vector<2x128xf32>
    %5 = tpu.matmul %3, %4, %cst_5 {dimension_numbers = #tpu.dot_dimension_numbers<[1], [0], [0], [1], [0, 0, 1, 1], [], []>} : vector<2x64xf32>, vector<64x128xf32>, vector<2x128xf32> -> vector<2x128xf32>
    %c0_6 = arith.constant 0 : index
    %c0_7 = arith.constant 0 : index
    %6 = vector.load %arg3[%c0_6, %c0_7] : memref<1x128xf32, #tpu.memory_space<vmem>>, vector<1x128xf32>
    %7 = vector.broadcast %6 : vector<1x128xf32> to vector<2x128xf32>
    %8 = arith.addf %5, %7 : vector<2x128xf32>
    %9 = vector.extract_strided_slice %8 {offsets = [0, 0], sizes = [2, 64], strides = [1, 1]} : vector<2x128xf32> to vector<2x64xf32>
    %10 = vector.extract_strided_slice %8 {offsets = [0, 64], sizes = [2, 64], strides = [1, 1]} : vector<2x128xf32> to vector<2x64xf32>
    %c0_8 = arith.constant 0 : index
    %c0_9 = arith.constant 0 : index
    %11 = vector.load %arg1[%c0_8, %c0_9] : memref<2x64xf32, #tpu.memory_space<vmem>>, vector<2x64xf32>
    %cst_10 = arith.constant 5.000000e-01 : f32
    %12 = vector.broadcast %cst_10 : f32 to vector<2x64xf32>
    %13 = arith.mulf %12, %10 : vector<2x64xf32>
    %14 = math.exp %13 : vector<2x64xf32>
    %15 = arith.mulf %11, %14 : vector<2x64xf32>
    %16 = arith.addf %9, %15 : vector<2x64xf32>
    %c0_11 = arith.constant 0 : index
    %c0_12 = arith.constant 0 : index
    %17 = vector.load %arg4[%c0_11, %c0_12] : memref<64x1024xf32, #tpu.memory_space<vmem>>, vector<64x1024xf32>
    %cst_13 = arith.constant dense<0.000000e+00> : vector<2x1024xf32>
    %18 = tpu.matmul %16, %17, %cst_13 {dimension_numbers = #tpu.dot_dimension_numbers<[1], [0], [0], [1], [0, 0, 1, 1], [], []>} : vector<2x64xf32>, vector<64x1024xf32>, vector<2x1024xf32> -> vector<2x1024xf32>
    %c0_14 = arith.constant 0 : index
    %c0_15 = arith.constant 0 : index
    %19 = vector.load %arg5[%c0_14, %c0_15] : memref<1x1024xf32, #tpu.memory_space<vmem>>, vector<1x1024xf32>
    %20 = vector.broadcast %19 : vector<1x1024xf32> to vector<2x1024xf32>
    %21 = arith.addf %18, %20 : vector<2x1024xf32>
    %c0_16 = arith.constant 0 : index
    %c0_17 = arith.constant 0 : index
    %22 = vector.load %arg6[%c0_16, %c0_17] : memref<2x64xf32, #tpu.memory_space<vmem>>, vector<2x64xf32>
    tpu.vector_store %arg6[%c0_16, %c0_17], %9 {strides = array<i32>} : memref<2x64xf32, #tpu.memory_space<vmem>>, vector<2x64xf32>,
    %c0_18 = arith.constant 0 : index
    %c0_19 = arith.constant 0 : index
    %23 = vector.load %arg7[%c0_18, %c0_19] : memref<2x64xf32, #tpu.memory_space<vmem>>, vector<2x64xf32>
    tpu.vector_store %arg7[%c0_18, %c0_19], %10 {strides = array<i32>} : memref<2x64xf32, #tpu.memory_space<vmem>>, vector<2x64xf32>,
    %c0_20 = arith.constant 0 : index
    %c0_21 = arith.constant 0 : index
    %24 = vector.load %arg8[%c0_20, %c0_21] : memref<2x1024xf32, #tpu.memory_space<vmem>>, vector<2x1024xf32>
    tpu.vector_store %arg8[%c0_20, %c0_21], %21 {strides = array<i32>} : memref<2x1024xf32, #tpu.memory_space<vmem>>, vector<2x1024xf32>,
    return
  }
}

module attributes {stable_mosaic.version = 11 : i64} {
  func.func @_gmm_kernel(%arg0: i32, %arg1: i32, %arg2: memref<1x32x256xbf16, #tpu.memory_space<vmem>>, %arg3: memref<1x256x128xbf16, #tpu.memory_space<vmem>>, %arg4: memref<1x128xf32, #tpu.memory_space<vmem>>, %arg5: memref<1x32x128xf32, #tpu.memory_space<vmem>>) attributes {dimension_semantics = [#tpu.dimension_semantics<parallel>, #tpu.dimension_semantics<parallel>], iteration_bounds = array<i64: 4, 1>, scalar_prefetch = 0 : i64, scratch_operands = 0 : i64, tpu.core_type = #tpu.core_type<tc>, window_params = [{transform_indices = @transform_0, window_bounds = array<i64: 1, 32, 256>}, {transform_indices = @transform_1, window_bounds = array<i64: 1, 256, 128>}, {pipeline_mode = #tpu.pipeline_mode<synchronous>, transform_indices = @transform_2, window_bounds = array<i64: 1, 128>}, {transform_indices = @transform_3, window_bounds = array<i64: 1, 32, 128>}]} {
    %c0 = arith.constant 0 : index
    %c0_0 = arith.constant 0 : index
    %c0_1 = arith.constant 0 : index
    %0 = vector.load %arg2[%c0, %c0_0, %c0_1] : memref<1x32x256xbf16, #tpu.memory_space<vmem>>, vector<1x32x256xbf16>
    %1 = vector.shape_cast %0 : vector<1x32x256xbf16> to vector<32x256xbf16>
    %c0_2 = arith.constant 0 : index
    %c0_3 = arith.constant 0 : index
    %c0_4 = arith.constant 0 : index
    %2 = vector.load %arg3[%c0_2, %c0_3, %c0_4] : memref<1x256x128xbf16, #tpu.memory_space<vmem>>, vector<1x256x128xbf16>
    %3 = vector.shape_cast %2 : vector<1x256x128xbf16> to vector<256x128xbf16>
    %cst = arith.constant dense<0.000000e+00> : vector<32x128xf32>
    %4 = tpu.matmul %1, %3, %cst {dimension_numbers = #tpu.dot_dimension_numbers<[1], [0], [0], [1], [0, 0, 1, 1], [], []>} : vector<32x256xbf16>, vector<256x128xbf16>, vector<32x128xf32> -> vector<32x128xf32>
    %c0_5 = arith.constant 0 : index
    %c0_6 = arith.constant 0 : index
    %5 = vector.load %arg4[%c0_5, %c0_6] : memref<1x128xf32, #tpu.memory_space<vmem>>, vector<1x128xf32>
    %6 = vector.broadcast %5 : vector<1x128xf32> to vector<32x128xf32>
    %7 = arith.addf %4, %6 : vector<32x128xf32>
    %cst_7 = arith.constant 0.000000e+00 : f32
    %8 = vector.broadcast %cst_7 : f32 to vector<32x128xf32>
    %9 = arith.maximumf %7, %8 : vector<32x128xf32>
    %c0_8 = arith.constant 0 : index
    %c0_9 = arith.constant 0 : index
    %c0_10 = arith.constant 0 : index
    %10 = vector.load %arg5[%c0_8, %c0_9, %c0_10] : memref<1x32x128xf32, #tpu.memory_space<vmem>>, vector<1x32x128xf32>
    %11 = vector.shape_cast %10 : vector<1x32x128xf32> to vector<32x128xf32>
    %12 = vector.shape_cast %9 : vector<32x128xf32> to vector<1x32x128xf32>
    tpu.vector_store %arg5[%c0_8, %c0_9, %c0_10], %12 {strides = array<i32>} : memref<1x32x128xf32, #tpu.memory_space<vmem>>, vector<1x32x128xf32>,
    return
  }
  func.func @transform_0(%arg0: i32, %arg1: i32) -> (i32, i32, i32) {
    %c0_i32 = arith.constant 0 : i32
    %c0_i32_0 = arith.constant 0 : i32
    return %arg0, %arg1, %c0_i32 : i32, i32, i32
  }
  func.func @transform_1(%arg0: i32, %arg1: i32) -> (i32, i32, i32) {
    %c0_i32 = arith.constant 0 : i32
    %c0_i32_0 = arith.constant 0 : i32
    %c0_i32_1 = arith.constant 0 : i32
    return %arg0, %c0_i32, %c0_i32_0 : i32, i32, i32
  }
  func.func @transform_2(%arg0: i32, %arg1: i32) -> (i32, i32) {
    %c0_i32 = arith.constant 0 : i32
    %c0_i32_0 = arith.constant 0 : i32
    %c0_i32_1 = arith.constant 0 : i32
    return %c0_i32, %c0_i32_0 : i32, i32
  }
  func.func @transform_3(%arg0: i32, %arg1: i32) -> (i32, i32, i32) {
    %c0_i32 = arith.constant 0 : i32
    %c0_i32_0 = arith.constant 0 : i32
    return %arg0, %arg1, %c0_i32 : i32, i32, i32
  }
}

module attributes {stable_mosaic.version = 11 : i64} {
  func.func @_gmm_kernel(%arg0: i32, %arg1: i32, %arg2: memref<1x512x128xbf16, #tpu.memory_space<vmem>>, %arg3: memref<1x64x512xbf16, #tpu.memory_space<vmem>>, %arg4: memref<64x1xf32, #tpu.memory_space<vmem>>, %arg5: memref<1x64x128xf32, #tpu.memory_space<vmem>>) attributes {dimension_semantics = [#tpu.dimension_semantics<parallel>, #tpu.dimension_semantics<parallel>], iteration_bounds = array<i64: 4, 1>, scalar_prefetch = 0 : i64, scratch_operands = 0 : i64, tpu.core_type = #tpu.core_type<tc>, window_params = [{transform_indices = @transform_0, window_bounds = array<i64: 1, 512, 128>}, {transform_indices = @transform_1, window_bounds = array<i64: 1, 64, 512>}, {pipeline_mode = #tpu.pipeline_mode<synchronous>, transform_indices = @transform_2, window_bounds = array<i64: 64, 1>}, {transform_indices = @transform_3, window_bounds = array<i64: 1, 64, 128>}]} {
    %c0 = arith.constant 0 : index
    %c0_0 = arith.constant 0 : index
    %c0_1 = arith.constant 0 : index
    %0 = vector.load %arg3[%c0, %c0_0, %c0_1] : memref<1x64x512xbf16, #tpu.memory_space<vmem>>, vector<1x64x512xbf16>
    %1 = vector.shape_cast %0 : vector<1x64x512xbf16> to vector<64x512xbf16>
    %c0_2 = arith.constant 0 : index
    %c0_3 = arith.constant 0 : index
    %c0_4 = arith.constant 0 : index
    %2 = vector.load %arg2[%c0_2, %c0_3, %c0_4] : memref<1x512x128xbf16, #tpu.memory_space<vmem>>, vector<1x512x128xbf16>
    %3 = vector.shape_cast %2 : vector<1x512x128xbf16> to vector<512x128xbf16>
    %cst = arith.constant dense<0.000000e+00> : vector<64x128xf32>
    %4 = tpu.matmul %1, %3, %cst {dimension_numbers = #tpu.dot_dimension_numbers<[1], [0], [0], [1], [0, 0, 1, 1], [], []>} : vector<64x512xbf16>, vector<512x128xbf16>, vector<64x128xf32> -> vector<64x128xf32>
    %c0_5 = arith.constant 0 : index
    %c0_6 = arith.constant 0 : index
    %5 = vector.load %arg4[%c0_5, %c0_6] : memref<64x1xf32, #tpu.memory_space<vmem>>, vector<64x1xf32>
    %6 = vector.broadcast %5 : vector<64x1xf32> to vector<64x128xf32>
    %7 = arith.addf %4, %6 : vector<64x128xf32>
    %cst_7 = arith.constant 0.000000e+00 : f32
    %8 = vector.broadcast %cst_7 : f32 to vector<64x128xf32>
    %9 = arith.maximumf %7, %8 : vector<64x128xf32>
    %c0_8 = arith.constant 0 : index
    %c0_9 = arith.constant 0 : index
    %c0_10 = arith.constant 0 : index
    %10 = vector.load %arg5[%c0_8, %c0_9, %c0_10] : memref<1x64x128xf32, #tpu.memory_space<vmem>>, vector<1x64x128xf32>
    %11 = vector.shape_cast %10 : vector<1x64x128xf32> to vector<64x128xf32>
    %12 = vector.shape_cast %9 : vector<64x128xf32> to vector<1x64x128xf32>
    tpu.vector_store %arg5[%c0_8, %c0_9, %c0_10], %12 {strides = array<i32>} : memref<1x64x128xf32, #tpu.memory_space<vmem>>, vector<1x64x128xf32>,
    return
  }
  func.func @transform_0(%arg0: i32, %arg1: i32) -> (i32, i32, i32) {
    %c0_i32 = arith.constant 0 : i32
    %c0_i32_0 = arith.constant 0 : i32
    return %arg0, %c0_i32, %arg1 : i32, i32, i32
  }
  func.func @transform_1(%arg0: i32, %arg1: i32) -> (i32, i32, i32) {
    %c0_i32 = arith.constant 0 : i32
    %c0_i32_0 = arith.constant 0 : i32
    %c0_i32_1 = arith.constant 0 : i32
    return %arg0, %c0_i32, %c0_i32_0 : i32, i32, i32
  }
  func.func @transform_2(%arg0: i32, %arg1: i32) -> (i32, i32) {
    %c0_i32 = arith.constant 0 : i32
    %c0_i32_0 = arith.constant 0 : i32
    %c0_i32_1 = arith.constant 0 : i32
    return %c0_i32, %c0_i32_0 : i32, i32
  }
  func.func @transform_3(%arg0: i32, %arg1: i32) -> (i32, i32, i32) {
    %c0_i32 = arith.constant 0 : i32
    %c0_i32_0 = arith.constant 0 : i32
    return %arg0, %c0_i32, %arg1 : i32, i32, i32
  }
}

module attributes {stable_mosaic.version = 11 : i64} {
  func.func @_gmm_kernel(%arg0: i32, %arg1: i32, %arg2: memref<1x256x512xbf16, #tpu.memory_space<vmem>>, %arg3: memref<1x32x256xbf16, #tpu.memory_space<vmem>>, %arg4: memref<32x1xf32, #tpu.memory_space<vmem>>, %arg5: memref<1x32x512xf32, #tpu.memory_space<vmem>>) attributes {dimension_semantics = [#tpu.dimension_semantics<parallel>, #tpu.dimension_semantics<parallel>], iteration_bounds = array<i64: 4, 1>, scalar_prefetch = 0 : i64, scratch_operands = 0 : i64, tpu.core_type = #tpu.core_type<tc>, window_params = [{transform_indices = @transform_0, window_bounds = array<i64: 1, 256, 512>}, {transform_indices = @transform_1, window_bounds = array<i64: 1, 32, 256>}, {pipeline_mode = #tpu.pipeline_mode<synchronous>, transform_indices = @transform_2, window_bounds = array<i64: 32, 1>}, {transform_indices = @transform_3, window_bounds = array<i64: 1, 32, 512>}]} {
    %c0 = arith.constant 0 : index
    %c0_0 = arith.constant 0 : index
    %c0_1 = arith.constant 0 : index
    %0 = vector.load %arg3[%c0, %c0_0, %c0_1] : memref<1x32x256xbf16, #tpu.memory_space<vmem>>, vector<1x32x256xbf16>
    %1 = vector.shape_cast %0 : vector<1x32x256xbf16> to vector<32x256xbf16>
    %c0_2 = arith.constant 0 : index
    %c0_3 = arith.constant 0 : index
    %c0_4 = arith.constant 0 : index
    %2 = vector.load %arg2[%c0_2, %c0_3, %c0_4] : memref<1x256x512xbf16, #tpu.memory_space<vmem>>, vector<1x256x512xbf16>
    %3 = vector.shape_cast %2 : vector<1x256x512xbf16> to vector<256x512xbf16>
    %cst = arith.constant dense<0.000000e+00> : vector<32x512xf32>
    %4 = tpu.matmul %1, %3, %cst {dimension_numbers = #tpu.dot_dimension_numbers<[1], [0], [0], [1], [0, 0, 1, 1], [], []>} : vector<32x256xbf16>, vector<256x512xbf16>, vector<32x512xf32> -> vector<32x512xf32>
    %c0_5 = arith.constant 0 : index
    %c0_6 = arith.constant 0 : index
    %5 = vector.load %arg4[%c0_5, %c0_6] : memref<32x1xf32, #tpu.memory_space<vmem>>, vector<32x1xf32>
    %6 = vector.broadcast %5 : vector<32x1xf32> to vector<32x512xf32>
    %7 = arith.addf %4, %6 : vector<32x512xf32>
    %cst_7 = arith.constant 0.000000e+00 : f32
    %8 = vector.broadcast %cst_7 : f32 to vector<32x512xf32>
    %9 = arith.maximumf %7, %8 : vector<32x512xf32>
    %c0_8 = arith.constant 0 : index
    %c0_9 = arith.constant 0 : index
    %c0_10 = arith.constant 0 : index
    %10 = vector.load %arg5[%c0_8, %c0_9, %c0_10] : memref<1x32x512xf32, #tpu.memory_space<vmem>>, vector<1x32x512xf32>
    %11 = vector.shape_cast %10 : vector<1x32x512xf32> to vector<32x512xf32>
    %12 = vector.shape_cast %9 : vector<32x512xf32> to vector<1x32x512xf32>
    tpu.vector_store %arg5[%c0_8, %c0_9, %c0_10], %12 {strides = array<i32>} : memref<1x32x512xf32, #tpu.memory_space<vmem>>, vector<1x32x512xf32>,
    return
  }
  func.func @transform_0(%arg0: i32, %arg1: i32) -> (i32, i32, i32) {
    %c0_i32 = arith.constant 0 : i32
    %c0_i32_0 = arith.constant 0 : i32
    return %arg0, %c0_i32, %arg1 : i32, i32, i32
  }
  func.func @transform_1(%arg0: i32, %arg1: i32) -> (i32, i32, i32) {
    %c0_i32 = arith.constant 0 : i32
    %c0_i32_0 = arith.constant 0 : i32
    %c0_i32_1 = arith.constant 0 : i32
    return %arg0, %c0_i32, %c0_i32_0 : i32, i32, i32
  }
  func.func @transform_2(%arg0: i32, %arg1: i32) -> (i32, i32) {
    %c0_i32 = arith.constant 0 : i32
    %c0_i32_0 = arith.constant 0 : i32
    %c0_i32_1 = arith.constant 0 : i32
    return %c0_i32, %c0_i32_0 : i32, i32
  }
  func.func @transform_3(%arg0: i32, %arg1: i32) -> (i32, i32, i32) {
    %c0_i32 = arith.constant 0 : i32
    %c0_i32_0 = arith.constant 0 : i32
    return %arg0, %c0_i32, %arg1 : i32, i32, i32
  }
}

module attributes {stable_mosaic.version = 11 : i64} {
  func.func @_gmm_kernel(%arg0: i32, %arg1: i32, %arg2: memref<1x128x2048xbf16, #tpu.memory_space<vmem>>, %arg3: memref<1x16x128xbf16, #tpu.memory_space<vmem>>, %arg4: memref<16x1xf32, #tpu.memory_space<vmem>>, %arg5: memref<1x16x2048xf32, #tpu.memory_space<vmem>>) attributes {dimension_semantics = [#tpu.dimension_semantics<parallel>, #tpu.dimension_semantics<parallel>], iteration_bounds = array<i64: 4, 1>, scalar_prefetch = 0 : i64, scratch_operands = 0 : i64, tpu.core_type = #tpu.core_type<tc>, window_params = [{transform_indices = @transform_0, window_bounds = array<i64: 1, 128, 2048>}, {transform_indices = @transform_1, window_bounds = array<i64: 1, 16, 128>}, {pipeline_mode = #tpu.pipeline_mode<synchronous>, transform_indices = @transform_2, window_bounds = array<i64: 16, 1>}, {transform_indices = @transform_3, window_bounds = array<i64: 1, 16, 2048>}]} {
    %c0 = arith.constant 0 : index
    %c0_0 = arith.constant 0 : index
    %c0_1 = arith.constant 0 : index
    %0 = vector.load %arg3[%c0, %c0_0, %c0_1] : memref<1x16x128xbf16, #tpu.memory_space<vmem>>, vector<1x16x128xbf16>
    %1 = vector.shape_cast %0 : vector<1x16x128xbf16> to vector<16x128xbf16>
    %c0_2 = arith.constant 0 : index
    %c0_3 = arith.constant 0 : index
    %c0_4 = arith.constant 0 : index
    %2 = vector.load %arg2[%c0_2, %c0_3, %c0_4] : memref<1x128x2048xbf16, #tpu.memory_space<vmem>>, vector<1x128x2048xbf16>
    %3 = vector.shape_cast %2 : vector<1x128x2048xbf16> to vector<128x2048xbf16>
    %cst = arith.constant dense<0.000000e+00> : vector<16x2048xf32>
    %4 = tpu.matmul %1, %3, %cst {dimension_numbers = #tpu.dot_dimension_numbers<[1], [0], [0], [1], [0, 0, 1, 1], [], []>} : vector<16x128xbf16>, vector<128x2048xbf16>, vector<16x2048xf32> -> vector<16x2048xf32>
    %c0_5 = arith.constant 0 : index
    %c0_6 = arith.constant 0 : index
    %5 = vector.load %arg4[%c0_5, %c0_6] : memref<16x1xf32, #tpu.memory_space<vmem>>, vector<16x1xf32>
    %6 = vector.broadcast %5 : vector<16x1xf32> to vector<16x2048xf32>
    %7 = arith.addf %4, %6 : vector<16x2048xf32>
    %cst_7 = arith.constant 0.000000e+00 : f32
    %8 = vector.broadcast %cst_7 : f32 to vector<16x2048xf32>
    %9 = arith.maximumf %7, %8 : vector<16x2048xf32>
    %c0_8 = arith.constant 0 : index
    %c0_9 = arith.constant 0 : index
    %c0_10 = arith.constant 0 : index
    %10 = vector.load %arg5[%c0_8, %c0_9, %c0_10] : memref<1x16x2048xf32, #tpu.memory_space<vmem>>, vector<1x16x2048xf32>
    %11 = vector.shape_cast %10 : vector<1x16x2048xf32> to vector<16x2048xf32>
    %12 = vector.shape_cast %9 : vector<16x2048xf32> to vector<1x16x2048xf32>
    tpu.vector_store %arg5[%c0_8, %c0_9, %c0_10], %12 {strides = array<i32>} : memref<1x16x2048xf32, #tpu.memory_space<vmem>>, vector<1x16x2048xf32>,
    return
  }
  func.func @transform_0(%arg0: i32, %arg1: i32) -> (i32, i32, i32) {
    %c0_i32 = arith.constant 0 : i32
    %c0_i32_0 = arith.constant 0 : i32
    return %arg0, %c0_i32, %arg1 : i32, i32, i32
  }
  func.func @transform_1(%arg0: i32, %arg1: i32) -> (i32, i32, i32) {
    %c0_i32 = arith.constant 0 : i32
    %c0_i32_0 = arith.constant 0 : i32
    %c0_i32_1 = arith.constant 0 : i32
    return %arg0, %c0_i32, %c0_i32_0 : i32, i32, i32
  }
  func.func @transform_2(%arg0: i32, %arg1: i32) -> (i32, i32) {
    %c0_i32 = arith.constant 0 : i32
    %c0_i32_0 = arith.constant 0 : i32
    %c0_i32_1 = arith.constant 0 : i32
    return %c0_i32, %c0_i32_0 : i32, i32
  }
  func.func @transform_3(%arg0: i32, %arg1: i32) -> (i32, i32, i32) {
    %c0_i32 = arith.constant 0 : i32
    %c0_i32_0 = arith.constant 0 : i32
    return %arg0, %c0_i32, %arg1 : i32, i32, i32
  }
}

module attributes {stable_mosaic.version = 11 : i64} {
  func.func @_gmm_kernel(%arg0: i32, %arg1: i32, %arg2: memref<1x64x4096xbf16, #tpu.memory_space<vmem>>, %arg3: memref<1x3x64xbf16, #tpu.memory_space<vmem>>, %arg4: memref<3x1xf32, #tpu.memory_space<vmem>>, %arg5: memref<1x3x4096xf32, #tpu.memory_space<vmem>>) attributes {dimension_semantics = [#tpu.dimension_semantics<parallel>, #tpu.dimension_semantics<parallel>], iteration_bounds = array<i64: 4, 2>, scalar_prefetch = 0 : i64, scratch_operands = 0 : i64, tpu.core_type = #tpu.core_type<tc>, window_params = [{transform_indices = @transform_0, window_bounds = array<i64: 1, 64, 4096>}, {transform_indices = @transform_1, window_bounds = array<i64: 1, 3, 64>}, {pipeline_mode = #tpu.pipeline_mode<synchronous>, transform_indices = @transform_2, window_bounds = array<i64: 3, 1>}, {transform_indices = @transform_3, window_bounds = array<i64: 1, 3, 4096>}]} {
    %c0 = arith.constant 0 : index
    %c0_0 = arith.constant 0 : index
    %c0_1 = arith.constant 0 : index
    %0 = vector.load %arg3[%c0, %c0_0, %c0_1] : memref<1x3x64xbf16, #tpu.memory_space<vmem>>, vector<1x3x64xbf16>
    %1 = vector.shape_cast %0 : vector<1x3x64xbf16> to vector<3x64xbf16>
    %c0_2 = arith.constant 0 : index
    %c0_3 = arith.constant 0 : index
    %c0_4 = arith.constant 0 : index
    %2 = vector.load %arg2[%c0_2, %c0_3, %c0_4] : memref<1x64x4096xbf16, #tpu.memory_space<vmem>>, vector<1x64x4096xbf16>
    %3 = vector.shape_cast %2 : vector<1x64x4096xbf16> to vector<64x4096xbf16>
    %cst = arith.constant dense<0.000000e+00> : vector<3x4096xf32>
    %4 = tpu.matmul %1, %3, %cst {dimension_numbers = #tpu.dot_dimension_numbers<[1], [0], [0], [1], [0, 0, 1, 1], [], []>} : vector<3x64xbf16>, vector<64x4096xbf16>, vector<3x4096xf32> -> vector<3x4096xf32>
    %c0_5 = arith.constant 0 : index
    %c0_6 = arith.constant 0 : index
    %5 = vector.load %arg4[%c0_5, %c0_6] : memref<3x1xf32, #tpu.memory_space<vmem>>, vector<3x1xf32>
    %6 = vector.broadcast %5 : vector<3x1xf32> to vector<3x4096xf32>
    %7 = arith.addf %4, %6 : vector<3x4096xf32>
    %c0_7 = arith.constant 0 : index
    %c0_8 = arith.constant 0 : index
    %c0_9 = arith.constant 0 : index
    %8 = vector.load %arg5[%c0_7, %c0_8, %c0_9] : memref<1x3x4096xf32, #tpu.memory_space<vmem>>, vector<1x3x4096xf32>
    %9 = vector.shape_cast %8 : vector<1x3x4096xf32> to vector<3x4096xf32>
    %10 = vector.shape_cast %7 : vector<3x4096xf32> to vector<1x3x4096xf32>
    tpu.vector_store %arg5[%c0_7, %c0_8, %c0_9], %10 {strides = array<i32>} : memref<1x3x4096xf32, #tpu.memory_space<vmem>>, vector<1x3x4096xf32>,
    return
  }
  func.func @transform_0(%arg0: i32, %arg1: i32) -> (i32, i32, i32) {
    %c0_i32 = arith.constant 0 : i32
    %c0_i32_0 = arith.constant 0 : i32
    return %arg0, %c0_i32, %arg1 : i32, i32, i32
  }
  func.func @transform_1(%arg0: i32, %arg1: i32) -> (i32, i32, i32) {
    %c0_i32 = arith.constant 0 : i32
    %c0_i32_0 = arith.constant 0 : i32
    %c0_i32_1 = arith.constant 0 : i32
    return %arg0, %c0_i32, %c0_i32_0 : i32, i32, i32
  }
  func.func @transform_2(%arg0: i32, %arg1: i32) -> (i32, i32) {
    %c0_i32 = arith.constant 0 : i32
    %c0_i32_0 = arith.constant 0 : i32
    %c0_i32_1 = arith.constant 0 : i32
    return %c0_i32, %c0_i32_0 : i32, i32
  }
  func.func @transform_3(%arg0: i32, %arg1: i32) -> (i32, i32, i32) {
    %c0_i32 = arith.constant 0 : i32
    %c0_i32_0 = arith.constant 0 : i32
    return %arg0, %c0_i32, %arg1 : i32, i32, i32
  }
}

</mosaic_0001>

<llo_original>
// kernel: retina_forward.10
$region0: #{retina_forward.10}
  #allocation0 [shape = 'u32[]', space=smem, size = 0x4, offset = 0x4, fixed_abs, tag = 'smem constant byte address 0x4 - core index']
  #allocation1 [shape = 'u32[144,128]{1,0:T(1,128)}', space=vmem, size = 0x12000, scoped, tag = 'internal scratch']
  %s0 = inlined_call_operand.vmem [shape: bf16[1,512,128], index: 0, kind: input, shape index: {}]
  %s1 = inlined_call_operand.vmem [shape: bf16[1,128,32], index: 1, kind: input, shape index: {}]
  %s2 = inlined_call_operand.vmem [shape: f32[1,32], index: 2, kind: input, shape index: {}]
  %s3 = inlined_call_operand.vmem [shape: f32[1,512,32], index: 3, kind: output, shape index: {}]
  %s4 = sld [smem:[#allocation0]]
  $region22: #{retina_forward.10} parent=0
    _
  %s6 = ssub.s32 1, %s4
  %s7 = scalar_select 0, %s6, %s4
  // Predicated region
  $region2: #{retina_forward.10} parent=0 // pred_check
    _
  $region3: #{retina_forward.10} parent=0 // pred_check_branch
    %9 = sbr.rel (0) target = $region5
  $region4: #{retina_forward.10} parent=0 // pred_region
    _
  $region5: #{retina_forward.10} parent=0 // pred_fallthru
    _
  // Predicated region
  $region6: #{retina_forward.10} parent=0 // pred_check
    _
  $region7: #{retina_forward.10} parent=0 // pred_check_branch
    %11 = sbr.rel (0) target = $region9
  $region8: #{retina_forward.10} parent=0 // pred_region
    _
  $region9: #{retina_forward.10} parent=0 // pred_fallthru
    _
  // Predicated region
  $region10: #{retina_forward.10} parent=0 // pred_check
    _
  $region11: #{retina_forward.10} parent=0 // pred_check_branch
    %13 = sbr.rel (0) target = $region13
  $region12: #{retina_forward.10} parent=0 // pred_region
    _
  $region13: #{retina_forward.10} parent=0 // pred_fallthru
    _
  %v15 = vld [vmem:[%s0] sm:$0xf]
  %v16 = vld [vmem:[%s0 + $0x4] sm:$0xf]
  %v17 = vld [vmem:[%s0 + $0x8] sm:$0xf]
  %v18 = vld [vmem:[%s0 + $0xc] sm:$0xf]
  %v19 = vld [vmem:[%s0 + $0x10] sm:$0xf]
  %v20 = vld [vmem:[%s0 + $0x14] sm:$0xf]
  %v21 = vld [vmem:[%s0 + $0x18] sm:$0xf]
  %v22 = vld [vmem:[%s0 + $0x1c] sm:$0xf]
  %v23 = vld [vmem:[%s0 + $0x20] sm:$0xf]
  %v24 = vld [vmem:[%s0 + $0x24] sm:$0xf]
  %v25 = vld [vmem:[%s0 + $0x28] sm:$0xf]
  %v26 = vld [vmem:[%s0 + $0x2c] sm:$0xf]
  %v27 = vld [vmem:[%s0 + $0x30] sm:$0xf]
  %v28 = vld [vmem:[%s0 + $0x34] sm:$0xf]
  %v29 = vld [vmem:[%s0 + $0x38] sm:$0xf]
  %v30 = vld [vmem:[%s0 + $0x3c] sm:$0xf]
  %v31 = vld [vmem:[%s0 + $0x40] sm:$0xf]
  %v32 = vld [vmem:[%s0 + $0x44] sm:$0xf]
  %v33 = vld [vmem:[%s0 + $0x48] sm:$0xf]
  %v34 = vld [vmem:[%s0 + $0x4c] sm:$0xf]
  %v35 = vld [vmem:[%s0 + $0x50] sm:$0xf]
  %v36 = vld [vmem:[%s0 + $0x54] sm:$0xf]
  %v37 = vld [vmem:[%s0 + $0x58] sm:$0xf]
  %v38 = vld [vmem:[%s0 + $0x5c] sm:$0xf]
  %v39 = vld [vmem:[%s0 + $0x60] sm:$0xf]
  %v40 = vld [vmem:[%s0 + $0x64] sm:$0xf]
  %v41 = vld [vmem:[%s0 + $0x68] sm:$0xf]
  %v42 = vld [vmem:[%s0 + $0x6c] sm:$0xf]
  %v43 = vld [vmem:[%s0 + $0x70] sm:$0xf]
  %v44 = vld [vmem:[%s0 + $0x74] sm:$0xf]
  %v45 = vld [vmem:[%s0 + $0x78] sm:$0xf]
  %v46 = vld [vmem:[%s0 + $0x7c] sm:$0xf]
  %v47 = vld [vmem:[%s0 + $0x80] sm:$0xf]
  %v48 = vld [vmem:[%s0 + $0x84] sm:$0xf]
  %v49 = vld [vmem:[%s0 + $0x88] sm:$0xf]
  %v50 = vld [vmem:[%s0 + $0x8c] sm:$0xf]
  %v51 = vld [vmem:[%s0 + $0x90] sm:$0xf]
  %v52 = vld [vmem:[%s0 + $0x94] sm:$0xf]
  %v53 = vld [vmem:[%s0 + $0x98] sm:$0xf]
  %v54 = vld [vmem:[%s0 + $0x9c] sm:$0xf]
  %v55 = vld [vmem:[%s0 + $0xa0] sm:$0xf]
  %v56 = vld [vmem:[%s0 + $0xa4] sm:$0xf]
  %v57 = vld [vmem:[%s0 + $0xa8] sm:$0xf]
  %v58 = vld [vmem:[%s0 + $0xac] sm:$0xf]
  %v59 = vld [vmem:[%s0 + $0xb0] sm:$0xf]
  %v60 = vld [vmem:[%s0 + $0xb4] sm:$0xf]
  %v61 = vld [vmem:[%s0 + $0xb8] sm:$0xf]
  %v62 = vld [vmem:[%s0 + $0xbc] sm:$0xf]
  %v63 = vld [vmem:[%s0 + $0xc0] sm:$0xf]
  %v64 = vld [vmem:[%s0 + $0xc4] sm:$0xf]
  %v65 = vld [vmem:[%s0 + $0xc8] sm:$0xf]
  %v66 = vld [vmem:[%s0 + $0xcc] sm:$0xf]
  %v67 = vld [vmem:[%s0 + $0xd0] sm:$0xf]
  %v68 = vld [vmem:[%s0 + $0xd4] sm:$0xf]
  %v69 = vld [vmem:[%s0 + $0xd8] sm:$0xf]
  %v70 = vld [vmem:[%s0 + $0xdc] sm:$0xf]
  %v71 = vld [vmem:[%s0 + $0xe0] sm:$0xf]
  %v72 = vld [vmem:[%s0 + $0xe4] sm:$0xf]
  %v73 = vld [vmem:[%s0 + $0xe8] sm:$0xf]
  %v74 = vld [vmem:[%s0 + $0xec] sm:$0xf]
  %v75 = vld [vmem:[%s0 + $0xf0] sm:$0xf]
  %v76 = vld [vmem:[%s0 + $0xf4] sm:$0xf]
  %v77 = vld [vmem:[%s0 + $0xf8] sm:$0xf]
  %v78 = vld [vmem:[%s0 + $0xfc] sm:$0xf]
  %v79 = vld [vmem:[%s1] sm:$0xf]
  %v80 = vld [vmem:[%s1 + $0x4] sm:$0xf]
  %v81 = vld [vmem:[%s1 + $0x8] sm:$0xf]
  %v82 = vld [vmem:[%s1 + $0xc] sm:$0xf]
  %v83 = vld [vmem:[%s1 + $0x10] sm:$0xf]
  %v84 = vld [vmem:[%s1 + $0x14] sm:$0xf]
  %v85 = vld [vmem:[%s1 + $0x18] sm:$0xf]
  %v86 = vld [vmem:[%s1 + $0x1c] sm:$0xf]
  %v87 = vld [vmem:[%s1 + $0x20] sm:$0xf]
  %v88 = vld [vmem:[%s1 + $0x24] sm:$0xf]
  %v89 = vld [vmem:[%s1 + $0x28] sm:$0xf]
  %v90 = vld [vmem:[%s1 + $0x2c] sm:$0xf]
  %v91 = vld [vmem:[%s1 + $0x30] sm:$0xf]
  %v92 = vld [vmem:[%s1 + $0x34] sm:$0xf]
  %v93 = vld [vmem:[%s1 + $0x38] sm:$0xf]
  %v94 = vld [vmem:[%s1 + $0x3c] sm:$0xf]
  %v95 = vld [vmem:[%s2] sm:$0x1]
  %v97 = vlaneseq
  %v98 = vshrl.u32 %v97, 7
  %v99 = vsub.s32 0, %v98
  %v100 = vrot.slane %v95, %v99
  %v166 = vunpack.c.l.b16 %v15
  %v167 = vunpack.c.l.b16 %v16
  %v168 = vunpack.c.l.b16 %v17
  %v169 = vunpack.c.l.b16 %v18
  %v170 = vunpack.c.l.b16 %v19
  %v171 = vunpack.c.l.b16 %v20
  %v172 = vunpack.c.l.b16 %v21
  %v173 = vunpack.c.l.b16 %v22
  %v174 = vunpack.c.l.b16 %v23
  %v175 = vunpack.c.l.b16 %v24
  %v176 = vunpack.c.l.b16 %v25
  %v177 = vunpack.c.l.b16 %v26
  %v178 = vunpack.c.l.b16 %v27
  %v179 = vunpack.c.l.b16 %v28
  %v180 = vunpack.c.l.b16 %v29
  %v181 = vunpack.c.l.b16 %v30
  %v182 = vunpack.c.l.b16 %v31
  %v183 = vunpack.c.l.b16 %v32
  %v184 = vunpack.c.l.b16 %v33
  %v185 = vunpack.c.l.b16 %v34
  %v186 = vunpack.c.l.b16 %v35
  %v187 = vunpack.c.l.b16 %v36
  %v188 = vunpack.c.l.b16 %v37
  %v189 = vunpack.c.l.b16 %v38
  %v190 = vunpack.c.l.b16 %v39
  %v191 = vunpack.c.l.b16 %v40
  %v192 = vunpack.c.l.b16 %v41
  %v193 = vunpack.c.l.b16 %v42
  %v194 = vunpack.c.l.b16 %v43
  %v195 = vunpack.c.l.b16 %v44
  %v196 = vunpack.c.l.b16 %v45
  %v197 = vunpack.c.l.b16 %v46
  %v198 = vunpack.c.l.b16 %v47
  %v199 = vunpack.c.l.b16 %v48
  %v200 = vunpack.c.l.b16 %v49
  %v201 = vunpack.c.l.b16 %v50
  %v202 = vunpack.c.l.b16 %v51
  %v203 = vunpack.c.l.b16 %v52
  %v204 = vunpack.c.l.b16 %v53
  %v205 = vunpack.c.l.b16 %v54
  %v206 = vunpack.c.l.b16 %v55
  %v207 = vunpack.c.l.b16 %v56
  %v208 = vunpack.c.l.b16 %v57
  %v209 = vunpack.c.l.b16 %v58
  %v210 = vunpack.c.l.b16 %v59
  %v211 = vunpack.c.l.b16 %v60
  %v212 = vunpack.c.l.b16 %v61
  %v213 = vunpack.c.l.b16 %v62
  %v214 = vunpack.c.l.b16 %v63
  %v215 = vunpack.c.l.b16 %v64
  %v216 = vunpack.c.l.b16 %v65
  %v217 = vunpack.c.l.b16 %v66
  %v218 = vunpack.c.l.b16 %v67
  %v219 = vunpack.c.l.b16 %v68
  %v220 = vunpack.c.l.b16 %v69
  %v221 = vunpack.c.l.b16 %v70
  %v222 = vunpack.c.l.b16 %v71
  %v223 = vunpack.c.l.b16 %v72
  %v224 = vunpack.c.l.b16 %v73
  %v225 = vunpack.c.l.b16 %v74
  %v226 = vunpack.c.l.b16 %v75
  %v227 = vunpack.c.l.b16 %v76
  %v228 = vunpack.c.l.b16 %v77
  %v229 = vunpack.c.l.b16 %v78
  %v230 = vpack.c.b16 %v167, %v166
  %v231 = vpack.c.b16 %v169, %v168
  %v232 = vpack.c.b16 %v171, %v170
  %v233 = vpack.c.b16 %v173, %v172
  %v234 = vpack.c.b16 %v175, %v174
  %v235 = vpack.c.b16 %v177, %v176
  %v236 = vpack.c.b16 %v179, %v178
  %v237 = vpack.c.b16 %v181, %v180
  %v238 = vpack.c.b16 %v183, %v182
  %v239 = vpack.c.b16 %v185, %v184
  %v240 = vpack.c.b16 %v187, %v186
  %v241 = vpack.c.b16 %v189, %v188
  %v242 = vpack.c.b16 %v191, %v190
  %v243 = vpack.c.b16 %v193, %v192
  %v244 = vpack.c.b16 %v195, %v194
  %v245 = vpack.c.b16 %v197, %v196
  %v246 = vpack.c.b16 %v199, %v198
  %v247 = vpack.c.b16 %v201, %v200
  %v248 = vpack.c.b16 %v203, %v202
  %v249 = vpack.c.b16 %v205, %v204
  %v250 = vpack.c.b16 %v207, %v206
  %v251 = vpack.c.b16 %v209, %v208
  %v252 = vpack.c.b16 %v211, %v210
  %v253 = vpack.c.b16 %v213, %v212
  %v254 = vpack.c.b16 %v215, %v214
  %v255 = vpack.c.b16 %v217, %v216
  %v256 = vpack.c.b16 %v219, %v218
  %v257 = vpack.c.b16 %v221, %v220
  %v258 = vpack.c.b16 %v223, %v222
  %v259 = vpack.c.b16 %v225, %v224
  %v260 = vpack.c.b16 %v227, %v226
  %v261 = vpack.c.b16 %v229, %v228
  %v310 = vunpack.c.l.b16 %v79
  %v311 = vunpack.c.l.b16 %v80
  %v312 = vunpack.c.l.b16 %v81
  %v313 = vunpack.c.l.b16 %v82
  %v314 = vunpack.c.l.b16 %v83
  %v315 = vunpack.c.l.b16 %v84
  %v316 = vunpack.c.l.b16 %v85
  %v317 = vunpack.c.l.b16 %v86
  %v318 = vunpack.c.l.b16 %v87
  %v319 = vunpack.c.l.b16 %v88
  %v320 = vunpack.c.l.b16 %v89
  %v321 = vunpack.c.l.b16 %v90
  %v322 = vunpack.c.l.b16 %v91
  %v323 = vunpack.c.l.b16 %v92
  %v324 = vunpack.c.l.b16 %v93
  %v325 = vunpack.c.l.b16 %v94
  %v326 = vpack.c.b16 %v311, %v310
  %v327 = vpack.c.b16 %v313, %v312
  %v328 = vpack.c.b16 %v315, %v314
  %v329 = vpack.c.b16 %v317, %v316
  %v330 = vpack.c.b16 %v319, %v318
  %v331 = vpack.c.b16 %v321, %v320
  %v332 = vpack.c.b16 %v323, %v322
  %v333 = vpack.c.b16 %v325, %v324
  %342 = vmatprep.subr.bf16.mxu0 0
  %343 = vmatpush1.bf16.msra.mxu0 %v326
  %344 = vmatprep.subr.bf16.mxu0 0
  %345 = vmatpush1.bf16.msra.mxu0 %v327
  %346 = vmatprep.subr.bf16.mxu0 0
  %347 = vmatpush1.bf16.msra.mxu0 %v328
  %348 = vmatprep.subr.bf16.mxu0 0
  %349 = vmatpush1.bf16.msra.mxu0 %v329
  %350 = vmatprep.subr.bf16.mxu0 0
  %351 = vmatpush1.bf16.msra.mxu0 %v330
  %352 = vmatprep.subr.bf16.mxu0 0
  %353 = vmatpush1.bf16.msra.mxu0 %v331
  %354 = vmatprep.subr.bf16.mxu0 0
  %355 = vmatpush1.bf16.msra.mxu0 %v332
  %356 = vmatprep.subr.bf16.mxu0 0
  %357 = vmatpush1.bf16.msra.mxu0 %v333
  %358 = vmatprep.subr.bf16.mxu0 0
  %359 = vmatpush1.bf16.msra.mxu0 0
  %360 = vmatprep.subr.bf16.mxu0 0
  %361 = vmatpush1.bf16.msra.mxu0 0
  %362 = vmatprep.subr.bf16.mxu0 0
  %363 = vmatpush1.bf16.msra.mxu0 0
  %364 = vmatprep.subr.bf16.mxu0 0
  %365 = vmatpush1.bf16.msra.mxu0 0
  %366 = vmatprep.subr.bf16.mxu0 0
  %367 = vmatpush1.bf16.msra.mxu0 0
  %368 = vmatprep.subr.bf16.mxu0 0
  %369 = vmatpush1.bf16.msra.mxu0 0
  %370 = vmatprep.subr.bf16.mxu0 0
  %371 = vmatpush1.bf16.msra.mxu0 0
  %372 = vmatprep.subr.bf16.mxu0 0
  %373 = vmatpush1.bf16.msra.mxu0 0
  %374 = vmatprep.mubr.bf16.mxu0 0
  %375 = vmatmul.mubr.bf16.gmra.mrb[0].mxu0 %v230
  %v376 = vpop.f32.mrb[0].mxu0
  %v377 = vadd.f32 %v100, %v376
  %v378 = vpop.f32.mrb[0].mxu0
  %v379 = vpop.f32.mrb[0].mxu0
  %v380 = vadd.f32 %v100, %v379
  %v381 = vpop.f32.mrb[0].mxu0
  %382 = vmatprep.mubr.bf16.mxu0 0
  %383 = vmatmul.mubr.bf16.gmra.mrb[0].mxu0 %v231
  %v384 = vpop.f32.mrb[0].mxu0
  %v385 = vadd.f32 %v100, %v384
  %v386 = vpop.f32.mrb[0].mxu0
  %v387 = vpop.f32.mrb[0].mxu0
  %v388 = vadd.f32 %v100, %v387
  %v389 = vpop.f32.mrb[0].mxu0
  %390 = vmatprep.mubr.bf16.mxu0 0
  %391 = vmatmul.mubr.bf16.gmra.mrb[0].mxu0 %v232
  %v392 = vpop.f32.mrb[0].mxu0
  %v393 = vadd.f32 %v100, %v392
  %v394 = vpop.f32.mrb[0].mxu0
  %v395 = vpop.f32.mrb[0].mxu0
  %v396 = vadd.f32 %v100, %v395
  %v397 = vpop.f32.mrb[0].mxu0
  %398 = vmatprep.mubr.bf16.mxu0 0
  %399 = vmatmul.mubr.bf16.gmra.mrb[0].mxu0 %v233
  %v400 = vpop.f32.mrb[0].mxu0
  %v401 = vadd.f32 %v100, %v400
  %v402 = vpop.f32.mrb[0].mxu0
  %v403 = vpop.f32.mrb[0].mxu0
  %v404 = vadd.f32 %v100, %v403
  %v405 = vpop.f32.mrb[0].mxu0
  %406 = vmatprep.mubr.bf16.mxu0 0
  %407 = vmatmul.mubr.bf16.gmra.mrb[0].mxu0 %v234
  %v408 = vpop.f32.mrb[0].mxu0
  %v409 = vadd.f32 %v100, %v408
  %v410 = vpop.f32.mrb[0].mxu0
  %v411 = vpop.f32.mrb[0].mxu0
  %v412 = vadd.f32 %v100, %v411
  %v413 = vpop.f32.mrb[0].mxu0
  %414 = vmatprep.mubr.bf16.mxu0 0
  %415 = vmatmul.mubr.bf16.gmra.mrb[0].mxu0 %v235
  %v416 = vpop.f32.mrb[0].mxu0
  %v417 = vadd.f32 %v100, %v416
  %v418 = vpop.f32.mrb[0].mxu0
  %v419 = vpop.f32.mrb[0].mxu0
  %v420 = vadd.f32 %v100, %v419
  %v421 = vpop.f32.mrb[0].mxu0
  %422 = vmatprep.mubr.bf16.mxu0 0
  %423 = vmatmul.mubr.bf16.gmra.mrb[0].mxu0 %v236
  %v424 = vpop.f32.mrb[0].mxu0
  %v425 = vadd.f32 %v100, %v424
  %v426 = vpop.f32.mrb[0].mxu0
  %v427 = vpop.f32.mrb[0].mxu0
  %v428 = vadd.f32 %v100, %v427
  %v429 = vpop.f32.mrb[0].mxu0
  %430 = vmatprep.mubr.bf16.mxu0 0
  %431 = vmatmul.mubr.bf16.gmra.mrb[0].mxu0 %v237
  %v432 = vpop.f32.mrb[0].mxu0
  %v433 = vadd.f32 %v100, %v432
  %v434 = vpop.f32.mrb[0].mxu0
  %v435 = vpop.f32.mrb[0].mxu0
  %v436 = vadd.f32 %v100, %v435
  %v437 = vpop.f32.mrb[0].mxu0
  %438 = vmatprep.mubr.bf16.mxu0 0
  %439 = vmatmul.mubr.bf16.gmra.mrb[0].mxu0 %v238
  %v440 = vpop.f32.mrb[0].mxu0
  %v441 = vadd.f32 %v100, %v440
  %v442 = vpop.f32.mrb[0].mxu0
  %v443 = vpop.f32.mrb[0].mxu0
  %v444 = vadd.f32 %v100, %v443
  %v445 = vpop.f32.mrb[0].mxu0
  %446 = vmatprep.mubr.bf16.mxu0 0
  %447 = vmatmul.mubr.bf16.gmra.mrb[0].mxu0 %v239
  %v448 = vpop.f32.mrb[0].mxu0
  %v449 = vadd.f32 %v100, %v448
  %v450 = vpop.f32.mrb[0].mxu0
  %v451 = vpop.f32.mrb[0].mxu0
  %v452 = vadd.f32 %v100, %v451
  %v453 = vpop.f32.mrb[0].mxu0
  %454 = vmatprep.mubr.bf16.mxu0 0
  %455 = vmatmul.mubr.bf16.gmra.mrb[0].mxu0 %v240
  %v456 = vpop.f32.mrb[0].mxu0
  %v457 = vadd.f32 %v100, %v456
  %v458 = vpop.f32.mrb[0].mxu0
  %v459 = vpop.f32.mrb[0].mxu0
  %v460 = vadd.f32 %v100, %v459
  %v461 = vpop.f32.mrb[0].mxu0
  %462 = vmatprep.mubr.bf16.mxu0 0
  %463 = vmatmul.mubr.bf16.gmra.mrb[0].mxu0 %v241
  %v464 = vpop.f32.mrb[0].mxu0
  %v465 = vadd.f32 %v100, %v464
  %v466 = vpop.f32.mrb[0].mxu0
  %v467 = vpop.f32.mrb[0].mxu0
  %v468 = vadd.f32 %v100, %v467
  %v469 = vpop.f32.mrb[0].mxu0
  %470 = vmatprep.mubr.bf16.mxu0 0
  %471 = vmatmul.mubr.bf16.gmra.mrb[0].mxu0 %v242
  %v472 = vpop.f32.mrb[0].mxu0
  %v473 = vadd.f32 %v100, %v472
  %v474 = vpop.f32.mrb[0].mxu0
  %v475 = vpop.f32.mrb[0].mxu0
  %v476 = vadd.f32 %v100, %v475
  %v477 = vpop.f32.mrb[0].mxu0
  %478 = vmatprep.mubr.bf16.mxu0 0
  %479 = vmatmul.mubr.bf16.gmra.mrb[0].mxu0 %v243
  %v480 = vpop.f32.mrb[0].mxu0
  %v481 = vadd.f32 %v100, %v480
  %v482 = vpop.f32.mrb[0].mxu0
  %v483 = vpop.f32.mrb[0].mxu0
  %v484 = vadd.f32 %v100, %v483
  %v485 = vpop.f32.mrb[0].mxu0
  %486 = vmatprep.mubr.bf16.mxu0 0
  %487 = vmatmul.mubr.bf16.gmra.mrb[0].mxu0 %v244
  %v488 = vpop.f32.mrb[0].mxu0
  %v489 = vadd.f32 %v100, %v488
  %v490 = vpop.f32.mrb[0].mxu0
  %v491 = vpop.f32.mrb[0].mxu0
  %v492 = vadd.f32 %v100, %v491
  %v493 = vpop.f32.mrb[0].mxu0
  %494 = vmatprep.mubr.bf16.mxu0 0
  %495 = vmatmul.mubr.bf16.gmra.mrb[0].mxu0 %v245
  %v496 = vpop.f32.mrb[0].mxu0
  %v497 = vadd.f32 %v100, %v496
  %v498 = vpop.f32.mrb[0].mxu0
  %v499 = vpop.f32.mrb[0].mxu0
  %v500 = vadd.f32 %v100, %v499
  %v501 = vpop.f32.mrb[0].mxu0
  %502 = vmatprep.mubr.bf16.mxu0 0
  %503 = vmatmul.mubr.bf16.gmra.mrb[0].mxu0 %v246
  %v504 = vpop.f32.mrb[0].mxu0
  %v505 = vadd.f32 %v100, %v504
  %v506 = vpop.f32.mrb[0].mxu0
  %v507 = vpop.f32.mrb[0].mxu0
  %v508 = vadd.f32 %v100, %v507
  %v509 = vpop.f32.mrb[0].mxu0
  %510 = vmatprep.mubr.bf16.mxu0 0
  %511 = vmatmul.mubr.bf16.gmra.mrb[0].mxu0 %v247
  %v512 = vpop.f32.mrb[0].mxu0
  %v513 = vadd.f32 %v100, %v512
  %v514 = vpop.f32.mrb[0].mxu0
  %v515 = vpop.f32.mrb[0].mxu0
  %v516 = vadd.f32 %v100, %v515
  %v517 = vpop.f32.mrb[0].mxu0
  %518 = vmatprep.mubr.bf16.mxu0 0
  %519 = vmatmul.mubr.bf16.gmra.mrb[0].mxu0 %v248
  %v520 = vpop.f32.mrb[0].mxu0
  %v521 = vadd.f32 %v100, %v520
  %v522 = vpop.f32.mrb[0].mxu0
  %v523 = vpop.f32.mrb[0].mxu0
  %v524 = vadd.f32 %v100, %v523
  %v525 = vpop.f32.mrb[0].mxu0
  %526 = vmatprep.mubr.bf16.mxu0 0
  %527 = vmatmul.mubr.bf16.gmra.mrb[0].mxu0 %v249
  %v528 = vpop.f32.mrb[0].mxu0
  %v529 = vadd.f32 %v100, %v528
  %v530 = vpop.f32.mrb[0].mxu0
  %v531 = vpop.f32.mrb[0].mxu0
  %v532 = vadd.f32 %v100, %v531
  %v533 = vpop.f32.mrb[0].mxu0
  %534 = vmatprep.mubr.bf16.mxu0 0
  %535 = vmatmul.mubr.bf16.gmra.mrb[0].mxu0 %v250
  %v536 = vpop.f32.mrb[0].mxu0
  %v537 = vadd.f32 %v100, %v536
  %v538 = vpop.f32.mrb[0].mxu0
  %v539 = vpop.f32.mrb[0].mxu0
  %v540 = vadd.f32 %v100, %v539
  %v541 = vpop.f32.mrb[0].mxu0
  %542 = vmatprep.mubr.bf16.mxu0 0
  %543 = vmatmul.mubr.bf16.gmra.mrb[0].mxu0 %v251
  %v544 = vpop.f32.mrb[0].mxu0
  %v545 = vadd.f32 %v100, %v544
  %v546 = vpop.f32.mrb[0].mxu0
  %v547 = vpop.f32.mrb[0].mxu0
  %v548 = vadd.f32 %v100, %v547
  %v549 = vpop.f32.mrb[0].mxu0
  %550 = vmatprep.mubr.bf16.mxu0 0
  %551 = vmatmul.mubr.bf16.gmra.mrb[0].mxu0 %v252
  %v552 = vpop.f32.mrb[0].mxu0
  %v553 = vadd.f32 %v100, %v552
  %v554 = vpop.f32.mrb[0].mxu0
  %v555 = vpop.f32.mrb[0].mxu0
  %v556 = vadd.f32 %v100, %v555
  %v557 = vpop.f32.mrb[0].mxu0
  %558 = vmatprep.mubr.bf16.mxu0 0
  %559 = vmatmul.mubr.bf16.gmra.mrb[0].mxu0 %v253
  %v560 = vpop.f32.mrb[0].mxu0
  %v561 = vadd.f32 %v100, %v560
  %v562 = vpop.f32.mrb[0].mxu0
  %v563 = vpop.f32.mrb[0].mxu0
  %v564 = vadd.f32 %v100, %v563
  %v565 = vpop.f32.mrb[0].mxu0
  %566 = vmatprep.mubr.bf16.mxu0 0
  %567 = vmatmul.mubr.bf16.gmra.mrb[0].mxu0 %v254
  %v568 = vpop.f32.mrb[0].mxu0
  %v569 = vadd.f32 %v100, %v568
  %v570 = vpop.f32.mrb[0].mxu0
  %v571 = vpop.f32.mrb[0].mxu0
  %v572 = vadd.f32 %v100, %v571
  %v573 = vpop.f32.mrb[0].mxu0
  %574 = vmatprep.mubr.bf16.mxu0 0
  %575 = vmatmul.mubr.bf16.gmra.mrb[0].mxu0 %v255
  %v576 = vpop.f32.mrb[0].mxu0
  %v577 = vadd.f32 %v100, %v576
  %v578 = vpop.f32.mrb[0].mxu0
  %v579 = vpop.f32.mrb[0].mxu0
  %v580 = vadd.f32 %v100, %v579
  %v581 = vpop.f32.mrb[0].mxu0
  %582 = vmatprep.mubr.bf16.mxu0 0
  %583 = vmatmul.mubr.bf16.gmra.mrb[0].mxu0 %v256
  %v584 = vpop.f32.mrb[0].mxu0
  %v585 = vadd.f32 %v100, %v584
  %v586 = vpop.f32.mrb[0].mxu0
  %v587 = vpop.f32.mrb[0].mxu0
  %v588 = vadd.f32 %v100, %v587
  %v589 = vpop.f32.mrb[0].mxu0
  %590 = vmatprep.mubr.bf16.mxu0 0
  %591 = vmatmul.mubr.bf16.gmra.mrb[0].mxu0 %v257
  %v592 = vpop.f32.mrb[0].mxu0
  %v593 = vadd.f32 %v100, %v592
  %v594 = vpop.f32.mrb[0].mxu0
  %v595 = vpop.f32.mrb[0].mxu0
  %v596 = vadd.f32 %v100, %v595
  %v597 = vpop.f32.mrb[0].mxu0
  %598 = vmatprep.mubr.bf16.mxu0 0
  %599 = vmatmul.mubr.bf16.gmra.mrb[0].mxu0 %v258
  %v600 = vpop.f32.mrb[0].mxu0
  %v601 = vadd.f32 %v100, %v600
  %v602 = vpop.f32.mrb[0].mxu0
  %v603 = vpop.f32.mrb[0].mxu0
  %v604 = vadd.f32 %v100, %v603
  %v605 = vpop.f32.mrb[0].mxu0
  %606 = vmatprep.mubr.bf16.mxu0 0
  %607 = vmatmul.mubr.bf16.gmra.mrb[0].mxu0 %v259
  %v608 = vpop.f32.mrb[0].mxu0
  %v609 = vadd.f32 %v100, %v608
  %v610 = vpop.f32.mrb[0].mxu0
  %v611 = vpop.f32.mrb[0].mxu0
  %v612 = vadd.f32 %v100, %v611
  %v613 = vpop.f32.mrb[0].mxu0
  %614 = vmatprep.mubr.bf16.mxu0 0
  %615 = vmatmul.mubr.bf16.gmra.mrb[0].mxu0 %v260
  %v616 = vpop.f32.mrb[0].mxu0
  %v617 = vadd.f32 %v100, %v616
  %v618 = vpop.f32.mrb[0].mxu0
  %v619 = vpop.f32.mrb[0].mxu0
  %v620 = vadd.f32 %v100, %v619
  %v621 = vpop.f32.mrb[0].mxu0
  %622 = vmatprep.mubr.bf16.mxu0 0
  %623 = vmatmul.mubr.bf16.gmra.mrb[0].mxu0 %v261
  %v624 = vpop.f32.mrb[0].mxu0
  %v625 = vadd.f32 %v100, %v624
  %v626 = vpop.f32.mrb[0].mxu0
  %v627 = vpop.f32.mrb[0].mxu0
  %v628 = vadd.f32 %v100, %v627
  %v629 = vpop.f32.mrb[0].mxu0
  %630 = vdwg.mxu0
  %v631 = vmax.f32 %v377, 0.0
  %v632 = vmax.f32 %v380, 0.0
  %v633 = vmax.f32 %v385, 0.0
  %v634 = vmax.f32 %v388, 0.0
  %v635 = vmax.f32 %v393, 0.0
  %v636 = vmax.f32 %v396, 0.0
  %v637 = vmax.f32 %v401, 0.0
  %v638 = vmax.f32 %v404, 0.0
  %v639 = vmax.f32 %v409, 0.0
  %v640 = vmax.f32 %v412, 0.0
  %v641 = vmax.f32 %v417, 0.0
  %v642 = vmax.f32 %v420, 0.0
  %v643 = vmax.f32 %v425, 0.0
  %v644 = vmax.f32 %v428, 0.0
  %v645 = vmax.f32 %v433, 0.0
  %v646 = vmax.f32 %v436, 0.0
  %v647 = vmax.f32 %v441, 0.0
  %v648 = vmax.f32 %v444, 0.0
  %v649 = vmax.f32 %v449, 0.0
  %v650 = vmax.f32 %v452, 0.0
  %v651 = vmax.f32 %v457, 0.0
  %v652 = vmax.f32 %v460, 0.0
  %v653 = vmax.f32 %v465, 0.0
  %v654 = vmax.f32 %v468, 0.0
  %v655 = vmax.f32 %v473, 0.0
  %v656 = vmax.f32 %v476, 0.0
  %v657 = vmax.f32 %v481, 0.0
  %v658 = vmax.f32 %v484, 0.0
  %v659 = vmax.f32 %v489, 0.0
  %v660 = vmax.f32 %v492, 0.0
  %v661 = vmax.f32 %v497, 0.0
  %v662 = vmax.f32 %v500, 0.0
  %v663 = vmax.f32 %v505, 0.0
  %v664 = vmax.f32 %v508, 0.0
  %v665 = vmax.f32 %v513, 0.0
  %v666 = vmax.f32 %v516, 0.0
  %v667 = vmax.f32 %v521, 0.0
  %v668 = vmax.f32 %v524, 0.0
  %v669 = vmax.f32 %v529, 0.0
  %v670 = vmax.f32 %v532, 0.0
  %v671 = vmax.f32 %v537, 0.0
  %v672 = vmax.f32 %v540, 0.0
  %v673 = vmax.f32 %v545, 0.0
  %v674 = vmax.f32 %v548, 0.0
  %v675 = vmax.f32 %v553, 0.0
  %v676 = vmax.f32 %v556, 0.0
  %v677 = vmax.f32 %v561, 0.0
  %v678 = vmax.f32 %v564, 0.0
  %v679 = vmax.f32 %v569, 0.0
  %v680 = vmax.f32 %v572, 0.0
  %v681 = vmax.f32 %v577, 0.0
  %v682 = vmax.f32 %v580, 0.0
  %v683 = vmax.f32 %v585, 0.0
  %v684 = vmax.f32 %v588, 0.0
  %v685 = vmax.f32 %v593, 0.0
  %v686 = vmax.f32 %v596, 0.0
  %v687 = vmax.f32 %v601, 0.0
  %v688 = vmax.f32 %v604, 0.0
  %v689 = vmax.f32 %v609, 0.0
  %v690 = vmax.f32 %v612, 0.0
  %v691 = vmax.f32 %v617, 0.0
  %v692 = vmax.f32 %v620, 0.0
  %v693 = vmax.f32 %v625, 0.0
  %v694 = vmax.f32 %v628, 0.0
  %vm695 = vcmask 261120
  %696 = vst.msk [vmem:[%s3] sm:$0xff] %vm695, %v631
  %697 = vst.msk [vmem:[%s3 + $0x8] sm:$0xff] %vm695, %v632
  %698 = vst.msk [vmem:[%s3 + $0x10] sm:$0xff] %vm695, %v633
  %699 = vst.msk [vmem:[%s3 + $0x18] sm:$0xff] %vm695, %v634
  %700 = vst.msk [vmem:[%s3 + $0x20] sm:$0xff] %vm695, %v635
  %701 = vst.msk [vmem:[%s3 + $0x28] sm:$0xff] %vm695, %v636
  %702 = vst.msk [vmem:[%s3 + $0x30] sm:$0xff] %vm695, %v637
  %703 = vst.msk [vmem:[%s3 + $0x38] sm:$0xff] %vm695, %v638
  %704 = vst.msk [vmem:[%s3 + $0x40] sm:$0xff] %vm695, %v639
  %705 = vst.msk [vmem:[%s3 + $0x48] sm:$0xff] %vm695, %v640
  %706 = vst.msk [vmem:[%s3 + $0x50] sm:$0xff] %vm695, %v641
  %707 = vst.msk [vmem:[%s3 + $0x58] sm:$0xff] %vm695, %v642
  %708 = vst.msk [vmem:[%s3 + $0x60] sm:$0xff] %vm695, %v643
  %709 = vst.msk [vmem:[%s3 + $0x68] sm:$0xff] %vm695, %v644
  %710 = vst.msk [vmem:[%s3 + $0x70] sm:$0xff] %vm695, %v645
  %711 = vst.msk [vmem:[%s3 + $0x78] sm:$0xff] %vm695, %v646
  %712 = vst.msk [vmem:[%s3 + $0x80] sm:$0xff] %vm695, %v647
  %713 = vst.msk [vmem:[%s3 + $0x88] sm:$0xff] %vm695, %v648
  %714 = vst.msk [vmem:[%s3 + $0x90] sm:$0xff] %vm695, %v649
  %715 = vst.msk [vmem:[%s3 + $0x98] sm:$0xff] %vm695, %v650
  %716 = vst.msk [vmem:[%s3 + $0xa0] sm:$0xff] %vm695, %v651
  %717 = vst.msk [vmem:[%s3 + $0xa8] sm:$0xff] %vm695, %v652
  %718 = vst.msk [vmem:[%s3 + $0xb0] sm:$0xff] %vm695, %v653
  %719 = vst.msk [vmem:[%s3 + $0xb8] sm:$0xff] %vm695, %v654
  %720 = vst.msk [vmem:[%s3 + $0xc0] sm:$0xff] %vm695, %v655
  %721 = vst.msk [vmem:[%s3 + $0xc8] sm:$0xff] %vm695, %v656
  %722 = vst.msk [vmem:[%s3 + $0xd0] sm:$0xff] %vm695, %v657
  %723 = vst.msk [vmem:[%s3 + $0xd8] sm:$0xff] %vm695, %v658
  %724 = vst.msk [vmem:[%s3 + $0xe0] sm:$0xff] %vm695, %v659
  %725 = vst.msk [vmem:[%s3 + $0xe8] sm:$0xff] %vm695, %v660
  %726 = vst.msk [vmem:[%s3 + $0xf0] sm:$0xff] %vm695, %v661
  %727 = vst.msk [vmem:[%s3 + $0xf8] sm:$0xff] %vm695, %v662
  %728 = vst.msk [vmem:[%s3 + $0x100] sm:$0xff] %vm695, %v663
  %729 = vst.msk [vmem:[%s3 + $0x108] sm:$0xff] %vm695, %v664
  %730 = vst.msk [vmem:[%s3 + $0x110] sm:$0xff] %vm695, %v665
  %731 = vst.msk [vmem:[%s3 + $0x118] sm:$0xff] %vm695, %v666
  %732 = vst.msk [vmem:[%s3 + $0x120] sm:$0xff] %vm695, %v667
  %733 = vst.msk [vmem:[%s3 + $0x128] sm:$0xff] %vm695, %v668
  %734 = vst.msk [vmem:[%s3 + $0x130] sm:$0xff] %vm695, %v669
  %735 = vst.msk [vmem:[%s3 + $0x138] sm:$0xff] %vm695, %v670
  %736 = vst.msk [vmem:[%s3 + $0x140] sm:$0xff] %vm695, %v671
  %737 = vst.msk [vmem:[%s3 + $0x148] sm:$0xff] %vm695, %v672
  %738 = vst.msk [vmem:[%s3 + $0x150] sm:$0xff] %vm695, %v673
  %739 = vst.msk [vmem:[%s3 + $0x158] sm:$0xff] %vm695, %v674
  %740 = vst.msk [vmem:[%s3 + $0x160] sm:$0xff] %vm695, %v675
  %741 = vst.msk [vmem:[%s3 + $0x168] sm:$0xff] %vm695, %v676
  %742 = vst.msk [vmem:[%s3 + $0x170] sm:$0xff] %vm695, %v677
  %743 = vst.msk [vmem:[%s3 + $0x178] sm:$0xff] %vm695, %v678
  %744 = vst.msk [vmem:[%s3 + $0x180] sm:$0xff] %vm695, %v679
  %745 = vst.msk [vmem:[%s3 + $0x188] sm:$0xff] %vm695, %v680
  %746 = vst.msk [vmem:[%s3 + $0x190] sm:$0xff] %vm695, %v681
  %747 = vst.msk [vmem:[%s3 + $0x198] sm:$0xff] %vm695, %v682
  %748 = vst.msk [vmem:[%s3 + $0x1a0] sm:$0xff] %vm695, %v683
  %749 = vst.msk [vmem:[%s3 + $0x1a8] sm:$0xff] %vm695, %v684
  %750 = vst.msk [vmem:[%s3 + $0x1b0] sm:$0xff] %vm695, %v685
  %751 = vst.msk [vmem:[%s3 + $0x1b8] sm:$0xff] %vm695, %v686
  %752 = vst.msk [vmem:[%s3 + $0x1c0] sm:$0xff] %vm695, %v687
  %753 = vst.msk [vmem:[%s3 + $0x1c8] sm:$0xff] %vm695, %v688
  %754 = vst.msk [vmem:[%s3 + $0x1d0] sm:$0xff] %vm695, %v689
  %755 = vst.msk [vmem:[%s3 + $0x1d8] sm:$0xff] %vm695, %v690
  %756 = vst.msk [vmem:[%s3 + $0x1e0] sm:$0xff] %vm695, %v691
  %757 = vst.msk [vmem:[%s3 + $0x1e8] sm:$0xff] %vm695, %v692
  %758 = vst.msk [vmem:[%s3 + $0x1f0] sm:$0xff] %vm695, %v693
  %759 = vst.msk [vmem:[%s3 + $0x1f8] sm:$0xff] %vm695, %v694
  // Predicated region
  $region14: #{retina_forward.10} parent=0 // pred_check
    _
  $region15: #{retina_forward.10} parent=0 // pred_check_branch
    %761 = sbr.rel (0) target = $region17
  $region16: #{retina_forward.10} parent=0 // pred_region
    _
  $region17: #{retina_forward.10} parent=0 // pred_fallthru
    _
  // Predicated region
  $region18: #{retina_forward.10} parent=0 // pred_check
    _
  $region19: #{retina_forward.10} parent=0 // pred_check_branch
    %763 = sbr.rel (0) target = $region21
  $region20: #{retina_forward.10} parent=0 // pred_region
    _
  $region21: #{retina_forward.10} parent=0 // pred_fallthru
    _

// kernel: retina_forward.11
$region0: #{retina_forward.11}
  #allocation0 [shape = 'u32[]', space=smem, size = 0x4, offset = 0x4, fixed_abs, tag = 'smem constant byte address 0x4 - core index']
  #allocation1 [shape = 'u32[144,128]{1,0:T(1,128)}', space=vmem, size = 0x12000, scoped, tag = 'internal scratch']
  %s0 = inlined_call_operand.vmem [shape: bf16[1,128,512], index: 0, kind: input, shape index: {}]
  %s1 = inlined_call_operand.vmem [shape: bf16[1,512,64], index: 1, kind: input, shape index: {}]
  %s2 = inlined_call_operand.vmem [shape: f32[1,64], index: 2, kind: input, shape index: {}]
  %s3 = inlined_call_operand.vmem [shape: f32[1,128,64], index: 3, kind: output, shape index: {}]
  %s4 = sld [smem:[#allocation0]]
  $region22: #{retina_forward.11} parent=0
    _
  %s6 = ssub.s32 1, %s4
  %s7 = scalar_select 0, %s6, %s4
  // Predicated region
  $region2: #{retina_forward.11} parent=0 // pred_check
    _
  $region3: #{retina_forward.11} parent=0 // pred_check_branch
    %9 = sbr.rel (0) target = $region5
  $region4: #{retina_forward.11} parent=0 // pred_region
    _
  $region5: #{retina_forward.11} parent=0 // pred_fallthru
    _
  // Predicated region
  $region6: #{retina_forward.11} parent=0 // pred_check
    _
  $region7: #{retina_forward.11} parent=0 // pred_check_branch
    %11 = sbr.rel (0) target = $region9
  $region8: #{retina_forward.11} parent=0 // pred_region
    _
  $region9: #{retina_forward.11} parent=0 // pred_fallthru
    _
  // Predicated region
  $region10: #{retina_forward.11} parent=0 // pred_check
    _
  $region11: #{retina_forward.11} parent=0 // pred_check_branch
    %13 = sbr.rel (0) target = $region13
  $region12: #{retina_forward.11} parent=0 // pred_region
    _
  $region13: #{retina_forward.11} parent=0 // pred_fallthru
    _
  %v15 = vld [vmem:[%s0] sm:$0xff]
  %v16 = vld [vmem:[%s0 + $0x8] sm:$0xff]
  %v17 = vld [vmem:[%s0 + $0x10] sm:$0xff]
  %v18 = vld [vmem:[%s0 + $0x18] sm:$0xff]
  %v19 = vld [vmem:[%s0 + $0x20] sm:$0xff]
  %v20 = vld [vmem:[%s0 + $0x28] sm:$0xff]
  %v21 = vld [vmem:[%s0 + $0x30] sm:$0xff]
  %v22 = vld [vmem:[%s0 + $0x38] sm:$0xff]
  %v23 = vld [vmem:[%s0 + $0x40] sm:$0xff]
  %v24 = vld [vmem:[%s0 + $0x48] sm:$0xff]
  %v25 = vld [vmem:[%s0 + $0x50] sm:$0xff]
  %v26 = vld [vmem:[%s0 + $0x58] sm:$0xff]
  %v27 = vld [vmem:[%s0 + $0x60] sm:$0xff]
  %v28 = vld [vmem:[%s0 + $0x68] sm:$0xff]
  %v29 = vld [vmem:[%s0 + $0x70] sm:$0xff]
  %v30 = vld [vmem:[%s0 + $0x78] sm:$0xff]
  %v31 = vld [vmem:[%s0 + $0x80] sm:$0xff]
  %v32 = vld [vmem:[%s0 + $0x88] sm:$0xff]
  %v33 = vld [vmem:[%s0 + $0x90] sm:$0xff]
  %v34 = vld [vmem:[%s0 + $0x98] sm:$0xff]
  %v35 = vld [vmem:[%s0 + $0xa0] sm:$0xff]
  %v36 = vld [vmem:[%s0 + $0xa8] sm:$0xff]
  %v37 = vld [vmem:[%s0 + $0xb0] sm:$0xff]
  %v38 = vld [vmem:[%s0 + $0xb8] sm:$0xff]
  %v39 = vld [vmem:[%s0 + $0xc0] sm:$0xff]
  %v40 = vld [vmem:[%s0 + $0xc8] sm:$0xff]
  %v41 = vld [vmem:[%s0 + $0xd0] sm:$0xff]
  %v42 = vld [vmem:[%s0 + $0xd8] sm:$0xff]
  %v43 = vld [vmem:[%s0 + $0xe0] sm:$0xff]
  %v44 = vld [vmem:[%s0 + $0xe8] sm:$0xff]
  %v45 = vld [vmem:[%s0 + $0xf0] sm:$0xff]
  %v46 = vld [vmem:[%s0 + $0xf8] sm:$0xff]
  %v47 = vld [vmem:[%s1] sm:$0xf]
  %v48 = vld [vmem:[%s1 + $0x4] sm:$0xf]
  %v49 = vld [vmem:[%s1 + $0x8] sm:$0xf]
  %v50 = vld [vmem:[%s1 + $0xc] sm:$0xf]
  %v51 = vld [vmem:[%s1 + $0x10] sm:$0xf]
  %v52 = vld [vmem:[%s1 + $0x14] sm:$0xf]
  %v53 = vld [vmem:[%s1 + $0x18] sm:$0xf]
  %v54 = vld [vmem:[%s1 + $0x1c] sm:$0xf]
  %v55 = vld [vmem:[%s1 + $0x20] sm:$0xf]
  %v56 = vld [vmem:[%s1 + $0x24] sm:$0xf]
  %v57 = vld [vmem:[%s1 + $0x28] sm:$0xf]
  %v58 = vld [vmem:[%s1 + $0x2c] sm:$0xf]
  %v59 = vld [vmem:[%s1 + $0x30] sm:$0xf]
  %v60 = vld [vmem:[%s1 + $0x34] sm:$0xf]
  %v61 = vld [vmem:[%s1 + $0x38] sm:$0xf]
  %v62 = vld [vmem:[%s1 + $0x3c] sm:$0xf]
  %v63 = vld [vmem:[%s1 + $0x40] sm:$0xf]
  %v64 = vld [vmem:[%s1 + $0x44] sm:$0xf]
  %v65 = vld [vmem:[%s1 + $0x48] sm:$0xf]
  %v66 = vld [vmem:[%s1 + $0x4c] sm:$0xf]
  %v67 = vld [vmem:[%s1 + $0x50] sm:$0xf]
  %v68 = vld [vmem:[%s1 + $0x54] sm:$0xf]
  %v69 = vld [vmem:[%s1 + $0x58] sm:$0xf]
  %v70 = vld [vmem:[%s1 + $0x5c] sm:$0xf]
  %v71 = vld [vmem:[%s1 + $0x60] sm:$0xf]
  %v72 = vld [vmem:[%s1 + $0x64] sm:$0xf]
  %v73 = vld [vmem:[%s1 + $0x68] sm:$0xf]
  %v74 = vld [vmem:[%s1 + $0x6c] sm:$0xf]
  %v75 = vld [vmem:[%s1 + $0x70] sm:$0xf]
  %v76 = vld [vmem:[%s1 + $0x74] sm:$0xf]
  %v77 = vld [vmem:[%s1 + $0x78] sm:$0xf]
  %v78 = vld [vmem:[%s1 + $0x7c] sm:$0xf]
  %v79 = vld [vmem:[%s1 + $0x80] sm:$0xf]
  %v80 = vld [vmem:[%s1 + $0x84] sm:$0xf]
  %v81 = vld [vmem:[%s1 + $0x88] sm:$0xf]
  %v82 = vld [vmem:[%s1 + $0x8c] sm:$0xf]
  %v83 = vld [vmem:[%s1 + $0x90] sm:$0xf]
  %v84 = vld [vmem:[%s1 + $0x94] sm:$0xf]
  %v85 = vld [vmem:[%s1 + $0x98] sm:$0xf]
  %v86 = vld [vmem:[%s1 + $0x9c] sm:$0xf]
  %v87 = vld [vmem:[%s1 + $0xa0] sm:$0xf]
  %v88 = vld [vmem:[%s1 + $0xa4] sm:$0xf]
  %v89 = vld [vmem:[%s1 + $0xa8] sm:$0xf]
  %v90 = vld [vmem:[%s1 + $0xac] sm:$0xf]
  %v91 = vld [vmem:[%s1 + $0xb0] sm:$0xf]
  %v92 = vld [vmem:[%s1 + $0xb4] sm:$0xf]
  %v93 = vld [vmem:[%s1 + $0xb8] sm:$0xf]
  %v94 = vld [vmem:[%s1 + $0xbc] sm:$0xf]
  %v95 = vld [vmem:[%s1 + $0xc0] sm:$0xf]
  %v96 = vld [vmem:[%s1 + $0xc4] sm:$0xf]
  %v97 = vld [vmem:[%s1 + $0xc8] sm:$0xf]
  %v98 = vld [vmem:[%s1 + $0xcc] sm:$0xf]
  %v99 = vld [vmem:[%s1 + $0xd0] sm:$0xf]
  %v100 = vld [vmem:[%s1 + $0xd4] sm:$0xf]
  %v101 = vld [vmem:[%s1 + $0xd8] sm:$0xf]
  %v102 = vld [vmem:[%s1 + $0xdc] sm:$0xf]
  %v103 = vld [vmem:[%s1 + $0xe0] sm:$0xf]
  %v104 = vld [vmem:[%s1 + $0xe4] sm:$0xf]
  %v105 = vld [vmem:[%s1 + $0xe8] sm:$0xf]
  %v106 = vld [vmem:[%s1 + $0xec] sm:$0xf]
  %v107 = vld [vmem:[%s1 + $0xf0] sm:$0xf]
  %v108 = vld [vmem:[%s1 + $0xf4] sm:$0xf]
  %v109 = vld [vmem:[%s1 + $0xf8] sm:$0xf]
  %v110 = vld [vmem:[%s1 + $0xfc] sm:$0xf]
  %v111 = vld [vmem:[%s2] sm:$0x1]
  %v113 = vlaneseq
  %v114 = vshrl.u32 %v113, 7
  %v115 = vsub.s32 0, %v114
  %v116 = vrot.slane %v111, %v115
  %v150 = vunpack.c.l.b16 %v15
  %v151 = vunpack.c.h.b16 %v15
  %v152 = vunpack.c.l.b16 %v16
  %v153 = vunpack.c.h.b16 %v16
  %v154 = vunpack.c.l.b16 %v17
  %v155 = vunpack.c.h.b16 %v17
  %v156 = vunpack.c.l.b16 %v18
  %v157 = vunpack.c.h.b16 %v18
  %v158 = vunpack.c.l.b16 %v19
  %v159 = vunpack.c.h.b16 %v19
  %v160 = vunpack.c.l.b16 %v20
  %v161 = vunpack.c.h.b16 %v20
  %v162 = vunpack.c.l.b16 %v21
  %v163 = vunpack.c.h.b16 %v21
  %v164 = vunpack.c.l.b16 %v22
  %v165 = vunpack.c.h.b16 %v22
  %v166 = vunpack.c.l.b16 %v23
  %v167 = vunpack.c.h.b16 %v23
  %v168 = vunpack.c.l.b16 %v24
  %v169 = vunpack.c.h.b16 %v24
  %v170 = vunpack.c.l.b16 %v25
  %v171 = vunpack.c.h.b16 %v25
  %v172 = vunpack.c.l.b16 %v26
  %v173 = vunpack.c.h.b16 %v26
  %v174 = vunpack.c.l.b16 %v27
  %v175 = vunpack.c.h.b16 %v27
  %v176 = vunpack.c.l.b16 %v28
  %v177 = vunpack.c.h.b16 %v28
  %v178 = vunpack.c.l.b16 %v29
  %v179 = vunpack.c.h.b16 %v29
  %v180 = vunpack.c.l.b16 %v30
  %v181 = vunpack.c.h.b16 %v30
  %v182 = vunpack.c.l.b16 %v31
  %v183 = vunpack.c.h.b16 %v31
  %v184 = vunpack.c.l.b16 %v32
  %v185 = vunpack.c.h.b16 %v32
  %v186 = vunpack.c.l.b16 %v33
  %v187 = vunpack.c.h.b16 %v33
  %v188 = vunpack.c.l.b16 %v34
  %v189 = vunpack.c.h.b16 %v34
  %v190 = vunpack.c.l.b16 %v35
  %v191 = vunpack.c.h.b16 %v35
  %v192 = vunpack.c.l.b16 %v36
  %v193 = vunpack.c.h.b16 %v36
  %v194 = vunpack.c.l.b16 %v37
  %v195 = vunpack.c.h.b16 %v37
  %v196 = vunpack.c.l.b16 %v38
  %v197 = vunpack.c.h.b16 %v38
  %v198 = vunpack.c.l.b16 %v39
  %v199 = vunpack.c.h.b16 %v39
  %v200 = vunpack.c.l.b16 %v40
  %v201 = vunpack.c.h.b16 %v40
  %v202 = vunpack.c.l.b16 %v41
  %v203 = vunpack.c.h.b16 %v41
  %v204 = vunpack.c.l.b16 %v42
  %v205 = vunpack.c.h.b16 %v42
  %v206 = vunpack.c.l.b16 %v43
  %v207 = vunpack.c.h.b16 %v43
  %v208 = vunpack.c.l.b16 %v44
  %v209 = vunpack.c.h.b16 %v44
  %v210 = vunpack.c.l.b16 %v45
  %v211 = vunpack.c.h.b16 %v45
  %v212 = vunpack.c.l.b16 %v46
  %v213 = vunpack.c.h.b16 %v46
  %v214 = vpack.c.b16 %v154, %v150
  %v215 = vpack.c.b16 %v155, %v151
  %v216 = vpack.c.b16 %v156, %v152
  %v217 = vpack.c.b16 %v157, %v153
  %v218 = vpack.c.b16 %v162, %v158
  %v219 = vpack.c.b16 %v163, %v159
  %v220 = vpack.c.b16 %v164, %v160
  %v221 = vpack.c.b16 %v165, %v161
  %v222 = vpack.c.b16 %v170, %v166
  %v223 = vpack.c.b16 %v171, %v167
  %v224 = vpack.c.b16 %v172, %v168
  %v225 = vpack.c.b16 %v173, %v169
  %v226 = vpack.c.b16 %v178, %v174
  %v227 = vpack.c.b16 %v179, %v175
  %v228 = vpack.c.b16 %v180, %v176
  %v229 = vpack.c.b16 %v181, %v177
  %v230 = vpack.c.b16 %v186, %v182
  %v231 = vpack.c.b16 %v187, %v183
  %v232 = vpack.c.b16 %v188, %v184
  %v233 = vpack.c.b16 %v189, %v185
  %v234 = vpack.c.b16 %v194, %v190
  %v235 = vpack.c.b16 %v195, %v191
  %v236 = vpack.c.b16 %v196, %v192
  %v237 = vpack.c.b16 %v197, %v193
  %v238 = vpack.c.b16 %v202, %v198
  %v239 = vpack.c.b16 %v203, %v199
  %v240 = vpack.c.b16 %v204, %v200
  %v241 = vpack.c.b16 %v205, %v201
  %v242 = vpack.c.b16 %v210, %v206
  %v243 = vpack.c.b16 %v211, %v207
  %v244 = vpack.c.b16 %v212, %v208
  %v245 = vpack.c.b16 %v213, %v209
  %v342 = vunpack.c.l.b16 %v47
  %v343 = vunpack.c.l.b16 %v48
  %v344 = vunpack.c.l.b16 %v49
  %v345 = vunpack.c.l.b16 %v50
  %v346 = vunpack.c.l.b16 %v51
  %v347 = vunpack.c.l.b16 %v52
  %v348 = vunpack.c.l.b16 %v53
  %v349 = vunpack.c.l.b16 %v54
  %v350 = vunpack.c.l.b16 %v55
  %v351 = vunpack.c.l.b16 %v56
  %v352 = vunpack.c.l.b16 %v57
  %v353 = vunpack.c.l.b16 %v58
  %v354 = vunpack.c.l.b16 %v59
  %v355 = vunpack.c.l.b16 %v60
  %v356 = vunpack.c.l.b16 %v61
  %v357 = vunpack.c.l.b16 %v62
  %v358 = vunpack.c.l.b16 %v63
  %v359 = vunpack.c.l.b16 %v64
  %v360 = vunpack.c.l.b16 %v65
  %v361 = vunpack.c.l.b16 %v66
  %v362 = vunpack.c.l.b16 %v67
  %v363 = vunpack.c.l.b16 %v68
  %v364 = vunpack.c.l.b16 %v69
  %v365 = vunpack.c.l.b16 %v70
  %v366 = vunpack.c.l.b16 %v71
  %v367 = vunpack.c.l.b16 %v72
  %v368 = vunpack.c.l.b16 %v73
  %v369 = vunpack.c.l.b16 %v74
  %v370 = vunpack.c.l.b16 %v75
  %v371 = vunpack.c.l.b16 %v76
  %v372 = vunpack.c.l.b16 %v77
  %v373 = vunpack.c.l.b16 %v78
  %v374 = vunpack.c.l.b16 %v79
  %v375 = vunpack.c.l.b16 %v80
  %v376 = vunpack.c.l.b16 %v81
  %v377 = vunpack.c.l.b16 %v82
  %v378 = vunpack.c.l.b16 %v83
  %v379 = vunpack.c.l.b16 %v84
  %v380 = vunpack.c.l.b16 %v85
  %v381 = vunpack.c.l.b16 %v86
  %v382 = vunpack.c.l.b16 %v87
  %v383 = vunpack.c.l.b16 %v88
  %v384 = vunpack.c.l.b16 %v89
  %v385 = vunpack.c.l.b16 %v90
  %v386 = vunpack.c.l.b16 %v91
  %v387 = vunpack.c.l.b16 %v92
  %v388 = vunpack.c.l.b16 %v93
  %v389 = vunpack.c.l.b16 %v94
  %v390 = vunpack.c.l.b16 %v95
  %v391 = vunpack.c.l.b16 %v96
  %v392 = vunpack.c.l.b16 %v97
  %v393 = vunpack.c.l.b16 %v98
  %v394 = vunpack.c.l.b16 %v99
  %v395 = vunpack.c.l.b16 %v100
  %v396 = vunpack.c.l.b16 %v101
  %v397 = vunpack.c.l.b16 %v102
  %v398 = vunpack.c.l.b16 %v103
  %v399 = vunpack.c.l.b16 %v104
  %v400 = vunpack.c.l.b16 %v105
  %v401 = vunpack.c.l.b16 %v106
  %v402 = vunpack.c.l.b16 %v107
  %v403 = vunpack.c.l.b16 %v108
  %v404 = vunpack.c.l.b16 %v109
  %v405 = vunpack.c.l.b16 %v110
  %v406 = vpack.c.b16 %v343, %v342
  %v407 = vpack.c.b16 %v345, %v344
  %v408 = vpack.c.b16 %v347, %v346
  %v409 = vpack.c.b16 %v349, %v348
  %v410 = vpack.c.b16 %v351, %v350
  %v411 = vpack.c.b16 %v353, %v352
  %v412 = vpack.c.b16 %v355, %v354
  %v413 = vpack.c.b16 %v357, %v356
  %v414 = vpack.c.b16 %v359, %v358
  %v415 = vpack.c.b16 %v361, %v360
  %v416 = vpack.c.b16 %v363, %v362
  %v417 = vpack.c.b16 %v365, %v364
  %v418 = vpack.c.b16 %v367, %v366
  %v419 = vpack.c.b16 %v369, %v368
  %v420 = vpack.c.b16 %v371, %v370
  %v421 = vpack.c.b16 %v373, %v372
  %v422 = vpack.c.b16 %v375, %v374
  %v423 = vpack.c.b16 %v377, %v376
  %v424 = vpack.c.b16 %v379, %v378
  %v425 = vpack.c.b16 %v381, %v380
  %v426 = vpack.c.b16 %v383, %v382
  %v427 = vpack.c.b16 %v385, %v384
  %v428 = vpack.c.b16 %v387, %v386
  %v429 = vpack.c.b16 %v389, %v388
  %v430 = vpack.c.b16 %v391, %v390
  %v431 = vpack.c.b16 %v393, %v392
  %v432 = vpack.c.b16 %v395, %v394
  %v433 = vpack.c.b16 %v397, %v396
  %v434 = vpack.c.b16 %v399, %v398
  %v435 = vpack.c.b16 %v401, %v400
  %v436 = vpack.c.b16 %v403, %v402
  %v437 = vpack.c.b16 %v405, %v404
  %470 = vmatprep.subr.bf16.mxu0 0
  %471 = vmatpush1.bf16.msra.mxu0 %v406
  %472 = vmatprep.subr.bf16.mxu0 0
  %473 = vmatpush1.bf16.msra.mxu0 %v407
  %474 = vmatprep.subr.bf16.mxu0 0
  %475 = vmatpush1.bf16.msra.mxu0 %v408
  %476 = vmatprep.subr.bf16.mxu0 0
  %477 = vmatpush1.bf16.msra.mxu0 %v409
  %478 = vmatprep.subr.bf16.mxu0 0
  %479 = vmatpush1.bf16.msra.mxu0 %v410
  %480 = vmatprep.subr.bf16.mxu0 0
  %481 = vmatpush1.bf16.msra.mxu0 %v411
  %482 = vmatprep.subr.bf16.mxu0 0
  %483 = vmatpush1.bf16.msra.mxu0 %v412
  %484 = vmatprep.subr.bf16.mxu0 0
  %485 = vmatpush1.bf16.msra.mxu0 %v413
  %486 = vmatprep.subr.bf16.mxu0 0
  %487 = vmatpush1.bf16.msra.mxu0 %v414
  %488 = vmatprep.subr.bf16.mxu0 0
  %489 = vmatpush1.bf16.msra.mxu0 %v415
  %490 = vmatprep.subr.bf16.mxu0 0
  %491 = vmatpush1.bf16.msra.mxu0 %v416
  %492 = vmatprep.subr.bf16.mxu0 0
  %493 = vmatpush1.bf16.msra.mxu0 %v417
  %494 = vmatprep.subr.bf16.mxu0 0
  %495 = vmatpush1.bf16.msra.mxu0 %v418
  %496 = vmatprep.subr.bf16.mxu0 0
  %497 = vmatpush1.bf16.msra.mxu0 %v419
  %498 = vmatprep.subr.bf16.mxu0 0
  %499 = vmatpush1.bf16.msra.mxu0 %v420
  %500 = vmatprep.subr.bf16.mxu0 0
  %501 = vmatpush1.bf16.msra.mxu0 %v421
  %502 = vmatprep.mubr.bf16.mxu0 %v215
  %503 = vmatmul.mubr.bf16.gmra.mrb[0].mxu0 %v214
  %v504 = vpop.f32.mrb[0].mxu0
  %v505 = vadd.f32 %v116, %v504
  %v506 = vpop.f32.mrb[0].mxu0
  %v507 = vpop.f32.mrb[0].mxu0
  %v508 = vadd.f32 %v116, %v507
  %v509 = vpop.f32.mrb[0].mxu0
  %510 = vmatprep.mubr.bf16.mxu0 %v219
  %511 = vmatmul.mubr.bf16.gmra.mrb[0].mxu0 %v218
  %v512 = vpop.f32.mrb[0].mxu0
  %v513 = vadd.f32 %v116, %v512
  %v514 = vpop.f32.mrb[0].mxu0
  %v515 = vpop.f32.mrb[0].mxu0
  %v516 = vadd.f32 %v116, %v515
  %v517 = vpop.f32.mrb[0].mxu0
  %518 = vmatprep.mubr.bf16.mxu0 %v223
  %519 = vmatmul.mubr.bf16.gmra.mrb[0].mxu0 %v222
  %v520 = vpop.f32.mrb[0].mxu0
  %v521 = vadd.f32 %v116, %v520
  %v522 = vpop.f32.mrb[0].mxu0
  %v523 = vpop.f32.mrb[0].mxu0
  %v524 = vadd.f32 %v116, %v523
  %v525 = vpop.f32.mrb[0].mxu0
  %526 = vmatprep.mubr.bf16.mxu0 %v227
  %527 = vmatmul.mubr.bf16.gmra.mrb[0].mxu0 %v226
  %v528 = vpop.f32.mrb[0].mxu0
  %v529 = vadd.f32 %v116, %v528
  %v530 = vpop.f32.mrb[0].mxu0
  %v531 = vpop.f32.mrb[0].mxu0
  %v532 = vadd.f32 %v116, %v531
  %v533 = vpop.f32.mrb[0].mxu0
  %534 = vmatprep.mubr.bf16.mxu0 %v231
  %535 = vmatmul.mubr.bf16.gmra.mrb[0].mxu0 %v230
  %v536 = vpop.f32.mrb[0].mxu0
  %v537 = vadd.f32 %v116, %v536
  %v538 = vpop.f32.mrb[0].mxu0
  %v539 = vpop.f32.mrb[0].mxu0
  %v540 = vadd.f32 %v116, %v539
  %v541 = vpop.f32.mrb[0].mxu0
  %542 = vmatprep.mubr.bf16.mxu0 %v235
  %543 = vmatmul.mubr.bf16.gmra.mrb[0].mxu0 %v234
  %v544 = vpop.f32.mrb[0].mxu0
  %v545 = vadd.f32 %v116, %v544
  %v546 = vpop.f32.mrb[0].mxu0
  %v547 = vpop.f32.mrb[0].mxu0
  %v548 = vadd.f32 %v116, %v547
  %v549 = vpop.f32.mrb[0].mxu0
  %550 = vmatprep.mubr.bf16.mxu0 %v239
  %551 = vmatmul.mubr.bf16.gmra.mrb[0].mxu0 %v238
  %v552 = vpop.f32.mrb[0].mxu0
  %v553 = vadd.f32 %v116, %v552
  %v554 = vpop.f32.mrb[0].mxu0
  %v555 = vpop.f32.mrb[0].mxu0
  %v556 = vadd.f32 %v116, %v555
  %v557 = vpop.f32.mrb[0].mxu0
  %558 = vmatprep.mubr.bf16.mxu0 %v243
  %559 = vmatmul.mubr.bf16.gmra.mrb[0].mxu0 %v242
  %v560 = vpop.f32.mrb[0].mxu0
  %v561 = vadd.f32 %v116, %v560
  %v562 = vpop.f32.mrb[0].mxu0
  %v563 = vpop.f32.mrb[0].mxu0
  %v564 = vadd.f32 %v116, %v563
  %v565 = vpop.f32.mrb[0].mxu0
  %566 = vdwg.mxu0
  %567 = vmatprep.subr.bf16.mxu0 0
  %568 = vmatpush1.bf16.msra.mxu0 %v422
  %569 = vmatprep.subr.bf16.mxu0 0
  %570 = vmatpush1.bf16.msra.mxu0 %v423
  %571 = vmatprep.subr.bf16.mxu0 0
  %572 = vmatpush1.bf16.msra.mxu0 %v424
  %573 = vmatprep.subr.bf16.mxu0 0
  %574 = vmatpush1.bf16.msra.mxu0 %v425
  %575 = vmatprep.subr.bf16.mxu0 0
  %576 = vmatpush1.bf16.msra.mxu0 %v426
  %577 = vmatprep.subr.bf16.mxu0 0
  %578 = vmatpush1.bf16.msra.mxu0 %v427
  %579 = vmatprep.subr.bf16.mxu0 0
  %580 = vmatpush1.bf16.msra.mxu0 %v428
  %581 = vmatprep.subr.bf16.mxu0 0
  %582 = vmatpush1.bf16.msra.mxu0 %v429
  %583 = vmatprep.subr.bf16.mxu0 0
  %584 = vmatpush1.bf16.msra.mxu0 %v430
  %585 = vmatprep.subr.bf16.mxu0 0
  %586 = vmatpush1.bf16.msra.mxu0 %v431
  %587 = vmatprep.subr.bf16.mxu0 0
  %588 = vmatpush1.bf16.msra.mxu0 %v432
  %589 = vmatprep.subr.bf16.mxu0 0
  %590 = vmatpush1.bf16.msra.mxu0 %v433
  %591 = vmatprep.subr.bf16.mxu0 0
  %592 = vmatpush1.bf16.msra.mxu0 %v434
  %593 = vmatprep.subr.bf16.mxu0 0
  %594 = vmatpush1.bf16.msra.mxu0 %v435
  %595 = vmatprep.subr.bf16.mxu0 0
  %596 = vmatpush1.bf16.msra.mxu0 %v436
  %597 = vmatprep.subr.bf16.mxu0 0
  %598 = vmatpush1.bf16.msra.mxu0 %v437
  %599 = vmatprep.mubr.bf16.mxu0 %v217
  %600 = vmatmul.mubr.bf16.gmra.mrb[0].mxu0 %v216
  %v601 = vpop.f32.mrb[0].mxu0
  %v602 = vadd.f32 %v505, %v601
  %v603 = vpop.f32.mrb[0].mxu0
  %v604 = vpop.f32.mrb[0].mxu0
  %v605 = vadd.f32 %v508, %v604
  %v606 = vpop.f32.mrb[0].mxu0
  %607 = vmatprep.mubr.bf16.mxu0 %v221
  %608 = vmatmul.mubr.bf16.gmra.mrb[0].mxu0 %v220
  %v609 = vpop.f32.mrb[0].mxu0
  %v610 = vadd.f32 %v513, %v609
  %v611 = vpop.f32.mrb[0].mxu0
  %v612 = vpop.f32.mrb[0].mxu0
  %v613 = vadd.f32 %v516, %v612
  %v614 = vpop.f32.mrb[0].mxu0
  %615 = vmatprep.mubr.bf16.mxu0 %v225
  %616 = vmatmul.mubr.bf16.gmra.mrb[0].mxu0 %v224
  %v617 = vpop.f32.mrb[0].mxu0
  %v618 = vadd.f32 %v521, %v617
  %v619 = vpop.f32.mrb[0].mxu0
  %v620 = vpop.f32.mrb[0].mxu0
  %v621 = vadd.f32 %v524, %v620
  %v622 = vpop.f32.mrb[0].mxu0
  %623 = vmatprep.mubr.bf16.mxu0 %v229
  %624 = vmatmul.mubr.bf16.gmra.mrb[0].mxu0 %v228
  %v625 = vpop.f32.mrb[0].mxu0
  %v626 = vadd.f32 %v529, %v625
  %v627 = vpop.f32.mrb[0].mxu0
  %v628 = vpop.f32.mrb[0].mxu0
  %v629 = vadd.f32 %v532, %v628
  %v630 = vpop.f32.mrb[0].mxu0
  %631 = vmatprep.mubr.bf16.mxu0 %v233
  %632 = vmatmul.mubr.bf16.gmra.mrb[0].mxu0 %v232
  %v633 = vpop.f32.mrb[0].mxu0
  %v634 = vadd.f32 %v537, %v633
  %v635 = vpop.f32.mrb[0].mxu0
  %v636 = vpop.f32.mrb[0].mxu0
  %v637 = vadd.f32 %v540, %v636
  %v638 = vpop.f32.mrb[0].mxu0
  %639 = vmatprep.mubr.bf16.mxu0 %v237
  %640 = vmatmul.mubr.bf16.gmra.mrb[0].mxu0 %v236
  %v641 = vpop.f32.mrb[0].mxu0
  %v642 = vadd.f32 %v545, %v641
  %v643 = vpop.f32.mrb[0].mxu0
  %v644 = vpop.f32.mrb[0].mxu0
  %v645 = vadd.f32 %v548, %v644
  %v646 = vpop.f32.mrb[0].mxu0
  %647 = vmatprep.mubr.bf16.mxu0 %v241
  %648 = vmatmul.mubr.bf16.gmra.mrb[0].mxu0 %v240
  %v649 = vpop.f32.mrb[0].mxu0
  %v650 = vadd.f32 %v553, %v649
  %v651 = vpop.f32.mrb[0].mxu0
  %v652 = vpop.f32.mrb[0].mxu0
  %v653 = vadd.f32 %v556, %v652
  %v654 = vpop.f32.mrb[0].mxu0
  %655 = vmatprep.mubr.bf16.mxu0 %v245
  %656 = vmatmul.mubr.bf16.gmra.mrb[0].mxu0 %v244
  %v657 = vpop.f32.mrb[0].mxu0
  %v658 = vadd.f32 %v561, %v657
  %v659 = vpop.f32.mrb[0].mxu0
  %v660 = vpop.f32.mrb[0].mxu0
  %v661 = vadd.f32 %v564, %v660
  %v662 = vpop.f32.mrb[0].mxu0
  %663 = vdwg.mxu0
  %v664 = vmax.f32 %v602, 0.0
  %v665 = vmax.f32 %v605, 0.0
  %v666 = vmax.f32 %v610, 0.0
  %v667 = vmax.f32 %v613, 0.0
  %v668 = vmax.f32 %v618, 0.0
  %v669 = vmax.f32 %v621, 0.0
  %v670 = vmax.f32 %v626, 0.0
  %v671 = vmax.f32 %v629, 0.0
  %v672 = vmax.f32 %v634, 0.0
  %v673 = vmax.f32 %v637, 0.0
  %v674 = vmax.f32 %v642, 0.0
  %v675 = vmax.f32 %v645, 0.0
  %v676 = vmax.f32 %v650, 0.0
  %v677 = vmax.f32 %v653, 0.0
  %v678 = vmax.f32 %v658, 0.0
  %v679 = vmax.f32 %v661, 0.0
  %vm680 = vcmask 523264
  %681 = vst.msk [vmem:[%s3] sm:$0xff] %vm680, %v664
  %682 = vst.msk [vmem:[%s3 + $0x8] sm:$0xff] %vm680, %v665
  %683 = vst.msk [vmem:[%s3 + $0x10] sm:$0xff] %vm680, %v666
  %684 = vst.msk [vmem:[%s3 + $0x18] sm:$0xff] %vm680, %v667
  %685 = vst.msk [vmem:[%s3 + $0x20] sm:$0xff] %vm680, %v668
  %686 = vst.msk [vmem:[%s3 + $0x28] sm:$0xff] %vm680, %v669
  %687 = vst.msk [vmem:[%s3 + $0x30] sm:$0xff] %vm680, %v670
  %688 = vst.msk [vmem:[%s3 + $0x38] sm:$0xff] %vm680, %v671
  %689 = vst.msk [vmem:[%s3 + $0x40] sm:$0xff] %vm680, %v672
  %690 = vst.msk [vmem:[%s3 + $0x48] sm:$0xff] %vm680, %v673
  %691 = vst.msk [vmem:[%s3 + $0x50] sm:$0xff] %vm680, %v674
  %692 = vst.msk [vmem:[%s3 + $0x58] sm:$0xff] %vm680, %v675
  %693 = vst.msk [vmem:[%s3 + $0x60] sm:$0xff] %vm680, %v676
  %694 = vst.msk [vmem:[%s3 + $0x68] sm:$0xff] %vm680, %v677
  %695 = vst.msk [vmem:[%s3 + $0x70] sm:$0xff] %vm680, %v678
  %696 = vst.msk [vmem:[%s3 + $0x78] sm:$0xff] %vm680, %v679
  // Predicated region
  $region14: #{retina_forward.11} parent=0 // pred_check
    _
  $region15: #{retina_forward.11} parent=0 // pred_check_branch
    %698 = sbr.rel (0) target = $region17
  $region16: #{retina_forward.11} parent=0 // pred_region
    _
  $region17: #{retina_forward.11} parent=0 // pred_fallthru
    _
  // Predicated region
  $region18: #{retina_forward.11} parent=0 // pred_check
    _
  $region19: #{retina_forward.11} parent=0 // pred_check_branch
    %700 = sbr.rel (0) target = $region21
  $region20: #{retina_forward.11} parent=0 // pred_region
    _
  $region21: #{retina_forward.11} parent=0 // pred_fallthru
    _

// kernel: retina_forward.12
$region0: #{retina_forward.12}
  #allocation0 [shape = 'u32[]', space=smem, size = 0x4, offset = 0x4, fixed_abs, tag = 'smem constant byte address 0x4 - core index']
  #allocation1 [shape = 'u32[144,128]{1,0:T(1,128)}', space=vmem, size = 0x12000, scoped, tag = 'internal scratch']
  %s0 = inlined_call_operand.vmem [shape: bf16[1,32,1024], index: 0, kind: input, shape index: {}]
  %s1 = inlined_call_operand.vmem [shape: bf16[1,1024,128], index: 1, kind: input, shape index: {}]
  %s2 = inlined_call_operand.vmem [shape: f32[1,128], index: 2, kind: input, shape index: {}]
  %s3 = inlined_call_operand.vmem [shape: f32[1,32,128], index: 3, kind: output, shape index: {}]
  %s4 = sld [smem:[#allocation0]]
  $region22: #{retina_forward.12} parent=0
    _
  %s6 = ssub.s32 1, %s4
  %s7 = scalar_select 0, %s6, %s4
  // Predicated region
  $region2: #{retina_forward.12} parent=0 // pred_check
    _
  $region3: #{retina_forward.12} parent=0 // pred_check_branch
    %9 = sbr.rel (0) target = $region5
  $region4: #{retina_forward.12} parent=0 // pred_region
    _
  $region5: #{retina_forward.12} parent=0 // pred_fallthru
    _
  // Predicated region
  $region6: #{retina_forward.12} parent=0 // pred_check
    _
  $region7: #{retina_forward.12} parent=0 // pred_check_branch
    %11 = sbr.rel (0) target = $region9
  $region8: #{retina_forward.12} parent=0 // pred_region
    _
  $region9: #{retina_forward.12} parent=0 // pred_fallthru
    _
  // Predicated region
  $region10: #{retina_forward.12} parent=0 // pred_check
    _
  $region11: #{retina_forward.12} parent=0 // pred_check_branch
    %13 = sbr.rel (0) target = $region13
  $region12: #{retina_forward.12} parent=0 // pred_region
    _
  $region13: #{retina_forward.12} parent=0 // pred_fallthru
    _
  %v15 = vld [vmem:[%s0] sm:$0xff]
  %v16 = vld [vmem:[%s0 + $0x8] sm:$0xff]
  %v17 = vld [vmem:[%s0 + $0x10] sm:$0xff]
  %v18 = vld [vmem:[%s0 + $0x18] sm:$0xff]
  %v19 = vld [vmem:[%s0 + $0x20] sm:$0xff]
  %v20 = vld [vmem:[%s0 + $0x28] sm:$0xff]
  %v21 = vld [vmem:[%s0 + $0x30] sm:$0xff]
  %v22 = vld [vmem:[%s0 + $0x38] sm:$0xff]
  %v23 = vld [vmem:[%s0 + $0x40] sm:$0xff]
  %v24 = vld [vmem:[%s0 + $0x48] sm:$0xff]
  %v25 = vld [vmem:[%s0 + $0x50] sm:$0xff]
  %v26 = vld [vmem:[%s0 + $0x58] sm:$0xff]
  %v27 = vld [vmem:[%s0 + $0x60] sm:$0xff]
  %v28 = vld [vmem:[%s0 + $0x68] sm:$0xff]
  %v29 = vld [vmem:[%s0 + $0x70] sm:$0xff]
  %v30 = vld [vmem:[%s0 + $0x78] sm:$0xff]
  %v31 = vld [vmem:[%s1] sm:$0xf]
  %v32 = vld [vmem:[%s1 + $0x4] sm:$0xf]
  %v33 = vld [vmem:[%s1 + $0x8] sm:$0xf]
  %v34 = vld [vmem:[%s1 + $0xc] sm:$0xf]
  %v35 = vld [vmem:[%s1 + $0x10] sm:$0xf]
  %v36 = vld [vmem:[%s1 + $0x14] sm:$0xf]
  %v37 = vld [vmem:[%s1 + $0x18] sm:$0xf]
  %v38 = vld [vmem:[%s1 + $0x1c] sm:$0xf]
  %v39 = vld [vmem:[%s1 + $0x20] sm:$0xf]
  %v40 = vld [vmem:[%s1 + $0x24] sm:$0xf]
  %v41 = vld [vmem:[%s1 + $0x28] sm:$0xf]
  %v42 = vld [vmem:[%s1 + $0x2c] sm:$0xf]
  %v43 = vld [vmem:[%s1 + $0x30] sm:$0xf]
  %v44 = vld [vmem:[%s1 + $0x34] sm:$0xf]
  %v45 = vld [vmem:[%s1 + $0x38] sm:$0xf]
  %v46 = vld [vmem:[%s1 + $0x3c] sm:$0xf]
  %v47 = vld [vmem:[%s1 + $0x40] sm:$0xf]
  %v48 = vld [vmem:[%s1 + $0x44] sm:$0xf]
  %v49 = vld [vmem:[%s1 + $0x48] sm:$0xf]
  %v50 = vld [vmem:[%s1 + $0x4c] sm:$0xf]
  %v51 = vld [vmem:[%s1 + $0x50] sm:$0xf]
  %v52 = vld [vmem:[%s1 + $0x54] sm:$0xf]
  %v53 = vld [vmem:[%s1 + $0x58] sm:$0xf]
  %v54 = vld [vmem:[%s1 + $0x5c] sm:$0xf]
  %v55 = vld [vmem:[%s1 + $0x60] sm:$0xf]
  %v56 = vld [vmem:[%s1 + $0x64] sm:$0xf]
  %v57 = vld [vmem:[%s1 + $0x68] sm:$0xf]
  %v58 = vld [vmem:[%s1 + $0x6c] sm:$0xf]
  %v59 = vld [vmem:[%s1 + $0x70] sm:$0xf]
  %v60 = vld [vmem:[%s1 + $0x74] sm:$0xf]
  %v61 = vld [vmem:[%s1 + $0x78] sm:$0xf]
  %v62 = vld [vmem:[%s1 + $0x7c] sm:$0xf]
  %v63 = vld [vmem:[%s1 + $0x80] sm:$0xf]
  %v64 = vld [vmem:[%s1 + $0x84] sm:$0xf]
  %v65 = vld [vmem:[%s1 + $0x88] sm:$0xf]
  %v66 = vld [vmem:[%s1 + $0x8c] sm:$0xf]
  %v67 = vld [vmem:[%s1 + $0x90] sm:$0xf]
  %v68 = vld [vmem:[%s1 + $0x94] sm:$0xf]
  %v69 = vld [vmem:[%s1 + $0x98] sm:$0xf]
  %v70 = vld [vmem:[%s1 + $0x9c] sm:$0xf]
  %v71 = vld [vmem:[%s1 + $0xa0] sm:$0xf]
  %v72 = vld [vmem:[%s1 + $0xa4] sm:$0xf]
  %v73 = vld [vmem:[%s1 + $0xa8] sm:$0xf]
  %v74 = vld [vmem:[%s1 + $0xac] sm:$0xf]
  %v75 = vld [vmem:[%s1 + $0xb0] sm:$0xf]
  %v76 = vld [vmem:[%s1 + $0xb4] sm:$0xf]
  %v77 = vld [vmem:[%s1 + $0xb8] sm:$0xf]
  %v78 = vld [vmem:[%s1 + $0xbc] sm:$0xf]
  %v79 = vld [vmem:[%s1 + $0xc0] sm:$0xf]
  %v80 = vld [vmem:[%s1 + $0xc4] sm:$0xf]
  %v81 = vld [vmem:[%s1 + $0xc8] sm:$0xf]
  %v82 = vld [vmem:[%s1 + $0xcc] sm:$0xf]
  %v83 = vld [vmem:[%s1 + $0xd0] sm:$0xf]
  %v84 = vld [vmem:[%s1 + $0xd4] sm:$0xf]
  %v85 = vld [vmem:[%s1 + $0xd8] sm:$0xf]
  %v86 = vld [vmem:[%s1 + $0xdc] sm:$0xf]
  %v87 = vld [vmem:[%s1 + $0xe0] sm:$0xf]
  %v88 = vld [vmem:[%s1 + $0xe4] sm:$0xf]
  %v89 = vld [vmem:[%s1 + $0xe8] sm:$0xf]
  %v90 = vld [vmem:[%s1 + $0xec] sm:$0xf]
  %v91 = vld [vmem:[%s1 + $0xf0] sm:$0xf]
  %v92 = vld [vmem:[%s1 + $0xf4] sm:$0xf]
  %v93 = vld [vmem:[%s1 + $0xf8] sm:$0xf]
  %v94 = vld [vmem:[%s1 + $0xfc] sm:$0xf]
  %v95 = vld [vmem:[%s1 + $0x100] sm:$0xf]
  %v96 = vld [vmem:[%s1 + $0x104] sm:$0xf]
  %v97 = vld [vmem:[%s1 + $0x108] sm:$0xf]
  %v98 = vld [vmem:[%s1 + $0x10c] sm:$0xf]
  %v99 = vld [vmem:[%s1 + $0x110] sm:$0xf]
  %v100 = vld [vmem:[%s1 + $0x114] sm:$0xf]
  %v101 = vld [vmem:[%s1 + $0x118] sm:$0xf]
  %v102 = vld [vmem:[%s1 + $0x11c] sm:$0xf]
  %v103 = vld [vmem:[%s1 + $0x120] sm:$0xf]
  %v104 = vld [vmem:[%s1 + $0x124] sm:$0xf]
  %v105 = vld [vmem:[%s1 + $0x128] sm:$0xf]
  %v106 = vld [vmem:[%s1 + $0x12c] sm:$0xf]
  %v107 = vld [vmem:[%s1 + $0x130] sm:$0xf]
  %v108 = vld [vmem:[%s1 + $0x134] sm:$0xf]
  %v109 = vld [vmem:[%s1 + $0x138] sm:$0xf]
  %v110 = vld [vmem:[%s1 + $0x13c] sm:$0xf]
  %v111 = vld [vmem:[%s1 + $0x140] sm:$0xf]
  %v112 = vld [vmem:[%s1 + $0x144] sm:$0xf]
  %v113 = vld [vmem:[%s1 + $0x148] sm:$0xf]
  %v114 = vld [vmem:[%s1 + $0x14c] sm:$0xf]
  %v115 = vld [vmem:[%s1 + $0x150] sm:$0xf]
  %v116 = vld [vmem:[%s1 + $0x154] sm:$0xf]
  %v117 = vld [vmem:[%s1 + $0x158] sm:$0xf]
  %v118 = vld [vmem:[%s1 + $0x15c] sm:$0xf]
  %v119 = vld [vmem:[%s1 + $0x160] sm:$0xf]
  %v120 = vld [vmem:[%s1 + $0x164] sm:$0xf]
  %v121 = vld [vmem:[%s1 + $0x168] sm:$0xf]
  %v122 = vld [vmem:[%s1 + $0x16c] sm:$0xf]
  %v123 = vld [vmem:[%s1 + $0x170] sm:$0xf]
  %v124 = vld [vmem:[%s1 + $0x174] sm:$0xf]
  %v125 = vld [vmem:[%s1 + $0x178] sm:$0xf]
  %v126 = vld [vmem:[%s1 + $0x17c] sm:$0xf]
  %v127 = vld [vmem:[%s1 + $0x180] sm:$0xf]
  %v128 = vld [vmem:[%s1 + $0x184] sm:$0xf]
  %v129 = vld [vmem:[%s1 + $0x188] sm:$0xf]
  %v130 = vld [vmem:[%s1 + $0x18c] sm:$0xf]
  %v131 = vld [vmem:[%s1 + $0x190] sm:$0xf]
  %v132 = vld [vmem:[%s1 + $0x194] sm:$0xf]
  %v133 = vld [vmem:[%s1 + $0x198] sm:$0xf]
  %v134 = vld [vmem:[%s1 + $0x19c] sm:$0xf]
  %v135 = vld [vmem:[%s1 + $0x1a0] sm:$0xf]
  %v136 = vld [vmem:[%s1 + $0x1a4] sm:$0xf]
  %v137 = vld [vmem:[%s1 + $0x1a8] sm:$0xf]
  %v138 = vld [vmem:[%s1 + $0x1ac] sm:$0xf]
  %v139 = vld [vmem:[%s1 + $0x1b0] sm:$0xf]
  %v140 = vld [vmem:[%s1 + $0x1b4] sm:$0xf]
  %v141 = vld [vmem:[%s1 + $0x1b8] sm:$0xf]
  %v142 = vld [vmem:[%s1 + $0x1bc] sm:$0xf]
  %v143 = vld [vmem:[%s1 + $0x1c0] sm:$0xf]
  %v144 = vld [vmem:[%s1 + $0x1c4] sm:$0xf]
  %v145 = vld [vmem:[%s1 + $0x1c8] sm:$0xf]
  %v146 = vld [vmem:[%s1 + $0x1cc] sm:$0xf]
  %v147 = vld [vmem:[%s1 + $0x1d0] sm:$0xf]
  %v148 = vld [vmem:[%s1 + $0x1d4] sm:$0xf]
  %v149 = vld [vmem:[%s1 + $0x1d8] sm:$0xf]
  %v150 = vld [vmem:[%s1 + $0x1dc] sm:$0xf]
  %v151 = vld [vmem:[%s1 + $0x1e0] sm:$0xf]
  %v152 = vld [vmem:[%s1 + $0x1e4] sm:$0xf]
  %v153 = vld [vmem:[%s1 + $0x1e8] sm:$0xf]
  %v154 = vld [vmem:[%s1 + $0x1ec] sm:$0xf]
  %v155 = vld [vmem:[%s1 + $0x1f0] sm:$0xf]
  %v156 = vld [vmem:[%s1 + $0x1f4] sm:$0xf]
  %v157 = vld [vmem:[%s1 + $0x1f8] sm:$0xf]
  %v158 = vld [vmem:[%s1 + $0x1fc] sm:$0xf]
  %v159 = vld [vmem:[%s2] sm:$0x1]
  %v161 = vlaneseq
  %v162 = vshrl.u32 %v161, 7
  %v163 = vsub.s32 0, %v162
  %v164 = vrot.slane %v159, %v163
  %v182 = vunpack.c.l.b16 %v15
  %v183 = vunpack.c.h.b16 %v15
  %v184 = vunpack.c.l.b16 %v16
  %v185 = vunpack.c.h.b16 %v16
  %v186 = vunpack.c.l.b16 %v17
  %v187 = vunpack.c.h.b16 %v17
  %v188 = vunpack.c.l.b16 %v18
  %v189 = vunpack.c.h.b16 %v18
  %v190 = vunpack.c.l.b16 %v19
  %v191 = vunpack.c.h.b16 %v19
  %v192 = vunpack.c.l.b16 %v20
  %v193 = vunpack.c.h.b16 %v20
  %v194 = vunpack.c.l.b16 %v21
  %v195 = vunpack.c.h.b16 %v21
  %v196 = vunpack.c.l.b16 %v22
  %v197 = vunpack.c.h.b16 %v22
  %v198 = vunpack.c.l.b16 %v23
  %v199 = vunpack.c.h.b16 %v23
  %v200 = vunpack.c.l.b16 %v24
  %v201 = vunpack.c.h.b16 %v24
  %v202 = vunpack.c.l.b16 %v25
  %v203 = vunpack.c.h.b16 %v25
  %v204 = vunpack.c.l.b16 %v26
  %v205 = vunpack.c.h.b16 %v26
  %v206 = vunpack.c.l.b16 %v27
  %v207 = vunpack.c.h.b16 %v27
  %v208 = vunpack.c.l.b16 %v28
  %v209 = vunpack.c.h.b16 %v28
  %v210 = vunpack.c.l.b16 %v29
  %v211 = vunpack.c.h.b16 %v29
  %v212 = vunpack.c.l.b16 %v30
  %v213 = vunpack.c.h.b16 %v30
  %v214 = vpack.c.b16 %v190, %v182
  %v215 = vpack.c.b16 %v191, %v183
  %v216 = vpack.c.b16 %v192, %v184
  %v217 = vpack.c.b16 %v193, %v185
  %v218 = vpack.c.b16 %v194, %v186
  %v219 = vpack.c.b16 %v195, %v187
  %v220 = vpack.c.b16 %v196, %v188
  %v221 = vpack.c.b16 %v197, %v189
  %v222 = vpack.c.b16 %v206, %v198
  %v223 = vpack.c.b16 %v207, %v199
  %v224 = vpack.c.b16 %v208, %v200
  %v225 = vpack.c.b16 %v209, %v201
  %v226 = vpack.c.b16 %v210, %v202
  %v227 = vpack.c.b16 %v211, %v203
  %v228 = vpack.c.b16 %v212, %v204
  %v229 = vpack.c.b16 %v213, %v205
  %v374 = vunpack.c.l.b16 %v31
  %v375 = vunpack.c.l.b16 %v32
  %v376 = vunpack.c.l.b16 %v33
  %v377 = vunpack.c.l.b16 %v34
  %v378 = vunpack.c.l.b16 %v35
  %v379 = vunpack.c.l.b16 %v36
  %v380 = vunpack.c.l.b16 %v37
  %v381 = vunpack.c.l.b16 %v38
  %v382 = vunpack.c.l.b16 %v39
  %v383 = vunpack.c.l.b16 %v40
  %v384 = vunpack.c.l.b16 %v41
  %v385 = vunpack.c.l.b16 %v42
  %v386 = vunpack.c.l.b16 %v43
  %v387 = vunpack.c.l.b16 %v44
  %v388 = vunpack.c.l.b16 %v45
  %v389 = vunpack.c.l.b16 %v46
  %v390 = vunpack.c.l.b16 %v47
  %v391 = vunpack.c.l.b16 %v48
  %v392 = vunpack.c.l.b16 %v49
  %v393 = vunpack.c.l.b16 %v50
  %v394 = vunpack.c.l.b16 %v51
  %v395 = vunpack.c.l.b16 %v52
  %v396 = vunpack.c.l.b16 %v53
  %v397 = vunpack.c.l.b16 %v54
  %v398 = vunpack.c.l.b16 %v55
  %v399 = vunpack.c.l.b16 %v56
  %v400 = vunpack.c.l.b16 %v57
  %v401 = vunpack.c.l.b16 %v58
  %v402 = vunpack.c.l.b16 %v59
  %v403 = vunpack.c.l.b16 %v60
  %v404 = vunpack.c.l.b16 %v61
  %v405 = vunpack.c.l.b16 %v62
  %v406 = vunpack.c.l.b16 %v63
  %v407 = vunpack.c.l.b16 %v64
  %v408 = vunpack.c.l.b16 %v65
  %v409 = vunpack.c.l.b16 %v66
  %v410 = vunpack.c.l.b16 %v67
  %v411 = vunpack.c.l.b16 %v68
  %v412 = vunpack.c.l.b16 %v69
  %v413 = vunpack.c.l.b16 %v70
  %v414 = vunpack.c.l.b16 %v71
  %v415 = vunpack.c.l.b16 %v72
  %v416 = vunpack.c.l.b16 %v73
  %v417 = vunpack.c.l.b16 %v74
  %v418 = vunpack.c.l.b16 %v75
  %v419 = vunpack.c.l.b16 %v76
  %v420 = vunpack.c.l.b16 %v77
  %v421 = vunpack.c.l.b16 %v78
  %v422 = vunpack.c.l.b16 %v79
  %v423 = vunpack.c.l.b16 %v80
  %v424 = vunpack.c.l.b16 %v81
  %v425 = vunpack.c.l.b16 %v82
  %v426 = vunpack.c.l.b16 %v83
  %v427 = vunpack.c.l.b16 %v84
  %v428 = vunpack.c.l.b16 %v85
  %v429 = vunpack.c.l.b16 %v86
  %v430 = vunpack.c.l.b16 %v87
  %v431 = vunpack.c.l.b16 %v88
  %v432 = vunpack.c.l.b16 %v89
  %v433 = vunpack.c.l.b16 %v90
  %v434 = vunpack.c.l.b16 %v91
  %v435 = vunpack.c.l.b16 %v92
  %v436 = vunpack.c.l.b16 %v93
  %v437 = vunpack.c.l.b16 %v94
  %v438 = vunpack.c.l.b16 %v95
  %v439 = vunpack.c.l.b16 %v96
  %v440 = vunpack.c.l.b16 %v97
  %v441 = vunpack.c.l.b16 %v98
  %v442 = vunpack.c.l.b16 %v99
  %v443 = vunpack.c.l.b16 %v100
  %v444 = vunpack.c.l.b16 %v101
  %v445 = vunpack.c.l.b16 %v102
  %v446 = vunpack.c.l.b16 %v103
  %v447 = vunpack.c.l.b16 %v104
  %v448 = vunpack.c.l.b16 %v105
  %v449 = vunpack.c.l.b16 %v106
  %v450 = vunpack.c.l.b16 %v107
  %v451 = vunpack.c.l.b16 %v108
  %v452 = vunpack.c.l.b16 %v109
  %v453 = vunpack.c.l.b16 %v110
  %v454 = vunpack.c.l.b16 %v111
  %v455 = vunpack.c.l.b16 %v112
  %v456 = vunpack.c.l.b16 %v113
  %v457 = vunpack.c.l.b16 %v114
  %v458 = vunpack.c.l.b16 %v115
  %v459 = vunpack.c.l.b16 %v116
  %v460 = vunpack.c.l.b16 %v117
  %v461 = vunpack.c.l.b16 %v118
  %v462 = vunpack.c.l.b16 %v119
  %v463 = vunpack.c.l.b16 %v120
  %v464 = vunpack.c.l.b16 %v121
  %v465 = vunpack.c.l.b16 %v122
  %v466 = vunpack.c.l.b16 %v123
  %v467 = vunpack.c.l.b16 %v124
  %v468 = vunpack.c.l.b16 %v125
  %v469 = vunpack.c.l.b16 %v126
  %v470 = vunpack.c.l.b16 %v127
  %v471 = vunpack.c.l.b16 %v128
  %v472 = vunpack.c.l.b16 %v129
  %v473 = vunpack.c.l.b16 %v130
  %v474 = vunpack.c.l.b16 %v131
  %v475 = vunpack.c.l.b16 %v132
  %v476 = vunpack.c.l.b16 %v133
  %v477 = vunpack.c.l.b16 %v134
  %v478 = vunpack.c.l.b16 %v135
  %v479 = vunpack.c.l.b16 %v136
  %v480 = vunpack.c.l.b16 %v137
  %v481 = vunpack.c.l.b16 %v138
  %v482 = vunpack.c.l.b16 %v139
  %v483 = vunpack.c.l.b16 %v140
  %v484 = vunpack.c.l.b16 %v141
  %v485 = vunpack.c.l.b16 %v142
  %v486 = vunpack.c.l.b16 %v143
  %v487 = vunpack.c.l.b16 %v144
  %v488 = vunpack.c.l.b16 %v145
  %v489 = vunpack.c.l.b16 %v146
  %v490 = vunpack.c.l.b16 %v147
  %v491 = vunpack.c.l.b16 %v148
  %v492 = vunpack.c.l.b16 %v149
  %v493 = vunpack.c.l.b16 %v150
  %v494 = vunpack.c.l.b16 %v151
  %v495 = vunpack.c.l.b16 %v152
  %v496 = vunpack.c.l.b16 %v153
  %v497 = vunpack.c.l.b16 %v154
  %v498 = vunpack.c.l.b16 %v155
  %v499 = vunpack.c.l.b16 %v156
  %v500 = vunpack.c.l.b16 %v157
  %v501 = vunpack.c.l.b16 %v158
  %v502 = vpack.c.b16 %v375, %v374
  %v503 = vpack.c.b16 %v377, %v376
  %v504 = vpack.c.b16 %v379, %v378
  %v505 = vpack.c.b16 %v381, %v380
  %v506 = vpack.c.b16 %v383, %v382
  %v507 = vpack.c.b16 %v385, %v384
  %v508 = vpack.c.b16 %v387, %v386
  %v509 = vpack.c.b16 %v389, %v388
  %v510 = vpack.c.b16 %v391, %v390
  %v511 = vpack.c.b16 %v393, %v392
  %v512 = vpack.c.b16 %v395, %v394
  %v513 = vpack.c.b16 %v397, %v396
  %v514 = vpack.c.b16 %v399, %v398
  %v515 = vpack.c.b16 %v401, %v400
  %v516 = vpack.c.b16 %v403, %v402
  %v517 = vpack.c.b16 %v405, %v404
  %v518 = vpack.c.b16 %v407, %v406
  %v519 = vpack.c.b16 %v409, %v408
  %v520 = vpack.c.b16 %v411, %v410
  %v521 = vpack.c.b16 %v413, %v412
  %v522 = vpack.c.b16 %v415, %v414
  %v523 = vpack.c.b16 %v417, %v416
  %v524 = vpack.c.b16 %v419, %v418
  %v525 = vpack.c.b16 %v421, %v420
  %v526 = vpack.c.b16 %v423, %v422
  %v527 = vpack.c.b16 %v425, %v424
  %v528 = vpack.c.b16 %v427, %v426
  %v529 = vpack.c.b16 %v429, %v428
  %v530 = vpack.c.b16 %v431, %v430
  %v531 = vpack.c.b16 %v433, %v432
  %v532 = vpack.c.b16 %v435, %v434
  %v533 = vpack.c.b16 %v437, %v436
  %v534 = vpack.c.b16 %v439, %v438
  %v535 = vpack.c.b16 %v441, %v440
  %v536 = vpack.c.b16 %v443, %v442
  %v537 = vpack.c.b16 %v445, %v444
  %v538 = vpack.c.b16 %v447, %v446
  %v539 = vpack.c.b16 %v449, %v448
  %v540 = vpack.c.b16 %v451, %v450
  %v541 = vpack.c.b16 %v453, %v452
  %v542 = vpack.c.b16 %v455, %v454
  %v543 = vpack.c.b16 %v457, %v456
  %v544 = vpack.c.b16 %v459, %v458
  %v545 = vpack.c.b16 %v461, %v460
  %v546 = vpack.c.b16 %v463, %v462
  %v547 = vpack.c.b16 %v465, %v464
  %v548 = vpack.c.b16 %v467, %v466
  %v549 = vpack.c.b16 %v469, %v468
  %v550 = vpack.c.b16 %v471, %v470
  %v551 = vpack.c.b16 %v473, %v472
  %v552 = vpack.c.b16 %v475, %v474
  %v553 = vpack.c.b16 %v477, %v476
  %v554 = vpack.c.b16 %v479, %v478
  %v555 = vpack.c.b16 %v481, %v480
  %v556 = vpack.c.b16 %v483, %v482
  %v557 = vpack.c.b16 %v485, %v484
  %v558 = vpack.c.b16 %v487, %v486
  %v559 = vpack.c.b16 %v489, %v488
  %v560 = vpack.c.b16 %v491, %v490
  %v561 = vpack.c.b16 %v493, %v492
  %v562 = vpack.c.b16 %v495, %v494
  %v563 = vpack.c.b16 %v497, %v496
  %v564 = vpack.c.b16 %v499, %v498
  %v565 = vpack.c.b16 %v501, %v500
  %630 = vmatprep.subr.bf16.mxu0 0
  %631 = vmatpush1.bf16.msra.mxu0 %v502
  %632 = vmatprep.subr.bf16.mxu0 0
  %633 = vmatpush1.bf16.msra.mxu0 %v503
  %634 = vmatprep.subr.bf16.mxu0 0
  %635 = vmatpush1.bf16.msra.mxu0 %v504
  %636 = vmatprep.subr.bf16.mxu0 0
  %637 = vmatpush1.bf16.msra.mxu0 %v505
  %638 = vmatprep.subr.bf16.mxu0 0
  %639 = vmatpush1.bf16.msra.mxu0 %v506
  %640 = vmatprep.subr.bf16.mxu0 0
  %641 = vmatpush1.bf16.msra.mxu0 %v507
  %642 = vmatprep.subr.bf16.mxu0 0
  %643 = vmatpush1.bf16.msra.mxu0 %v508
  %644 = vmatprep.subr.bf16.mxu0 0
  %645 = vmatpush1.bf16.msra.mxu0 %v509
  %646 = vmatprep.subr.bf16.mxu0 0
  %647 = vmatpush1.bf16.msra.mxu0 %v510
  %648 = vmatprep.subr.bf16.mxu0 0
  %649 = vmatpush1.bf16.msra.mxu0 %v511
  %650 = vmatprep.subr.bf16.mxu0 0
  %651 = vmatpush1.bf16.msra.mxu0 %v512
  %652 = vmatprep.subr.bf16.mxu0 0
  %653 = vmatpush1.bf16.msra.mxu0 %v513
  %654 = vmatprep.subr.bf16.mxu0 0
  %655 = vmatpush1.bf16.msra.mxu0 %v514
  %656 = vmatprep.subr.bf16.mxu0 0
  %657 = vmatpush1.bf16.msra.mxu0 %v515
  %658 = vmatprep.subr.bf16.mxu0 0
  %659 = vmatpush1.bf16.msra.mxu0 %v516
  %660 = vmatprep.subr.bf16.mxu0 0
  %661 = vmatpush1.bf16.msra.mxu0 %v517
  %662 = vmatprep.mubr.bf16.mxu0 %v215
  %663 = vmatmul.mubr.bf16.gmra.mrb[0].mxu0 %v214
  %v664 = vpop.f32.mrb[0].mxu0
  %v665 = vadd.f32 %v164, %v664
  %v666 = vpop.f32.mrb[0].mxu0
  %v667 = vpop.f32.mrb[0].mxu0
  %v668 = vadd.f32 %v164, %v667
  %v669 = vpop.f32.mrb[0].mxu0
  %670 = vmatprep.mubr.bf16.mxu0 %v223
  %671 = vmatmul.mubr.bf16.gmra.mrb[0].mxu0 %v222
  %v672 = vpop.f32.mrb[0].mxu0
  %v673 = vadd.f32 %v164, %v672
  %v674 = vpop.f32.mrb[0].mxu0
  %v675 = vpop.f32.mrb[0].mxu0
  %v676 = vadd.f32 %v164, %v675
  %v677 = vpop.f32.mrb[0].mxu0
  %678 = vdwg.mxu0
  %679 = vmatprep.subr.bf16.mxu0 0
  %680 = vmatpush1.bf16.msra.mxu0 %v518
  %681 = vmatprep.subr.bf16.mxu0 0
  %682 = vmatpush1.bf16.msra.mxu0 %v519
  %683 = vmatprep.subr.bf16.mxu0 0
  %684 = vmatpush1.bf16.msra.mxu0 %v520
  %685 = vmatprep.subr.bf16.mxu0 0
  %686 = vmatpush1.bf16.msra.mxu0 %v521
  %687 = vmatprep.subr.bf16.mxu0 0
  %688 = vmatpush1.bf16.msra.mxu0 %v522
  %689 = vmatprep.subr.bf16.mxu0 0
  %690 = vmatpush1.bf16.msra.mxu0 %v523
  %691 = vmatprep.subr.bf16.mxu0 0
  %692 = vmatpush1.bf16.msra.mxu0 %v524
  %693 = vmatprep.subr.bf16.mxu0 0
  %694 = vmatpush1.bf16.msra.mxu0 %v525
  %695 = vmatprep.subr.bf16.mxu0 0
  %696 = vmatpush1.bf16.msra.mxu0 %v526
  %697 = vmatprep.subr.bf16.mxu0 0
  %698 = vmatpush1.bf16.msra.mxu0 %v527
  %699 = vmatprep.subr.bf16.mxu0 0
  %700 = vmatpush1.bf16.msra.mxu0 %v528
  %701 = vmatprep.subr.bf16.mxu0 0
  %702 = vmatpush1.bf16.msra.mxu0 %v529
  %703 = vmatprep.subr.bf16.mxu0 0
  %704 = vmatpush1.bf16.msra.mxu0 %v530
  %705 = vmatprep.subr.bf16.mxu0 0
  %706 = vmatpush1.bf16.msra.mxu0 %v531
  %707 = vmatprep.subr.bf16.mxu0 0
  %708 = vmatpush1.bf16.msra.mxu0 %v532
  %709 = vmatprep.subr.bf16.mxu0 0
  %710 = vmatpush1.bf16.msra.mxu0 %v533
  %711 = vmatprep.mubr.bf16.mxu0 %v217
  %712 = vmatmul.mubr.bf16.gmra.mrb[0].mxu0 %v216
  %v713 = vpop.f32.mrb[0].mxu0
  %v714 = vadd.f32 %v665, %v713
  %v715 = vpop.f32.mrb[0].mxu0
  %v716 = vpop.f32.mrb[0].mxu0
  %v717 = vadd.f32 %v668, %v716
  %v718 = vpop.f32.mrb[0].mxu0
  %719 = vmatprep.mubr.bf16.mxu0 %v225
  %720 = vmatmul.mubr.bf16.gmra.mrb[0].mxu0 %v224
  %v721 = vpop.f32.mrb[0].mxu0
  %v722 = vadd.f32 %v673, %v721
  %v723 = vpop.f32.mrb[0].mxu0
  %v724 = vpop.f32.mrb[0].mxu0
  %v725 = vadd.f32 %v676, %v724
  %v726 = vpop.f32.mrb[0].mxu0
  %727 = vdwg.mxu0
  %728 = vmatprep.subr.bf16.mxu0 0
  %729 = vmatpush1.bf16.msra.mxu0 %v534
  %730 = vmatprep.subr.bf16.mxu0 0
  %731 = vmatpush1.bf16.msra.mxu0 %v535
  %732 = vmatprep.subr.bf16.mxu0 0
  %733 = vmatpush1.bf16.msra.mxu0 %v536
  %734 = vmatprep.subr.bf16.mxu0 0
  %735 = vmatpush1.bf16.msra.mxu0 %v537
  %736 = vmatprep.subr.bf16.mxu0 0
  %737 = vmatpush1.bf16.msra.mxu0 %v538
  %738 = vmatprep.subr.bf16.mxu0 0
  %739 = vmatpush1.bf16.msra.mxu0 %v539
  %740 = vmatprep.subr.bf16.mxu0 0
  %741 = vmatpush1.bf16.msra.mxu0 %v540
  %742 = vmatprep.subr.bf16.mxu0 0
  %743 = vmatpush1.bf16.msra.mxu0 %v541
  %744 = vmatprep.subr.bf16.mxu0 0
  %745 = vmatpush1.bf16.msra.mxu0 %v542
  %746 = vmatprep.subr.bf16.mxu0 0
  %747 = vmatpush1.bf16.msra.mxu0 %v543
  %748 = vmatprep.subr.bf16.mxu0 0
  %749 = vmatpush1.bf16.msra.mxu0 %v544
  %750 = vmatprep.subr.bf16.mxu0 0
  %751 = vmatpush1.bf16.msra.mxu0 %v545
  %752 = vmatprep.subr.bf16.mxu0 0
  %753 = vmatpush1.bf16.msra.mxu0 %v546
  %754 = vmatprep.subr.bf16.mxu0 0
  %755 = vmatpush1.bf16.msra.mxu0 %v547
  %756 = vmatprep.subr.bf16.mxu0 0
  %757 = vmatpush1.bf16.msra.mxu0 %v548
  %758 = vmatprep.subr.bf16.mxu0 0
  %759 = vmatpush1.bf16.msra.mxu0 %v549
  %760 = vmatprep.mubr.bf16.mxu0 %v219
  %761 = vmatmul.mubr.bf16.gmra.mrb[0].mxu0 %v218
  %v762 = vpop.f32.mrb[0].mxu0
  %v763 = vadd.f32 %v714, %v762
  %v764 = vpop.f32.mrb[0].mxu0
  %v765 = vpop.f32.mrb[0].mxu0
  %v766 = vadd.f32 %v717, %v765
  %v767 = vpop.f32.mrb[0].mxu0
  %768 = vmatprep.mubr.bf16.mxu0 %v227
  %769 = vmatmul.mubr.bf16.gmra.mrb[0].mxu0 %v226
  %v770 = vpop.f32.mrb[0].mxu0
  %v771 = vadd.f32 %v722, %v770
  %v772 = vpop.f32.mrb[0].mxu0
  %v773 = vpop.f32.mrb[0].mxu0
  %v774 = vadd.f32 %v725, %v773
  %v775 = vpop.f32.mrb[0].mxu0
  %776 = vdwg.mxu0
  %777 = vmatprep.subr.bf16.mxu0 0
  %778 = vmatpush1.bf16.msra.mxu0 %v550
  %779 = vmatprep.subr.bf16.mxu0 0
  %780 = vmatpush1.bf16.msra.mxu0 %v551
  %781 = vmatprep.subr.bf16.mxu0 0
  %782 = vmatpush1.bf16.msra.mxu0 %v552
  %783 = vmatprep.subr.bf16.mxu0 0
  %784 = vmatpush1.bf16.msra.mxu0 %v553
  %785 = vmatprep.subr.bf16.mxu0 0
  %786 = vmatpush1.bf16.msra.mxu0 %v554
  %787 = vmatprep.subr.bf16.mxu0 0
  %788 = vmatpush1.bf16.msra.mxu0 %v555
  %789 = vmatprep.subr.bf16.mxu0 0
  %790 = vmatpush1.bf16.msra.mxu0 %v556
  %791 = vmatprep.subr.bf16.mxu0 0
  %792 = vmatpush1.bf16.msra.mxu0 %v557
  %793 = vmatprep.subr.bf16.mxu0 0
  %794 = vmatpush1.bf16.msra.mxu0 %v558
  %795 = vmatprep.subr.bf16.mxu0 0
  %796 = vmatpush1.bf16.msra.mxu0 %v559
  %797 = vmatprep.subr.bf16.mxu0 0
  %798 = vmatpush1.bf16.msra.mxu0 %v560
  %799 = vmatprep.subr.bf16.mxu0 0
  %800 = vmatpush1.bf16.msra.mxu0 %v561
  %801 = vmatprep.subr.bf16.mxu0 0
  %802 = vmatpush1.bf16.msra.mxu0 %v562
  %803 = vmatprep.subr.bf16.mxu0 0
  %804 = vmatpush1.bf16.msra.mxu0 %v563
  %805 = vmatprep.subr.bf16.mxu0 0
  %806 = vmatpush1.bf16.msra.mxu0 %v564
  %807 = vmatprep.subr.bf16.mxu0 0
  %808 = vmatpush1.bf16.msra.mxu0 %v565
  %809 = vmatprep.mubr.bf16.mxu0 %v221
  %810 = vmatmul.mubr.bf16.gmra.mrb[0].mxu0 %v220
  %v811 = vpop.f32.mrb[0].mxu0
  %v812 = vadd.f32 %v763, %v811
  %v813 = vpop.f32.mrb[0].mxu0
  %v814 = vpop.f32.mrb[0].mxu0
  %v815 = vadd.f32 %v766, %v814
  %v816 = vpop.f32.mrb[0].mxu0
  %817 = vmatprep.mubr.bf16.mxu0 %v229
  %818 = vmatmul.mubr.bf16.gmra.mrb[0].mxu0 %v228
  %v819 = vpop.f32.mrb[0].mxu0
  %v820 = vadd.f32 %v771, %v819
  %v821 = vpop.f32.mrb[0].mxu0
  %v822 = vpop.f32.mrb[0].mxu0
  %v823 = vadd.f32 %v774, %v822
  %v824 = vpop.f32.mrb[0].mxu0
  %825 = vdwg.mxu0
  %v826 = vmax.f32 %v812, 0.0
  %v827 = vmax.f32 %v815, 0.0
  %v828 = vmax.f32 %v820, 0.0
  %v829 = vmax.f32 %v823, 0.0
  %830 = vst [vmem:[%s3] sm:$0xff] %v826
  %831 = vst [vmem:[%s3 + $0x8] sm:$0xff] %v827
  %832 = vst [vmem:[%s3 + $0x10] sm:$0xff] %v828
  %833 = vst [vmem:[%s3 + $0x18] sm:$0xff] %v829
  // Predicated region
  $region14: #{retina_forward.12} parent=0 // pred_check
    _
  $region15: #{retina_forward.12} parent=0 // pred_check_branch
    %835 = sbr.rel (0) target = $region17
  $region16: #{retina_forward.12} parent=0 // pred_region
    _
  $region17: #{retina_forward.12} parent=0 // pred_fallthru
    _
  // Predicated region
  $region18: #{retina_forward.12} parent=0 // pred_check
    _
  $region19: #{retina_forward.12} parent=0 // pred_check_branch
    %837 = sbr.rel (0) target = $region21
  $region20: #{retina_forward.12} parent=0 // pred_region
    _
  $region21: #{retina_forward.12} parent=0 // pred_fallthru
    _

// kernel: retina_forward.14
$region0: #{retina_forward.14}
  #allocation0 [shape = 'u32[]', space=smem, size = 0x4, offset = 0x4, fixed_abs, tag = 'smem constant byte address 0x4 - core index']
  #allocation1 [shape = 'u32[144,128]{1,0:T(1,128)}', space=vmem, size = 0x12000, scoped, tag = 'internal scratch']
  %s0 = inlined_call_operand.vmem [shape: f32[2,4,64], index: 0, kind: input, shape index: {}]
  %s1 = inlined_call_operand.vmem [shape: f32[2,64], index: 1, kind: input, shape index: {}]
  %s2 = inlined_call_operand.vmem [shape: f32[64,128], index: 2, kind: input, shape index: {}]
  %s3 = inlined_call_operand.vmem [shape: f32[1,128], index: 3, kind: input, shape index: {}]
  %s4 = inlined_call_operand.vmem [shape: f32[64,1024], index: 4, kind: input, shape index: {}]
  %s5 = inlined_call_operand.vmem [shape: f32[1,1024], index: 5, kind: input, shape index: {}]
  %s6 = inlined_call_operand.hbm [shape: f32[2,64], index: 6, kind: output, shape index: {0}]
  %s7 = inlined_call_operand.hbm [shape: f32[2,64], index: 7, kind: output, shape index: {1}]
  %s8 = inlined_call_operand.vmem [shape: f32[2,1024], index: 8, kind: output, shape index: {2}]
  %9 = xla_tuple %s6, %s7, %s8
  %s10 = sld [smem:[#allocation0]]
  $region50: #{retina_forward.14} parent=0
    _
  %s12 = ssub.s32 1, %s10
  %s13 = scalar_select 0, %s12, %s10
  $region1: #{retina_forward.14} parent=0
    #allocation2 [shape = 'u8[1024]{0}', space=vmem, size = 0x400, scoped, tag = 'output window, operand 0, single buffered']
    #allocation3 [shape = 's32[1]{0}', space=sflag, size = 0x4, scoped, tag = 'scoped memory for retina_forward.14']
    #allocation4 [shape = 'u8[1024]{0}', space=vmem, size = 0x400, scoped, tag = 'output window, operand 1, single buffered']
    #allocation5 [shape = 's32[1]{0}', space=sflag, size = 0x4, scoped, tag = 'scoped memory for retina_forward.14']
    %14 = vsyncpa [#allocation3], 0
    %15 = vsyncpa [#allocation5], 0
    // Predicated region
    $region2: #{retina_forward.14} parent=1 // pred_check
      _
    $region3: #{retina_forward.14} parent=1 // pred_check_branch
      %17 = sbr.rel (0) target = $region5
    $region4: #{retina_forward.14} parent=1 // pred_region
      _
    $region5: #{retina_forward.14} parent=1 // pred_fallthru
      _
    // Predicated region
    $region6: #{retina_forward.14} parent=1 // pred_check
      _
    $region7: #{retina_forward.14} parent=1 // pred_check_branch
      %19 = sbr.rel (0) target = $region9
    $region8: #{retina_forward.14} parent=1 // pred_region
      _
    $region9: #{retina_forward.14} parent=1 // pred_fallthru
      _
    // Predicated region
    $region10: #{retina_forward.14} parent=1 // pred_check
      _
    $region11: #{retina_forward.14} parent=1 // pred_check_branch
      %21 = sbr.rel (0) target = $region13
    $region12: #{retina_forward.14} parent=1 // pred_region
      _
    $region13: #{retina_forward.14} parent=1 // pred_fallthru
      _
    // Predicated region
    $region14: #{retina_forward.14} parent=1 // pred_check
      _
    $region15: #{retina_forward.14} parent=1 // pred_check_branch
      %23 = sbr.rel (0) target = $region17
    $region16: #{retina_forward.14} parent=1 // pred_region
      _
    $region17: #{retina_forward.14} parent=1 // pred_fallthru
      _
    // Predicated region
    $region18: #{retina_forward.14} parent=1 // pred_check
      _
    $region19: #{retina_forward.14} parent=1 // pred_check_branch
      %25 = sbr.rel (0) target = $region21
    $region20: #{retina_forward.14} parent=1 // pred_region
      _
    $region21: #{retina_forward.14} parent=1 // pred_fallthru
      _
    // Predicated region
    $region22: #{retina_forward.14} parent=1 // pred_check
      _
    $region23: #{retina_forward.14} parent=1 // pred_check_branch
      %27 = sbr.rel (0) target = $region25
    $region24: #{retina_forward.14} parent=1 // pred_region
      _
    $region25: #{retina_forward.14} parent=1 // pred_fallthru
      _
    %v28 = vld [vmem:[%s0] sm:$0xf]
    %v29 = vld [vmem:[%s0 + $0x4] sm:$0xf]
    %vm30 = vcmask 519168
    %v31 = vsel %vm30, %v28, 0.0
    %v32 = vrot.slane %v31, 4
    %v33 = vadd.f32 %v31, %v32
    %v34 = vrot.slane %v33, 2
    %v35 = vadd.f32 %v33, %v34
    %v36 = vrot.slane %v35, 1
    %v37 = vadd.f32 %v35, %v36
    %v38 = vsel %vm30, %v29, 0.0
    %v39 = vrot.slane %v38, 4
    %v40 = vadd.f32 %v38, %v39
    %v41 = vrot.slane %v40, 2
    %v42 = vadd.f32 %v40, %v41
    %v43 = vrot.slane %v42, 1
    %v44 = vadd.f32 %v42, %v43
    %v45 = vrcp.pop 4.0
    %v46 = vmul.f32 %v37, %v45
    %v47 = vmul.f32 %v44, %v45
    %v48 = vld [vmem:[%s2] sm:$0xff]
    %v49 = vld [vmem:[%s2 + $0x8] sm:$0xff]
    %v50 = vld [vmem:[%s2 + $0x10] sm:$0xff]
    %v51 = vld [vmem:[%s2 + $0x18] sm:$0xff]
    %v52 = vld [vmem:[%s2 + $0x20] sm:$0xff]
    %v53 = vld [vmem:[%s2 + $0x28] sm:$0xff]
    %v54 = vld [vmem:[%s2 + $0x30] sm:$0xff]
    %v55 = vld [vmem:[%s2 + $0x38] sm:$0xff]
    %v56 = vld [vmem:[%s3] sm:$0x1]
    %v58 = vlaneseq
    %v59 = vshrl.u32 %v58, 7
    %v60 = vsub.s32 0, %v59
    %v61 = vrot.slane %v56, %v60
    %vm65 = vcmask 1041409
    %v66 = vsel %vm65, %v47, %v46
    %vm67 = vcmask 523264
    %v68 = vsel %vm67, %v66, 0
    %70 = vmatprep.subr.mxu0 0.0
    %71 = vmatpush1.msra.mxu0 %v48
    %72 = vmatprep.subr.mxu0 0.0
    %73 = vmatpush1.msra.mxu0 %v49
    %74 = vmatprep.subr.mxu0 0.0
    %75 = vmatpush1.msra.mxu0 %v50
    %76 = vmatprep.subr.mxu0 0.0
    %77 = vmatpush1.msra.mxu0 %v51
    %78 = vmatprep.subr.mxu0 0.0
    %79 = vmatpush1.msra.mxu0 %v52
    %80 = vmatprep.subr.mxu0 0.0
    %81 = vmatpush1.msra.mxu0 %v53
    %82 = vmatprep.subr.mxu0 0.0
    %83 = vmatpush1.msra.mxu0 %v54
    %84 = vmatprep.subr.mxu0 0.0
    %85 = vmatpush1.msra.mxu0 %v55
    %86 = vmatprep.subr.mxu0 0.0
    %87 = vmatpush1.msra.mxu0 0.0
    %88 = vmatprep.subr.mxu0 0.0
    %89 = vmatpush1.msra.mxu0 0.0
    %90 = vmatprep.subr.mxu0 0.0
    %91 = vmatpush1.msra.mxu0 0.0
    %92 = vmatprep.subr.mxu0 0.0
    %93 = vmatpush1.msra.mxu0 0.0
    %94 = vmatprep.subr.mxu0 0.0
    %95 = vmatpush1.msra.mxu0 0.0
    %96 = vmatprep.subr.mxu0 0.0
    %97 = vmatpush1.msra.mxu0 0.0
    %98 = vmatprep.subr.mxu0 0.0
    %99 = vmatpush1.msra.mxu0 0.0
    %100 = vmatprep.subr.mxu0 0.0
    %101 = vmatpush1.msra.mxu0 0.0
    %102 = vmatprep.subr.mxu0 0.0
    %103 = vmatpush1.msra.mxu0 0.0
    %104 = vmatprep.subr.mxu0 0.0
    %105 = vmatpush1.msra.mxu0 0.0
    %106 = vmatprep.subr.mxu0 0.0
    %107 = vmatpush1.msra.mxu0 0.0
    %108 = vmatprep.subr.mxu0 0.0
    %109 = vmatpush1.msra.mxu0 0.0
    %110 = vmatprep.subr.mxu0 0.0
    %111 = vmatpush1.msra.mxu0 0.0
    %112 = vmatprep.subr.mxu0 0.0
    %113 = vmatpush1.msra.mxu0 0.0
    %114 = vmatprep.subr.mxu0 0.0
    %115 = vmatpush1.msra.mxu0 0.0
    %116 = vmatprep.subr.mxu0 0.0
    %117 = vmatpush1.msra.mxu0 0.0
    %118 = vmatprep.subr.mxu0 0.0
    %119 = vmatpush1.msra.mxu0 0.0
    %120 = vmatprep.subr.mxu0 0.0
    %121 = vmatpush1.msra.mxu0 0.0
    %122 = vmatprep.subr.mxu0 0.0
    %123 = vmatpush1.msra.mxu0 0.0
    %124 = vmatprep.subr.mxu0 0.0
    %125 = vmatpush1.msra.mxu0 0.0
    %126 = vmatprep.subr.mxu0 0.0
    %127 = vmatpush1.msra.mxu0 0.0
    %128 = vmatprep.subr.mxu0 0.0
    %129 = vmatpush1.msra.mxu0 0.0
    %130 = vmatprep.subr.mxu0 0.0
    %131 = vmatpush1.msra.mxu0 0.0
    %132 = vmatprep.subr.mxu0 0.0
    %133 = vmatpush1.msra.mxu0 0.0
    %134 = vmatprep.mubr.f32.mxu0 0.0
    %135 = vmatmul.mubr.f32.gmra.mrb[0].mxu0 %v68
    %v136 = vpop.f32.mrb[0].mxu0
    %v137 = vadd.f32 %v61, %v136
    %v138 = vpop.f32.mrb[0].mxu0
    %139 = vdwg.mxu0
    %v140 = vld [vmem:[%s1] sm:$0x3]
    %v141 = vmul.f32 %v137, 0.5
    %v142 = vmul.f32 %v141, 1.442695
    %v143 = vpow.pop %v142
    %145 = vrot.lane.b32.xlu0 %v143, 64
    %v146 = vpop.permute.xlu0 %145
    %v148 = vmul.f32 %v140, %v146
    %v149 = vadd.f32 %v137, %v148
    %v150 = vld [vmem:[%s4] sm:$0xff]
    %v151 = vld [vmem:[%s4 + $0x8] sm:$0xff]
    %v152 = vld [vmem:[%s4 + $0x10] sm:$0xff]
    %v153 = vld [vmem:[%s4 + $0x18] sm:$0xff]
    %v154 = vld [vmem:[%s4 + $0x20] sm:$0xff]
    %v155 = vld [vmem:[%s4 + $0x28] sm:$0xff]
    %v156 = vld [vmem:[%s4 + $0x30] sm:$0xff]
    %v157 = vld [vmem:[%s4 + $0x38] sm:$0xff]
    %v158 = vld [vmem:[%s4 + $0x40] sm:$0xff]
    %v159 = vld [vmem:[%s4 + $0x48] sm:$0xff]
    %v160 = vld [vmem:[%s4 + $0x50] sm:$0xff]
    %v161 = vld [vmem:[%s4 + $0x58] sm:$0xff]
    %v162 = vld [vmem:[%s4 + $0x60] sm:$0xff]
    %v163 = vld [vmem:[%s4 + $0x68] sm:$0xff]
    %v164 = vld [vmem:[%s4 + $0x70] sm:$0xff]
    %v165 = vld [vmem:[%s4 + $0x78] sm:$0xff]
    %v166 = vld [vmem:[%s4 + $0x80] sm:$0xff]
    %v167 = vld [vmem:[%s4 + $0x88] sm:$0xff]
    %v168 = vld [vmem:[%s4 + $0x90] sm:$0xff]
    %v169 = vld [vmem:[%s4 + $0x98] sm:$0xff]
    %v170 = vld [vmem:[%s4 + $0xa0] sm:$0xff]
    %v171 = vld [vmem:[%s4 + $0xa8] sm:$0xff]
    %v172 = vld [vmem:[%s4 + $0xb0] sm:$0xff]
    %v173 = vld [vmem:[%s4 + $0xb8] sm:$0xff]
    %v174 = vld [vmem:[%s4 + $0xc0] sm:$0xff]
    %v175 = vld [vmem:[%s4 + $0xc8] sm:$0xff]
    %v176 = vld [vmem:[%s4 + $0xd0] sm:$0xff]
    %v177 = vld [vmem:[%s4 + $0xd8] sm:$0xff]
    %v178 = vld [vmem:[%s4 + $0xe0] sm:$0xff]
    %v179 = vld [vmem:[%s4 + $0xe8] sm:$0xff]
    %v180 = vld [vmem:[%s4 + $0xf0] sm:$0xff]
    %v181 = vld [vmem:[%s4 + $0xf8] sm:$0xff]
    %v182 = vld [vmem:[%s4 + $0x100] sm:$0xff]
    %v183 = vld [vmem:[%s4 + $0x108] sm:$0xff]
    %v184 = vld [vmem:[%s4 + $0x110] sm:$0xff]
    %v185 = vld [vmem:[%s4 + $0x118] sm:$0xff]
    %v186 = vld [vmem:[%s4 + $0x120] sm:$0xff]
    %v187 = vld [vmem:[%s4 + $0x128] sm:$0xff]
    %v188 = vld [vmem:[%s4 + $0x130] sm:$0xff]
    %v189 = vld [vmem:[%s4 + $0x138] sm:$0xff]
    %v190 = vld [vmem:[%s4 + $0x140] sm:$0xff]
    %v191 = vld [vmem:[%s4 + $0x148] sm:$0xff]
    %v192 = vld [vmem:[%s4 + $0x150] sm:$0xff]
    %v193 = vld [vmem:[%s4 + $0x158] sm:$0xff]
    %v194 = vld [vmem:[%s4 + $0x160] sm:$0xff]
    %v195 = vld [vmem:[%s4 + $0x168] sm:$0xff]
    %v196 = vld [vmem:[%s4 + $0x170] sm:$0xff]
    %v197 = vld [vmem:[%s4 + $0x178] sm:$0xff]
    %v198 = vld [vmem:[%s4 + $0x180] sm:$0xff]
    %v199 = vld [vmem:[%s4 + $0x188] sm:$0xff]
    %v200 = vld [vmem:[%s4 + $0x190] sm:$0xff]
    %v201 = vld [vmem:[%s4 + $0x198] sm:$0xff]
    %v202 = vld [vmem:[%s4 + $0x1a0] sm:$0xff]
    %v203 = vld [vmem:[%s4 + $0x1a8] sm:$0xff]
    %v204 = vld [vmem:[%s4 + $0x1b0] sm:$0xff]
    %v205 = vld [vmem:[%s4 + $0x1b8] sm:$0xff]
    %v206 = vld [vmem:[%s4 + $0x1c0] sm:$0xff]
    %v207 = vld [vmem:[%s4 + $0x1c8] sm:$0xff]
    %v208 = vld [vmem:[%s4 + $0x1d0] sm:$0xff]
    %v209 = vld [vmem:[%s4 + $0x1d8] sm:$0xff]
    %v210 = vld [vmem:[%s4 + $0x1e0] sm:$0xff]
    %v211 = vld [vmem:[%s4 + $0x1e8] sm:$0xff]
    %v212 = vld [vmem:[%s4 + $0x1f0] sm:$0xff]
    %v213 = vld [vmem:[%s4 + $0x1f8] sm:$0xff]
    %v214 = vld [vmem:[%s5] sm:$0xff]
    %v216 = vlaneseq
    %v217 = vshrl.u32 %v216, 7
    %v218 = vsub.s32 0, %v217
    %v219 = vrot.slane %v214, %v218
    %v220 = vlaneseq
    %v221 = vshrl.u32 %v220, 7
    %v222 = vsub.s32 1, %v221
    %v223 = vrot.slane %v214, %v222
    %v224 = vlaneseq
    %v225 = vshrl.u32 %v224, 7
    %v226 = vsub.s32 2, %v225
    %v227 = vrot.slane %v214, %v226
    %v228 = vlaneseq
    %v229 = vshrl.u32 %v228, 7
    %v230 = vsub.s32 3, %v229
    %v231 = vrot.slane %v214, %v230
    %v232 = vlaneseq
    %v233 = vshrl.u32 %v232, 7
    %v234 = vsub.s32 4, %v233
    %v235 = vrot.slane %v214, %v234
    %v236 = vlaneseq
    %v237 = vshrl.u32 %v236, 7
    %v238 = vsub.s32 5, %v237
    %v239 = vrot.slane %v214, %v238
    %v240 = vlaneseq
    %v241 = vshrl.u32 %v240, 7
    %v242 = vsub.s32 6, %v241
    %v243 = vrot.slane %v214, %v242
    %v244 = vlaneseq
    %v245 = vshrl.u32 %v244, 7
    %v246 = vsub.s32 7, %v245
    %v247 = vrot.slane %v214, %v246
    %v257 = vsel %vm67, %v149, 0
    %259 = vmatprep.subr.mxu0 %v151
    %260 = vmatpush1.msra.mxu0 %v150
    %261 = vmatprep.subr.mxu0 %v159
    %262 = vmatpush1.msra.mxu0 %v158
    %263 = vmatprep.subr.mxu0 %v167
    %264 = vmatpush1.msra.mxu0 %v166
    %265 = vmatprep.subr.mxu0 %v175
    %266 = vmatpush1.msra.mxu0 %v174
    %267 = vmatprep.subr.mxu0 %v183
    %268 = vmatpush1.msra.mxu0 %v182
    %269 = vmatprep.subr.mxu0 %v191
    %270 = vmatpush1.msra.mxu0 %v190
    %271 = vmatprep.subr.mxu0 %v199
    %272 = vmatpush1.msra.mxu0 %v198
    %273 = vmatprep.subr.mxu0 %v207
    %274 = vmatpush1.msra.mxu0 %v206
    %275 = vmatprep.subr.mxu0 0.0
    %276 = vmatpush1.msra.mxu0 0.0
    %277 = vmatprep.subr.mxu0 0.0
    %278 = vmatpush1.msra.mxu0 0.0
    %279 = vmatprep.subr.mxu0 0.0
    %280 = vmatpush1.msra.mxu0 0.0
    %281 = vmatprep.subr.mxu0 0.0
    %282 = vmatpush1.msra.mxu0 0.0
    %283 = vmatprep.subr.mxu0 0.0
    %284 = vmatpush1.msra.mxu0 0.0
    %285 = vmatprep.subr.mxu0 0.0
    %286 = vmatpush1.msra.mxu0 0.0
    %287 = vmatprep.subr.mxu0 0.0
    %288 = vmatpush1.msra.mxu0 0.0
    %289 = vmatprep.subr.mxu0 0.0
    %290 = vmatpush1.msra.mxu0 0.0
    %291 = vmatprep.subr.mxu0 0.0
    %292 = vmatpush1.msra.mxu0 0.0
    %293 = vmatprep.subr.mxu0 0.0
    %294 = vmatpush1.msra.mxu0 0.0
    %295 = vmatprep.subr.mxu0 0.0
    %296 = vmatpush1.msra.mxu0 0.0
    %297 = vmatprep.subr.mxu0 0.0
    %298 = vmatpush1.msra.mxu0 0.0
    %299 = vmatprep.subr.mxu0 0.0
    %300 = vmatpush1.msra.mxu0 0.0
    %301 = vmatprep.subr.mxu0 0.0
    %302 = vmatpush1.msra.mxu0 0.0
    %303 = vmatprep.subr.mxu0 0.0
    %304 = vmatpush1.msra.mxu0 0.0
    %305 = vmatprep.subr.mxu0 0.0
    %306 = vmatpush1.msra.mxu0 0.0
    %307 = vmatprep.subr.mxu0 0.0
    %308 = vmatpush1.msra.mxu0 0.0
    %309 = vmatprep.subr.mxu0 0.0
    %310 = vmatpush1.msra.mxu0 0.0
    %311 = vmatprep.subr.mxu0 0.0
    %312 = vmatpush1.msra.mxu0 0.0
    %313 = vmatprep.subr.mxu0 0.0
    %314 = vmatpush1.msra.mxu0 0.0
    %315 = vmatprep.subr.mxu0 0.0
    %316 = vmatpush1.msra.mxu0 0.0
    %317 = vmatprep.subr.mxu0 0.0
    %318 = vmatpush1.msra.mxu0 0.0
    %319 = vmatprep.subr.mxu0 0.0
    %320 = vmatpush1.msra.mxu0 0.0
    %321 = vmatprep.subr.mxu0 0.0
    %322 = vmatpush1.msra.mxu0 0.0
    %323 = vmatprep.mubr.f32.mxu0 0.0
    %324 = vmatmul.mubr.f32.gmra.mrb[0].mxu0 %v257
    %v325 = vpop.f32.mrb[0].mxu0
    %v326 = vadd.f32 %v219, %v325
    %v327 = vpop.f32.mrb[0].mxu0
    %v328 = vadd.f32 %v223, %v327
    %329 = vdwg.mxu0
    %330 = vmatprep.subr.mxu0 %v153
    %331 = vmatpush1.msra.mxu0 %v152
    %332 = vmatprep.subr.mxu0 %v161
    %333 = vmatpush1.msra.mxu0 %v160
    %334 = vmatprep.subr.mxu0 %v169
    %335 = vmatpush1.msra.mxu0 %v168
    %336 = vmatprep.subr.mxu0 %v177
    %337 = vmatpush1.msra.mxu0 %v176
    %338 = vmatprep.subr.mxu0 %v185
    %339 = vmatpush1.msra.mxu0 %v184
    %340 = vmatprep.subr.mxu0 %v193
    %341 = vmatpush1.msra.mxu0 %v192
    %342 = vmatprep.subr.mxu0 %v201
    %343 = vmatpush1.msra.mxu0 %v200
    %344 = vmatprep.subr.mxu0 %v209
    %345 = vmatpush1.msra.mxu0 %v208
    %346 = vmatprep.subr.mxu0 0.0
    %347 = vmatpush1.msra.mxu0 0.0
    %348 = vmatprep.subr.mxu0 0.0
    %349 = vmatpush1.msra.mxu0 0.0
    %350 = vmatprep.subr.mxu0 0.0
    %351 = vmatpush1.msra.mxu0 0.0
    %352 = vmatprep.subr.mxu0 0.0
    %353 = vmatpush1.msra.mxu0 0.0
    %354 = vmatprep.subr.mxu0 0.0
    %355 = vmatpush1.msra.mxu0 0.0
    %356 = vmatprep.subr.mxu0 0.0
    %357 = vmatpush1.msra.mxu0 0.0
    %358 = vmatprep.subr.mxu0 0.0
    %359 = vmatpush1.msra.mxu0 0.0
    %360 = vmatprep.subr.mxu0 0.0
    %361 = vmatpush1.msra.mxu0 0.0
    %362 = vmatprep.subr.mxu0 0.0
    %363 = vmatpush1.msra.mxu0 0.0
    %364 = vmatprep.subr.mxu0 0.0
    %365 = vmatpush1.msra.mxu0 0.0
    %366 = vmatprep.subr.mxu0 0.0
    %367 = vmatpush1.msra.mxu0 0.0
    %368 = vmatprep.subr.mxu0 0.0
    %369 = vmatpush1.msra.mxu0 0.0
    %370 = vmatprep.subr.mxu0 0.0
    %371 = vmatpush1.msra.mxu0 0.0
    %372 = vmatprep.subr.mxu0 0.0
    %373 = vmatpush1.msra.mxu0 0.0
    %374 = vmatprep.subr.mxu0 0.0
    %375 = vmatpush1.msra.mxu0 0.0
    %376 = vmatprep.subr.mxu0 0.0
    %377 = vmatpush1.msra.mxu0 0.0
    %378 = vmatprep.subr.mxu0 0.0
    %379 = vmatpush1.msra.mxu0 0.0
    %380 = vmatprep.subr.mxu0 0.0
    %381 = vmatpush1.msra.mxu0 0.0
    %382 = vmatprep.subr.mxu0 0.0
    %383 = vmatpush1.msra.mxu0 0.0
    %384 = vmatprep.subr.mxu0 0.0
    %385 = vmatpush1.msra.mxu0 0.0
    %386 = vmatprep.subr.mxu0 0.0
    %387 = vmatpush1.msra.mxu0 0.0
    %388 = vmatprep.subr.mxu0 0.0
    %389 = vmatpush1.msra.mxu0 0.0
    %390 = vmatprep.subr.mxu0 0.0
    %391 = vmatpush1.msra.mxu0 0.0
    %392 = vmatprep.subr.mxu0 0.0
    %393 = vmatpush1.msra.mxu0 0.0
    %394 = vmatprep.mubr.f32.mxu0 0.0
    %395 = vmatmul.mubr.f32.gmra.mrb[0].mxu0 %v257
    %v396 = vpop.f32.mrb[0].mxu0
    %v397 = vadd.f32 %v227, %v396
    %v398 = vpop.f32.mrb[0].mxu0
    %v399 = vadd.f32 %v231, %v398
    %400 = vdwg.mxu0
    %401 = vmatprep.subr.mxu0 %v155
    %402 = vmatpush1.msra.mxu0 %v154
    %403 = vmatprep.subr.mxu0 %v163
    %404 = vmatpush1.msra.mxu0 %v162
    %405 = vmatprep.subr.mxu0 %v171
    %406 = vmatpush1.msra.mxu0 %v170
    %407 = vmatprep.subr.mxu0 %v179
    %408 = vmatpush1.msra.mxu0 %v178
    %409 = vmatprep.subr.mxu0 %v187
    %410 = vmatpush1.msra.mxu0 %v186
    %411 = vmatprep.subr.mxu0 %v195
    %412 = vmatpush1.msra.mxu0 %v194
    %413 = vmatprep.subr.mxu0 %v203
    %414 = vmatpush1.msra.mxu0 %v202
    %415 = vmatprep.subr.mxu0 %v211
    %416 = vmatpush1.msra.mxu0 %v210
    %417 = vmatprep.subr.mxu0 0.0
    %418 = vmatpush1.msra.mxu0 0.0
    %419 = vmatprep.subr.mxu0 0.0
    %420 = vmatpush1.msra.mxu0 0.0
    %421 = vmatprep.subr.mxu0 0.0
    %422 = vmatpush1.msra.mxu0 0.0
    %423 = vmatprep.subr.mxu0 0.0
    %424 = vmatpush1.msra.mxu0 0.0
    %425 = vmatprep.subr.mxu0 0.0
    %426 = vmatpush1.msra.mxu0 0.0
    %427 = vmatprep.subr.mxu0 0.0
    %428 = vmatpush1.msra.mxu0 0.0
    %429 = vmatprep.subr.mxu0 0.0
    %430 = vmatpush1.msra.mxu0 0.0
    %431 = vmatprep.subr.mxu0 0.0
    %432 = vmatpush1.msra.mxu0 0.0
    %433 = vmatprep.subr.mxu0 0.0
    %434 = vmatpush1.msra.mxu0 0.0
    %435 = vmatprep.subr.mxu0 0.0
    %436 = vmatpush1.msra.mxu0 0.0
    %437 = vmatprep.subr.mxu0 0.0
    %438 = vmatpush1.msra.mxu0 0.0
    %439 = vmatprep.subr.mxu0 0.0
    %440 = vmatpush1.msra.mxu0 0.0
    %441 = vmatprep.subr.mxu0 0.0
    %442 = vmatpush1.msra.mxu0 0.0
    %443 = vmatprep.subr.mxu0 0.0
    %444 = vmatpush1.msra.mxu0 0.0
    %445 = vmatprep.subr.mxu0 0.0
    %446 = vmatpush1.msra.mxu0 0.0
    %447 = vmatprep.subr.mxu0 0.0
    %448 = vmatpush1.msra.mxu0 0.0
    %449 = vmatprep.subr.mxu0 0.0
    %450 = vmatpush1.msra.mxu0 0.0
    %451 = vmatprep.subr.mxu0 0.0
    %452 = vmatpush1.msra.mxu0 0.0
    %453 = vmatprep.subr.mxu0 0.0
    %454 = vmatpush1.msra.mxu0 0.0
    %455 = vmatprep.subr.mxu0 0.0
    %456 = vmatpush1.msra.mxu0 0.0
    %457 = vmatprep.subr.mxu0 0.0
    %458 = vmatpush1.msra.mxu0 0.0
    %459 = vmatprep.subr.mxu0 0.0
    %460 = vmatpush1.msra.mxu0 0.0
    %461 = vmatprep.subr.mxu0 0.0
    %462 = vmatpush1.msra.mxu0 0.0
    %463 = vmatprep.subr.mxu0 0.0
    %464 = vmatpush1.msra.mxu0 0.0
    %465 = vmatprep.mubr.f32.mxu0 0.0
    %466 = vmatmul.mubr.f32.gmra.mrb[0].mxu0 %v257
    %v467 = vpop.f32.mrb[0].mxu0
    %v468 = vadd.f32 %v235, %v467
    %v469 = vpop.f32.mrb[0].mxu0
    %v470 = vadd.f32 %v239, %v469
    %471 = vdwg.mxu0
    %472 = vmatprep.subr.mxu0 %v157
    %473 = vmatpush1.msra.mxu0 %v156
    %474 = vmatprep.subr.mxu0 %v165
    %475 = vmatpush1.msra.mxu0 %v164
    %476 = vmatprep.subr.mxu0 %v173
    %477 = vmatpush1.msra.mxu0 %v172
    %478 = vmatprep.subr.mxu0 %v181
    %479 = vmatpush1.msra.mxu0 %v180
    %480 = vmatprep.subr.mxu0 %v189
    %481 = vmatpush1.msra.mxu0 %v188
    %482 = vmatprep.subr.mxu0 %v197
    %483 = vmatpush1.msra.mxu0 %v196
    %484 = vmatprep.subr.mxu0 %v205
    %485 = vmatpush1.msra.mxu0 %v204
    %486 = vmatprep.subr.mxu0 %v213
    %487 = vmatpush1.msra.mxu0 %v212
    %488 = vmatprep.subr.mxu0 0.0
    %489 = vmatpush1.msra.mxu0 0.0
    %490 = vmatprep.subr.mxu0 0.0
    %491 = vmatpush1.msra.mxu0 0.0
    %492 = vmatprep.subr.mxu0 0.0
    %493 = vmatpush1.msra.mxu0 0.0
    %494 = vmatprep.subr.mxu0 0.0
    %495 = vmatpush1.msra.mxu0 0.0
    %496 = vmatprep.subr.mxu0 0.0
    %497 = vmatpush1.msra.mxu0 0.0
    %498 = vmatprep.subr.mxu0 0.0
    %499 = vmatpush1.msra.mxu0 0.0
    %500 = vmatprep.subr.mxu0 0.0
    %501 = vmatpush1.msra.mxu0 0.0
    %502 = vmatprep.subr.mxu0 0.0
    %503 = vmatpush1.msra.mxu0 0.0
    %504 = vmatprep.subr.mxu0 0.0
    %505 = vmatpush1.msra.mxu0 0.0
    %506 = vmatprep.subr.mxu0 0.0
    %507 = vmatpush1.msra.mxu0 0.0
    %508 = vmatprep.subr.mxu0 0.0
    %509 = vmatpush1.msra.mxu0 0.0
    %510 = vmatprep.subr.mxu0 0.0
    %511 = vmatpush1.msra.mxu0 0.0
    %512 = vmatprep.subr.mxu0 0.0
    %513 = vmatpush1.msra.mxu0 0.0
    %514 = vmatprep.subr.mxu0 0.0
    %515 = vmatpush1.msra.mxu0 0.0
    %516 = vmatprep.subr.mxu0 0.0
    %517 = vmatpush1.msra.mxu0 0.0
    %518 = vmatprep.subr.mxu0 0.0
    %519 = vmatpush1.msra.mxu0 0.0
    %520 = vmatprep.subr.mxu0 0.0
    %521 = vmatpush1.msra.mxu0 0.0
    %522 = vmatprep.subr.mxu0 0.0
    %523 = vmatpush1.msra.mxu0 0.0
    %524 = vmatprep.subr.mxu0 0.0
    %525 = vmatpush1.msra.mxu0 0.0
    %526 = vmatprep.subr.mxu0 0.0
    %527 = vmatpush1.msra.mxu0 0.0
    %528 = vmatprep.subr.mxu0 0.0
    %529 = vmatpush1.msra.mxu0 0.0
    %530 = vmatprep.subr.mxu0 0.0
    %531 = vmatpush1.msra.mxu0 0.0
    %532 = vmatprep.subr.mxu0 0.0
    %533 = vmatpush1.msra.mxu0 0.0
    %534 = vmatprep.subr.mxu0 0.0
    %535 = vmatpush1.msra.mxu0 0.0
    %536 = vmatprep.mubr.f32.mxu0 0.0
    %537 = vmatmul.mubr.f32.gmra.mrb[0].mxu0 %v257
    %v538 = vpop.f32.mrb[0].mxu0
    %v539 = vadd.f32 %v243, %v538
    %v540 = vpop.f32.mrb[0].mxu0
    %v541 = vadd.f32 %v247, %v540
    %542 = vdwg.mxu0
    %vm543 = vcmask 517120
    %544 = vst.msk [vmem:[#allocation2] sm:$0x3] %vm543, %v137
    %546 = vrot.lane.b32.xlu0 %v137, 64
    %v547 = vpop.permute.xlu0 %546
    %549 = vst.msk [vmem:[#allocation4] sm:$0x3] %vm543, %v547
    %v558 = vcombine.low %v326, %v328
    %v559 = vcombine.low %v397, %v399
    %v561 = vunpack.c.l.s4 1983009808
    %v562 = vunpack.c.0.s8 %v561
    %v563 = vlaneseq
    %v564 = vshrl.u32 %v563, 7
    %v565 = vsub.s32 %v562, %v564
    %v566 = vrot.slane %v558, %v565
    %v568 = vunpack.c.l.s4 1983009808
    %v569 = vunpack.c.0.s8 %v568
    %v570 = vlaneseq
    %v571 = vshrl.u32 %v570, 7
    %v572 = vsub.s32 %v569, %v571
    %v573 = vrot.slane %v559, %v572
    %v574 = vcombine.low %v566, %v573
    %v575 = vcombine.low %v468, %v470
    %v576 = vcombine.low %v539, %v541
    %v578 = vunpack.c.l.s4 1983009808
    %v579 = vunpack.c.0.s8 %v578
    %v580 = vlaneseq
    %v581 = vshrl.u32 %v580, 7
    %v582 = vsub.s32 %v579, %v581
    %v583 = vrot.slane %v575, %v582
    %v585 = vunpack.c.l.s4 1983009808
    %v586 = vunpack.c.0.s8 %v585
    %v587 = vlaneseq
    %v588 = vshrl.u32 %v587, 7
    %v589 = vsub.s32 %v586, %v588
    %v590 = vrot.slane %v576, %v589
    %v591 = vcombine.low %v583, %v590
    %594 = vst [vmem:[%s8] sm:$0xff] %v574
    %595 = vst [vmem:[%s8 + $0x8] sm:$0xff] %v591
    // Predicated region
    $region26: #{retina_forward.14} parent=1 // pred_check
      _
    $region27: #{retina_forward.14} parent=1 // pred_check_branch
      %597 = sbr.rel (0) target = $region29
    $region28: #{retina_forward.14} parent=1 // pred_region
      %s599 = ssub.s32 32, 32
      %600 = vsyncadd [#allocation3], %s599
      %s602 = sshll.u32 [#allocation2], 4
      %s603 = int_to_ptr.vmem [resolvable:$true] %s602
      %605 = dma.vmem_to_hbm [thread:$0]  %s603, 32, %s6, [#allocation3]
    $region29: #{retina_forward.14} parent=1 // pred_fallthru
      _
    // Predicated region
    $region30: #{retina_forward.14} parent=1 // pred_check
      _
    $region31: #{retina_forward.14} parent=1 // pred_check_branch
      %607 = sbr.rel (0) target = $region33
    $region32: #{retina_forward.14} parent=1 // pred_region
      %s609 = ssub.s32 32, 32
      %610 = vsyncadd [#allocation5], %s609
      %s612 = sshll.u32 [#allocation4], 4
      %s613 = int_to_ptr.vmem [resolvable:$true] %s612
      %615 = dma.vmem_to_hbm [thread:$0]  %s613, 32, %s7, [#allocation5]
    $region33: #{retina_forward.14} parent=1 // pred_fallthru
      _
    // Predicated region
    $region34: #{retina_forward.14} parent=1 // pred_check
      _
    $region35: #{retina_forward.14} parent=1 // pred_check_branch
      %617 = sbr.rel (0) target = $region37
    $region36: #{retina_forward.14} parent=1 // pred_region
      _
    $region37: #{retina_forward.14} parent=1 // pred_fallthru
      _
    // Predicated region
    $region38: #{retina_forward.14} parent=1 // pred_check
      _
    $region39: #{retina_forward.14} parent=1 // pred_check_branch
      %619 = sbr.rel (0) target = $region41
    $region40: #{retina_forward.14} parent=1 // pred_region
      %620 = dma.done [#allocation3], 32
    $region41: #{retina_forward.14} parent=1 // pred_fallthru
      _
    // Predicated region
    $region42: #{retina_forward.14} parent=1 // pred_check
      _
    $region43: #{retina_forward.14} parent=1 // pred_check_branch
      %622 = sbr.rel (0) target = $region45
    $region44: #{retina_forward.14} parent=1 // pred_region
      %623 = dma.done [#allocation5], 32
    $region45: #{retina_forward.14} parent=1 // pred_fallthru
      _
    // Predicated region
    $region46: #{retina_forward.14} parent=1 // pred_check
      _
    $region47: #{retina_forward.14} parent=1 // pred_check_branch
      %625 = sbr.rel (0) target = $region49
    $region48: #{retina_forward.14} parent=1 // pred_region
      _
    $region49: #{retina_forward.14} parent=1 // pred_fallthru
      _
    %626 = vsyncpa [#allocation3], 1
    %627 = vsyncpa [#allocation5], 1

// kernel: retina_forward.13
$region0: #{retina_forward.13}
  #allocation0 [shape = 'u32[]', space=smem, size = 0x4, offset = 0x4, fixed_abs, tag = 'smem constant byte address 0x4 - core index']
  #allocation1 [shape = 'u32[144,128]{1,0:T(1,128)}', space=vmem, size = 0x12000, scoped, tag = 'internal scratch']
  %s0 = inlined_call_operand.vmem [shape: bf16[1,8,2048], index: 0, kind: input, shape index: {}]
  %s1 = inlined_call_operand.vmem [shape: bf16[1,2048,64], index: 1, kind: input, shape index: {}]
  %s2 = inlined_call_operand.vmem [shape: f32[1,64], index: 2, kind: input, shape index: {}]
  %s3 = inlined_call_operand.vmem [shape: f32[1,8,64], index: 3, kind: output, shape index: {}]
  %s4 = sld [smem:[#allocation0]]
  $region22: #{retina_forward.13} parent=0
    _
  %s6 = ssub.s32 1, %s4
  %s7 = scalar_select 0, %s6, %s4
  // Predicated region
  $region2: #{retina_forward.13} parent=0 // pred_check
    _
  $region3: #{retina_forward.13} parent=0 // pred_check_branch
    %9 = sbr.rel (0) target = $region5
  $region4: #{retina_forward.13} parent=0 // pred_region
    _
  $region5: #{retina_forward.13} parent=0 // pred_fallthru
    _
  // Predicated region
  $region6: #{retina_forward.13} parent=0 // pred_check
    _
  $region7: #{retina_forward.13} parent=0 // pred_check_branch
    %11 = sbr.rel (0) target = $region9
  $region8: #{retina_forward.13} parent=0 // pred_region
    _
  $region9: #{retina_forward.13} parent=0 // pred_fallthru
    _
  // Predicated region
  $region10: #{retina_forward.13} parent=0 // pred_check
    _
  $region11: #{retina_forward.13} parent=0 // pred_check_branch
    %13 = sbr.rel (0) target = $region13
  $region12: #{retina_forward.13} parent=0 // pred_region
    _
  $region13: #{retina_forward.13} parent=0 // pred_fallthru
    _
  %v15 = vld [vmem:[%s0] sm:$0xff]
  %v16 = vld [vmem:[%s0 + $0x8] sm:$0xff]
  %v17 = vld [vmem:[%s0 + $0x10] sm:$0xff]
  %v18 = vld [vmem:[%s0 + $0x18] sm:$0xff]
  %v19 = vld [vmem:[%s0 + $0x20] sm:$0xff]
  %v20 = vld [vmem:[%s0 + $0x28] sm:$0xff]
  %v21 = vld [vmem:[%s0 + $0x30] sm:$0xff]
  %v22 = vld [vmem:[%s0 + $0x38] sm:$0xff]
  %v23 = vld [vmem:[%s1] sm:$0xf]
  %v24 = vld [vmem:[%s1 + $0x4] sm:$0xf]
  %v25 = vld [vmem:[%s1 + $0x8] sm:$0xf]
  %v26 = vld [vmem:[%s1 + $0xc] sm:$0xf]
  %v27 = vld [vmem:[%s1 + $0x10] sm:$0xf]
  %v28 = vld [vmem:[%s1 + $0x14] sm:$0xf]
  %v29 = vld [vmem:[%s1 + $0x18] sm:$0xf]
  %v30 = vld [vmem:[%s1 + $0x1c] sm:$0xf]
  %v31 = vld [vmem:[%s1 + $0x20] sm:$0xf]
  %v32 = vld [vmem:[%s1 + $0x24] sm:$0xf]
  %v33 = vld [vmem:[%s1 + $0x28] sm:$0xf]
  %v34 = vld [vmem:[%s1 + $0x2c] sm:$0xf]
  %v35 = vld [vmem:[%s1 + $0x30] sm:$0xf]
  %v36 = vld [vmem:[%s1 + $0x34] sm:$0xf]
  %v37 = vld [vmem:[%s1 + $0x38] sm:$0xf]
  %v38 = vld [vmem:[%s1 + $0x3c] sm:$0xf]
  %v39 = vld [vmem:[%s1 + $0x40] sm:$0xf]
  %v40 = vld [vmem:[%s1 + $0x44] sm:$0xf]
  %v41 = vld [vmem:[%s1 + $0x48] sm:$0xf]
  %v42 = vld [vmem:[%s1 + $0x4c] sm:$0xf]
  %v43 = vld [vmem:[%s1 + $0x50] sm:$0xf]
  %v44 = vld [vmem:[%s1 + $0x54] sm:$0xf]
  %v45 = vld [vmem:[%s1 + $0x58] sm:$0xf]
  %v46 = vld [vmem:[%s1 + $0x5c] sm:$0xf]
  %v47 = vld [vmem:[%s1 + $0x60] sm:$0xf]
  %v48 = vld [vmem:[%s1 + $0x64] sm:$0xf]
  %v49 = vld [vmem:[%s1 + $0x68] sm:$0xf]
  %v50 = vld [vmem:[%s1 + $0x6c] sm:$0xf]
  %v51 = vld [vmem:[%s1 + $0x70] sm:$0xf]
  %v52 = vld [vmem:[%s1 + $0x74] sm:$0xf]
  %v53 = vld [vmem:[%s1 + $0x78] sm:$0xf]
  %v54 = vld [vmem:[%s1 + $0x7c] sm:$0xf]
  %v55 = vld [vmem:[%s1 + $0x80] sm:$0xf]
  %v56 = vld [vmem:[%s1 + $0x84] sm:$0xf]
  %v57 = vld [vmem:[%s1 + $0x88] sm:$0xf]
  %v58 = vld [vmem:[%s1 + $0x8c] sm:$0xf]
  %v59 = vld [vmem:[%s1 + $0x90] sm:$0xf]
  %v60 = vld [vmem:[%s1 + $0x94] sm:$0xf]
  %v61 = vld [vmem:[%s1 + $0x98] sm:$0xf]
  %v62 = vld [vmem:[%s1 + $0x9c] sm:$0xf]
  %v63 = vld [vmem:[%s1 + $0xa0] sm:$0xf]
  %v64 = vld [vmem:[%s1 + $0xa4] sm:$0xf]
  %v65 = vld [vmem:[%s1 + $0xa8] sm:$0xf]
  %v66 = vld [vmem:[%s1 + $0xac] sm:$0xf]
  %v67 = vld [vmem:[%s1 + $0xb0] sm:$0xf]
  %v68 = vld [vmem:[%s1 + $0xb4] sm:$0xf]
  %v69 = vld [vmem:[%s1 + $0xb8] sm:$0xf]
  %v70 = vld [vmem:[%s1 + $0xbc] sm:$0xf]
  %v71 = vld [vmem:[%s1 + $0xc0] sm:$0xf]
  %v72 = vld [vmem:[%s1 + $0xc4] sm:$0xf]
  %v73 = vld [vmem:[%s1 + $0xc8] sm:$0xf]
  %v74 = vld [vmem:[%s1 + $0xcc] sm:$0xf]
  %v75 = vld [vmem:[%s1 + $0xd0] sm:$0xf]
  %v76 = vld [vmem:[%s1 + $0xd4] sm:$0xf]
  %v77 = vld [vmem:[%s1 + $0xd8] sm:$0xf]
  %v78 = vld [vmem:[%s1 + $0xdc] sm:$0xf]
  %v79 = vld [vmem:[%s1 + $0xe0] sm:$0xf]
  %v80 = vld [vmem:[%s1 + $0xe4] sm:$0xf]
  %v81 = vld [vmem:[%s1 + $0xe8] sm:$0xf]
  %v82 = vld [vmem:[%s1 + $0xec] sm:$0xf]
  %v83 = vld [vmem:[%s1 + $0xf0] sm:$0xf]
  %v84 = vld [vmem:[%s1 + $0xf4] sm:$0xf]
  %v85 = vld [vmem:[%s1 + $0xf8] sm:$0xf]
  %v86 = vld [vmem:[%s1 + $0xfc] sm:$0xf]
  %v87 = vld [vmem:[%s1 + $0x100] sm:$0xf]
  %v88 = vld [vmem:[%s1 + $0x104] sm:$0xf]
  %v89 = vld [vmem:[%s1 + $0x108] sm:$0xf]
  %v90 = vld [vmem:[%s1 + $0x10c] sm:$0xf]
  %v91 = vld [vmem:[%s1 + $0x110] sm:$0xf]
  %v92 = vld [vmem:[%s1 + $0x114] sm:$0xf]
  %v93 = vld [vmem:[%s1 + $0x118] sm:$0xf]
  %v94 = vld [vmem:[%s1 + $0x11c] sm:$0xf]
  %v95 = vld [vmem:[%s1 + $0x120] sm:$0xf]
  %v96 = vld [vmem:[%s1 + $0x124] sm:$0xf]
  %v97 = vld [vmem:[%s1 + $0x128] sm:$0xf]
  %v98 = vld [vmem:[%s1 + $0x12c] sm:$0xf]
  %v99 = vld [vmem:[%s1 + $0x130] sm:$0xf]
  %v100 = vld [vmem:[%s1 + $0x134] sm:$0xf]
  %v101 = vld [vmem:[%s1 + $0x138] sm:$0xf]
  %v102 = vld [vmem:[%s1 + $0x13c] sm:$0xf]
  %v103 = vld [vmem:[%s1 + $0x140] sm:$0xf]
  %v104 = vld [vmem:[%s1 + $0x144] sm:$0xf]
  %v105 = vld [vmem:[%s1 + $0x148] sm:$0xf]
  %v106 = vld [vmem:[%s1 + $0x14c] sm:$0xf]
  %v107 = vld [vmem:[%s1 + $0x150] sm:$0xf]
  %v108 = vld [vmem:[%s1 + $0x154] sm:$0xf]
  %v109 = vld [vmem:[%s1 + $0x158] sm:$0xf]
  %v110 = vld [vmem:[%s1 + $0x15c] sm:$0xf]
  %v111 = vld [vmem:[%s1 + $0x160] sm:$0xf]
  %v112 = vld [vmem:[%s1 + $0x164] sm:$0xf]
  %v113 = vld [vmem:[%s1 + $0x168] sm:$0xf]
  %v114 = vld [vmem:[%s1 + $0x16c] sm:$0xf]
  %v115 = vld [vmem:[%s1 + $0x170] sm:$0xf]
  %v116 = vld [vmem:[%s1 + $0x174] sm:$0xf]
  %v117 = vld [vmem:[%s1 + $0x178] sm:$0xf]
  %v118 = vld [vmem:[%s1 + $0x17c] sm:$0xf]
  %v119 = vld [vmem:[%s1 + $0x180] sm:$0xf]
  %v120 = vld [vmem:[%s1 + $0x184] sm:$0xf]
  %v121 = vld [vmem:[%s1 + $0x188] sm:$0xf]
  %v122 = vld [vmem:[%s1 + $0x18c] sm:$0xf]
  %v123 = vld [vmem:[%s1 + $0x190] sm:$0xf]
  %v124 = vld [vmem:[%s1 + $0x194] sm:$0xf]
  %v125 = vld [vmem:[%s1 + $0x198] sm:$0xf]
  %v126 = vld [vmem:[%s1 + $0x19c] sm:$0xf]
  %v127 = vld [vmem:[%s1 + $0x1a0] sm:$0xf]
  %v128 = vld [vmem:[%s1 + $0x1a4] sm:$0xf]
  %v129 = vld [vmem:[%s1 + $0x1a8] sm:$0xf]
  %v130 = vld [vmem:[%s1 + $0x1ac] sm:$0xf]
  %v131 = vld [vmem:[%s1 + $0x1b0] sm:$0xf]
  %v132 = vld [vmem:[%s1 + $0x1b4] sm:$0xf]
  %v133 = vld [vmem:[%s1 + $0x1b8] sm:$0xf]
  %v134 = vld [vmem:[%s1 + $0x1bc] sm:$0xf]
  %v135 = vld [vmem:[%s1 + $0x1c0] sm:$0xf]
  %v136 = vld [vmem:[%s1 + $0x1c4] sm:$0xf]
  %v137 = vld [vmem:[%s1 + $0x1c8] sm:$0xf]
  %v138 = vld [vmem:[%s1 + $0x1cc] sm:$0xf]
  %v139 = vld [vmem:[%s1 + $0x1d0] sm:$0xf]
  %v140 = vld [vmem:[%s1 + $0x1d4] sm:$0xf]
  %v141 = vld [vmem:[%s1 + $0x1d8] sm:$0xf]
  %v142 = vld [vmem:[%s1 + $0x1dc] sm:$0xf]
  %v143 = vld [vmem:[%s1 + $0x1e0] sm:$0xf]
  %v144 = vld [vmem:[%s1 + $0x1e4] sm:$0xf]
  %v145 = vld [vmem:[%s1 + $0x1e8] sm:$0xf]
  %v146 = vld [vmem:[%s1 + $0x1ec] sm:$0xf]
  %v147 = vld [vmem:[%s1 + $0x1f0] sm:$0xf]
  %v148 = vld [vmem:[%s1 + $0x1f4] sm:$0xf]
  %v149 = vld [vmem:[%s1 + $0x1f8] sm:$0xf]
  %v150 = vld [vmem:[%s1 + $0x1fc] sm:$0xf]
  %v151 = vld [vmem:[%s1 + $0x200] sm:$0xf]
  %v152 = vld [vmem:[%s1 + $0x204] sm:$0xf]
  %v153 = vld [vmem:[%s1 + $0x208] sm:$0xf]
  %v154 = vld [vmem:[%s1 + $0x20c] sm:$0xf]
  %v155 = vld [vmem:[%s1 + $0x210] sm:$0xf]
  %v156 = vld [vmem:[%s1 + $0x214] sm:$0xf]
  %v157 = vld [vmem:[%s1 + $0x218] sm:$0xf]
  %v158 = vld [vmem:[%s1 + $0x21c] sm:$0xf]
  %v159 = vld [vmem:[%s1 + $0x220] sm:$0xf]
  %v160 = vld [vmem:[%s1 + $0x224] sm:$0xf]
  %v161 = vld [vmem:[%s1 + $0x228] sm:$0xf]
  %v162 = vld [vmem:[%s1 + $0x22c] sm:$0xf]
  %v163 = vld [vmem:[%s1 + $0x230] sm:$0xf]
  %v164 = vld [vmem:[%s1 + $0x234] sm:$0xf]
  %v165 = vld [vmem:[%s1 + $0x238] sm:$0xf]
  %v166 = vld [vmem:[%s1 + $0x23c] sm:$0xf]
  %v167 = vld [vmem:[%s1 + $0x240] sm:$0xf]
  %v168 = vld [vmem:[%s1 + $0x244] sm:$0xf]
  %v169 = vld [vmem:[%s1 + $0x248] sm:$0xf]
  %v170 = vld [vmem:[%s1 + $0x24c] sm:$0xf]
  %v171 = vld [vmem:[%s1 + $0x250] sm:$0xf]
  %v172 = vld [vmem:[%s1 + $0x254] sm:$0xf]
  %v173 = vld [vmem:[%s1 + $0x258] sm:$0xf]
  %v174 = vld [vmem:[%s1 + $0x25c] sm:$0xf]
  %v175 = vld [vmem:[%s1 + $0x260] sm:$0xf]
  %v176 = vld [vmem:[%s1 + $0x264] sm:$0xf]
  %v177 = vld [vmem:[%s1 + $0x268] sm:$0xf]
  %v178 = vld [vmem:[%s1 + $0x26c] sm:$0xf]
  %v179 = vld [vmem:[%s1 + $0x270] sm:$0xf]
  %v180 = vld [vmem:[%s1 + $0x274] sm:$0xf]
  %v181 = vld [vmem:[%s1 + $0x278] sm:$0xf]
  %v182 = vld [vmem:[%s1 + $0x27c] sm:$0xf]
  %v183 = vld [vmem:[%s1 + $0x280] sm:$0xf]
  %v184 = vld [vmem:[%s1 + $0x284] sm:$0xf]
  %v185 = vld [vmem:[%s1 + $0x288] sm:$0xf]
  %v186 = vld [vmem:[%s1 + $0x28c] sm:$0xf]
  %v187 = vld [vmem:[%s1 + $0x290] sm:$0xf]
  %v188 = vld [vmem:[%s1 + $0x294] sm:$0xf]
  %v189 = vld [vmem:[%s1 + $0x298] sm:$0xf]
  %v190 = vld [vmem:[%s1 + $0x29c] sm:$0xf]
  %v191 = vld [vmem:[%s1 + $0x2a0] sm:$0xf]
  %v192 = vld [vmem:[%s1 + $0x2a4] sm:$0xf]
  %v193 = vld [vmem:[%s1 + $0x2a8] sm:$0xf]
  %v194 = vld [vmem:[%s1 + $0x2ac] sm:$0xf]
  %v195 = vld [vmem:[%s1 + $0x2b0] sm:$0xf]
  %v196 = vld [vmem:[%s1 + $0x2b4] sm:$0xf]
  %v197 = vld [vmem:[%s1 + $0x2b8] sm:$0xf]
  %v198 = vld [vmem:[%s1 + $0x2bc] sm:$0xf]
  %v199 = vld [vmem:[%s1 + $0x2c0] sm:$0xf]
  %v200 = vld [vmem:[%s1 + $0x2c4] sm:$0xf]
  %v201 = vld [vmem:[%s1 + $0x2c8] sm:$0xf]
  %v202 = vld [vmem:[%s1 + $0x2cc] sm:$0xf]
  %v203 = vld [vmem:[%s1 + $0x2d0] sm:$0xf]
  %v204 = vld [vmem:[%s1 + $0x2d4] sm:$0xf]
  %v205 = vld [vmem:[%s1 + $0x2d8] sm:$0xf]
  %v206 = vld [vmem:[%s1 + $0x2dc] sm:$0xf]
  %v207 = vld [vmem:[%s1 + $0x2e0] sm:$0xf]
  %v208 = vld [vmem:[%s1 + $0x2e4] sm:$0xf]
  %v209 = vld [vmem:[%s1 + $0x2e8] sm:$0xf]
  %v210 = vld [vmem:[%s1 + $0x2ec] sm:$0xf]
  %v211 = vld [vmem:[%s1 + $0x2f0] sm:$0xf]
  %v212 = vld [vmem:[%s1 + $0x2f4] sm:$0xf]
  %v213 = vld [vmem:[%s1 + $0x2f8] sm:$0xf]
  %v214 = vld [vmem:[%s1 + $0x2fc] sm:$0xf]
  %v215 = vld [vmem:[%s1 + $0x300] sm:$0xf]
  %v216 = vld [vmem:[%s1 + $0x304] sm:$0xf]
  %v217 = vld [vmem:[%s1 + $0x308] sm:$0xf]
  %v218 = vld [vmem:[%s1 + $0x30c] sm:$0xf]
  %v219 = vld [vmem:[%s1 + $0x310] sm:$0xf]
  %v220 = vld [vmem:[%s1 + $0x314] sm:$0xf]
  %v221 = vld [vmem:[%s1 + $0x318] sm:$0xf]
  %v222 = vld [vmem:[%s1 + $0x31c] sm:$0xf]
  %v223 = vld [vmem:[%s1 + $0x320] sm:$0xf]
  %v224 = vld [vmem:[%s1 + $0x324] sm:$0xf]
  %v225 = vld [vmem:[%s1 + $0x328] sm:$0xf]
  %v226 = vld [vmem:[%s1 + $0x32c] sm:$0xf]
  %v227 = vld [vmem:[%s1 + $0x330] sm:$0xf]
  %v228 = vld [vmem:[%s1 + $0x334] sm:$0xf]
  %v229 = vld [vmem:[%s1 + $0x338] sm:$0xf]
  %v230 = vld [vmem:[%s1 + $0x33c] sm:$0xf]
  %v231 = vld [vmem:[%s1 + $0x340] sm:$0xf]
  %v232 = vld [vmem:[%s1 + $0x344] sm:$0xf]
  %v233 = vld [vmem:[%s1 + $0x348] sm:$0xf]
  %v234 = vld [vmem:[%s1 + $0x34c] sm:$0xf]
  %v235 = vld [vmem:[%s1 + $0x350] sm:$0xf]
  %v236 = vld [vmem:[%s1 + $0x354] sm:$0xf]
  %v237 = vld [vmem:[%s1 + $0x358] sm:$0xf]
  %v238 = vld [vmem:[%s1 + $0x35c] sm:$0xf]
  %v239 = vld [vmem:[%s1 + $0x360] sm:$0xf]
  %v240 = vld [vmem:[%s1 + $0x364] sm:$0xf]
  %v241 = vld [vmem:[%s1 + $0x368] sm:$0xf]
  %v242 = vld [vmem:[%s1 + $0x36c] sm:$0xf]
  %v243 = vld [vmem:[%s1 + $0x370] sm:$0xf]
  %v244 = vld [vmem:[%s1 + $0x374] sm:$0xf]
  %v245 = vld [vmem:[%s1 + $0x378] sm:$0xf]
  %v246 = vld [vmem:[%s1 + $0x37c] sm:$0xf]
  %v247 = vld [vmem:[%s1 + $0x380] sm:$0xf]
  %v248 = vld [vmem:[%s1 + $0x384] sm:$0xf]
  %v249 = vld [vmem:[%s1 + $0x388] sm:$0xf]
  %v250 = vld [vmem:[%s1 + $0x38c] sm:$0xf]
  %v251 = vld [vmem:[%s1 + $0x390] sm:$0xf]
  %v252 = vld [vmem:[%s1 + $0x394] sm:$0xf]
  %v253 = vld [vmem:[%s1 + $0x398] sm:$0xf]
  %v254 = vld [vmem:[%s1 + $0x39c] sm:$0xf]
  %v255 = vld [vmem:[%s1 + $0x3a0] sm:$0xf]
  %v256 = vld [vmem:[%s1 + $0x3a4] sm:$0xf]
  %v257 = vld [vmem:[%s1 + $0x3a8] sm:$0xf]
  %v258 = vld [vmem:[%s1 + $0x3ac] sm:$0xf]
  %v259 = vld [vmem:[%s1 + $0x3b0] sm:$0xf]
  %v260 = vld [vmem:[%s1 + $0x3b4] sm:$0xf]
  %v261 = vld [vmem:[%s1 + $0x3b8] sm:$0xf]
  %v262 = vld [vmem:[%s1 + $0x3bc] sm:$0xf]
  %v263 = vld [vmem:[%s1 + $0x3c0] sm:$0xf]
  %v264 = vld [vmem:[%s1 + $0x3c4] sm:$0xf]
  %v265 = vld [vmem:[%s1 + $0x3c8] sm:$0xf]
  %v266 = vld [vmem:[%s1 + $0x3cc] sm:$0xf]
  %v267 = vld [vmem:[%s1 + $0x3d0] sm:$0xf]
  %v268 = vld [vmem:[%s1 + $0x3d4] sm:$0xf]
  %v269 = vld [vmem:[%s1 + $0x3d8] sm:$0xf]
  %v270 = vld [vmem:[%s1 + $0x3dc] sm:$0xf]
  %v271 = vld [vmem:[%s1 + $0x3e0] sm:$0xf]
  %v272 = vld [vmem:[%s1 + $0x3e4] sm:$0xf]
  %v273 = vld [vmem:[%s1 + $0x3e8] sm:$0xf]
  %v274 = vld [vmem:[%s1 + $0x3ec] sm:$0xf]
  %v275 = vld [vmem:[%s1 + $0x3f0] sm:$0xf]
  %v276 = vld [vmem:[%s1 + $0x3f4] sm:$0xf]
  %v277 = vld [vmem:[%s1 + $0x3f8] sm:$0xf]
  %v278 = vld [vmem:[%s1 + $0x3fc] sm:$0xf]
  %v279 = vld [vmem:[%s2] sm:$0x1]
  %v281 = vlaneseq
  %v282 = vshrl.u32 %v281, 7
  %v283 = vsub.s32 0, %v282
  %v284 = vrot.slane %v279, %v283
  %v294 = vunpack.c.l.b16 %v15
  %v295 = vunpack.c.h.b16 %v15
  %v296 = vunpack.c.l.b16 %v16
  %v297 = vunpack.c.h.b16 %v16
  %v298 = vunpack.c.l.b16 %v17
  %v299 = vunpack.c.h.b16 %v17
  %v300 = vunpack.c.l.b16 %v18
  %v301 = vunpack.c.h.b16 %v18
  %v302 = vunpack.c.l.b16 %v19
  %v303 = vunpack.c.h.b16 %v19
  %v304 = vunpack.c.l.b16 %v20
  %v305 = vunpack.c.h.b16 %v20
  %v306 = vunpack.c.l.b16 %v21
  %v307 = vunpack.c.h.b16 %v21
  %v308 = vunpack.c.l.b16 %v22
  %v309 = vunpack.c.h.b16 %v22
  %v310 = vpack.c.b16 %v294, %v294
  %v311 = vpack.c.b16 %v295, %v295
  %v312 = vpack.c.b16 %v296, %v296
  %v313 = vpack.c.b16 %v297, %v297
  %v314 = vpack.c.b16 %v298, %v298
  %v315 = vpack.c.b16 %v299, %v299
  %v316 = vpack.c.b16 %v300, %v300
  %v317 = vpack.c.b16 %v301, %v301
  %v318 = vpack.c.b16 %v302, %v302
  %v319 = vpack.c.b16 %v303, %v303
  %v320 = vpack.c.b16 %v304, %v304
  %v321 = vpack.c.b16 %v305, %v305
  %v322 = vpack.c.b16 %v306, %v306
  %v323 = vpack.c.b16 %v307, %v307
  %v324 = vpack.c.b16 %v308, %v308
  %v325 = vpack.c.b16 %v309, %v309
  %v598 = vunpack.c.l.b16 %v23
  %v599 = vunpack.c.l.b16 %v24
  %v600 = vunpack.c.l.b16 %v25
  %v601 = vunpack.c.l.b16 %v26
  %v602 = vunpack.c.l.b16 %v27
  %v603 = vunpack.c.l.b16 %v28
  %v604 = vunpack.c.l.b16 %v29
  %v605 = vunpack.c.l.b16 %v30
  %v606 = vunpack.c.l.b16 %v31
  %v607 = vunpack.c.l.b16 %v32
  %v608 = vunpack.c.l.b16 %v33
  %v609 = vunpack.c.l.b16 %v34
  %v610 = vunpack.c.l.b16 %v35
  %v611 = vunpack.c.l.b16 %v36
  %v612 = vunpack.c.l.b16 %v37
  %v613 = vunpack.c.l.b16 %v38
  %v614 = vunpack.c.l.b16 %v39
  %v615 = vunpack.c.l.b16 %v40
  %v616 = vunpack.c.l.b16 %v41
  %v617 = vunpack.c.l.b16 %v42
  %v618 = vunpack.c.l.b16 %v43
  %v619 = vunpack.c.l.b16 %v44
  %v620 = vunpack.c.l.b16 %v45
  %v621 = vunpack.c.l.b16 %v46
  %v622 = vunpack.c.l.b16 %v47
  %v623 = vunpack.c.l.b16 %v48
  %v624 = vunpack.c.l.b16 %v49
  %v625 = vunpack.c.l.b16 %v50
  %v626 = vunpack.c.l.b16 %v51
  %v627 = vunpack.c.l.b16 %v52
  %v628 = vunpack.c.l.b16 %v53
  %v629 = vunpack.c.l.b16 %v54
  %v630 = vunpack.c.l.b16 %v55
  %v631 = vunpack.c.l.b16 %v56
  %v632 = vunpack.c.l.b16 %v57
  %v633 = vunpack.c.l.b16 %v58
  %v634 = vunpack.c.l.b16 %v59
  %v635 = vunpack.c.l.b16 %v60
  %v636 = vunpack.c.l.b16 %v61
  %v637 = vunpack.c.l.b16 %v62
  %v638 = vunpack.c.l.b16 %v63
  %v639 = vunpack.c.l.b16 %v64
  %v640 = vunpack.c.l.b16 %v65
  %v641 = vunpack.c.l.b16 %v66
  %v642 = vunpack.c.l.b16 %v67
  %v643 = vunpack.c.l.b16 %v68
  %v644 = vunpack.c.l.b16 %v69
  %v645 = vunpack.c.l.b16 %v70
  %v646 = vunpack.c.l.b16 %v71
  %v647 = vunpack.c.l.b16 %v72
  %v648 = vunpack.c.l.b16 %v73
  %v649 = vunpack.c.l.b16 %v74
  %v650 = vunpack.c.l.b16 %v75
  %v651 = vunpack.c.l.b16 %v76
  %v652 = vunpack.c.l.b16 %v77
  %v653 = vunpack.c.l.b16 %v78
  %v654 = vunpack.c.l.b16 %v79
  %v655 = vunpack.c.l.b16 %v80
  %v656 = vunpack.c.l.b16 %v81
  %v657 = vunpack.c.l.b16 %v82
  %v658 = vunpack.c.l.b16 %v83
  %v659 = vunpack.c.l.b16 %v84
  %v660 = vunpack.c.l.b16 %v85
  %v661 = vunpack.c.l.b16 %v86
  %v662 = vunpack.c.l.b16 %v87
  %v663 = vunpack.c.l.b16 %v88
  %v664 = vunpack.c.l.b16 %v89
  %v665 = vunpack.c.l.b16 %v90
  %v666 = vunpack.c.l.b16 %v91
  %v667 = vunpack.c.l.b16 %v92
  %v668 = vunpack.c.l.b16 %v93
  %v669 = vunpack.c.l.b16 %v94
  %v670 = vunpack.c.l.b16 %v95
  %v671 = vunpack.c.l.b16 %v96
  %v672 = vunpack.c.l.b16 %v97
  %v673 = vunpack.c.l.b16 %v98
  %v674 = vunpack.c.l.b16 %v99
  %v675 = vunpack.c.l.b16 %v100
  %v676 = vunpack.c.l.b16 %v101
  %v677 = vunpack.c.l.b16 %v102
  %v678 = vunpack.c.l.b16 %v103
  %v679 = vunpack.c.l.b16 %v104
  %v680 = vunpack.c.l.b16 %v105
  %v681 = vunpack.c.l.b16 %v106
  %v682 = vunpack.c.l.b16 %v107
  %v683 = vunpack.c.l.b16 %v108
  %v684 = vunpack.c.l.b16 %v109
  %v685 = vunpack.c.l.b16 %v110
  %v686 = vunpack.c.l.b16 %v111
  %v687 = vunpack.c.l.b16 %v112
  %v688 = vunpack.c.l.b16 %v113
  %v689 = vunpack.c.l.b16 %v114
  %v690 = vunpack.c.l.b16 %v115
  %v691 = vunpack.c.l.b16 %v116
  %v692 = vunpack.c.l.b16 %v117
  %v693 = vunpack.c.l.b16 %v118
  %v694 = vunpack.c.l.b16 %v119
  %v695 = vunpack.c.l.b16 %v120
  %v696 = vunpack.c.l.b16 %v121
  %v697 = vunpack.c.l.b16 %v122
  %v698 = vunpack.c.l.b16 %v123
  %v699 = vunpack.c.l.b16 %v124
  %v700 = vunpack.c.l.b16 %v125
  %v701 = vunpack.c.l.b16 %v126
  %v702 = vunpack.c.l.b16 %v127
  %v703 = vunpack.c.l.b16 %v128
  %v704 = vunpack.c.l.b16 %v129
  %v705 = vunpack.c.l.b16 %v130
  %v706 = vunpack.c.l.b16 %v131
  %v707 = vunpack.c.l.b16 %v132
  %v708 = vunpack.c.l.b16 %v133
  %v709 = vunpack.c.l.b16 %v134
  %v710 = vunpack.c.l.b16 %v135
  %v711 = vunpack.c.l.b16 %v136
  %v712 = vunpack.c.l.b16 %v137
  %v713 = vunpack.c.l.b16 %v138
  %v714 = vunpack.c.l.b16 %v139
  %v715 = vunpack.c.l.b16 %v140
  %v716 = vunpack.c.l.b16 %v141
  %v717 = vunpack.c.l.b16 %v142
  %v718 = vunpack.c.l.b16 %v143
  %v719 = vunpack.c.l.b16 %v144
  %v720 = vunpack.c.l.b16 %v145
  %v721 = vunpack.c.l.b16 %v146
  %v722 = vunpack.c.l.b16 %v147
  %v723 = vunpack.c.l.b16 %v148
  %v724 = vunpack.c.l.b16 %v149
  %v725 = vunpack.c.l.b16 %v150
  %v726 = vunpack.c.l.b16 %v151
  %v727 = vunpack.c.l.b16 %v152
  %v728 = vunpack.c.l.b16 %v153
  %v729 = vunpack.c.l.b16 %v154
  %v730 = vunpack.c.l.b16 %v155
  %v731 = vunpack.c.l.b16 %v156
  %v732 = vunpack.c.l.b16 %v157
  %v733 = vunpack.c.l.b16 %v158
  %v734 = vunpack.c.l.b16 %v159
  %v735 = vunpack.c.l.b16 %v160
  %v736 = vunpack.c.l.b16 %v161
  %v737 = vunpack.c.l.b16 %v162
  %v738 = vunpack.c.l.b16 %v163
  %v739 = vunpack.c.l.b16 %v164
  %v740 = vunpack.c.l.b16 %v165
  %v741 = vunpack.c.l.b16 %v166
  %v742 = vunpack.c.l.b16 %v167
  %v743 = vunpack.c.l.b16 %v168
  %v744 = vunpack.c.l.b16 %v169
  %v745 = vunpack.c.l.b16 %v170
  %v746 = vunpack.c.l.b16 %v171
  %v747 = vunpack.c.l.b16 %v172
  %v748 = vunpack.c.l.b16 %v173
  %v749 = vunpack.c.l.b16 %v174
  %v750 = vunpack.c.l.b16 %v175
  %v751 = vunpack.c.l.b16 %v176
  %v752 = vunpack.c.l.b16 %v177
  %v753 = vunpack.c.l.b16 %v178
  %v754 = vunpack.c.l.b16 %v179
  %v755 = vunpack.c.l.b16 %v180
  %v756 = vunpack.c.l.b16 %v181
  %v757 = vunpack.c.l.b16 %v182
  %v758 = vunpack.c.l.b16 %v183
  %v759 = vunpack.c.l.b16 %v184
  %v760 = vunpack.c.l.b16 %v185
  %v761 = vunpack.c.l.b16 %v186
  %v762 = vunpack.c.l.b16 %v187
  %v763 = vunpack.c.l.b16 %v188
  %v764 = vunpack.c.l.b16 %v189
  %v765 = vunpack.c.l.b16 %v190
  %v766 = vunpack.c.l.b16 %v191
  %v767 = vunpack.c.l.b16 %v192
  %v768 = vunpack.c.l.b16 %v193
  %v769 = vunpack.c.l.b16 %v194
  %v770 = vunpack.c.l.b16 %v195
  %v771 = vunpack.c.l.b16 %v196
  %v772 = vunpack.c.l.b16 %v197
  %v773 = vunpack.c.l.b16 %v198
  %v774 = vunpack.c.l.b16 %v199
  %v775 = vunpack.c.l.b16 %v200
  %v776 = vunpack.c.l.b16 %v201
  %v777 = vunpack.c.l.b16 %v202
  %v778 = vunpack.c.l.b16 %v203
  %v779 = vunpack.c.l.b16 %v204
  %v780 = vunpack.c.l.b16 %v205
  %v781 = vunpack.c.l.b16 %v206
  %v782 = vunpack.c.l.b16 %v207
  %v783 = vunpack.c.l.b16 %v208
  %v784 = vunpack.c.l.b16 %v209
  %v785 = vunpack.c.l.b16 %v210
  %v786 = vunpack.c.l.b16 %v211
  %v787 = vunpack.c.l.b16 %v212
  %v788 = vunpack.c.l.b16 %v213
  %v789 = vunpack.c.l.b16 %v214
  %v790 = vunpack.c.l.b16 %v215
  %v791 = vunpack.c.l.b16 %v216
  %v792 = vunpack.c.l.b16 %v217
  %v793 = vunpack.c.l.b16 %v218
  %v794 = vunpack.c.l.b16 %v219
  %v795 = vunpack.c.l.b16 %v220
  %v796 = vunpack.c.l.b16 %v221
  %v797 = vunpack.c.l.b16 %v222
  %v798 = vunpack.c.l.b16 %v223
  %v799 = vunpack.c.l.b16 %v224
  %v800 = vunpack.c.l.b16 %v225
  %v801 = vunpack.c.l.b16 %v226
  %v802 = vunpack.c.l.b16 %v227
  %v803 = vunpack.c.l.b16 %v228
  %v804 = vunpack.c.l.b16 %v229
  %v805 = vunpack.c.l.b16 %v230
  %v806 = vunpack.c.l.b16 %v231
  %v807 = vunpack.c.l.b16 %v232
  %v808 = vunpack.c.l.b16 %v233
  %v809 = vunpack.c.l.b16 %v234
  %v810 = vunpack.c.l.b16 %v235
  %v811 = vunpack.c.l.b16 %v236
  %v812 = vunpack.c.l.b16 %v237
  %v813 = vunpack.c.l.b16 %v238
  %v814 = vunpack.c.l.b16 %v239
  %v815 = vunpack.c.l.b16 %v240
  %v816 = vunpack.c.l.b16 %v241
  %v817 = vunpack.c.l.b16 %v242
  %v818 = vunpack.c.l.b16 %v243
  %v819 = vunpack.c.l.b16 %v244
  %v820 = vunpack.c.l.b16 %v245
  %v821 = vunpack.c.l.b16 %v246
  %v822 = vunpack.c.l.b16 %v247
  %v823 = vunpack.c.l.b16 %v248
  %v824 = vunpack.c.l.b16 %v249
  %v825 = vunpack.c.l.b16 %v250
  %v826 = vunpack.c.l.b16 %v251
  %v827 = vunpack.c.l.b16 %v252
  %v828 = vunpack.c.l.b16 %v253
  %v829 = vunpack.c.l.b16 %v254
  %v830 = vunpack.c.l.b16 %v255
  %v831 = vunpack.c.l.b16 %v256
  %v832 = vunpack.c.l.b16 %v257
  %v833 = vunpack.c.l.b16 %v258
  %v834 = vunpack.c.l.b16 %v259
  %v835 = vunpack.c.l.b16 %v260
  %v836 = vunpack.c.l.b16 %v261
  %v837 = vunpack.c.l.b16 %v262
  %v838 = vunpack.c.l.b16 %v263
  %v839 = vunpack.c.l.b16 %v264
  %v840 = vunpack.c.l.b16 %v265
  %v841 = vunpack.c.l.b16 %v266
  %v842 = vunpack.c.l.b16 %v267
  %v843 = vunpack.c.l.b16 %v268
  %v844 = vunpack.c.l.b16 %v269
  %v845 = vunpack.c.l.b16 %v270
  %v846 = vunpack.c.l.b16 %v271
  %v847 = vunpack.c.l.b16 %v272
  %v848 = vunpack.c.l.b16 %v273
  %v849 = vunpack.c.l.b16 %v274
  %v850 = vunpack.c.l.b16 %v275
  %v851 = vunpack.c.l.b16 %v276
  %v852 = vunpack.c.l.b16 %v277
  %v853 = vunpack.c.l.b16 %v278
  %v854 = vpack.c.b16 %v599, %v598
  %v855 = vpack.c.b16 %v601, %v600
  %v856 = vpack.c.b16 %v603, %v602
  %v857 = vpack.c.b16 %v605, %v604
  %v858 = vpack.c.b16 %v607, %v606
  %v859 = vpack.c.b16 %v609, %v608
  %v860 = vpack.c.b16 %v611, %v610
  %v861 = vpack.c.b16 %v613, %v612
  %v862 = vpack.c.b16 %v615, %v614
  %v863 = vpack.c.b16 %v617, %v616
  %v864 = vpack.c.b16 %v619, %v618
  %v865 = vpack.c.b16 %v621, %v620
  %v866 = vpack.c.b16 %v623, %v622
  %v867 = vpack.c.b16 %v625, %v624
  %v868 = vpack.c.b16 %v627, %v626
  %v869 = vpack.c.b16 %v629, %v628
  %v870 = vpack.c.b16 %v631, %v630
  %v871 = vpack.c.b16 %v633, %v632
  %v872 = vpack.c.b16 %v635, %v634
  %v873 = vpack.c.b16 %v637, %v636
  %v874 = vpack.c.b16 %v639, %v638
  %v875 = vpack.c.b16 %v641, %v640
  %v876 = vpack.c.b16 %v643, %v642
  %v877 = vpack.c.b16 %v645, %v644
  %v878 = vpack.c.b16 %v647, %v646
  %v879 = vpack.c.b16 %v649, %v648
  %v880 = vpack.c.b16 %v651, %v650
  %v881 = vpack.c.b16 %v653, %v652
  %v882 = vpack.c.b16 %v655, %v654
  %v883 = vpack.c.b16 %v657, %v656
  %v884 = vpack.c.b16 %v659, %v658
  %v885 = vpack.c.b16 %v661, %v660
  %v886 = vpack.c.b16 %v663, %v662
  %v887 = vpack.c.b16 %v665, %v664
  %v888 = vpack.c.b16 %v667, %v666
  %v889 = vpack.c.b16 %v669, %v668
  %v890 = vpack.c.b16 %v671, %v670
  %v891 = vpack.c.b16 %v673, %v672
  %v892 = vpack.c.b16 %v675, %v674
  %v893 = vpack.c.b16 %v677, %v676
  %v894 = vpack.c.b16 %v679, %v678
  %v895 = vpack.c.b16 %v681, %v680
  %v896 = vpack.c.b16 %v683, %v682
  %v897 = vpack.c.b16 %v685, %v684
  %v898 = vpack.c.b16 %v687, %v686
  %v899 = vpack.c.b16 %v689, %v688
  %v900 = vpack.c.b16 %v691, %v690
  %v901 = vpack.c.b16 %v693, %v692
  %v902 = vpack.c.b16 %v695, %v694
  %v903 = vpack.c.b16 %v697, %v696
  %v904 = vpack.c.b16 %v699, %v698
  %v905 = vpack.c.b16 %v701, %v700
  %v906 = vpack.c.b16 %v703, %v702
  %v907 = vpack.c.b16 %v705, %v704
  %v908 = vpack.c.b16 %v707, %v706
  %v909 = vpack.c.b16 %v709, %v708
  %v910 = vpack.c.b16 %v711, %v710
  %v911 = vpack.c.b16 %v713, %v712
  %v912 = vpack.c.b16 %v715, %v714
  %v913 = vpack.c.b16 %v717, %v716
  %v914 = vpack.c.b16 %v719, %v718
  %v915 = vpack.c.b16 %v721, %v720
  %v916 = vpack.c.b16 %v723, %v722
  %v917 = vpack.c.b16 %v725, %v724
  %v918 = vpack.c.b16 %v727, %v726
  %v919 = vpack.c.b16 %v729, %v728
  %v920 = vpack.c.b16 %v731, %v730
  %v921 = vpack.c.b16 %v733, %v732
  %v922 = vpack.c.b16 %v735, %v734
  %v923 = vpack.c.b16 %v737, %v736
  %v924 = vpack.c.b16 %v739, %v738
  %v925 = vpack.c.b16 %v741, %v740
  %v926 = vpack.c.b16 %v743, %v742
  %v927 = vpack.c.b16 %v745, %v744
  %v928 = vpack.c.b16 %v747, %v746
  %v929 = vpack.c.b16 %v749, %v748
  %v930 = vpack.c.b16 %v751, %v750
  %v931 = vpack.c.b16 %v753, %v752
  %v932 = vpack.c.b16 %v755, %v754
  %v933 = vpack.c.b16 %v757, %v756
  %v934 = vpack.c.b16 %v759, %v758
  %v935 = vpack.c.b16 %v761, %v760
  %v936 = vpack.c.b16 %v763, %v762
  %v937 = vpack.c.b16 %v765, %v764
  %v938 = vpack.c.b16 %v767, %v766
  %v939 = vpack.c.b16 %v769, %v768
  %v940 = vpack.c.b16 %v771, %v770
  %v941 = vpack.c.b16 %v773, %v772
  %v942 = vpack.c.b16 %v775, %v774
  %v943 = vpack.c.b16 %v777, %v776
  %v944 = vpack.c.b16 %v779, %v778
  %v945 = vpack.c.b16 %v781, %v780
  %v946 = vpack.c.b16 %v783, %v782
  %v947 = vpack.c.b16 %v785, %v784
  %v948 = vpack.c.b16 %v787, %v786
  %v949 = vpack.c.b16 %v789, %v788
  %v950 = vpack.c.b16 %v791, %v790
  %v951 = vpack.c.b16 %v793, %v792
  %v952 = vpack.c.b16 %v795, %v794
  %v953 = vpack.c.b16 %v797, %v796
  %v954 = vpack.c.b16 %v799, %v798
  %v955 = vpack.c.b16 %v801, %v800
  %v956 = vpack.c.b16 %v803, %v802
  %v957 = vpack.c.b16 %v805, %v804
  %v958 = vpack.c.b16 %v807, %v806
  %v959 = vpack.c.b16 %v809, %v808
  %v960 = vpack.c.b16 %v811, %v810
  %v961 = vpack.c.b16 %v813, %v812
  %v962 = vpack.c.b16 %v815, %v814
  %v963 = vpack.c.b16 %v817, %v816
  %v964 = vpack.c.b16 %v819, %v818
  %v965 = vpack.c.b16 %v821, %v820
  %v966 = vpack.c.b16 %v823, %v822
  %v967 = vpack.c.b16 %v825, %v824
  %v968 = vpack.c.b16 %v827, %v826
  %v969 = vpack.c.b16 %v829, %v828
  %v970 = vpack.c.b16 %v831, %v830
  %v971 = vpack.c.b16 %v833, %v832
  %v972 = vpack.c.b16 %v835, %v834
  %v973 = vpack.c.b16 %v837, %v836
  %v974 = vpack.c.b16 %v839, %v838
  %v975 = vpack.c.b16 %v841, %v840
  %v976 = vpack.c.b16 %v843, %v842
  %v977 = vpack.c.b16 %v845, %v844
  %v978 = vpack.c.b16 %v847, %v846
  %v979 = vpack.c.b16 %v849, %v848
  %v980 = vpack.c.b16 %v851, %v850
  %v981 = vpack.c.b16 %v853, %v852
  %1110 = vmatprep.subr.bf16.mxu0 0
  %1111 = vmatpush1.bf16.msra.mxu0 %v854
  %1112 = vmatprep.subr.bf16.mxu0 0
  %1113 = vmatpush1.bf16.msra.mxu0 %v855
  %1114 = vmatprep.subr.bf16.mxu0 0
  %1115 = vmatpush1.bf16.msra.mxu0 %v856
  %1116 = vmatprep.subr.bf16.mxu0 0
  %1117 = vmatpush1.bf16.msra.mxu0 %v857
  %1118 = vmatprep.subr.bf16.mxu0 0
  %1119 = vmatpush1.bf16.msra.mxu0 %v858
  %1120 = vmatprep.subr.bf16.mxu0 0
  %1121 = vmatpush1.bf16.msra.mxu0 %v859
  %1122 = vmatprep.subr.bf16.mxu0 0
  %1123 = vmatpush1.bf16.msra.mxu0 %v860
  %1124 = vmatprep.subr.bf16.mxu0 0
  %1125 = vmatpush1.bf16.msra.mxu0 %v861
  %1126 = vmatprep.subr.bf16.mxu0 0
  %1127 = vmatpush1.bf16.msra.mxu0 %v862
  %1128 = vmatprep.subr.bf16.mxu0 0
  %1129 = vmatpush1.bf16.msra.mxu0 %v863
  %1130 = vmatprep.subr.bf16.mxu0 0
  %1131 = vmatpush1.bf16.msra.mxu0 %v864
  %1132 = vmatprep.subr.bf16.mxu0 0
  %1133 = vmatpush1.bf16.msra.mxu0 %v865
  %1134 = vmatprep.subr.bf16.mxu0 0
  %1135 = vmatpush1.bf16.msra.mxu0 %v866
  %1136 = vmatprep.subr.bf16.mxu0 0
  %1137 = vmatpush1.bf16.msra.mxu0 %v867
  %1138 = vmatprep.subr.bf16.mxu0 0
  %1139 = vmatpush1.bf16.msra.mxu0 %v868
  %1140 = vmatprep.subr.bf16.mxu0 0
  %1141 = vmatpush1.bf16.msra.mxu0 %v869
  %1142 = vmatprep.mubr.bf16.mxu0 %v311
  %1143 = vmatmul.mubr.bf16.gmra.mrb[0].mxu0 %v310
  %v1144 = vpop.f32.mrb[0].mxu0
  %v1145 = vadd.f32 %v284, %v1144
  %v1146 = vpop.f32.mrb[0].mxu0
  %v1147 = vpop.f32.mrb[0].mxu0
  %v1148 = vpop.f32.mrb[0].mxu0
  %1149 = vdwg.mxu0
  %1150 = vmatprep.subr.bf16.mxu0 0
  %1151 = vmatpush1.bf16.msra.mxu0 %v870
  %1152 = vmatprep.subr.bf16.mxu0 0
  %1153 = vmatpush1.bf16.msra.mxu0 %v871
  %1154 = vmatprep.subr.bf16.mxu0 0
  %1155 = vmatpush1.bf16.msra.mxu0 %v872
  %1156 = vmatprep.subr.bf16.mxu0 0
  %1157 = vmatpush1.bf16.msra.mxu0 %v873
  %1158 = vmatprep.subr.bf16.mxu0 0
  %1159 = vmatpush1.bf16.msra.mxu0 %v874
  %1160 = vmatprep.subr.bf16.mxu0 0
  %1161 = vmatpush1.bf16.msra.mxu0 %v875
  %1162 = vmatprep.subr.bf16.mxu0 0
  %1163 = vmatpush1.bf16.msra.mxu0 %v876
  %1164 = vmatprep.subr.bf16.mxu0 0
  %1165 = vmatpush1.bf16.msra.mxu0 %v877
  %1166 = vmatprep.subr.bf16.mxu0 0
  %1167 = vmatpush1.bf16.msra.mxu0 %v878
  %1168 = vmatprep.subr.bf16.mxu0 0
  %1169 = vmatpush1.bf16.msra.mxu0 %v879
  %1170 = vmatprep.subr.bf16.mxu0 0
  %1171 = vmatpush1.bf16.msra.mxu0 %v880
  %1172 = vmatprep.subr.bf16.mxu0 0
  %1173 = vmatpush1.bf16.msra.mxu0 %v881
  %1174 = vmatprep.subr.bf16.mxu0 0
  %1175 = vmatpush1.bf16.msra.mxu0 %v882
  %1176 = vmatprep.subr.bf16.mxu0 0
  %1177 = vmatpush1.bf16.msra.mxu0 %v883
  %1178 = vmatprep.subr.bf16.mxu0 0
  %1179 = vmatpush1.bf16.msra.mxu0 %v884
  %1180 = vmatprep.subr.bf16.mxu0 0
  %1181 = vmatpush1.bf16.msra.mxu0 %v885
  %1182 = vmatprep.mubr.bf16.mxu0 %v313
  %1183 = vmatmul.mubr.bf16.gmra.mrb[0].mxu0 %v312
  %v1184 = vpop.f32.mrb[0].mxu0
  %v1185 = vadd.f32 %v1145, %v1184
  %v1186 = vpop.f32.mrb[0].mxu0
  %v1187 = vpop.f32.mrb[0].mxu0
  %v1188 = vpop.f32.mrb[0].mxu0
  %1189 = vdwg.mxu0
  %1190 = vmatprep.subr.bf16.mxu0 0
  %1191 = vmatpush1.bf16.msra.mxu0 %v886
  %1192 = vmatprep.subr.bf16.mxu0 0
  %1193 = vmatpush1.bf16.msra.mxu0 %v887
  %1194 = vmatprep.subr.bf16.mxu0 0
  %1195 = vmatpush1.bf16.msra.mxu0 %v888
  %1196 = vmatprep.subr.bf16.mxu0 0
  %1197 = vmatpush1.bf16.msra.mxu0 %v889
  %1198 = vmatprep.subr.bf16.mxu0 0
  %1199 = vmatpush1.bf16.msra.mxu0 %v890
  %1200 = vmatprep.subr.bf16.mxu0 0
  %1201 = vmatpush1.bf16.msra.mxu0 %v891
  %1202 = vmatprep.subr.bf16.mxu0 0
  %1203 = vmatpush1.bf16.msra.mxu0 %v892
  %1204 = vmatprep.subr.bf16.mxu0 0
  %1205 = vmatpush1.bf16.msra.mxu0 %v893
  %1206 = vmatprep.subr.bf16.mxu0 0
  %1207 = vmatpush1.bf16.msra.mxu0 %v894
  %1208 = vmatprep.subr.bf16.mxu0 0
  %1209 = vmatpush1.bf16.msra.mxu0 %v895
  %1210 = vmatprep.subr.bf16.mxu0 0
  %1211 = vmatpush1.bf16.msra.mxu0 %v896
  %1212 = vmatprep.subr.bf16.mxu0 0
  %1213 = vmatpush1.bf16.msra.mxu0 %v897
  %1214 = vmatprep.subr.bf16.mxu0 0
  %1215 = vmatpush1.bf16.msra.mxu0 %v898
  %1216 = vmatprep.subr.bf16.mxu0 0
  %1217 = vmatpush1.bf16.msra.mxu0 %v899
  %1218 = vmatprep.subr.bf16.mxu0 0
  %1219 = vmatpush1.bf16.msra.mxu0 %v900
  %1220 = vmatprep.subr.bf16.mxu0 0
  %1221 = vmatpush1.bf16.msra.mxu0 %v901
  %1222 = vmatprep.mubr.bf16.mxu0 %v315
  %1223 = vmatmul.mubr.bf16.gmra.mrb[0].mxu0 %v314
  %v1224 = vpop.f32.mrb[0].mxu0
  %v1225 = vadd.f32 %v1185, %v1224
  %v1226 = vpop.f32.mrb[0].mxu0
  %v1227 = vpop.f32.mrb[0].mxu0
  %v1228 = vpop.f32.mrb[0].mxu0
  %1229 = vdwg.mxu0
  %1230 = vmatprep.subr.bf16.mxu0 0
  %1231 = vmatpush1.bf16.msra.mxu0 %v902
  %1232 = vmatprep.subr.bf16.mxu0 0
  %1233 = vmatpush1.bf16.msra.mxu0 %v903
  %1234 = vmatprep.subr.bf16.mxu0 0
  %1235 = vmatpush1.bf16.msra.mxu0 %v904
  %1236 = vmatprep.subr.bf16.mxu0 0
  %1237 = vmatpush1.bf16.msra.mxu0 %v905
  %1238 = vmatprep.subr.bf16.mxu0 0
  %1239 = vmatpush1.bf16.msra.mxu0 %v906
  %1240 = vmatprep.subr.bf16.mxu0 0
  %1241 = vmatpush1.bf16.msra.mxu0 %v907
  %1242 = vmatprep.subr.bf16.mxu0 0
  %1243 = vmatpush1.bf16.msra.mxu0 %v908
  %1244 = vmatprep.subr.bf16.mxu0 0
  %1245 = vmatpush1.bf16.msra.mxu0 %v909
  %1246 = vmatprep.subr.bf16.mxu0 0
  %1247 = vmatpush1.bf16.msra.mxu0 %v910
  %1248 = vmatprep.subr.bf16.mxu0 0
  %1249 = vmatpush1.bf16.msra.mxu0 %v911
  %1250 = vmatprep.subr.bf16.mxu0 0
  %1251 = vmatpush1.bf16.msra.mxu0 %v912
  %1252 = vmatprep.subr.bf16.mxu0 0
  %1253 = vmatpush1.bf16.msra.mxu0 %v913
  %1254 = vmatprep.subr.bf16.mxu0 0
  %1255 = vmatpush1.bf16.msra.mxu0 %v914
  %1256 = vmatprep.subr.bf16.mxu0 0
  %1257 = vmatpush1.bf16.msra.mxu0 %v915
  %1258 = vmatprep.subr.bf16.mxu0 0
  %1259 = vmatpush1.bf16.msra.mxu0 %v916
  %1260 = vmatprep.subr.bf16.mxu0 0
  %1261 = vmatpush1.bf16.msra.mxu0 %v917
  %1262 = vmatprep.mubr.bf16.mxu0 %v317
  %1263 = vmatmul.mubr.bf16.gmra.mrb[0].mxu0 %v316
  %v1264 = vpop.f32.mrb[0].mxu0
  %v1265 = vadd.f32 %v1225, %v1264
  %v1266 = vpop.f32.mrb[0].mxu0
  %v1267 = vpop.f32.mrb[0].mxu0
  %v1268 = vpop.f32.mrb[0].mxu0
  %1269 = vdwg.mxu0
  %1270 = vmatprep.subr.bf16.mxu0 0
  %1271 = vmatpush1.bf16.msra.mxu0 %v918
  %1272 = vmatprep.subr.bf16.mxu0 0
  %1273 = vmatpush1.bf16.msra.mxu0 %v919
  %1274 = vmatprep.subr.bf16.mxu0 0
  %1275 = vmatpush1.bf16.msra.mxu0 %v920
  %1276 = vmatprep.subr.bf16.mxu0 0
  %1277 = vmatpush1.bf16.msra.mxu0 %v921
  %1278 = vmatprep.subr.bf16.mxu0 0
  %1279 = vmatpush1.bf16.msra.mxu0 %v922
  %1280 = vmatprep.subr.bf16.mxu0 0
  %1281 = vmatpush1.bf16.msra.mxu0 %v923
  %1282 = vmatprep.subr.bf16.mxu0 0
  %1283 = vmatpush1.bf16.msra.mxu0 %v924
  %1284 = vmatprep.subr.bf16.mxu0 0
  %1285 = vmatpush1.bf16.msra.mxu0 %v925
  %1286 = vmatprep.subr.bf16.mxu0 0
  %1287 = vmatpush1.bf16.msra.mxu0 %v926
  %1288 = vmatprep.subr.bf16.mxu0 0
  %1289 = vmatpush1.bf16.msra.mxu0 %v927
  %1290 = vmatprep.subr.bf16.mxu0 0
  %1291 = vmatpush1.bf16.msra.mxu0 %v928
  %1292 = vmatprep.subr.bf16.mxu0 0
  %1293 = vmatpush1.bf16.msra.mxu0 %v929
  %1294 = vmatprep.subr.bf16.mxu0 0
  %1295 = vmatpush1.bf16.msra.mxu0 %v930
  %1296 = vmatprep.subr.bf16.mxu0 0
  %1297 = vmatpush1.bf16.msra.mxu0 %v931
  %1298 = vmatprep.subr.bf16.mxu0 0
  %1299 = vmatpush1.bf16.msra.mxu0 %v932
  %1300 = vmatprep.subr.bf16.mxu0 0
  %1301 = vmatpush1.bf16.msra.mxu0 %v933
  %1302 = vmatprep.mubr.bf16.mxu0 %v319
  %1303 = vmatmul.mubr.bf16.gmra.mrb[0].mxu0 %v318
  %v1304 = vpop.f32.mrb[0].mxu0
  %v1305 = vadd.f32 %v1265, %v1304
  %v1306 = vpop.f32.mrb[0].mxu0
  %v1307 = vpop.f32.mrb[0].mxu0
  %v1308 = vpop.f32.mrb[0].mxu0
  %1309 = vdwg.mxu0
  %1310 = vmatprep.subr.bf16.mxu0 0
  %1311 = vmatpush1.bf16.msra.mxu0 %v934
  %1312 = vmatprep.subr.bf16.mxu0 0
  %1313 = vmatpush1.bf16.msra.mxu0 %v935
  %1314 = vmatprep.subr.bf16.mxu0 0
  %1315 = vmatpush1.bf16.msra.mxu0 %v936
  %1316 = vmatprep.subr.bf16.mxu0 0
  %1317 = vmatpush1.bf16.msra.mxu0 %v937
  %1318 = vmatprep.subr.bf16.mxu0 0
  %1319 = vmatpush1.bf16.msra.mxu0 %v938
  %1320 = vmatprep.subr.bf16.mxu0 0
  %1321 = vmatpush1.bf16.msra.mxu0 %v939
  %1322 = vmatprep.subr.bf16.mxu0 0
  %1323 = vmatpush1.bf16.msra.mxu0 %v940
  %1324 = vmatprep.subr.bf16.mxu0 0
  %1325 = vmatpush1.bf16.msra.mxu0 %v941
  %1326 = vmatprep.subr.bf16.mxu0 0
  %1327 = vmatpush1.bf16.msra.mxu0 %v942
  %1328 = vmatprep.subr.bf16.mxu0 0
  %1329 = vmatpush1.bf16.msra.mxu0 %v943
  %1330 = vmatprep.subr.bf16.mxu0 0
  %1331 = vmatpush1.bf16.msra.mxu0 %v944
  %1332 = vmatprep.subr.bf16.mxu0 0
  %1333 = vmatpush1.bf16.msra.mxu0 %v945
  %1334 = vmatprep.subr.bf16.mxu0 0
  %1335 = vmatpush1.bf16.msra.mxu0 %v946
  %1336 = vmatprep.subr.bf16.mxu0 0
  %1337 = vmatpush1.bf16.msra.mxu0 %v947
  %1338 = vmatprep.subr.bf16.mxu0 0
  %1339 = vmatpush1.bf16.msra.mxu0 %v948
  %1340 = vmatprep.subr.bf16.mxu0 0
  %1341 = vmatpush1.bf16.msra.mxu0 %v949
  %1342 = vmatprep.mubr.bf16.mxu0 %v321
  %1343 = vmatmul.mubr.bf16.gmra.mrb[0].mxu0 %v320
  %v1344 = vpop.f32.mrb[0].mxu0
  %v1345 = vadd.f32 %v1305, %v1344
  %v1346 = vpop.f32.mrb[0].mxu0
  %v1347 = vpop.f32.mrb[0].mxu0
  %v1348 = vpop.f32.mrb[0].mxu0
  %1349 = vdwg.mxu0
  %1350 = vmatprep.subr.bf16.mxu0 0
  %1351 = vmatpush1.bf16.msra.mxu0 %v950
  %1352 = vmatprep.subr.bf16.mxu0 0
  %1353 = vmatpush1.bf16.msra.mxu0 %v951
  %1354 = vmatprep.subr.bf16.mxu0 0
  %1355 = vmatpush1.bf16.msra.mxu0 %v952
  %1356 = vmatprep.subr.bf16.mxu0 0
  %1357 = vmatpush1.bf16.msra.mxu0 %v953
  %1358 = vmatprep.subr.bf16.mxu0 0
  %1359 = vmatpush1.bf16.msra.mxu0 %v954
  %1360 = vmatprep.subr.bf16.mxu0 0
  %1361 = vmatpush1.bf16.msra.mxu0 %v955
  %1362 = vmatprep.subr.bf16.mxu0 0
  %1363 = vmatpush1.bf16.msra.mxu0 %v956
  %1364 = vmatprep.subr.bf16.mxu0 0
  %1365 = vmatpush1.bf16.msra.mxu0 %v957
  %1366 = vmatprep.subr.bf16.mxu0 0
  %1367 = vmatpush1.bf16.msra.mxu0 %v958
  %1368 = vmatprep.subr.bf16.mxu0 0
  %1369 = vmatpush1.bf16.msra.mxu0 %v959
  %1370 = vmatprep.subr.bf16.mxu0 0
  %1371 = vmatpush1.bf16.msra.mxu0 %v960
  %1372 = vmatprep.subr.bf16.mxu0 0
  %1373 = vmatpush1.bf16.msra.mxu0 %v961
  %1374 = vmatprep.subr.bf16.mxu0 0
  %1375 = vmatpush1.bf16.msra.mxu0 %v962
  %1376 = vmatprep.subr.bf16.mxu0 0
  %1377 = vmatpush1.bf16.msra.mxu0 %v963
  %1378 = vmatprep.subr.bf16.mxu0 0
  %1379 = vmatpush1.bf16.msra.mxu0 %v964
  %1380 = vmatprep.subr.bf16.mxu0 0
  %1381 = vmatpush1.bf16.msra.mxu0 %v965
  %1382 = vmatprep.mubr.bf16.mxu0 %v323
  %1383 = vmatmul.mubr.bf16.gmra.mrb[0].mxu0 %v322
  %v1384 = vpop.f32.mrb[0].mxu0
  %v1385 = vadd.f32 %v1345, %v1384
  %v1386 = vpop.f32.mrb[0].mxu0
  %v1387 = vpop.f32.mrb[0].mxu0
  %v1388 = vpop.f32.mrb[0].mxu0
  %1389 = vdwg.mxu0
  %1390 = vmatprep.subr.bf16.mxu0 0
  %1391 = vmatpush1.bf16.msra.mxu0 %v966
  %1392 = vmatprep.subr.bf16.mxu0 0
  %1393 = vmatpush1.bf16.msra.mxu0 %v967
  %1394 = vmatprep.subr.bf16.mxu0 0
  %1395 = vmatpush1.bf16.msra.mxu0 %v968
  %1396 = vmatprep.subr.bf16.mxu0 0
  %1397 = vmatpush1.bf16.msra.mxu0 %v969
  %1398 = vmatprep.subr.bf16.mxu0 0
  %1399 = vmatpush1.bf16.msra.mxu0 %v970
  %1400 = vmatprep.subr.bf16.mxu0 0
  %1401 = vmatpush1.bf16.msra.mxu0 %v971
  %1402 = vmatprep.subr.bf16.mxu0 0
  %1403 = vmatpush1.bf16.msra.mxu0 %v972
  %1404 = vmatprep.subr.bf16.mxu0 0
  %1405 = vmatpush1.bf16.msra.mxu0 %v973
  %1406 = vmatprep.subr.bf16.mxu0 0
  %1407 = vmatpush1.bf16.msra.mxu0 %v974
  %1408 = vmatprep.subr.bf16.mxu0 0
  %1409 = vmatpush1.bf16.msra.mxu0 %v975
  %1410 = vmatprep.subr.bf16.mxu0 0
  %1411 = vmatpush1.bf16.msra.mxu0 %v976
  %1412 = vmatprep.subr.bf16.mxu0 0
  %1413 = vmatpush1.bf16.msra.mxu0 %v977
  %1414 = vmatprep.subr.bf16.mxu0 0
  %1415 = vmatpush1.bf16.msra.mxu0 %v978
  %1416 = vmatprep.subr.bf16.mxu0 0
  %1417 = vmatpush1.bf16.msra.mxu0 %v979
  %1418 = vmatprep.subr.bf16.mxu0 0
  %1419 = vmatpush1.bf16.msra.mxu0 %v980
  %1420 = vmatprep.subr.bf16.mxu0 0
  %1421 = vmatpush1.bf16.msra.mxu0 %v981
  %1422 = vmatprep.mubr.bf16.mxu0 %v325
  %1423 = vmatmul.mubr.bf16.gmra.mrb[0].mxu0 %v324
  %v1424 = vpop.f32.mrb[0].mxu0
  %v1425 = vadd.f32 %v1385, %v1424
  %v1426 = vpop.f32.mrb[0].mxu0
  %v1427 = vpop.f32.mrb[0].mxu0
  %v1428 = vpop.f32.mrb[0].mxu0
  %1429 = vdwg.mxu0
  %v1430 = vmax.f32 %v1425, 0.0
  %vm1431 = vcmask 523264
  %1432 = vst.msk [vmem:[%s3] sm:$0xff] %vm1431, %v1430
  // Predicated region
  $region14: #{retina_forward.13} parent=0 // pred_check
    _
  $region15: #{retina_forward.13} parent=0 // pred_check_branch
    %1434 = sbr.rel (0) target = $region17
  $region16: #{retina_forward.13} parent=0 // pred_region
    _
  $region17: #{retina_forward.13} parent=0 // pred_fallthru
    _
  // Predicated region
  $region18: #{retina_forward.13} parent=0 // pred_check
    _
  $region19: #{retina_forward.13} parent=0 // pred_check_branch
    %1436 = sbr.rel (0) target = $region21
  $region20: #{retina_forward.13} parent=0 // pred_region
    _
  $region21: #{retina_forward.13} parent=0 // pred_fallthru
    _

// kernel: retina_forward.15
$region0: #{retina_forward.15}
  #allocation0 [shape = 'u32[]', space=smem, size = 0x4, offset = 0x4, fixed_abs, tag = 'smem constant byte address 0x4 - core index']
  #allocation1 [shape = 'u32[144,128]{1,0:T(1,128)}', space=vmem, size = 0x12000, scoped, tag = 'internal scratch']
  %s0 = inlined_call_operand.vmem [shape: bf16[4,32,256], index: 0, kind: input, shape index: {}]
  %s1 = inlined_call_operand.vmem [shape: bf16[4,256,128], index: 1, kind: input, shape index: {}]
  %s2 = inlined_call_operand.vmem [shape: f32[1,128], index: 2, kind: input, shape index: {}]
  %s3 = inlined_call_operand.vmem [shape: f32[4,32,128], index: 3, kind: output, shape index: {}]
  %s4 = sld [smem:[#allocation0]]
  $region45: #{retina_forward.15} parent=0
    _
  %s6 = ssub.s32 1, %s4
  %s7 = scalar_select 0, %s6, %s4
  loop: start=0, step=1, limit=6
  $region2: #{retina_forward.15} parent=0 // loop_pre_header
    _
  $region3: #{retina_forward.15} parent=0 // loop_header
    %s9 = sphi 0, %s13
    %p10 = scmp.ge.s32.totalorder %s9, 6
    %s16 = sphi 0, %s28
    %s17 = sphi 0, %s24
    %s18 = sphi 0, %s16
    %s19 = sphi 0, %s17
    %s20 = sphi 0, %s18
    %s21 = sphi 0, %s19
    %s33 = sphi 0, %s35
    %s36 = sphi 0, %s33
    %s37 = sphi 0, %s36
    %s53 = sphi 0, %s37
    %s59 = sphi 0, %s61
    %s62 = sphi 0, %s59
    %s63 = sphi 0, %s62
    %s79 = sphi 0, %s63
    %s83 = sphi 0, %s83
    %s85 = sphi 0, %s83
    %s86 = sphi 0, %s85
    %s100 = sphi 0, %s86
    %s108 = sphi 0, %s110
    %s111 = sphi 0, %s108
    %s112 = sphi 0, %s111
    %s128 = sphi 0, %s112
  $region4: #{retina_forward.15} parent=0 // loop_header_branch
    %12 = sbr.rel (%p10) target = $region8
  $region5: #{retina_forward.15} parent=0 // loop_body
    %s14 = ssub.s32 %s9, 1
    %s15 = ssub.s32 %s9, 2
    %s22 = sadd.s32 1, %s17
    %p23 = scmp.ge.s32.totalorder %s22, 1
    %s24 = scalar_select %p23, 0, %s22
    %s25 = sadd.s32 1, %s16
    %s26 = scalar_select %p23, %s25, %s16
    %p27 = scmp.ge.s32.totalorder %s26, 4
    %s28 = scalar_select %p27, 0, %s26
    %s29 = ssub.s32 %s16, %s28
    %s30 = ssub.s32 %s17, %s24
    %s31 = sor.u32 %s29, %s30
    %p32 = scmp.eq.s32.totalorder %s31, 0
    %s34 = sadd.s32 %s33, 1
    %s35 = scalar_select %p32, %s33, %s34
    %p38 = pneg %p32
    %p39 = scmp.eq.s32.totalorder %s9, 3
    %p40 = por %p38, %p39
    %p41 = scmp.ne.s32.totalorder %s33, %s36
    %p42 = scmp.eq.s32.totalorder %s9, 0
    %p43 = por %p41, %p42
    %p44 = scmp.ne.s32.totalorder %s33, %s36
    %p45 = scmp.eq.s32.totalorder %s14, 3
    %p46 = por %p44, %p45
    %p47 = scmp.ne.s32.totalorder %s36, %s37
    %p48 = scmp.eq.s32.totalorder %s14, 0
    %p49 = por %p47, %p48
    %p50 = scmp.ne.s32.totalorder %s36, %s37
    %p51 = scmp.eq.s32.totalorder %s15, 3
    %p52 = por %p50, %p51
    %p54 = scmp.ne.s32.totalorder %s37, %s53
    %p55 = scmp.eq.s32.totalorder %s15, 0
    %p56 = por %p54, %p55
    %s57 = ssub.s32 %s16, %s28
    %p58 = scmp.eq.s32.totalorder %s57, 0
    %s60 = sadd.s32 %s59, 1
    %s61 = scalar_select %p58, %s59, %s60
    %p64 = pneg %p58
    %p65 = scmp.eq.s32.totalorder %s9, 3
    %p66 = por %p64, %p65
    %p67 = scmp.ne.s32.totalorder %s59, %s62
    %p68 = scmp.eq.s32.totalorder %s9, 0
    %p69 = por %p67, %p68
    %p70 = scmp.ne.s32.totalorder %s59, %s62
    %p71 = scmp.eq.s32.totalorder %s14, 3
    %p72 = por %p70, %p71
    %p73 = scmp.ne.s32.totalorder %s62, %s63
    %p74 = scmp.eq.s32.totalorder %s14, 0
    %p75 = por %p73, %p74
    %p76 = scmp.ne.s32.totalorder %s62, %s63
    %p77 = scmp.eq.s32.totalorder %s15, 3
    %p78 = por %p76, %p77
    %p80 = scmp.ne.s32.totalorder %s63, %s79
    %p81 = scmp.eq.s32.totalorder %s15, 0
    %p82 = por %p80, %p81
    %s84 = sadd.s32 %s83, 1
    %p87 = scmp.eq.s32.totalorder %s9, 3
    %p88 = scmp.ne.s32.totalorder %s83, %s85
    %p89 = scmp.eq.s32.totalorder %s9, 0
    %p90 = por %p88, %p89
    %p91 = scmp.ne.s32.totalorder %s83, %s85
    %p92 = scmp.eq.s32.totalorder %s14, 3
    %p93 = por %p91, %p92
    %p94 = scmp.ne.s32.totalorder %s85, %s86
    %p95 = scmp.eq.s32.totalorder %s14, 0
    %p96 = por %p94, %p95
    %p97 = scmp.ne.s32.totalorder %s85, %s86
    %p98 = scmp.eq.s32.totalorder %s15, 3
    %p99 = por %p97, %p98
    %p101 = scmp.ne.s32.totalorder %s86, %s100
    %p102 = scmp.eq.s32.totalorder %s15, 0
    %p103 = por %p101, %p102
    %s104 = ssub.s32 %s16, %s28
    %s105 = ssub.s32 %s17, %s24
    %s106 = sor.u32 %s104, %s105
    %p107 = scmp.eq.s32.totalorder %s106, 0
    %s109 = sadd.s32 %s108, 1
    %s110 = scalar_select %p107, %s108, %s109
    %p113 = pneg %p107
    %p114 = scmp.eq.s32.totalorder %s9, 3
    %p115 = por %p113, %p114
    %p116 = scmp.ne.s32.totalorder %s108, %s111
    %p117 = scmp.eq.s32.totalorder %s9, 0
    %p118 = por %p116, %p117
    %p119 = scmp.ne.s32.totalorder %s108, %s111
    %p120 = scmp.eq.s32.totalorder %s14, 3
    %p121 = por %p119, %p120
    %p122 = scmp.ne.s32.totalorder %s111, %s112
    %p123 = scmp.eq.s32.totalorder %s14, 0
    %p124 = por %p122, %p123
    %p125 = scmp.ne.s32.totalorder %s111, %s112
    %p126 = scmp.eq.s32.totalorder %s15, 3
    %p127 = por %p125, %p126
    %p129 = scmp.ne.s32.totalorder %s112, %s128
    %p130 = scmp.eq.s32.totalorder %s15, 0
    %p131 = por %p129, %p130
    %p132 = scmp.le.s32.totalorder 1, %s9
    %p133 = scmp.lt.s32.totalorder %s9, 5
    %p134 = pnand %p132, %p133
    %p135 = pneg %p134
    // Predicated region
    $region9: #{retina_forward.15} parent=5 // pred_check
      _
    $region10: #{retina_forward.15} parent=5 // pred_check_branch
      %137 = sbr.rel (%p134) target = $region12
    $region11: #{retina_forward.15} parent=5 // pred_region
      %s138 = ssub.s32 %s9, 1
      // Predicated region
      $region13: #{retina_forward.15} parent=11 // pred_check
        %p139 = pneg %p96
      $region14: #{retina_forward.15} parent=11 // pred_check_branch
        %141 = sbr.rel (%p139) target = $region16
      $region15: #{retina_forward.15} parent=11 // pred_region
        _
      $region16: #{retina_forward.15} parent=11 // pred_fallthru
        _
    $region12: #{retina_forward.15} parent=5 // pred_fallthru
      _
    %p142 = scmp.lt.s32.totalorder %s9, 4
    // Predicated region
    $region17: #{retina_forward.15} parent=5 // pred_check
      %p143 = pneg %p142
    $region18: #{retina_forward.15} parent=5 // pred_check_branch
      %145 = sbr.rel (%p143) target = $region20
    $region19: #{retina_forward.15} parent=5 // pred_region
      // Predicated region
      $region21: #{retina_forward.15} parent=19 // pred_check
        %p146 = pneg %p43
      $region22: #{retina_forward.15} parent=19 // pred_check_branch
        %148 = sbr.rel (%p146) target = $region24
      $region23: #{retina_forward.15} parent=19 // pred_region
        %s149 = smul.u32 4, %s17
        %p150 = scmp.lt.s32.totalorder %s16, 3
        %s151 = scalar_select %p150, %s16, 3
        %p152 = scmp.lt.s32.totalorder %s149, 3
        %s153 = scalar_select %p152, %s149, 3
        %s154 = smul.addr %s153, 2
        %s155 = smul.addr %s151, 8
        %s156 = sadd.s32 %s154, %s155
        %s157 = smul.addr %s156, 4
        %s158 = scalar_lea.vmem %s0, %s157
        %s159 = smul.u32 4, %s17
      $region24: #{retina_forward.15} parent=19 // pred_fallthru
        _
      // Predicated region
      $region25: #{retina_forward.15} parent=19 // pred_check
        %p160 = pneg %p69
      $region26: #{retina_forward.15} parent=19 // pred_check_branch
        %162 = sbr.rel (%p160) target = $region28
      $region27: #{retina_forward.15} parent=19 // pred_region
        %p163 = scmp.lt.s32.totalorder %s16, 3
        %s164 = scalar_select %p163, %s16, 3
        %s165 = smul.addr %s164, 32
        %s166 = smul.addr %s165, 4
        %s167 = scalar_lea.vmem %s1, %s166
      $region28: #{retina_forward.15} parent=19 // pred_fallthru
        _
    $region20: #{retina_forward.15} parent=5 // pred_fallthru
      _
    %p168 = scmp.le.s32.totalorder 1, %s9
    %p169 = scmp.lt.s32.totalorder %s9, 5
    %p170 = pnand %p168, %p169
    %p171 = pneg %p170
    // Predicated region
    $region29: #{retina_forward.15} parent=5 // pred_check
      _
    $region30: #{retina_forward.15} parent=5 // pred_check_branch
      %173 = sbr.rel (%p170) target = $region32
    $region31: #{retina_forward.15} parent=5 // pred_region
      %s174 = ssub.s32 %s9, 1
      %s175 = smul.u32 4, %s19
      %p176 = scmp.lt.s32.totalorder %s18, 3
      %s177 = scalar_select %p176, %s18, 3
      %p178 = scmp.lt.s32.totalorder %s175, 3
      %s179 = scalar_select %p178, %s175, 3
      %s180 = smul.addr %s179, 2
      %s181 = smul.addr %s177, 8
      %s182 = sadd.s32 %s180, %s181
      %s183 = smul.addr %s182, 4
      %s184 = scalar_lea.vmem %s0, %s183
      %p185 = pneg %p49
      %p186 = pneg %p46
      %p187 = scmp.lt.s32.totalorder %s18, 3
      %s188 = scalar_select %p187, %s18, 3
      %s189 = smul.addr %s188, 32
      %s190 = smul.addr %s189, 4
      %s191 = scalar_lea.vmem %s1, %s190
      %p192 = pneg %p75
      %p193 = pneg %p72
      %p194 = pneg %p96
      %p195 = pneg %p93
      %p196 = pneg %p124
      %p197 = pneg %p121
      %s198 = smul.u32 4, %s19
      %p199 = scmp.lt.s32.totalorder %s18, 3
      %s200 = scalar_select %p199, %s18, 3
      %p201 = scmp.lt.s32.totalorder %s198, 3
      %s202 = scalar_select %p201, %s198, 3
      %s203 = smul.addr %s200, 4
      %s204 = sadd.s32 %s202, %s203
      %s205 = smul.addr %s204, 8
      %s206 = scalar_lea.vmem %s3, %s205
      %s207 = smul.u32 4, %s19
      %p208 = scmp.lt.s32.totalorder %s18, 3
      %s209 = scalar_select %p208, %s18, 3
      %p210 = scmp.lt.s32.totalorder %s207, 3
      %s211 = scalar_select %p210, %s207, 3
      %s212 = smul.addr %s211, 2
      %s213 = smul.addr %s209, 8
      %s214 = sadd.s32 %s212, %s213
      %s215 = smul.addr %s214, 4
      %s216 = scalar_lea.vmem %s0, %s215
      %s217 = smul.u32 4, %s19
      %p218 = scmp.lt.s32.totalorder %s18, 3
      %s219 = scalar_select %p218, %s18, 3
      %s220 = smul.addr %s219, 32
      %s221 = smul.addr %s220, 4
      %s222 = scalar_lea.vmem %s1, %s221
      %s223 = smul.u32 4, %s19
      %p224 = scmp.lt.s32.totalorder %s18, 3
      %s225 = scalar_select %p224, %s18, 3
      %p226 = scmp.lt.s32.totalorder %s223, 3
      %s227 = scalar_select %p226, %s223, 3
      %s228 = smul.addr %s225, 4
      %s229 = sadd.s32 %s227, %s228
      %s230 = smul.addr %s229, 8
      %s231 = scalar_lea.vmem %s3, %s230
      %s232 = smul.u32 4, %s19
      %v234 = vld [vmem:[%s216] sm:$0xff]
      %v235 = vld [vmem:[%s216 + $0x8] sm:$0xff]
      %v236 = vld [vmem:[%s216 + $0x10] sm:$0xff]
      %v237 = vld [vmem:[%s216 + $0x18] sm:$0xff]
      %v238 = vld [vmem:[%s222] sm:$0xf]
      %v239 = vld [vmem:[%s222 + $0x4] sm:$0xf]
      %v240 = vld [vmem:[%s222 + $0x8] sm:$0xf]
      %v241 = vld [vmem:[%s222 + $0xc] sm:$0xf]
      %v242 = vld [vmem:[%s222 + $0x10] sm:$0xf]
      %v243 = vld [vmem:[%s222 + $0x14] sm:$0xf]
      %v244 = vld [vmem:[%s222 + $0x18] sm:$0xf]
      %v245 = vld [vmem:[%s222 + $0x1c] sm:$0xf]
      %v246 = vld [vmem:[%s222 + $0x20] sm:$0xf]
      %v247 = vld [vmem:[%s222 + $0x24] sm:$0xf]
      %v248 = vld [vmem:[%s222 + $0x28] sm:$0xf]
      %v249 = vld [vmem:[%s222 + $0x2c] sm:$0xf]
      %v250 = vld [vmem:[%s222 + $0x30] sm:$0xf]
      %v251 = vld [vmem:[%s222 + $0x34] sm:$0xf]
      %v252 = vld [vmem:[%s222 + $0x38] sm:$0xf]
      %v253 = vld [vmem:[%s222 + $0x3c] sm:$0xf]
      %v254 = vld [vmem:[%s222 + $0x40] sm:$0xf]
      %v255 = vld [vmem:[%s222 + $0x44] sm:$0xf]
      %v256 = vld [vmem:[%s222 + $0x48] sm:$0xf]
      %v257 = vld [vmem:[%s222 + $0x4c] sm:$0xf]
      %v258 = vld [vmem:[%s222 + $0x50] sm:$0xf]
      %v259 = vld [vmem:[%s222 + $0x54] sm:$0xf]
      %v260 = vld [vmem:[%s222 + $0x58] sm:$0xf]
      %v261 = vld [vmem:[%s222 + $0x5c] sm:$0xf]
      %v262 = vld [vmem:[%s222 + $0x60] sm:$0xf]
      %v263 = vld [vmem:[%s222 + $0x64] sm:$0xf]
      %v264 = vld [vmem:[%s222 + $0x68] sm:$0xf]
      %v265 = vld [vmem:[%s222 + $0x6c] sm:$0xf]
      %v266 = vld [vmem:[%s222 + $0x70] sm:$0xf]
      %v267 = vld [vmem:[%s222 + $0x74] sm:$0xf]
      %v268 = vld [vmem:[%s222 + $0x78] sm:$0xf]
      %v269 = vld [vmem:[%s222 + $0x7c] sm:$0xf]
      %v270 = vld [vmem:[%s2] sm:$0x1]
      %v272 = vlaneseq
      %v273 = vshrl.u32 %v272, 7
      %v274 = vsub.s32 0, %v273
      %v275 = vrot.slane %v270, %v274
      %v281 = vunpack.c.l.b16 %v234
      %v282 = vunpack.c.h.b16 %v234
      %v283 = vunpack.c.l.b16 %v235
      %v284 = vunpack.c.h.b16 %v235
      %v285 = vunpack.c.l.b16 %v236
      %v286 = vunpack.c.h.b16 %v236
      %v287 = vunpack.c.l.b16 %v237
      %v288 = vunpack.c.h.b16 %v237
      %v289 = vpack.c.b16 %v283, %v281
      %v290 = vpack.c.b16 %v284, %v282
      %v291 = vpack.c.b16 %v287, %v285
      %v292 = vpack.c.b16 %v288, %v286
      %v329 = vunpack.c.l.b16 %v238
      %v330 = vunpack.c.l.b16 %v239
      %v331 = vunpack.c.l.b16 %v240
      %v332 = vunpack.c.l.b16 %v241
      %v333 = vunpack.c.l.b16 %v242
      %v334 = vunpack.c.l.b16 %v243
      %v335 = vunpack.c.l.b16 %v244
      %v336 = vunpack.c.l.b16 %v245
      %v337 = vunpack.c.l.b16 %v246
      %v338 = vunpack.c.l.b16 %v247
      %v339 = vunpack.c.l.b16 %v248
      %v340 = vunpack.c.l.b16 %v249
      %v341 = vunpack.c.l.b16 %v250
      %v342 = vunpack.c.l.b16 %v251
      %v343 = vunpack.c.l.b16 %v252
      %v344 = vunpack.c.l.b16 %v253
      %v345 = vunpack.c.l.b16 %v254
      %v346 = vunpack.c.l.b16 %v255
      %v347 = vunpack.c.l.b16 %v256
      %v348 = vunpack.c.l.b16 %v257
      %v349 = vunpack.c.l.b16 %v258
      %v350 = vunpack.c.l.b16 %v259
      %v351 = vunpack.c.l.b16 %v260
      %v352 = vunpack.c.l.b16 %v261
      %v353 = vunpack.c.l.b16 %v262
      %v354 = vunpack.c.l.b16 %v263
      %v355 = vunpack.c.l.b16 %v264
      %v356 = vunpack.c.l.b16 %v265
      %v357 = vunpack.c.l.b16 %v266
      %v358 = vunpack.c.l.b16 %v267
      %v359 = vunpack.c.l.b16 %v268
      %v360 = vunpack.c.l.b16 %v269
      %v361 = vpack.c.b16 %v330, %v329
      %v362 = vpack.c.b16 %v332, %v331
      %v363 = vpack.c.b16 %v334, %v333
      %v364 = vpack.c.b16 %v336, %v335
      %v365 = vpack.c.b16 %v338, %v337
      %v366 = vpack.c.b16 %v340, %v339
      %v367 = vpack.c.b16 %v342, %v341
      %v368 = vpack.c.b16 %v344, %v343
      %v369 = vpack.c.b16 %v346, %v345
      %v370 = vpack.c.b16 %v348, %v347
      %v371 = vpack.c.b16 %v350, %v349
      %v372 = vpack.c.b16 %v352, %v351
      %v373 = vpack.c.b16 %v354, %v353
      %v374 = vpack.c.b16 %v356, %v355
      %v375 = vpack.c.b16 %v358, %v357
      %v376 = vpack.c.b16 %v360, %v359
      %393 = vmatprep.subr.bf16.mxu0 0
      %394 = vmatpush1.bf16.msra.mxu0 %v361
      %395 = vmatprep.subr.bf16.mxu0 0
      %396 = vmatpush1.bf16.msra.mxu0 %v362
      %397 = vmatprep.subr.bf16.mxu0 0
      %398 = vmatpush1.bf16.msra.mxu0 %v363
      %399 = vmatprep.subr.bf16.mxu0 0
      %400 = vmatpush1.bf16.msra.mxu0 %v364
      %401 = vmatprep.subr.bf16.mxu0 0
      %402 = vmatpush1.bf16.msra.mxu0 %v365
      %403 = vmatprep.subr.bf16.mxu0 0
      %404 = vmatpush1.bf16.msra.mxu0 %v366
      %405 = vmatprep.subr.bf16.mxu0 0
      %406 = vmatpush1.bf16.msra.mxu0 %v367
      %407 = vmatprep.subr.bf16.mxu0 0
      %408 = vmatpush1.bf16.msra.mxu0 %v368
      %409 = vmatprep.subr.bf16.mxu0 0
      %410 = vmatpush1.bf16.msra.mxu0 %v369
      %411 = vmatprep.subr.bf16.mxu0 0
      %412 = vmatpush1.bf16.msra.mxu0 %v370
      %413 = vmatprep.subr.bf16.mxu0 0
      %414 = vmatpush1.bf16.msra.mxu0 %v371
      %415 = vmatprep.subr.bf16.mxu0 0
      %416 = vmatpush1.bf16.msra.mxu0 %v372
      %417 = vmatprep.subr.bf16.mxu0 0
      %418 = vmatpush1.bf16.msra.mxu0 %v373
      %419 = vmatprep.subr.bf16.mxu0 0
      %420 = vmatpush1.bf16.msra.mxu0 %v374
      %421 = vmatprep.subr.bf16.mxu0 0
      %422 = vmatpush1.bf16.msra.mxu0 %v375
      %423 = vmatprep.subr.bf16.mxu0 0
      %424 = vmatpush1.bf16.msra.mxu0 %v376
      %425 = vmatprep.mubr.bf16.mxu0 %v290
      %426 = vmatmul.mubr.bf16.gmra.mrb[0].mxu0 %v289
      %v427 = vpop.f32.mrb[0].mxu0
      %v428 = vadd.f32 %v275, %v427
      %v429 = vpop.f32.mrb[0].mxu0
      %v430 = vpop.f32.mrb[0].mxu0
      %v431 = vadd.f32 %v275, %v430
      %v432 = vpop.f32.mrb[0].mxu0
      %433 = vmatprep.mubr.bf16.mxu0 %v292
      %434 = vmatmul.mubr.bf16.gmra.mrb[0].mxu0 %v291
      %v435 = vpop.f32.mrb[0].mxu0
      %v436 = vadd.f32 %v275, %v435
      %v437 = vpop.f32.mrb[0].mxu0
      %v438 = vpop.f32.mrb[0].mxu0
      %v439 = vadd.f32 %v275, %v438
      %v440 = vpop.f32.mrb[0].mxu0
      %441 = vdwg.mxu0
      %v442 = vmax.f32 %v428, 0.0
      %v443 = vmax.f32 %v431, 0.0
      %v444 = vmax.f32 %v436, 0.0
      %v445 = vmax.f32 %v439, 0.0
      %446 = vst [vmem:[%s231] sm:$0xff] %v442
      %447 = vst [vmem:[%s231 + $0x8] sm:$0xff] %v443
      %448 = vst [vmem:[%s231 + $0x10] sm:$0xff] %v444
      %449 = vst [vmem:[%s231 + $0x18] sm:$0xff] %v445
      %s450 = smul.u32 4, %s19
      %p451 = scmp.lt.s32.totalorder %s18, 3
      %s452 = scalar_select %p451, %s18, 3
      %p453 = scmp.lt.s32.totalorder %s450, 3
      %s454 = scalar_select %p453, %s450, 3
      %s455 = smul.addr %s452, 4
      %s456 = sadd.s32 %s454, %s455
      %s457 = smul.addr %s456, 8
      %s458 = scalar_lea.vmem %s3, %s457
      // Predicated region
      $region33: #{retina_forward.15} parent=31 // pred_check
        %p459 = pneg %p121
      $region34: #{retina_forward.15} parent=31 // pred_check_branch
        %461 = sbr.rel (%p459) target = $region36
      $region35: #{retina_forward.15} parent=31 // pred_region
        %s462 = smul.u32 4, %s19
      $region36: #{retina_forward.15} parent=31 // pred_fallthru
        _
    $region32: #{retina_forward.15} parent=5 // pred_fallthru
      _
    %p463 = scmp.le.s32.totalorder 2, %s9
    // Predicated region
    $region37: #{retina_forward.15} parent=5 // pred_check
      %p464 = pneg %p463
    $region38: #{retina_forward.15} parent=5 // pred_check_branch
      %466 = sbr.rel (%p464) target = $region40
    $region39: #{retina_forward.15} parent=5 // pred_region
      %s467 = ssub.s32 %s9, 2
      // Predicated region
      $region41: #{retina_forward.15} parent=39 // pred_check
        %p468 = pneg %p127
      $region42: #{retina_forward.15} parent=39 // pred_check_branch
        %470 = sbr.rel (%p468) target = $region44
      $region43: #{retina_forward.15} parent=39 // pred_region
        %s471 = smul.u32 4, %s21
        %p472 = scmp.lt.s32.totalorder %s20, 3
        %s473 = scalar_select %p472, %s20, 3
        %p474 = scmp.lt.s32.totalorder %s471, 3
        %s475 = scalar_select %p474, %s471, 3
        %s476 = smul.addr %s473, 4
        %s477 = sadd.s32 %s475, %s476
        %s478 = smul.addr %s477, 8
        %s479 = scalar_lea.vmem %s3, %s478
      $region44: #{retina_forward.15} parent=39 // pred_fallthru
        _
    $region40: #{retina_forward.15} parent=5 // pred_fallthru
      _
  $region6: #{retina_forward.15} parent=0 // loop_footer
    %s13 = sadd.s32 1, %s9
  $region7: #{retina_forward.15} parent=0 // loop_footer_branch
    %8 = sbr.rel target = $region3
  $region8: #{retina_forward.15} parent=0 // loop_exit
    _

// kernel: retina_forward.16
$region0: #{retina_forward.16}
  #allocation0 [shape = 'u32[]', space=smem, size = 0x4, offset = 0x4, fixed_abs, tag = 'smem constant byte address 0x4 - core index']
  #allocation1 [shape = 'u32[144,128]{1,0:T(1,128)}', space=vmem, size = 0x12000, scoped, tag = 'internal scratch']
  %s0 = inlined_call_operand.vmem [shape: bf16[4,512,128], index: 0, kind: input, shape index: {}]
  %s1 = inlined_call_operand.vmem [shape: bf16[4,64,512], index: 1, kind: input, shape index: {}]
  %s2 = inlined_call_operand.vmem [shape: f32[64,1], index: 2, kind: input, shape index: {}]
  %s3 = inlined_call_operand.vmem [shape: f32[4,64,128], index: 3, kind: output, shape index: {}]
  %s4 = sld [smem:[#allocation0]]
  $region45: #{retina_forward.16} parent=0
    _
  %s6 = ssub.s32 1, %s4
  %s7 = scalar_select 0, %s6, %s4
  loop: start=0, step=1, limit=6
  $region2: #{retina_forward.16} parent=0 // loop_pre_header
    _
  $region3: #{retina_forward.16} parent=0 // loop_header
    %s9 = sphi 0, %s13
    %p10 = scmp.ge.s32.totalorder %s9, 6
    %s16 = sphi 0, %s28
    %s17 = sphi 0, %s24
    %s18 = sphi 0, %s16
    %s19 = sphi 0, %s17
    %s20 = sphi 0, %s18
    %s21 = sphi 0, %s19
    %s33 = sphi 0, %s35
    %s36 = sphi 0, %s33
    %s37 = sphi 0, %s36
    %s53 = sphi 0, %s37
    %s59 = sphi 0, %s61
    %s62 = sphi 0, %s59
    %s63 = sphi 0, %s62
    %s79 = sphi 0, %s63
    %s83 = sphi 0, %s83
    %s85 = sphi 0, %s83
    %s86 = sphi 0, %s85
    %s100 = sphi 0, %s86
    %s108 = sphi 0, %s110
    %s111 = sphi 0, %s108
    %s112 = sphi 0, %s111
    %s128 = sphi 0, %s112
  $region4: #{retina_forward.16} parent=0 // loop_header_branch
    %12 = sbr.rel (%p10) target = $region8
  $region5: #{retina_forward.16} parent=0 // loop_body
    %s14 = ssub.s32 %s9, 1
    %s15 = ssub.s32 %s9, 2
    %s22 = sadd.s32 1, %s17
    %p23 = scmp.ge.s32.totalorder %s22, 1
    %s24 = scalar_select %p23, 0, %s22
    %s25 = sadd.s32 1, %s16
    %s26 = scalar_select %p23, %s25, %s16
    %p27 = scmp.ge.s32.totalorder %s26, 4
    %s28 = scalar_select %p27, 0, %s26
    %s29 = ssub.s32 %s16, %s28
    %s30 = ssub.s32 %s17, %s24
    %s31 = sor.u32 %s29, %s30
    %p32 = scmp.eq.s32.totalorder %s31, 0
    %s34 = sadd.s32 %s33, 1
    %s35 = scalar_select %p32, %s33, %s34
    %p38 = pneg %p32
    %p39 = scmp.eq.s32.totalorder %s9, 3
    %p40 = por %p38, %p39
    %p41 = scmp.ne.s32.totalorder %s33, %s36
    %p42 = scmp.eq.s32.totalorder %s9, 0
    %p43 = por %p41, %p42
    %p44 = scmp.ne.s32.totalorder %s33, %s36
    %p45 = scmp.eq.s32.totalorder %s14, 3
    %p46 = por %p44, %p45
    %p47 = scmp.ne.s32.totalorder %s36, %s37
    %p48 = scmp.eq.s32.totalorder %s14, 0
    %p49 = por %p47, %p48
    %p50 = scmp.ne.s32.totalorder %s36, %s37
    %p51 = scmp.eq.s32.totalorder %s15, 3
    %p52 = por %p50, %p51
    %p54 = scmp.ne.s32.totalorder %s37, %s53
    %p55 = scmp.eq.s32.totalorder %s15, 0
    %p56 = por %p54, %p55
    %s57 = ssub.s32 %s16, %s28
    %p58 = scmp.eq.s32.totalorder %s57, 0
    %s60 = sadd.s32 %s59, 1
    %s61 = scalar_select %p58, %s59, %s60
    %p64 = pneg %p58
    %p65 = scmp.eq.s32.totalorder %s9, 3
    %p66 = por %p64, %p65
    %p67 = scmp.ne.s32.totalorder %s59, %s62
    %p68 = scmp.eq.s32.totalorder %s9, 0
    %p69 = por %p67, %p68
    %p70 = scmp.ne.s32.totalorder %s59, %s62
    %p71 = scmp.eq.s32.totalorder %s14, 3
    %p72 = por %p70, %p71
    %p73 = scmp.ne.s32.totalorder %s62, %s63
    %p74 = scmp.eq.s32.totalorder %s14, 0
    %p75 = por %p73, %p74
    %p76 = scmp.ne.s32.totalorder %s62, %s63
    %p77 = scmp.eq.s32.totalorder %s15, 3
    %p78 = por %p76, %p77
    %p80 = scmp.ne.s32.totalorder %s63, %s79
    %p81 = scmp.eq.s32.totalorder %s15, 0
    %p82 = por %p80, %p81
    %s84 = sadd.s32 %s83, 1
    %p87 = scmp.eq.s32.totalorder %s9, 3
    %p88 = scmp.ne.s32.totalorder %s83, %s85
    %p89 = scmp.eq.s32.totalorder %s9, 0
    %p90 = por %p88, %p89
    %p91 = scmp.ne.s32.totalorder %s83, %s85
    %p92 = scmp.eq.s32.totalorder %s14, 3
    %p93 = por %p91, %p92
    %p94 = scmp.ne.s32.totalorder %s85, %s86
    %p95 = scmp.eq.s32.totalorder %s14, 0
    %p96 = por %p94, %p95
    %p97 = scmp.ne.s32.totalorder %s85, %s86
    %p98 = scmp.eq.s32.totalorder %s15, 3
    %p99 = por %p97, %p98
    %p101 = scmp.ne.s32.totalorder %s86, %s100
    %p102 = scmp.eq.s32.totalorder %s15, 0
    %p103 = por %p101, %p102
    %s104 = ssub.s32 %s16, %s28
    %s105 = ssub.s32 %s17, %s24
    %s106 = sor.u32 %s104, %s105
    %p107 = scmp.eq.s32.totalorder %s106, 0
    %s109 = sadd.s32 %s108, 1
    %s110 = scalar_select %p107, %s108, %s109
    %p113 = pneg %p107
    %p114 = scmp.eq.s32.totalorder %s9, 3
    %p115 = por %p113, %p114
    %p116 = scmp.ne.s32.totalorder %s108, %s111
    %p117 = scmp.eq.s32.totalorder %s9, 0
    %p118 = por %p116, %p117
    %p119 = scmp.ne.s32.totalorder %s108, %s111
    %p120 = scmp.eq.s32.totalorder %s14, 3
    %p121 = por %p119, %p120
    %p122 = scmp.ne.s32.totalorder %s111, %s112
    %p123 = scmp.eq.s32.totalorder %s14, 0
    %p124 = por %p122, %p123
    %p125 = scmp.ne.s32.totalorder %s111, %s112
    %p126 = scmp.eq.s32.totalorder %s15, 3
    %p127 = por %p125, %p126
    %p129 = scmp.ne.s32.totalorder %s112, %s128
    %p130 = scmp.eq.s32.totalorder %s15, 0
    %p131 = por %p129, %p130
    %p132 = scmp.le.s32.totalorder 1, %s9
    %p133 = scmp.lt.s32.totalorder %s9, 5
    %p134 = pnand %p132, %p133
    %p135 = pneg %p134
    // Predicated region
    $region9: #{retina_forward.16} parent=5 // pred_check
      _
    $region10: #{retina_forward.16} parent=5 // pred_check_branch
      %137 = sbr.rel (%p134) target = $region12
    $region11: #{retina_forward.16} parent=5 // pred_region
      %s138 = ssub.s32 %s9, 1
      // Predicated region
      $region13: #{retina_forward.16} parent=11 // pred_check
        %p139 = pneg %p96
      $region14: #{retina_forward.16} parent=11 // pred_check_branch
        %141 = sbr.rel (%p139) target = $region16
      $region15: #{retina_forward.16} parent=11 // pred_region
        _
      $region16: #{retina_forward.16} parent=11 // pred_fallthru
        _
    $region12: #{retina_forward.16} parent=5 // pred_fallthru
      _
    %p142 = scmp.lt.s32.totalorder %s9, 4
    // Predicated region
    $region17: #{retina_forward.16} parent=5 // pred_check
      %p143 = pneg %p142
    $region18: #{retina_forward.16} parent=5 // pred_check_branch
      %145 = sbr.rel (%p143) target = $region20
    $region19: #{retina_forward.16} parent=5 // pred_region
      // Predicated region
      $region21: #{retina_forward.16} parent=19 // pred_check
        %p146 = pneg %p43
      $region22: #{retina_forward.16} parent=19 // pred_check_branch
        %148 = sbr.rel (%p146) target = $region24
      $region23: #{retina_forward.16} parent=19 // pred_region
        %p149 = scmp.lt.s32.totalorder %s16, 3
        %s150 = scalar_select %p149, %s16, 3
        %p151 = scmp.lt.s32.totalorder %s17, 0
        %s152 = scalar_select %p151, %s17, 0
        %s153 = smul.addr %s150, 64
        %s154 = sadd.s32 %s152, %s153
        %s155 = smul.addr %s154, 4
        %s156 = scalar_lea.vmem %s0, %s155
      $region24: #{retina_forward.16} parent=19 // pred_fallthru
        _
      // Predicated region
      $region25: #{retina_forward.16} parent=19 // pred_check
        %p157 = pneg %p69
      $region26: #{retina_forward.16} parent=19 // pred_check_branch
        %159 = sbr.rel (%p157) target = $region28
      $region27: #{retina_forward.16} parent=19 // pred_region
        %p160 = scmp.lt.s32.totalorder %s16, 3
        %s161 = scalar_select %p160, %s16, 3
        %s162 = smul.addr %s161, 32
        %s163 = smul.addr %s162, 4
        %s164 = scalar_lea.vmem %s1, %s163
      $region28: #{retina_forward.16} parent=19 // pred_fallthru
        _
    $region20: #{retina_forward.16} parent=5 // pred_fallthru
      _
    %p165 = scmp.le.s32.totalorder 1, %s9
    %p166 = scmp.lt.s32.totalorder %s9, 5
    %p167 = pnand %p165, %p166
    %p168 = pneg %p167
    // Predicated region
    $region29: #{retina_forward.16} parent=5 // pred_check
      _
    $region30: #{retina_forward.16} parent=5 // pred_check_branch
      %170 = sbr.rel (%p167) target = $region32
    $region31: #{retina_forward.16} parent=5 // pred_region
      %s171 = ssub.s32 %s9, 1
      %p172 = scmp.lt.s32.totalorder %s18, 3
      %s173 = scalar_select %p172, %s18, 3
      %p174 = scmp.lt.s32.totalorder %s19, 0
      %s175 = scalar_select %p174, %s19, 0
      %s176 = smul.addr %s173, 64
      %s177 = sadd.s32 %s175, %s176
      %s178 = smul.addr %s177, 4
      %s179 = scalar_lea.vmem %s0, %s178
      %p180 = pneg %p49
      %p181 = pneg %p46
      %p182 = scmp.lt.s32.totalorder %s18, 3
      %s183 = scalar_select %p182, %s18, 3
      %s184 = smul.addr %s183, 32
      %s185 = smul.addr %s184, 4
      %s186 = scalar_lea.vmem %s1, %s185
      %p187 = pneg %p75
      %p188 = pneg %p72
      %p189 = pneg %p96
      %p190 = pneg %p93
      %p191 = pneg %p124
      %p192 = pneg %p121
      %p193 = scmp.lt.s32.totalorder %s18, 3
      %s194 = scalar_select %p193, %s18, 3
      %p195 = scmp.lt.s32.totalorder %s19, 0
      %s196 = scalar_select %p195, %s19, 0
      %s197 = smul.addr %s194, 8
      %s198 = sadd.s32 %s196, %s197
      %s199 = smul.addr %s198, 8
      %s200 = scalar_lea.vmem %s3, %s199
      %p201 = scmp.lt.s32.totalorder %s18, 3
      %s202 = scalar_select %p201, %s18, 3
      %p203 = scmp.lt.s32.totalorder %s19, 0
      %s204 = scalar_select %p203, %s19, 0
      %s205 = smul.addr %s202, 64
      %s206 = sadd.s32 %s204, %s205
      %s207 = smul.addr %s206, 4
      %s208 = scalar_lea.vmem %s0, %s207
      %p209 = scmp.lt.s32.totalorder %s18, 3
      %s210 = scalar_select %p209, %s18, 3
      %s211 = smul.addr %s210, 32
      %s212 = smul.addr %s211, 4
      %s213 = scalar_lea.vmem %s1, %s212
      %p214 = scmp.lt.s32.totalorder %s18, 3
      %s215 = scalar_select %p214, %s18, 3
      %p216 = scmp.lt.s32.totalorder %s19, 0
      %s217 = scalar_select %p216, %s19, 0
      %s218 = smul.addr %s215, 8
      %s219 = sadd.s32 %s217, %s218
      %s220 = smul.addr %s219, 8
      %s221 = scalar_lea.vmem %s3, %s220
      %v223 = vld [vmem:[%s213] sm:$0xff]
      %v224 = vld [vmem:[%s213 + $0x8] sm:$0xff]
      %v225 = vld [vmem:[%s213 + $0x10] sm:$0xff]
      %v226 = vld [vmem:[%s213 + $0x18] sm:$0xff]
      %v227 = vld [vmem:[%s213 + $0x20] sm:$0xff]
      %v228 = vld [vmem:[%s213 + $0x28] sm:$0xff]
      %v229 = vld [vmem:[%s213 + $0x30] sm:$0xff]
      %v230 = vld [vmem:[%s213 + $0x38] sm:$0xff]
      %v231 = vld [vmem:[%s213 + $0x40] sm:$0xff]
      %v232 = vld [vmem:[%s213 + $0x48] sm:$0xff]
      %v233 = vld [vmem:[%s213 + $0x50] sm:$0xff]
      %v234 = vld [vmem:[%s213 + $0x58] sm:$0xff]
      %v235 = vld [vmem:[%s213 + $0x60] sm:$0xff]
      %v236 = vld [vmem:[%s213 + $0x68] sm:$0xff]
      %v237 = vld [vmem:[%s213 + $0x70] sm:$0xff]
      %v238 = vld [vmem:[%s213 + $0x78] sm:$0xff]
      %v239 = vld [vmem:[%s208] sm:$0xf]
      %v240 = vld [vmem:[%s208 + $0x4] sm:$0xf]
      %v241 = vld [vmem:[%s208 + $0x8] sm:$0xf]
      %v242 = vld [vmem:[%s208 + $0xc] sm:$0xf]
      %v243 = vld [vmem:[%s208 + $0x10] sm:$0xf]
      %v244 = vld [vmem:[%s208 + $0x14] sm:$0xf]
      %v245 = vld [vmem:[%s208 + $0x18] sm:$0xf]
      %v246 = vld [vmem:[%s208 + $0x1c] sm:$0xf]
      %v247 = vld [vmem:[%s208 + $0x20] sm:$0xf]
      %v248 = vld [vmem:[%s208 + $0x24] sm:$0xf]
      %v249 = vld [vmem:[%s208 + $0x28] sm:$0xf]
      %v250 = vld [vmem:[%s208 + $0x2c] sm:$0xf]
      %v251 = vld [vmem:[%s208 + $0x30] sm:$0xf]
      %v252 = vld [vmem:[%s208 + $0x34] sm:$0xf]
      %v253 = vld [vmem:[%s208 + $0x38] sm:$0xf]
      %v254 = vld [vmem:[%s208 + $0x3c] sm:$0xf]
      %v255 = vld [vmem:[%s208 + $0x40] sm:$0xf]
      %v256 = vld [vmem:[%s208 + $0x44] sm:$0xf]
      %v257 = vld [vmem:[%s208 + $0x48] sm:$0xf]
      %v258 = vld [vmem:[%s208 + $0x4c] sm:$0xf]
      %v259 = vld [vmem:[%s208 + $0x50] sm:$0xf]
      %v260 = vld [vmem:[%s208 + $0x54] sm:$0xf]
      %v261 = vld [vmem:[%s208 + $0x58] sm:$0xf]
      %v262 = vld [vmem:[%s208 + $0x5c] sm:$0xf]
      %v263 = vld [vmem:[%s208 + $0x60] sm:$0xf]
      %v264 = vld [vmem:[%s208 + $0x64] sm:$0xf]
      %v265 = vld [vmem:[%s208 + $0x68] sm:$0xf]
      %v266 = vld [vmem:[%s208 + $0x6c] sm:$0xf]
      %v267 = vld [vmem:[%s208 + $0x70] sm:$0xf]
      %v268 = vld [vmem:[%s208 + $0x74] sm:$0xf]
      %v269 = vld [vmem:[%s208 + $0x78] sm:$0xf]
      %v270 = vld [vmem:[%s208 + $0x7c] sm:$0xf]
      %v271 = vld [vmem:[%s208 + $0x80] sm:$0xf]
      %v272 = vld [vmem:[%s208 + $0x84] sm:$0xf]
      %v273 = vld [vmem:[%s208 + $0x88] sm:$0xf]
      %v274 = vld [vmem:[%s208 + $0x8c] sm:$0xf]
      %v275 = vld [vmem:[%s208 + $0x90] sm:$0xf]
      %v276 = vld [vmem:[%s208 + $0x94] sm:$0xf]
      %v277 = vld [vmem:[%s208 + $0x98] sm:$0xf]
      %v278 = vld [vmem:[%s208 + $0x9c] sm:$0xf]
      %v279 = vld [vmem:[%s208 + $0xa0] sm:$0xf]
      %v280 = vld [vmem:[%s208 + $0xa4] sm:$0xf]
      %v281 = vld [vmem:[%s208 + $0xa8] sm:$0xf]
      %v282 = vld [vmem:[%s208 + $0xac] sm:$0xf]
      %v283 = vld [vmem:[%s208 + $0xb0] sm:$0xf]
      %v284 = vld [vmem:[%s208 + $0xb4] sm:$0xf]
      %v285 = vld [vmem:[%s208 + $0xb8] sm:$0xf]
      %v286 = vld [vmem:[%s208 + $0xbc] sm:$0xf]
      %v287 = vld [vmem:[%s208 + $0xc0] sm:$0xf]
      %v288 = vld [vmem:[%s208 + $0xc4] sm:$0xf]
      %v289 = vld [vmem:[%s208 + $0xc8] sm:$0xf]
      %v290 = vld [vmem:[%s208 + $0xcc] sm:$0xf]
      %v291 = vld [vmem:[%s208 + $0xd0] sm:$0xf]
      %v292 = vld [vmem:[%s208 + $0xd4] sm:$0xf]
      %v293 = vld [vmem:[%s208 + $0xd8] sm:$0xf]
      %v294 = vld [vmem:[%s208 + $0xdc] sm:$0xf]
      %v295 = vld [vmem:[%s208 + $0xe0] sm:$0xf]
      %v296 = vld [vmem:[%s208 + $0xe4] sm:$0xf]
      %v297 = vld [vmem:[%s208 + $0xe8] sm:$0xf]
      %v298 = vld [vmem:[%s208 + $0xec] sm:$0xf]
      %v299 = vld [vmem:[%s208 + $0xf0] sm:$0xf]
      %v300 = vld [vmem:[%s208 + $0xf4] sm:$0xf]
      %v301 = vld [vmem:[%s208 + $0xf8] sm:$0xf]
      %v302 = vld [vmem:[%s208 + $0xfc] sm:$0xf]
      %v303 = vld [vmem:[%s2] sm:$0xff]
      %v304 = vld [vmem:[%s2 + $0x8] sm:$0xff]
      %v305 = vld [vmem:[%s2 + $0x10] sm:$0xff]
      %v306 = vld [vmem:[%s2 + $0x18] sm:$0xff]
      %v307 = vld [vmem:[%s2 + $0x20] sm:$0xff]
      %v308 = vld [vmem:[%s2 + $0x28] sm:$0xff]
      %v309 = vld [vmem:[%s2 + $0x30] sm:$0xff]
      %v310 = vld [vmem:[%s2 + $0x38] sm:$0xff]
      %312 = vset.pattern.permute.xlu0 0
      %313 = vperm.xlu0 %312, %v303
      %v314 = vpop.permute.xlu0 %313
      %317 = vset.pattern.permute.xlu0 0
      %318 = vperm.xlu0 %317, %v304
      %v319 = vpop.permute.xlu0 %318
      %322 = vset.pattern.permute.xlu0 0
      %323 = vperm.xlu0 %322, %v305
      %v324 = vpop.permute.xlu0 %323
      %327 = vset.pattern.permute.xlu0 0
      %328 = vperm.xlu0 %327, %v306
      %v329 = vpop.permute.xlu0 %328
      %332 = vset.pattern.permute.xlu0 0
      %333 = vperm.xlu0 %332, %v307
      %v334 = vpop.permute.xlu0 %333
      %337 = vset.pattern.permute.xlu0 0
      %338 = vperm.xlu0 %337, %v308
      %v339 = vpop.permute.xlu0 %338
      %342 = vset.pattern.permute.xlu0 0
      %343 = vperm.xlu0 %342, %v309
      %v344 = vpop.permute.xlu0 %343
      %347 = vset.pattern.permute.xlu0 0
      %348 = vperm.xlu0 %347, %v310
      %v349 = vpop.permute.xlu0 %348
      %v367 = vunpack.c.l.b16 %v223
      %v368 = vunpack.c.h.b16 %v223
      %v369 = vunpack.c.l.b16 %v224
      %v370 = vunpack.c.h.b16 %v224
      %v371 = vunpack.c.l.b16 %v225
      %v372 = vunpack.c.h.b16 %v225
      %v373 = vunpack.c.l.b16 %v226
      %v374 = vunpack.c.h.b16 %v226
      %v375 = vunpack.c.l.b16 %v227
      %v376 = vunpack.c.h.b16 %v227
      %v377 = vunpack.c.l.b16 %v228
      %v378 = vunpack.c.h.b16 %v228
      %v379 = vunpack.c.l.b16 %v229
      %v380 = vunpack.c.h.b16 %v229
      %v381 = vunpack.c.l.b16 %v230
      %v382 = vunpack.c.h.b16 %v230
      %v383 = vunpack.c.l.b16 %v231
      %v384 = vunpack.c.h.b16 %v231
      %v385 = vunpack.c.l.b16 %v232
      %v386 = vunpack.c.h.b16 %v232
      %v387 = vunpack.c.l.b16 %v233
      %v388 = vunpack.c.h.b16 %v233
      %v389 = vunpack.c.l.b16 %v234
      %v390 = vunpack.c.h.b16 %v234
      %v391 = vunpack.c.l.b16 %v235
      %v392 = vunpack.c.h.b16 %v235
      %v393 = vunpack.c.l.b16 %v236
      %v394 = vunpack.c.h.b16 %v236
      %v395 = vunpack.c.l.b16 %v237
      %v396 = vunpack.c.h.b16 %v237
      %v397 = vunpack.c.l.b16 %v238
      %v398 = vunpack.c.h.b16 %v238
      %v399 = vpack.c.b16 %v371, %v367
      %v400 = vpack.c.b16 %v372, %v368
      %v401 = vpack.c.b16 %v373, %v369
      %v402 = vpack.c.b16 %v374, %v370
      %v403 = vpack.c.b16 %v379, %v375
      %v404 = vpack.c.b16 %v380, %v376
      %v405 = vpack.c.b16 %v381, %v377
      %v406 = vpack.c.b16 %v382, %v378
      %v407 = vpack.c.b16 %v387, %v383
      %v408 = vpack.c.b16 %v388, %v384
      %v409 = vpack.c.b16 %v389, %v385
      %v410 = vpack.c.b16 %v390, %v386
      %v411 = vpack.c.b16 %v395, %v391
      %v412 = vpack.c.b16 %v396, %v392
      %v413 = vpack.c.b16 %v397, %v393
      %v414 = vpack.c.b16 %v398, %v394
      %v495 = vunpack.c.l.b16 %v239
      %v496 = vunpack.c.l.b16 %v240
      %v497 = vunpack.c.l.b16 %v241
      %v498 = vunpack.c.l.b16 %v242
      %v499 = vunpack.c.l.b16 %v243
      %v500 = vunpack.c.l.b16 %v244
      %v501 = vunpack.c.l.b16 %v245
      %v502 = vunpack.c.l.b16 %v246
      %v503 = vunpack.c.l.b16 %v247
      %v504 = vunpack.c.l.b16 %v248
      %v505 = vunpack.c.l.b16 %v249
      %v506 = vunpack.c.l.b16 %v250
      %v507 = vunpack.c.l.b16 %v251
      %v508 = vunpack.c.l.b16 %v252
      %v509 = vunpack.c.l.b16 %v253
      %v510 = vunpack.c.l.b16 %v254
      %v511 = vunpack.c.l.b16 %v255
      %v512 = vunpack.c.l.b16 %v256
      %v513 = vunpack.c.l.b16 %v257
      %v514 = vunpack.c.l.b16 %v258
      %v515 = vunpack.c.l.b16 %v259
      %v516 = vunpack.c.l.b16 %v260
      %v517 = vunpack.c.l.b16 %v261
      %v518 = vunpack.c.l.b16 %v262
      %v519 = vunpack.c.l.b16 %v263
      %v520 = vunpack.c.l.b16 %v264
      %v521 = vunpack.c.l.b16 %v265
      %v522 = vunpack.c.l.b16 %v266
      %v523 = vunpack.c.l.b16 %v267
      %v524 = vunpack.c.l.b16 %v268
      %v525 = vunpack.c.l.b16 %v269
      %v526 = vunpack.c.l.b16 %v270
      %v527 = vunpack.c.l.b16 %v271
      %v528 = vunpack.c.l.b16 %v272
      %v529 = vunpack.c.l.b16 %v273
      %v530 = vunpack.c.l.b16 %v274
      %v531 = vunpack.c.l.b16 %v275
      %v532 = vunpack.c.l.b16 %v276
      %v533 = vunpack.c.l.b16 %v277
      %v534 = vunpack.c.l.b16 %v278
      %v535 = vunpack.c.l.b16 %v279
      %v536 = vunpack.c.l.b16 %v280
      %v537 = vunpack.c.l.b16 %v281
      %v538 = vunpack.c.l.b16 %v282
      %v539 = vunpack.c.l.b16 %v283
      %v540 = vunpack.c.l.b16 %v284
      %v541 = vunpack.c.l.b16 %v285
      %v542 = vunpack.c.l.b16 %v286
      %v543 = vunpack.c.l.b16 %v287
      %v544 = vunpack.c.l.b16 %v288
      %v545 = vunpack.c.l.b16 %v289
      %v546 = vunpack.c.l.b16 %v290
      %v547 = vunpack.c.l.b16 %v291
      %v548 = vunpack.c.l.b16 %v292
      %v549 = vunpack.c.l.b16 %v293
      %v550 = vunpack.c.l.b16 %v294
      %v551 = vunpack.c.l.b16 %v295
      %v552 = vunpack.c.l.b16 %v296
      %v553 = vunpack.c.l.b16 %v297
      %v554 = vunpack.c.l.b16 %v298
      %v555 = vunpack.c.l.b16 %v299
      %v556 = vunpack.c.l.b16 %v300
      %v557 = vunpack.c.l.b16 %v301
      %v558 = vunpack.c.l.b16 %v302
      %v559 = vpack.c.b16 %v496, %v495
      %v560 = vpack.c.b16 %v498, %v497
      %v561 = vpack.c.b16 %v500, %v499
      %v562 = vpack.c.b16 %v502, %v501
      %v563 = vpack.c.b16 %v504, %v503
      %v564 = vpack.c.b16 %v506, %v505
      %v565 = vpack.c.b16 %v508, %v507
      %v566 = vpack.c.b16 %v510, %v509
      %v567 = vpack.c.b16 %v512, %v511
      %v568 = vpack.c.b16 %v514, %v513
      %v569 = vpack.c.b16 %v516, %v515
      %v570 = vpack.c.b16 %v518, %v517
      %v571 = vpack.c.b16 %v520, %v519
      %v572 = vpack.c.b16 %v522, %v521
      %v573 = vpack.c.b16 %v524, %v523
      %v574 = vpack.c.b16 %v526, %v525
      %v575 = vpack.c.b16 %v528, %v527
      %v576 = vpack.c.b16 %v530, %v529
      %v577 = vpack.c.b16 %v532, %v531
      %v578 = vpack.c.b16 %v534, %v533
      %v579 = vpack.c.b16 %v536, %v535
      %v580 = vpack.c.b16 %v538, %v537
      %v581 = vpack.c.b16 %v540, %v539
      %v582 = vpack.c.b16 %v542, %v541
      %v583 = vpack.c.b16 %v544, %v543
      %v584 = vpack.c.b16 %v546, %v545
      %v585 = vpack.c.b16 %v548, %v547
      %v586 = vpack.c.b16 %v550, %v549
      %v587 = vpack.c.b16 %v552, %v551
      %v588 = vpack.c.b16 %v554, %v553
      %v589 = vpack.c.b16 %v556, %v555
      %v590 = vpack.c.b16 %v558, %v557
      %623 = vmatprep.subr.bf16.mxu0 0
      %624 = vmatpush1.bf16.msra.mxu0 %v559
      %625 = vmatprep.subr.bf16.mxu0 0
      %626 = vmatpush1.bf16.msra.mxu0 %v560
      %627 = vmatprep.subr.bf16.mxu0 0
      %628 = vmatpush1.bf16.msra.mxu0 %v561
      %629 = vmatprep.subr.bf16.mxu0 0
      %630 = vmatpush1.bf16.msra.mxu0 %v562
      %631 = vmatprep.subr.bf16.mxu0 0
      %632 = vmatpush1.bf16.msra.mxu0 %v563
      %633 = vmatprep.subr.bf16.mxu0 0
      %634 = vmatpush1.bf16.msra.mxu0 %v564
      %635 = vmatprep.subr.bf16.mxu0 0
      %636 = vmatpush1.bf16.msra.mxu0 %v565
      %637 = vmatprep.subr.bf16.mxu0 0
      %638 = vmatpush1.bf16.msra.mxu0 %v566
      %639 = vmatprep.subr.bf16.mxu0 0
      %640 = vmatpush1.bf16.msra.mxu0 %v567
      %641 = vmatprep.subr.bf16.mxu0 0
      %642 = vmatpush1.bf16.msra.mxu0 %v568
      %643 = vmatprep.subr.bf16.mxu0 0
      %644 = vmatpush1.bf16.msra.mxu0 %v569
      %645 = vmatprep.subr.bf16.mxu0 0
      %646 = vmatpush1.bf16.msra.mxu0 %v570
      %647 = vmatprep.subr.bf16.mxu0 0
      %648 = vmatpush1.bf16.msra.mxu0 %v571
      %649 = vmatprep.subr.bf16.mxu0 0
      %650 = vmatpush1.bf16.msra.mxu0 %v572
      %651 = vmatprep.subr.bf16.mxu0 0
      %652 = vmatpush1.bf16.msra.mxu0 %v573
      %653 = vmatprep.subr.bf16.mxu0 0
      %654 = vmatpush1.bf16.msra.mxu0 %v574
      %655 = vmatprep.mubr.bf16.mxu0 %v400
      %656 = vmatmul.mubr.bf16.gmra.mrb[0].mxu0 %v399
      %v657 = vpop.f32.mrb[0].mxu0
      %v658 = vadd.f32 %v314, %v657
      %v659 = vpop.f32.mrb[0].mxu0
      %v660 = vpop.f32.mrb[0].mxu0
      %v661 = vadd.f32 %v319, %v660
      %v662 = vpop.f32.mrb[0].mxu0
      %663 = vmatprep.mubr.bf16.mxu0 %v404
      %664 = vmatmul.mubr.bf16.gmra.mrb[0].mxu0 %v403
      %v665 = vpop.f32.mrb[0].mxu0
      %v666 = vadd.f32 %v324, %v665
      %v667 = vpop.f32.mrb[0].mxu0
      %v668 = vpop.f32.mrb[0].mxu0
      %v669 = vadd.f32 %v329, %v668
      %v670 = vpop.f32.mrb[0].mxu0
      %671 = vmatprep.mubr.bf16.mxu0 %v408
      %672 = vmatmul.mubr.bf16.gmra.mrb[0].mxu0 %v407
      %v673 = vpop.f32.mrb[0].mxu0
      %v674 = vadd.f32 %v334, %v673
      %v675 = vpop.f32.mrb[0].mxu0
      %v676 = vpop.f32.mrb[0].mxu0
      %v677 = vadd.f32 %v339, %v676
      %v678 = vpop.f32.mrb[0].mxu0
      %679 = vmatprep.mubr.bf16.mxu0 %v412
      %680 = vmatmul.mubr.bf16.gmra.mrb[0].mxu0 %v411
      %v681 = vpop.f32.mrb[0].mxu0
      %v682 = vadd.f32 %v344, %v681
      %v683 = vpop.f32.mrb[0].mxu0
      %v684 = vpop.f32.mrb[0].mxu0
      %v685 = vadd.f32 %v349, %v684
      %v686 = vpop.f32.mrb[0].mxu0
      %687 = vdwg.mxu0
      %688 = vmatprep.subr.bf16.mxu0 0
      %689 = vmatpush1.bf16.msra.mxu0 %v575
      %690 = vmatprep.subr.bf16.mxu0 0
      %691 = vmatpush1.bf16.msra.mxu0 %v576
      %692 = vmatprep.subr.bf16.mxu0 0
      %693 = vmatpush1.bf16.msra.mxu0 %v577
      %694 = vmatprep.subr.bf16.mxu0 0
      %695 = vmatpush1.bf16.msra.mxu0 %v578
      %696 = vmatprep.subr.bf16.mxu0 0
      %697 = vmatpush1.bf16.msra.mxu0 %v579
      %698 = vmatprep.subr.bf16.mxu0 0
      %699 = vmatpush1.bf16.msra.mxu0 %v580
      %700 = vmatprep.subr.bf16.mxu0 0
      %701 = vmatpush1.bf16.msra.mxu0 %v581
      %702 = vmatprep.subr.bf16.mxu0 0
      %703 = vmatpush1.bf16.msra.mxu0 %v582
      %704 = vmatprep.subr.bf16.mxu0 0
      %705 = vmatpush1.bf16.msra.mxu0 %v583
      %706 = vmatprep.subr.bf16.mxu0 0
      %707 = vmatpush1.bf16.msra.mxu0 %v584
      %708 = vmatprep.subr.bf16.mxu0 0
      %709 = vmatpush1.bf16.msra.mxu0 %v585
      %710 = vmatprep.subr.bf16.mxu0 0
      %711 = vmatpush1.bf16.msra.mxu0 %v586
      %712 = vmatprep.subr.bf16.mxu0 0
      %713 = vmatpush1.bf16.msra.mxu0 %v587
      %714 = vmatprep.subr.bf16.mxu0 0
      %715 = vmatpush1.bf16.msra.mxu0 %v588
      %716 = vmatprep.subr.bf16.mxu0 0
      %717 = vmatpush1.bf16.msra.mxu0 %v589
      %718 = vmatprep.subr.bf16.mxu0 0
      %719 = vmatpush1.bf16.msra.mxu0 %v590
      %720 = vmatprep.mubr.bf16.mxu0 %v402
      %721 = vmatmul.mubr.bf16.gmra.mrb[0].mxu0 %v401
      %v722 = vpop.f32.mrb[0].mxu0
      %v723 = vadd.f32 %v658, %v722
      %v724 = vpop.f32.mrb[0].mxu0
      %v725 = vpop.f32.mrb[0].mxu0
      %v726 = vadd.f32 %v661, %v725
      %v727 = vpop.f32.mrb[0].mxu0
      %728 = vmatprep.mubr.bf16.mxu0 %v406
      %729 = vmatmul.mubr.bf16.gmra.mrb[0].mxu0 %v405
      %v730 = vpop.f32.mrb[0].mxu0
      %v731 = vadd.f32 %v666, %v730
      %v732 = vpop.f32.mrb[0].mxu0
      %v733 = vpop.f32.mrb[0].mxu0
      %v734 = vadd.f32 %v669, %v733
      %v735 = vpop.f32.mrb[0].mxu0
      %736 = vmatprep.mubr.bf16.mxu0 %v410
      %737 = vmatmul.mubr.bf16.gmra.mrb[0].mxu0 %v409
      %v738 = vpop.f32.mrb[0].mxu0
      %v739 = vadd.f32 %v674, %v738
      %v740 = vpop.f32.mrb[0].mxu0
      %v741 = vpop.f32.mrb[0].mxu0
      %v742 = vadd.f32 %v677, %v741
      %v743 = vpop.f32.mrb[0].mxu0
      %744 = vmatprep.mubr.bf16.mxu0 %v414
      %745 = vmatmul.mubr.bf16.gmra.mrb[0].mxu0 %v413
      %v746 = vpop.f32.mrb[0].mxu0
      %v747 = vadd.f32 %v682, %v746
      %v748 = vpop.f32.mrb[0].mxu0
      %v749 = vpop.f32.mrb[0].mxu0
      %v750 = vadd.f32 %v685, %v749
      %v751 = vpop.f32.mrb[0].mxu0
      %752 = vdwg.mxu0
      %v753 = vmax.f32 %v723, 0.0
      %v754 = vmax.f32 %v726, 0.0
      %v755 = vmax.f32 %v731, 0.0
      %v756 = vmax.f32 %v734, 0.0
      %v757 = vmax.f32 %v739, 0.0
      %v758 = vmax.f32 %v742, 0.0
      %v759 = vmax.f32 %v747, 0.0
      %v760 = vmax.f32 %v750, 0.0
      %761 = vst [vmem:[%s221] sm:$0xff] %v753
      %762 = vst [vmem:[%s221 + $0x8] sm:$0xff] %v754
      %763 = vst [vmem:[%s221 + $0x10] sm:$0xff] %v755
      %764 = vst [vmem:[%s221 + $0x18] sm:$0xff] %v756
      %765 = vst [vmem:[%s221 + $0x20] sm:$0xff] %v757
      %766 = vst [vmem:[%s221 + $0x28] sm:$0xff] %v758
      %767 = vst [vmem:[%s221 + $0x30] sm:$0xff] %v759
      %768 = vst [vmem:[%s221 + $0x38] sm:$0xff] %v760
      %p769 = scmp.lt.s32.totalorder %s18, 3
      %s770 = scalar_select %p769, %s18, 3
      %p771 = scmp.lt.s32.totalorder %s19, 0
      %s772 = scalar_select %p771, %s19, 0
      %s773 = smul.addr %s770, 8
      %s774 = sadd.s32 %s772, %s773
      %s775 = smul.addr %s774, 8
      %s776 = scalar_lea.vmem %s3, %s775
      // Predicated region
      $region33: #{retina_forward.16} parent=31 // pred_check
        %p777 = pneg %p121
      $region34: #{retina_forward.16} parent=31 // pred_check_branch
        %779 = sbr.rel (%p777) target = $region36
      $region35: #{retina_forward.16} parent=31 // pred_region
        _
      $region36: #{retina_forward.16} parent=31 // pred_fallthru
        _
    $region32: #{retina_forward.16} parent=5 // pred_fallthru
      _
    %p780 = scmp.le.s32.totalorder 2, %s9
    // Predicated region
    $region37: #{retina_forward.16} parent=5 // pred_check
      %p781 = pneg %p780
    $region38: #{retina_forward.16} parent=5 // pred_check_branch
      %783 = sbr.rel (%p781) target = $region40
    $region39: #{retina_forward.16} parent=5 // pred_region
      %s784 = ssub.s32 %s9, 2
      // Predicated region
      $region41: #{retina_forward.16} parent=39 // pred_check
        %p785 = pneg %p127
      $region42: #{retina_forward.16} parent=39 // pred_check_branch
        %787 = sbr.rel (%p785) target = $region44
      $region43: #{retina_forward.16} parent=39 // pred_region
        %p788 = scmp.lt.s32.totalorder %s20, 3
        %s789 = scalar_select %p788, %s20, 3
        %p790 = scmp.lt.s32.totalorder %s21, 0
        %s791 = scalar_select %p790, %s21, 0
        %s792 = smul.addr %s789, 8
        %s793 = sadd.s32 %s791, %s792
        %s794 = smul.addr %s793, 8
        %s795 = scalar_lea.vmem %s3, %s794
      $region44: #{retina_forward.16} parent=39 // pred_fallthru
        _
    $region40: #{retina_forward.16} parent=5 // pred_fallthru
      _
  $region6: #{retina_forward.16} parent=0 // loop_footer
    %s13 = sadd.s32 1, %s9
  $region7: #{retina_forward.16} parent=0 // loop_footer_branch
    %8 = sbr.rel target = $region3
  $region8: #{retina_forward.16} parent=0 // loop_exit
    _

// kernel: retina_forward.17
$region0: #{retina_forward.17}
  #allocation0 [shape = 'u32[]', space=smem, size = 0x4, offset = 0x4, fixed_abs, tag = 'smem constant byte address 0x4 - core index']
  #allocation1 [shape = 'u32[144,128]{1,0:T(1,128)}', space=vmem, size = 0x12000, scoped, tag = 'internal scratch']
  %s0 = inlined_call_operand.vmem [shape: bf16[4,256,512], index: 0, kind: input, shape index: {}]
  %s1 = inlined_call_operand.vmem [shape: bf16[4,32,256], index: 1, kind: input, shape index: {}]
  %s2 = inlined_call_operand.vmem [shape: f32[32,1], index: 2, kind: input, shape index: {}]
  %s3 = inlined_call_operand.vmem [shape: f32[4,32,512], index: 3, kind: output, shape index: {}]
  %s4 = sld [smem:[#allocation0]]
  $region45: #{retina_forward.17} parent=0
    _
  %s6 = ssub.s32 1, %s4
  %s7 = scalar_select 0, %s6, %s4
  loop: start=0, step=1, limit=6
  $region2: #{retina_forward.17} parent=0 // loop_pre_header
    _
  $region3: #{retina_forward.17} parent=0 // loop_header
    %s9 = sphi 0, %s13
    %p10 = scmp.ge.s32.totalorder %s9, 6
    %s16 = sphi 0, %s28
    %s17 = sphi 0, %s24
    %s18 = sphi 0, %s16
    %s19 = sphi 0, %s17
    %s20 = sphi 0, %s18
    %s21 = sphi 0, %s19
    %s33 = sphi 0, %s35
    %s36 = sphi 0, %s33
    %s37 = sphi 0, %s36
    %s53 = sphi 0, %s37
    %s59 = sphi 0, %s61
    %s62 = sphi 0, %s59
    %s63 = sphi 0, %s62
    %s79 = sphi 0, %s63
    %s83 = sphi 0, %s83
    %s85 = sphi 0, %s83
    %s86 = sphi 0, %s85
    %s100 = sphi 0, %s86
    %s108 = sphi 0, %s110
    %s111 = sphi 0, %s108
    %s112 = sphi 0, %s111
    %s128 = sphi 0, %s112
  $region4: #{retina_forward.17} parent=0 // loop_header_branch
    %12 = sbr.rel (%p10) target = $region8
  $region5: #{retina_forward.17} parent=0 // loop_body
    %s14 = ssub.s32 %s9, 1
    %s15 = ssub.s32 %s9, 2
    %s22 = sadd.s32 1, %s17
    %p23 = scmp.ge.s32.totalorder %s22, 1
    %s24 = scalar_select %p23, 0, %s22
    %s25 = sadd.s32 1, %s16
    %s26 = scalar_select %p23, %s25, %s16
    %p27 = scmp.ge.s32.totalorder %s26, 4
    %s28 = scalar_select %p27, 0, %s26
    %s29 = ssub.s32 %s16, %s28
    %s30 = ssub.s32 %s17, %s24
    %s31 = sor.u32 %s29, %s30
    %p32 = scmp.eq.s32.totalorder %s31, 0
    %s34 = sadd.s32 %s33, 1
    %s35 = scalar_select %p32, %s33, %s34
    %p38 = pneg %p32
    %p39 = scmp.eq.s32.totalorder %s9, 3
    %p40 = por %p38, %p39
    %p41 = scmp.ne.s32.totalorder %s33, %s36
    %p42 = scmp.eq.s32.totalorder %s9, 0
    %p43 = por %p41, %p42
    %p44 = scmp.ne.s32.totalorder %s33, %s36
    %p45 = scmp.eq.s32.totalorder %s14, 3
    %p46 = por %p44, %p45
    %p47 = scmp.ne.s32.totalorder %s36, %s37
    %p48 = scmp.eq.s32.totalorder %s14, 0
    %p49 = por %p47, %p48
    %p50 = scmp.ne.s32.totalorder %s36, %s37
    %p51 = scmp.eq.s32.totalorder %s15, 3
    %p52 = por %p50, %p51
    %p54 = scmp.ne.s32.totalorder %s37, %s53
    %p55 = scmp.eq.s32.totalorder %s15, 0
    %p56 = por %p54, %p55
    %s57 = ssub.s32 %s16, %s28
    %p58 = scmp.eq.s32.totalorder %s57, 0
    %s60 = sadd.s32 %s59, 1
    %s61 = scalar_select %p58, %s59, %s60
    %p64 = pneg %p58
    %p65 = scmp.eq.s32.totalorder %s9, 3
    %p66 = por %p64, %p65
    %p67 = scmp.ne.s32.totalorder %s59, %s62
    %p68 = scmp.eq.s32.totalorder %s9, 0
    %p69 = por %p67, %p68
    %p70 = scmp.ne.s32.totalorder %s59, %s62
    %p71 = scmp.eq.s32.totalorder %s14, 3
    %p72 = por %p70, %p71
    %p73 = scmp.ne.s32.totalorder %s62, %s63
    %p74 = scmp.eq.s32.totalorder %s14, 0
    %p75 = por %p73, %p74
    %p76 = scmp.ne.s32.totalorder %s62, %s63
    %p77 = scmp.eq.s32.totalorder %s15, 3
    %p78 = por %p76, %p77
    %p80 = scmp.ne.s32.totalorder %s63, %s79
    %p81 = scmp.eq.s32.totalorder %s15, 0
    %p82 = por %p80, %p81
    %s84 = sadd.s32 %s83, 1
    %p87 = scmp.eq.s32.totalorder %s9, 3
    %p88 = scmp.ne.s32.totalorder %s83, %s85
    %p89 = scmp.eq.s32.totalorder %s9, 0
    %p90 = por %p88, %p89
    %p91 = scmp.ne.s32.totalorder %s83, %s85
    %p92 = scmp.eq.s32.totalorder %s14, 3
    %p93 = por %p91, %p92
    %p94 = scmp.ne.s32.totalorder %s85, %s86
    %p95 = scmp.eq.s32.totalorder %s14, 0
    %p96 = por %p94, %p95
    %p97 = scmp.ne.s32.totalorder %s85, %s86
    %p98 = scmp.eq.s32.totalorder %s15, 3
    %p99 = por %p97, %p98
    %p101 = scmp.ne.s32.totalorder %s86, %s100
    %p102 = scmp.eq.s32.totalorder %s15, 0
    %p103 = por %p101, %p102
    %s104 = ssub.s32 %s16, %s28
    %s105 = ssub.s32 %s17, %s24
    %s106 = sor.u32 %s104, %s105
    %p107 = scmp.eq.s32.totalorder %s106, 0
    %s109 = sadd.s32 %s108, 1
    %s110 = scalar_select %p107, %s108, %s109
    %p113 = pneg %p107
    %p114 = scmp.eq.s32.totalorder %s9, 3
    %p115 = por %p113, %p114
    %p116 = scmp.ne.s32.totalorder %s108, %s111
    %p117 = scmp.eq.s32.totalorder %s9, 0
    %p118 = por %p116, %p117
    %p119 = scmp.ne.s32.totalorder %s108, %s111
    %p120 = scmp.eq.s32.totalorder %s14, 3
    %p121 = por %p119, %p120
    %p122 = scmp.ne.s32.totalorder %s111, %s112
    %p123 = scmp.eq.s32.totalorder %s14, 0
    %p124 = por %p122, %p123
    %p125 = scmp.ne.s32.totalorder %s111, %s112
    %p126 = scmp.eq.s32.totalorder %s15, 3
    %p127 = por %p125, %p126
    %p129 = scmp.ne.s32.totalorder %s112, %s128
    %p130 = scmp.eq.s32.totalorder %s15, 0
    %p131 = por %p129, %p130
    %p132 = scmp.le.s32.totalorder 1, %s9
    %p133 = scmp.lt.s32.totalorder %s9, 5
    %p134 = pnand %p132, %p133
    %p135 = pneg %p134
    // Predicated region
    $region9: #{retina_forward.17} parent=5 // pred_check
      _
    $region10: #{retina_forward.17} parent=5 // pred_check_branch
      %137 = sbr.rel (%p134) target = $region12
    $region11: #{retina_forward.17} parent=5 // pred_region
      %s138 = ssub.s32 %s9, 1
      // Predicated region
      $region13: #{retina_forward.17} parent=11 // pred_check
        %p139 = pneg %p96
      $region14: #{retina_forward.17} parent=11 // pred_check_branch
        %141 = sbr.rel (%p139) target = $region16
      $region15: #{retina_forward.17} parent=11 // pred_region
        _
      $region16: #{retina_forward.17} parent=11 // pred_fallthru
        _
    $region12: #{retina_forward.17} parent=5 // pred_fallthru
      _
    %p142 = scmp.lt.s32.totalorder %s9, 4
    // Predicated region
    $region17: #{retina_forward.17} parent=5 // pred_check
      %p143 = pneg %p142
    $region18: #{retina_forward.17} parent=5 // pred_check_branch
      %145 = sbr.rel (%p143) target = $region20
    $region19: #{retina_forward.17} parent=5 // pred_region
      // Predicated region
      $region21: #{retina_forward.17} parent=19 // pred_check
        %p146 = pneg %p43
      $region22: #{retina_forward.17} parent=19 // pred_check_branch
        %148 = sbr.rel (%p146) target = $region24
      $region23: #{retina_forward.17} parent=19 // pred_region
        %s149 = smul.u32 4, %s17
        %p150 = scmp.lt.s32.totalorder %s16, 3
        %s151 = scalar_select %p150, %s16, 3
        %p152 = scmp.lt.s32.totalorder %s149, 3
        %s153 = scalar_select %p152, %s149, 3
        %s154 = smul.addr %s151, 128
        %s155 = sadd.s32 %s153, %s154
        %s156 = smul.addr %s155, 4
        %s157 = scalar_lea.vmem %s0, %s156
        %s158 = smul.u32 4, %s17
      $region24: #{retina_forward.17} parent=19 // pred_fallthru
        _
      // Predicated region
      $region25: #{retina_forward.17} parent=19 // pred_check
        %p159 = pneg %p69
      $region26: #{retina_forward.17} parent=19 // pred_check_branch
        %161 = sbr.rel (%p159) target = $region28
      $region27: #{retina_forward.17} parent=19 // pred_region
        %p162 = scmp.lt.s32.totalorder %s16, 3
        %s163 = scalar_select %p162, %s16, 3
        %s164 = smul.addr %s163, 8
        %s165 = smul.addr %s164, 4
        %s166 = scalar_lea.vmem %s1, %s165
      $region28: #{retina_forward.17} parent=19 // pred_fallthru
        _
    $region20: #{retina_forward.17} parent=5 // pred_fallthru
      _
    %p167 = scmp.le.s32.totalorder 1, %s9
    %p168 = scmp.lt.s32.totalorder %s9, 5
    %p169 = pnand %p167, %p168
    %p170 = pneg %p169
    // Predicated region
    $region29: #{retina_forward.17} parent=5 // pred_check
      _
    $region30: #{retina_forward.17} parent=5 // pred_check_branch
      %172 = sbr.rel (%p169) target = $region32
    $region31: #{retina_forward.17} parent=5 // pred_region
      %s173 = ssub.s32 %s9, 1
      %s174 = smul.u32 4, %s19
      %p175 = scmp.lt.s32.totalorder %s18, 3
      %s176 = scalar_select %p175, %s18, 3
      %p177 = scmp.lt.s32.totalorder %s174, 3
      %s178 = scalar_select %p177, %s174, 3
      %s179 = smul.addr %s176, 128
      %s180 = sadd.s32 %s178, %s179
      %s181 = smul.addr %s180, 4
      %s182 = scalar_lea.vmem %s0, %s181
      %p183 = pneg %p49
      %p184 = pneg %p46
      %p185 = scmp.lt.s32.totalorder %s18, 3
      %s186 = scalar_select %p185, %s18, 3
      %s187 = smul.addr %s186, 8
      %s188 = smul.addr %s187, 4
      %s189 = scalar_lea.vmem %s1, %s188
      %p190 = pneg %p75
      %p191 = pneg %p72
      %p192 = pneg %p96
      %p193 = pneg %p93
      %p194 = pneg %p124
      %p195 = pneg %p121
      %s196 = smul.u32 4, %s19
      %p197 = scmp.lt.s32.totalorder %s18, 3
      %s198 = scalar_select %p197, %s18, 3
      %p199 = scmp.lt.s32.totalorder %s196, 3
      %s200 = scalar_select %p199, %s196, 3
      %s201 = smul.addr %s198, 16
      %s202 = sadd.s32 %s200, %s201
      %s203 = smul.addr %s202, 8
      %s204 = scalar_lea.vmem %s3, %s203
      %s205 = smul.u32 4, %s19
      %p206 = scmp.lt.s32.totalorder %s18, 3
      %s207 = scalar_select %p206, %s18, 3
      %p208 = scmp.lt.s32.totalorder %s205, 3
      %s209 = scalar_select %p208, %s205, 3
      %s210 = smul.addr %s207, 128
      %s211 = sadd.s32 %s209, %s210
      %s212 = smul.addr %s211, 4
      %s213 = scalar_lea.vmem %s0, %s212
      %s214 = smul.u32 4, %s19
      %p215 = scmp.lt.s32.totalorder %s18, 3
      %s216 = scalar_select %p215, %s18, 3
      %s217 = smul.addr %s216, 8
      %s218 = smul.addr %s217, 4
      %s219 = scalar_lea.vmem %s1, %s218
      %s220 = smul.u32 4, %s19
      %p221 = scmp.lt.s32.totalorder %s18, 3
      %s222 = scalar_select %p221, %s18, 3
      %p223 = scmp.lt.s32.totalorder %s220, 3
      %s224 = scalar_select %p223, %s220, 3
      %s225 = smul.addr %s222, 16
      %s226 = sadd.s32 %s224, %s225
      %s227 = smul.addr %s226, 8
      %s228 = scalar_lea.vmem %s3, %s227
      %s229 = smul.u32 4, %s19
      %v230 = vld [vmem:[%s219] sm:$0xff]
      %v231 = vld [vmem:[%s219 + $0x8] sm:$0xff]
      %v232 = vld [vmem:[%s219 + $0x10] sm:$0xff]
      %v233 = vld [vmem:[%s219 + $0x18] sm:$0xff]
      %v234 = vld [vmem:[%s213] sm:$0xff]
      %v235 = vld [vmem:[%s213 + $0x8] sm:$0xff]
      %v236 = vld [vmem:[%s213 + $0x10] sm:$0xff]
      %v237 = vld [vmem:[%s213 + $0x18] sm:$0xff]
      %v238 = vld [vmem:[%s213 + $0x20] sm:$0xff]
      %v239 = vld [vmem:[%s213 + $0x28] sm:$0xff]
      %v240 = vld [vmem:[%s213 + $0x30] sm:$0xff]
      %v241 = vld [vmem:[%s213 + $0x38] sm:$0xff]
      %v242 = vld [vmem:[%s213 + $0x40] sm:$0xff]
      %v243 = vld [vmem:[%s213 + $0x48] sm:$0xff]
      %v244 = vld [vmem:[%s213 + $0x50] sm:$0xff]
      %v245 = vld [vmem:[%s213 + $0x58] sm:$0xff]
      %v246 = vld [vmem:[%s213 + $0x60] sm:$0xff]
      %v247 = vld [vmem:[%s213 + $0x68] sm:$0xff]
      %v248 = vld [vmem:[%s213 + $0x70] sm:$0xff]
      %v249 = vld [vmem:[%s213 + $0x78] sm:$0xff]
      %v250 = vld [vmem:[%s213 + $0x80] sm:$0xff]
      %v251 = vld [vmem:[%s213 + $0x88] sm:$0xff]
      %v252 = vld [vmem:[%s213 + $0x90] sm:$0xff]
      %v253 = vld [vmem:[%s213 + $0x98] sm:$0xff]
      %v254 = vld [vmem:[%s213 + $0xa0] sm:$0xff]
      %v255 = vld [vmem:[%s213 + $0xa8] sm:$0xff]
      %v256 = vld [vmem:[%s213 + $0xb0] sm:$0xff]
      %v257 = vld [vmem:[%s213 + $0xb8] sm:$0xff]
      %v258 = vld [vmem:[%s213 + $0xc0] sm:$0xff]
      %v259 = vld [vmem:[%s213 + $0xc8] sm:$0xff]
      %v260 = vld [vmem:[%s213 + $0xd0] sm:$0xff]
      %v261 = vld [vmem:[%s213 + $0xd8] sm:$0xff]
      %v262 = vld [vmem:[%s213 + $0xe0] sm:$0xff]
      %v263 = vld [vmem:[%s213 + $0xe8] sm:$0xff]
      %v264 = vld [vmem:[%s213 + $0xf0] sm:$0xff]
      %v265 = vld [vmem:[%s213 + $0xf8] sm:$0xff]
      %v266 = vld [vmem:[%s213 + $0x100] sm:$0xff]
      %v267 = vld [vmem:[%s213 + $0x108] sm:$0xff]
      %v268 = vld [vmem:[%s213 + $0x110] sm:$0xff]
      %v269 = vld [vmem:[%s213 + $0x118] sm:$0xff]
      %v270 = vld [vmem:[%s213 + $0x120] sm:$0xff]
      %v271 = vld [vmem:[%s213 + $0x128] sm:$0xff]
      %v272 = vld [vmem:[%s213 + $0x130] sm:$0xff]
      %v273 = vld [vmem:[%s213 + $0x138] sm:$0xff]
      %v274 = vld [vmem:[%s213 + $0x140] sm:$0xff]
      %v275 = vld [vmem:[%s213 + $0x148] sm:$0xff]
      %v276 = vld [vmem:[%s213 + $0x150] sm:$0xff]
      %v277 = vld [vmem:[%s213 + $0x158] sm:$0xff]
      %v278 = vld [vmem:[%s213 + $0x160] sm:$0xff]
      %v279 = vld [vmem:[%s213 + $0x168] sm:$0xff]
      %v280 = vld [vmem:[%s213 + $0x170] sm:$0xff]
      %v281 = vld [vmem:[%s213 + $0x178] sm:$0xff]
      %v282 = vld [vmem:[%s213 + $0x180] sm:$0xff]
      %v283 = vld [vmem:[%s213 + $0x188] sm:$0xff]
      %v284 = vld [vmem:[%s213 + $0x190] sm:$0xff]
      %v285 = vld [vmem:[%s213 + $0x198] sm:$0xff]
      %v286 = vld [vmem:[%s213 + $0x1a0] sm:$0xff]
      %v287 = vld [vmem:[%s213 + $0x1a8] sm:$0xff]
      %v288 = vld [vmem:[%s213 + $0x1b0] sm:$0xff]
      %v289 = vld [vmem:[%s213 + $0x1b8] sm:$0xff]
      %v290 = vld [vmem:[%s213 + $0x1c0] sm:$0xff]
      %v291 = vld [vmem:[%s213 + $0x1c8] sm:$0xff]
      %v292 = vld [vmem:[%s213 + $0x1d0] sm:$0xff]
      %v293 = vld [vmem:[%s213 + $0x1d8] sm:$0xff]
      %v294 = vld [vmem:[%s213 + $0x1e0] sm:$0xff]
      %v295 = vld [vmem:[%s213 + $0x1e8] sm:$0xff]
      %v296 = vld [vmem:[%s213 + $0x1f0] sm:$0xff]
      %v297 = vld [vmem:[%s213 + $0x1f8] sm:$0xff]
      %v298 = vld [vmem:[%s2] sm:$0xff]
      %v299 = vld [vmem:[%s2 + $0x8] sm:$0xff]
      %v300 = vld [vmem:[%s2 + $0x10] sm:$0xff]
      %v301 = vld [vmem:[%s2 + $0x18] sm:$0xff]
      %303 = vset.pattern.permute.xlu0 0
      %304 = vperm.xlu0 %303, %v298
      %v305 = vpop.permute.xlu0 %304
      %308 = vset.pattern.permute.xlu0 0
      %309 = vperm.xlu0 %308, %v299
      %v310 = vpop.permute.xlu0 %309
      %313 = vset.pattern.permute.xlu0 0
      %314 = vperm.xlu0 %313, %v300
      %v315 = vpop.permute.xlu0 %314
      %318 = vset.pattern.permute.xlu0 0
      %319 = vperm.xlu0 %318, %v301
      %v320 = vpop.permute.xlu0 %319
      %v326 = vunpack.c.l.b16 %v230
      %v327 = vunpack.c.h.b16 %v230
      %v328 = vunpack.c.l.b16 %v231
      %v329 = vunpack.c.h.b16 %v231
      %v330 = vunpack.c.l.b16 %v232
      %v331 = vunpack.c.h.b16 %v232
      %v332 = vunpack.c.l.b16 %v233
      %v333 = vunpack.c.h.b16 %v233
      %v334 = vpack.c.b16 %v328, %v326
      %v335 = vpack.c.b16 %v329, %v327
      %v336 = vpack.c.b16 %v332, %v330
      %v337 = vpack.c.b16 %v333, %v331
      %v406 = vunpack.c.l.b16 %v234
      %v407 = vunpack.c.h.b16 %v234
      %v408 = vunpack.c.l.b16 %v235
      %v409 = vunpack.c.h.b16 %v235
      %v410 = vunpack.c.l.b16 %v236
      %v411 = vunpack.c.h.b16 %v236
      %v412 = vunpack.c.l.b16 %v237
      %v413 = vunpack.c.h.b16 %v237
      %v414 = vunpack.c.l.b16 %v238
      %v415 = vunpack.c.h.b16 %v238
      %v416 = vunpack.c.l.b16 %v239
      %v417 = vunpack.c.h.b16 %v239
      %v418 = vunpack.c.l.b16 %v240
      %v419 = vunpack.c.h.b16 %v240
      %v420 = vunpack.c.l.b16 %v241
      %v421 = vunpack.c.h.b16 %v241
      %v422 = vunpack.c.l.b16 %v242
      %v423 = vunpack.c.h.b16 %v242
      %v424 = vunpack.c.l.b16 %v243
      %v425 = vunpack.c.h.b16 %v243
      %v426 = vunpack.c.l.b16 %v244
      %v427 = vunpack.c.h.b16 %v244
      %v428 = vunpack.c.l.b16 %v245
      %v429 = vunpack.c.h.b16 %v245
      %v430 = vunpack.c.l.b16 %v246
      %v431 = vunpack.c.h.b16 %v246
      %v432 = vunpack.c.l.b16 %v247
      %v433 = vunpack.c.h.b16 %v247
      %v434 = vunpack.c.l.b16 %v248
      %v435 = vunpack.c.h.b16 %v248
      %v436 = vunpack.c.l.b16 %v249
      %v437 = vunpack.c.h.b16 %v249
      %v438 = vunpack.c.l.b16 %v250
      %v439 = vunpack.c.h.b16 %v250
      %v440 = vunpack.c.l.b16 %v251
      %v441 = vunpack.c.h.b16 %v251
      %v442 = vunpack.c.l.b16 %v252
      %v443 = vunpack.c.h.b16 %v252
      %v444 = vunpack.c.l.b16 %v253
      %v445 = vunpack.c.h.b16 %v253
      %v446 = vunpack.c.l.b16 %v254
      %v447 = vunpack.c.h.b16 %v254
      %v448 = vunpack.c.l.b16 %v255
      %v449 = vunpack.c.h.b16 %v255
      %v450 = vunpack.c.l.b16 %v256
      %v451 = vunpack.c.h.b16 %v256
      %v452 = vunpack.c.l.b16 %v257
      %v453 = vunpack.c.h.b16 %v257
      %v454 = vunpack.c.l.b16 %v258
      %v455 = vunpack.c.h.b16 %v258
      %v456 = vunpack.c.l.b16 %v259
      %v457 = vunpack.c.h.b16 %v259
      %v458 = vunpack.c.l.b16 %v260
      %v459 = vunpack.c.h.b16 %v260
      %v460 = vunpack.c.l.b16 %v261
      %v461 = vunpack.c.h.b16 %v261
      %v462 = vunpack.c.l.b16 %v262
      %v463 = vunpack.c.h.b16 %v262
      %v464 = vunpack.c.l.b16 %v263
      %v465 = vunpack.c.h.b16 %v263
      %v466 = vunpack.c.l.b16 %v264
      %v467 = vunpack.c.h.b16 %v264
      %v468 = vunpack.c.l.b16 %v265
      %v469 = vunpack.c.h.b16 %v265
      %v470 = vunpack.c.l.b16 %v266
      %v471 = vunpack.c.h.b16 %v266
      %v472 = vunpack.c.l.b16 %v267
      %v473 = vunpack.c.h.b16 %v267
      %v474 = vunpack.c.l.b16 %v268
      %v475 = vunpack.c.h.b16 %v268
      %v476 = vunpack.c.l.b16 %v269
      %v477 = vunpack.c.h.b16 %v269
      %v478 = vunpack.c.l.b16 %v270
      %v479 = vunpack.c.h.b16 %v270
      %v480 = vunpack.c.l.b16 %v271
      %v481 = vunpack.c.h.b16 %v271
      %v482 = vunpack.c.l.b16 %v272
      %v483 = vunpack.c.h.b16 %v272
      %v484 = vunpack.c.l.b16 %v273
      %v485 = vunpack.c.h.b16 %v273
      %v486 = vunpack.c.l.b16 %v274
      %v487 = vunpack.c.h.b16 %v274
      %v488 = vunpack.c.l.b16 %v275
      %v489 = vunpack.c.h.b16 %v275
      %v490 = vunpack.c.l.b16 %v276
      %v491 = vunpack.c.h.b16 %v276
      %v492 = vunpack.c.l.b16 %v277
      %v493 = vunpack.c.h.b16 %v277
      %v494 = vunpack.c.l.b16 %v278
      %v495 = vunpack.c.h.b16 %v278
      %v496 = vunpack.c.l.b16 %v279
      %v497 = vunpack.c.h.b16 %v279
      %v498 = vunpack.c.l.b16 %v280
      %v499 = vunpack.c.h.b16 %v280
      %v500 = vunpack.c.l.b16 %v281
      %v501 = vunpack.c.h.b16 %v281
      %v502 = vunpack.c.l.b16 %v282
      %v503 = vunpack.c.h.b16 %v282
      %v504 = vunpack.c.l.b16 %v283
      %v505 = vunpack.c.h.b16 %v283
      %v506 = vunpack.c.l.b16 %v284
      %v507 = vunpack.c.h.b16 %v284
      %v508 = vunpack.c.l.b16 %v285
      %v509 = vunpack.c.h.b16 %v285
      %v510 = vunpack.c.l.b16 %v286
      %v511 = vunpack.c.h.b16 %v286
      %v512 = vunpack.c.l.b16 %v287
      %v513 = vunpack.c.h.b16 %v287
      %v514 = vunpack.c.l.b16 %v288
      %v515 = vunpack.c.h.b16 %v288
      %v516 = vunpack.c.l.b16 %v289
      %v517 = vunpack.c.h.b16 %v289
      %v518 = vunpack.c.l.b16 %v290
      %v519 = vunpack.c.h.b16 %v290
      %v520 = vunpack.c.l.b16 %v291
      %v521 = vunpack.c.h.b16 %v291
      %v522 = vunpack.c.l.b16 %v292
      %v523 = vunpack.c.h.b16 %v292
      %v524 = vunpack.c.l.b16 %v293
      %v525 = vunpack.c.h.b16 %v293
      %v526 = vunpack.c.l.b16 %v294
      %v527 = vunpack.c.h.b16 %v294
      %v528 = vunpack.c.l.b16 %v295
      %v529 = vunpack.c.h.b16 %v295
      %v530 = vunpack.c.l.b16 %v296
      %v531 = vunpack.c.h.b16 %v296
      %v532 = vunpack.c.l.b16 %v297
      %v533 = vunpack.c.h.b16 %v297
      %v534 = vpack.c.b16 %v410, %v406
      %v535 = vpack.c.b16 %v411, %v407
      %v536 = vpack.c.b16 %v412, %v408
      %v537 = vpack.c.b16 %v413, %v409
      %v538 = vpack.c.b16 %v418, %v414
      %v539 = vpack.c.b16 %v419, %v415
      %v540 = vpack.c.b16 %v420, %v416
      %v541 = vpack.c.b16 %v421, %v417
      %v542 = vpack.c.b16 %v426, %v422
      %v543 = vpack.c.b16 %v427, %v423
      %v544 = vpack.c.b16 %v428, %v424
      %v545 = vpack.c.b16 %v429, %v425
      %v546 = vpack.c.b16 %v434, %v430
      %v547 = vpack.c.b16 %v435, %v431
      %v548 = vpack.c.b16 %v436, %v432
      %v549 = vpack.c.b16 %v437, %v433
      %v550 = vpack.c.b16 %v442, %v438
      %v551 = vpack.c.b16 %v443, %v439
      %v552 = vpack.c.b16 %v444, %v440
      %v553 = vpack.c.b16 %v445, %v441
      %v554 = vpack.c.b16 %v450, %v446
      %v555 = vpack.c.b16 %v451, %v447
      %v556 = vpack.c.b16 %v452, %v448
      %v557 = vpack.c.b16 %v453, %v449
      %v558 = vpack.c.b16 %v458, %v454
      %v559 = vpack.c.b16 %v459, %v455
      %v560 = vpack.c.b16 %v460, %v456
      %v561 = vpack.c.b16 %v461, %v457
      %v562 = vpack.c.b16 %v466, %v462
      %v563 = vpack.c.b16 %v467, %v463
      %v564 = vpack.c.b16 %v468, %v464
      %v565 = vpack.c.b16 %v469, %v465
      %v566 = vpack.c.b16 %v474, %v470
      %v567 = vpack.c.b16 %v475, %v471
      %v568 = vpack.c.b16 %v476, %v472
      %v569 = vpack.c.b16 %v477, %v473
      %v570 = vpack.c.b16 %v482, %v478
      %v571 = vpack.c.b16 %v483, %v479
      %v572 = vpack.c.b16 %v484, %v480
      %v573 = vpack.c.b16 %v485, %v481
      %v574 = vpack.c.b16 %v490, %v486
      %v575 = vpack.c.b16 %v491, %v487
      %v576 = vpack.c.b16 %v492, %v488
      %v577 = vpack.c.b16 %v493, %v489
      %v578 = vpack.c.b16 %v498, %v494
      %v579 = vpack.c.b16 %v499, %v495
      %v580 = vpack.c.b16 %v500, %v496
      %v581 = vpack.c.b16 %v501, %v497
      %v582 = vpack.c.b16 %v506, %v502
      %v583 = vpack.c.b16 %v507, %v503
      %v584 = vpack.c.b16 %v508, %v504
      %v585 = vpack.c.b16 %v509, %v505
      %v586 = vpack.c.b16 %v514, %v510
      %v587 = vpack.c.b16 %v515, %v511
      %v588 = vpack.c.b16 %v516, %v512
      %v589 = vpack.c.b16 %v517, %v513
      %v590 = vpack.c.b16 %v522, %v518
      %v591 = vpack.c.b16 %v523, %v519
      %v592 = vpack.c.b16 %v524, %v520
      %v593 = vpack.c.b16 %v525, %v521
      %v594 = vpack.c.b16 %v530, %v526
      %v595 = vpack.c.b16 %v531, %v527
      %v596 = vpack.c.b16 %v532, %v528
      %v597 = vpack.c.b16 %v533, %v529
      %662 = vmatprep.subr.bf16.mxu0 %v535
      %663 = vmatpush1.bf16.msra.mxu0 %v534
      %664 = vmatprep.subr.bf16.mxu0 %v539
      %665 = vmatpush1.bf16.msra.mxu0 %v538
      %666 = vmatprep.subr.bf16.mxu0 %v543
      %667 = vmatpush1.bf16.msra.mxu0 %v542
      %668 = vmatprep.subr.bf16.mxu0 %v547
      %669 = vmatpush1.bf16.msra.mxu0 %v546
      %670 = vmatprep.subr.bf16.mxu0 %v551
      %671 = vmatpush1.bf16.msra.mxu0 %v550
      %672 = vmatprep.subr.bf16.mxu0 %v555
      %673 = vmatpush1.bf16.msra.mxu0 %v554
      %674 = vmatprep.subr.bf16.mxu0 %v559
      %675 = vmatpush1.bf16.msra.mxu0 %v558
      %676 = vmatprep.subr.bf16.mxu0 %v563
      %677 = vmatpush1.bf16.msra.mxu0 %v562
      %678 = vmatprep.subr.bf16.mxu0 %v567
      %679 = vmatpush1.bf16.msra.mxu0 %v566
      %680 = vmatprep.subr.bf16.mxu0 %v571
      %681 = vmatpush1.bf16.msra.mxu0 %v570
      %682 = vmatprep.subr.bf16.mxu0 %v575
      %683 = vmatpush1.bf16.msra.mxu0 %v574
      %684 = vmatprep.subr.bf16.mxu0 %v579
      %685 = vmatpush1.bf16.msra.mxu0 %v578
      %686 = vmatprep.subr.bf16.mxu0 %v583
      %687 = vmatpush1.bf16.msra.mxu0 %v582
      %688 = vmatprep.subr.bf16.mxu0 %v587
      %689 = vmatpush1.bf16.msra.mxu0 %v586
      %690 = vmatprep.subr.bf16.mxu0 %v591
      %691 = vmatpush1.bf16.msra.mxu0 %v590
      %692 = vmatprep.subr.bf16.mxu0 %v595
      %693 = vmatpush1.bf16.msra.mxu0 %v594
      %694 = vmatprep.mubr.bf16.mxu0 %v335
      %695 = vmatmul.mubr.bf16.gmra.mrb[0].mxu0 %v334
      %v696 = vpop.f32.mrb[0].mxu0
      %v697 = vadd.f32 %v305, %v696
      %v698 = vpop.f32.mrb[0].mxu0
      %v699 = vadd.f32 %v305, %v698
      %v700 = vpop.f32.mrb[0].mxu0
      %v701 = vadd.f32 %v310, %v700
      %v702 = vpop.f32.mrb[0].mxu0
      %v703 = vadd.f32 %v310, %v702
      %704 = vmatprep.mubr.bf16.mxu0 %v337
      %705 = vmatmul.mubr.bf16.gmra.mrb[0].mxu0 %v336
      %v706 = vpop.f32.mrb[0].mxu0
      %v707 = vadd.f32 %v315, %v706
      %v708 = vpop.f32.mrb[0].mxu0
      %v709 = vadd.f32 %v315, %v708
      %v710 = vpop.f32.mrb[0].mxu0
      %v711 = vadd.f32 %v320, %v710
      %v712 = vpop.f32.mrb[0].mxu0
      %v713 = vadd.f32 %v320, %v712
      %714 = vdwg.mxu0
      %715 = vmatprep.subr.bf16.mxu0 %v537
      %716 = vmatpush1.bf16.msra.mxu0 %v536
      %717 = vmatprep.subr.bf16.mxu0 %v541
      %718 = vmatpush1.bf16.msra.mxu0 %v540
      %719 = vmatprep.subr.bf16.mxu0 %v545
      %720 = vmatpush1.bf16.msra.mxu0 %v544
      %721 = vmatprep.subr.bf16.mxu0 %v549
      %722 = vmatpush1.bf16.msra.mxu0 %v548
      %723 = vmatprep.subr.bf16.mxu0 %v553
      %724 = vmatpush1.bf16.msra.mxu0 %v552
      %725 = vmatprep.subr.bf16.mxu0 %v557
      %726 = vmatpush1.bf16.msra.mxu0 %v556
      %727 = vmatprep.subr.bf16.mxu0 %v561
      %728 = vmatpush1.bf16.msra.mxu0 %v560
      %729 = vmatprep.subr.bf16.mxu0 %v565
      %730 = vmatpush1.bf16.msra.mxu0 %v564
      %731 = vmatprep.subr.bf16.mxu0 %v569
      %732 = vmatpush1.bf16.msra.mxu0 %v568
      %733 = vmatprep.subr.bf16.mxu0 %v573
      %734 = vmatpush1.bf16.msra.mxu0 %v572
      %735 = vmatprep.subr.bf16.mxu0 %v577
      %736 = vmatpush1.bf16.msra.mxu0 %v576
      %737 = vmatprep.subr.bf16.mxu0 %v581
      %738 = vmatpush1.bf16.msra.mxu0 %v580
      %739 = vmatprep.subr.bf16.mxu0 %v585
      %740 = vmatpush1.bf16.msra.mxu0 %v584
      %741 = vmatprep.subr.bf16.mxu0 %v589
      %742 = vmatpush1.bf16.msra.mxu0 %v588
      %743 = vmatprep.subr.bf16.mxu0 %v593
      %744 = vmatpush1.bf16.msra.mxu0 %v592
      %745 = vmatprep.subr.bf16.mxu0 %v597
      %746 = vmatpush1.bf16.msra.mxu0 %v596
      %747 = vmatprep.mubr.bf16.mxu0 %v335
      %748 = vmatmul.mubr.bf16.gmra.mrb[0].mxu0 %v334
      %v749 = vpop.f32.mrb[0].mxu0
      %v750 = vadd.f32 %v305, %v749
      %v751 = vpop.f32.mrb[0].mxu0
      %v752 = vadd.f32 %v305, %v751
      %v753 = vpop.f32.mrb[0].mxu0
      %v754 = vadd.f32 %v310, %v753
      %v755 = vpop.f32.mrb[0].mxu0
      %v756 = vadd.f32 %v310, %v755
      %757 = vmatprep.mubr.bf16.mxu0 %v337
      %758 = vmatmul.mubr.bf16.gmra.mrb[0].mxu0 %v336
      %v759 = vpop.f32.mrb[0].mxu0
      %v760 = vadd.f32 %v315, %v759
      %v761 = vpop.f32.mrb[0].mxu0
      %v762 = vadd.f32 %v315, %v761
      %v763 = vpop.f32.mrb[0].mxu0
      %v764 = vadd.f32 %v320, %v763
      %v765 = vpop.f32.mrb[0].mxu0
      %v766 = vadd.f32 %v320, %v765
      %767 = vdwg.mxu0
      %v768 = vmax.f32 %v697, 0.0
      %v769 = vmax.f32 %v699, 0.0
      %v770 = vmax.f32 %v750, 0.0
      %v771 = vmax.f32 %v752, 0.0
      %v772 = vmax.f32 %v701, 0.0
      %v773 = vmax.f32 %v703, 0.0
      %v774 = vmax.f32 %v754, 0.0
      %v775 = vmax.f32 %v756, 0.0
      %v776 = vmax.f32 %v707, 0.0
      %v777 = vmax.f32 %v709, 0.0
      %v778 = vmax.f32 %v760, 0.0
      %v779 = vmax.f32 %v762, 0.0
      %v780 = vmax.f32 %v711, 0.0
      %v781 = vmax.f32 %v713, 0.0
      %v782 = vmax.f32 %v764, 0.0
      %v783 = vmax.f32 %v766, 0.0
      %784 = vst [vmem:[%s228] sm:$0xff] %v768
      %785 = vst [vmem:[%s228 + $0x8] sm:$0xff] %v769
      %786 = vst [vmem:[%s228 + $0x10] sm:$0xff] %v770
      %787 = vst [vmem:[%s228 + $0x18] sm:$0xff] %v771
      %788 = vst [vmem:[%s228 + $0x20] sm:$0xff] %v772
      %789 = vst [vmem:[%s228 + $0x28] sm:$0xff] %v773
      %790 = vst [vmem:[%s228 + $0x30] sm:$0xff] %v774
      %791 = vst [vmem:[%s228 + $0x38] sm:$0xff] %v775
      %792 = vst [vmem:[%s228 + $0x40] sm:$0xff] %v776
      %793 = vst [vmem:[%s228 + $0x48] sm:$0xff] %v777
      %794 = vst [vmem:[%s228 + $0x50] sm:$0xff] %v778
      %795 = vst [vmem:[%s228 + $0x58] sm:$0xff] %v779
      %796 = vst [vmem:[%s228 + $0x60] sm:$0xff] %v780
      %797 = vst [vmem:[%s228 + $0x68] sm:$0xff] %v781
      %798 = vst [vmem:[%s228 + $0x70] sm:$0xff] %v782
      %799 = vst [vmem:[%s228 + $0x78] sm:$0xff] %v783
      %s800 = smul.u32 4, %s19
      %p801 = scmp.lt.s32.totalorder %s18, 3
      %s802 = scalar_select %p801, %s18, 3
      %p803 = scmp.lt.s32.totalorder %s800, 3
      %s804 = scalar_select %p803, %s800, 3
      %s805 = smul.addr %s802, 16
      %s806 = sadd.s32 %s804, %s805
      %s807 = smul.addr %s806, 8
      %s808 = scalar_lea.vmem %s3, %s807
      // Predicated region
      $region33: #{retina_forward.17} parent=31 // pred_check
        %p809 = pneg %p121
      $region34: #{retina_forward.17} parent=31 // pred_check_branch
        %811 = sbr.rel (%p809) target = $region36
      $region35: #{retina_forward.17} parent=31 // pred_region
        %s812 = smul.u32 4, %s19
      $region36: #{retina_forward.17} parent=31 // pred_fallthru
        _
    $region32: #{retina_forward.17} parent=5 // pred_fallthru
      _
    %p813 = scmp.le.s32.totalorder 2, %s9
    // Predicated region
    $region37: #{retina_forward.17} parent=5 // pred_check
      %p814 = pneg %p813
    $region38: #{retina_forward.17} parent=5 // pred_check_branch
      %816 = sbr.rel (%p814) target = $region40
    $region39: #{retina_forward.17} parent=5 // pred_region
      %s817 = ssub.s32 %s9, 2
      // Predicated region
      $region41: #{retina_forward.17} parent=39 // pred_check
        %p818 = pneg %p127
      $region42: #{retina_forward.17} parent=39 // pred_check_branch
        %820 = sbr.rel (%p818) target = $region44
      $region43: #{retina_forward.17} parent=39 // pred_region
        %s821 = smul.u32 4, %s21
        %p822 = scmp.lt.s32.totalorder %s20, 3
        %s823 = scalar_select %p822, %s20, 3
        %p824 = scmp.lt.s32.totalorder %s821, 3
        %s825 = scalar_select %p824, %s821, 3
        %s826 = smul.addr %s823, 16
        %s827 = sadd.s32 %s825, %s826
        %s828 = smul.addr %s827, 8
        %s829 = scalar_lea.vmem %s3, %s828
      $region44: #{retina_forward.17} parent=39 // pred_fallthru
        _
    $region40: #{retina_forward.17} parent=5 // pred_fallthru
      _
  $region6: #{retina_forward.17} parent=0 // loop_footer
    %s13 = sadd.s32 1, %s9
  $region7: #{retina_forward.17} parent=0 // loop_footer_branch
    %8 = sbr.rel target = $region3
  $region8: #{retina_forward.17} parent=0 // loop_exit
    _

// kernel: retina_forward.18
$region0: #{retina_forward.18}
  #allocation0 [shape = 'u32[]', space=smem, size = 0x4, offset = 0x4, fixed_abs, tag = 'smem constant byte address 0x4 - core index']
  #allocation1 [shape = 'u32[144,128]{1,0:T(1,128)}', space=vmem, size = 0x12000, scoped, tag = 'internal scratch']
  %s0 = inlined_call_operand.vmem [shape: bf16[4,128,2048], index: 0, kind: input, shape index: {}]
  %s1 = inlined_call_operand.vmem [shape: bf16[4,16,128], index: 1, kind: input, shape index: {}]
  %s2 = inlined_call_operand.vmem [shape: f32[16,1], index: 2, kind: input, shape index: {}]
  %s3 = inlined_call_operand.vmem [shape: f32[4,16,2048], index: 3, kind: output, shape index: {}]
  %s4 = sld [smem:[#allocation0]]
  $region45: #{retina_forward.18} parent=0
    _
  %s6 = ssub.s32 1, %s4
  %s7 = scalar_select 0, %s6, %s4
  loop: start=0, step=1, limit=6
  $region2: #{retina_forward.18} parent=0 // loop_pre_header
    _
  $region3: #{retina_forward.18} parent=0 // loop_header
    %s9 = sphi 0, %s13
    %p10 = scmp.ge.s32.totalorder %s9, 6
    %s16 = sphi 0, %s28
    %s17 = sphi 0, %s24
    %s18 = sphi 0, %s16
    %s19 = sphi 0, %s17
    %s20 = sphi 0, %s18
    %s21 = sphi 0, %s19
    %s33 = sphi 0, %s35
    %s36 = sphi 0, %s33
    %s37 = sphi 0, %s36
    %s53 = sphi 0, %s37
    %s59 = sphi 0, %s61
    %s62 = sphi 0, %s59
    %s63 = sphi 0, %s62
    %s79 = sphi 0, %s63
    %s83 = sphi 0, %s83
    %s85 = sphi 0, %s83
    %s86 = sphi 0, %s85
    %s100 = sphi 0, %s86
    %s108 = sphi 0, %s110
    %s111 = sphi 0, %s108
    %s112 = sphi 0, %s111
    %s128 = sphi 0, %s112
  $region4: #{retina_forward.18} parent=0 // loop_header_branch
    %12 = sbr.rel (%p10) target = $region8
  $region5: #{retina_forward.18} parent=0 // loop_body
    %s14 = ssub.s32 %s9, 1
    %s15 = ssub.s32 %s9, 2
    %s22 = sadd.s32 1, %s17
    %p23 = scmp.ge.s32.totalorder %s22, 1
    %s24 = scalar_select %p23, 0, %s22
    %s25 = sadd.s32 1, %s16
    %s26 = scalar_select %p23, %s25, %s16
    %p27 = scmp.ge.s32.totalorder %s26, 4
    %s28 = scalar_select %p27, 0, %s26
    %s29 = ssub.s32 %s16, %s28
    %s30 = ssub.s32 %s17, %s24
    %s31 = sor.u32 %s29, %s30
    %p32 = scmp.eq.s32.totalorder %s31, 0
    %s34 = sadd.s32 %s33, 1
    %s35 = scalar_select %p32, %s33, %s34
    %p38 = pneg %p32
    %p39 = scmp.eq.s32.totalorder %s9, 3
    %p40 = por %p38, %p39
    %p41 = scmp.ne.s32.totalorder %s33, %s36
    %p42 = scmp.eq.s32.totalorder %s9, 0
    %p43 = por %p41, %p42
    %p44 = scmp.ne.s32.totalorder %s33, %s36
    %p45 = scmp.eq.s32.totalorder %s14, 3
    %p46 = por %p44, %p45
    %p47 = scmp.ne.s32.totalorder %s36, %s37
    %p48 = scmp.eq.s32.totalorder %s14, 0
    %p49 = por %p47, %p48
    %p50 = scmp.ne.s32.totalorder %s36, %s37
    %p51 = scmp.eq.s32.totalorder %s15, 3
    %p52 = por %p50, %p51
    %p54 = scmp.ne.s32.totalorder %s37, %s53
    %p55 = scmp.eq.s32.totalorder %s15, 0
    %p56 = por %p54, %p55
    %s57 = ssub.s32 %s16, %s28
    %p58 = scmp.eq.s32.totalorder %s57, 0
    %s60 = sadd.s32 %s59, 1
    %s61 = scalar_select %p58, %s59, %s60
    %p64 = pneg %p58
    %p65 = scmp.eq.s32.totalorder %s9, 3
    %p66 = por %p64, %p65
    %p67 = scmp.ne.s32.totalorder %s59, %s62
    %p68 = scmp.eq.s32.totalorder %s9, 0
    %p69 = por %p67, %p68
    %p70 = scmp.ne.s32.totalorder %s59, %s62
    %p71 = scmp.eq.s32.totalorder %s14, 3
    %p72 = por %p70, %p71
    %p73 = scmp.ne.s32.totalorder %s62, %s63
    %p74 = scmp.eq.s32.totalorder %s14, 0
    %p75 = por %p73, %p74
    %p76 = scmp.ne.s32.totalorder %s62, %s63
    %p77 = scmp.eq.s32.totalorder %s15, 3
    %p78 = por %p76, %p77
    %p80 = scmp.ne.s32.totalorder %s63, %s79
    %p81 = scmp.eq.s32.totalorder %s15, 0
    %p82 = por %p80, %p81
    %s84 = sadd.s32 %s83, 1
    %p87 = scmp.eq.s32.totalorder %s9, 3
    %p88 = scmp.ne.s32.totalorder %s83, %s85
    %p89 = scmp.eq.s32.totalorder %s9, 0
    %p90 = por %p88, %p89
    %p91 = scmp.ne.s32.totalorder %s83, %s85
    %p92 = scmp.eq.s32.totalorder %s14, 3
    %p93 = por %p91, %p92
    %p94 = scmp.ne.s32.totalorder %s85, %s86
    %p95 = scmp.eq.s32.totalorder %s14, 0
    %p96 = por %p94, %p95
    %p97 = scmp.ne.s32.totalorder %s85, %s86
    %p98 = scmp.eq.s32.totalorder %s15, 3
    %p99 = por %p97, %p98
    %p101 = scmp.ne.s32.totalorder %s86, %s100
    %p102 = scmp.eq.s32.totalorder %s15, 0
    %p103 = por %p101, %p102
    %s104 = ssub.s32 %s16, %s28
    %s105 = ssub.s32 %s17, %s24
    %s106 = sor.u32 %s104, %s105
    %p107 = scmp.eq.s32.totalorder %s106, 0
    %s109 = sadd.s32 %s108, 1
    %s110 = scalar_select %p107, %s108, %s109
    %p113 = pneg %p107
    %p114 = scmp.eq.s32.totalorder %s9, 3
    %p115 = por %p113, %p114
    %p116 = scmp.ne.s32.totalorder %s108, %s111
    %p117 = scmp.eq.s32.totalorder %s9, 0
    %p118 = por %p116, %p117
    %p119 = scmp.ne.s32.totalorder %s108, %s111
    %p120 = scmp.eq.s32.totalorder %s14, 3
    %p121 = por %p119, %p120
    %p122 = scmp.ne.s32.totalorder %s111, %s112
    %p123 = scmp.eq.s32.totalorder %s14, 0
    %p124 = por %p122, %p123
    %p125 = scmp.ne.s32.totalorder %s111, %s112
    %p126 = scmp.eq.s32.totalorder %s15, 3
    %p127 = por %p125, %p126
    %p129 = scmp.ne.s32.totalorder %s112, %s128
    %p130 = scmp.eq.s32.totalorder %s15, 0
    %p131 = por %p129, %p130
    %p132 = scmp.le.s32.totalorder 1, %s9
    %p133 = scmp.lt.s32.totalorder %s9, 5
    %p134 = pnand %p132, %p133
    %p135 = pneg %p134
    // Predicated region
    $region9: #{retina_forward.18} parent=5 // pred_check
      _
    $region10: #{retina_forward.18} parent=5 // pred_check_branch
      %137 = sbr.rel (%p134) target = $region12
    $region11: #{retina_forward.18} parent=5 // pred_region
      %s138 = ssub.s32 %s9, 1
      // Predicated region
      $region13: #{retina_forward.18} parent=11 // pred_check
        %p139 = pneg %p96
      $region14: #{retina_forward.18} parent=11 // pred_check_branch
        %141 = sbr.rel (%p139) target = $region16
      $region15: #{retina_forward.18} parent=11 // pred_region
        _
      $region16: #{retina_forward.18} parent=11 // pred_fallthru
        _
    $region12: #{retina_forward.18} parent=5 // pred_fallthru
      _
    %p142 = scmp.lt.s32.totalorder %s9, 4
    // Predicated region
    $region17: #{retina_forward.18} parent=5 // pred_check
      %p143 = pneg %p142
    $region18: #{retina_forward.18} parent=5 // pred_check_branch
      %145 = sbr.rel (%p143) target = $region20
    $region19: #{retina_forward.18} parent=5 // pred_region
      // Predicated region
      $region21: #{retina_forward.18} parent=19 // pred_check
        %p146 = pneg %p43
      $region22: #{retina_forward.18} parent=19 // pred_check_branch
        %148 = sbr.rel (%p146) target = $region24
      $region23: #{retina_forward.18} parent=19 // pred_region
        %s149 = smul.u32 16, %s17
        %p150 = scmp.lt.s32.totalorder %s16, 3
        %s151 = scalar_select %p150, %s16, 3
        %p152 = scmp.lt.s32.totalorder %s149, 15
        %s153 = scalar_select %p152, %s149, 15
        %s154 = smul.addr %s151, 256
        %s155 = sadd.s32 %s153, %s154
        %s156 = smul.addr %s155, 4
        %s157 = scalar_lea.vmem %s0, %s156
        %s158 = smul.u32 16, %s17
      $region24: #{retina_forward.18} parent=19 // pred_fallthru
        _
      // Predicated region
      $region25: #{retina_forward.18} parent=19 // pred_check
        %p159 = pneg %p69
      $region26: #{retina_forward.18} parent=19 // pred_check_branch
        %161 = sbr.rel (%p159) target = $region28
      $region27: #{retina_forward.18} parent=19 // pred_region
        %p162 = scmp.lt.s32.totalorder %s16, 3
        %s163 = scalar_select %p162, %s16, 3
        %s164 = smul.addr %s163, 2
        %s165 = smul.addr %s164, 4
        %s166 = scalar_lea.vmem %s1, %s165
      $region28: #{retina_forward.18} parent=19 // pred_fallthru
        _
    $region20: #{retina_forward.18} parent=5 // pred_fallthru
      _
    %p167 = scmp.le.s32.totalorder 1, %s9
    %p168 = scmp.lt.s32.totalorder %s9, 5
    %p169 = pnand %p167, %p168
    %p170 = pneg %p169
    // Predicated region
    $region29: #{retina_forward.18} parent=5 // pred_check
      _
    $region30: #{retina_forward.18} parent=5 // pred_check_branch
      %172 = sbr.rel (%p169) target = $region32
    $region31: #{retina_forward.18} parent=5 // pred_region
      %s173 = ssub.s32 %s9, 1
      %s174 = smul.u32 16, %s19
      %p175 = scmp.lt.s32.totalorder %s18, 3
      %s176 = scalar_select %p175, %s18, 3
      %p177 = scmp.lt.s32.totalorder %s174, 15
      %s178 = scalar_select %p177, %s174, 15
      %s179 = smul.addr %s176, 256
      %s180 = sadd.s32 %s178, %s179
      %s181 = smul.addr %s180, 4
      %s182 = scalar_lea.vmem %s0, %s181
      %p183 = pneg %p49
      %p184 = pneg %p46
      %p185 = scmp.lt.s32.totalorder %s18, 3
      %s186 = scalar_select %p185, %s18, 3
      %s187 = smul.addr %s186, 2
      %s188 = smul.addr %s187, 4
      %s189 = scalar_lea.vmem %s1, %s188
      %p190 = pneg %p75
      %p191 = pneg %p72
      %p192 = pneg %p96
      %p193 = pneg %p93
      %p194 = pneg %p124
      %p195 = pneg %p121
      %s196 = smul.u32 16, %s19
      %p197 = scmp.lt.s32.totalorder %s18, 3
      %s198 = scalar_select %p197, %s18, 3
      %p199 = scmp.lt.s32.totalorder %s196, 15
      %s200 = scalar_select %p199, %s196, 15
      %s201 = smul.addr %s198, 32
      %s202 = sadd.s32 %s200, %s201
      %s203 = smul.addr %s202, 8
      %s204 = scalar_lea.vmem %s3, %s203
      %s205 = smul.u32 16, %s19
      %p206 = scmp.lt.s32.totalorder %s18, 3
      %s207 = scalar_select %p206, %s18, 3
      %p208 = scmp.lt.s32.totalorder %s205, 15
      %s209 = scalar_select %p208, %s205, 15
      %s210 = smul.addr %s207, 256
      %s211 = sadd.s32 %s209, %s210
      %s212 = smul.addr %s211, 4
      %s213 = scalar_lea.vmem %s0, %s212
      %s214 = smul.u32 16, %s19
      %p215 = scmp.lt.s32.totalorder %s18, 3
      %s216 = scalar_select %p215, %s18, 3
      %s217 = smul.addr %s216, 2
      %s218 = smul.addr %s217, 4
      %s219 = scalar_lea.vmem %s1, %s218
      %s220 = smul.u32 16, %s19
      %p221 = scmp.lt.s32.totalorder %s18, 3
      %s222 = scalar_select %p221, %s18, 3
      %p223 = scmp.lt.s32.totalorder %s220, 15
      %s224 = scalar_select %p223, %s220, 15
      %s225 = smul.addr %s222, 32
      %s226 = sadd.s32 %s224, %s225
      %s227 = smul.addr %s226, 8
      %s228 = scalar_lea.vmem %s3, %s227
      %s229 = smul.u32 16, %s19
      %v231 = vld [vmem:[%s219] sm:$0xf]
      %v232 = vld [vmem:[%s219 + $0x4] sm:$0xf]
      %v233 = vld [vmem:[%s213] sm:$0xff]
      %v234 = vld [vmem:[%s213 + $0x8] sm:$0xff]
      %v235 = vld [vmem:[%s213 + $0x10] sm:$0xff]
      %v236 = vld [vmem:[%s213 + $0x18] sm:$0xff]
      %v237 = vld [vmem:[%s213 + $0x20] sm:$0xff]
      %v238 = vld [vmem:[%s213 + $0x28] sm:$0xff]
      %v239 = vld [vmem:[%s213 + $0x30] sm:$0xff]
      %v240 = vld [vmem:[%s213 + $0x38] sm:$0xff]
      %v241 = vld [vmem:[%s213 + $0x40] sm:$0xff]
      %v242 = vld [vmem:[%s213 + $0x48] sm:$0xff]
      %v243 = vld [vmem:[%s213 + $0x50] sm:$0xff]
      %v244 = vld [vmem:[%s213 + $0x58] sm:$0xff]
      %v245 = vld [vmem:[%s213 + $0x60] sm:$0xff]
      %v246 = vld [vmem:[%s213 + $0x68] sm:$0xff]
      %v247 = vld [vmem:[%s213 + $0x70] sm:$0xff]
      %v248 = vld [vmem:[%s213 + $0x78] sm:$0xff]
      %v249 = vld [vmem:[%s213 + $0x80] sm:$0xff]
      %v250 = vld [vmem:[%s213 + $0x88] sm:$0xff]
      %v251 = vld [vmem:[%s213 + $0x90] sm:$0xff]
      %v252 = vld [vmem:[%s213 + $0x98] sm:$0xff]
      %v253 = vld [vmem:[%s213 + $0xa0] sm:$0xff]
      %v254 = vld [vmem:[%s213 + $0xa8] sm:$0xff]
      %v255 = vld [vmem:[%s213 + $0xb0] sm:$0xff]
      %v256 = vld [vmem:[%s213 + $0xb8] sm:$0xff]
      %v257 = vld [vmem:[%s213 + $0xc0] sm:$0xff]
      %v258 = vld [vmem:[%s213 + $0xc8] sm:$0xff]
      %v259 = vld [vmem:[%s213 + $0xd0] sm:$0xff]
      %v260 = vld [vmem:[%s213 + $0xd8] sm:$0xff]
      %v261 = vld [vmem:[%s213 + $0xe0] sm:$0xff]
      %v262 = vld [vmem:[%s213 + $0xe8] sm:$0xff]
      %v263 = vld [vmem:[%s213 + $0xf0] sm:$0xff]
      %v264 = vld [vmem:[%s213 + $0xf8] sm:$0xff]
      %v265 = vld [vmem:[%s213 + $0x100] sm:$0xff]
      %v266 = vld [vmem:[%s213 + $0x108] sm:$0xff]
      %v267 = vld [vmem:[%s213 + $0x110] sm:$0xff]
      %v268 = vld [vmem:[%s213 + $0x118] sm:$0xff]
      %v269 = vld [vmem:[%s213 + $0x120] sm:$0xff]
      %v270 = vld [vmem:[%s213 + $0x128] sm:$0xff]
      %v271 = vld [vmem:[%s213 + $0x130] sm:$0xff]
      %v272 = vld [vmem:[%s213 + $0x138] sm:$0xff]
      %v273 = vld [vmem:[%s213 + $0x140] sm:$0xff]
      %v274 = vld [vmem:[%s213 + $0x148] sm:$0xff]
      %v275 = vld [vmem:[%s213 + $0x150] sm:$0xff]
      %v276 = vld [vmem:[%s213 + $0x158] sm:$0xff]
      %v277 = vld [vmem:[%s213 + $0x160] sm:$0xff]
      %v278 = vld [vmem:[%s213 + $0x168] sm:$0xff]
      %v279 = vld [vmem:[%s213 + $0x170] sm:$0xff]
      %v280 = vld [vmem:[%s213 + $0x178] sm:$0xff]
      %v281 = vld [vmem:[%s213 + $0x180] sm:$0xff]
      %v282 = vld [vmem:[%s213 + $0x188] sm:$0xff]
      %v283 = vld [vmem:[%s213 + $0x190] sm:$0xff]
      %v284 = vld [vmem:[%s213 + $0x198] sm:$0xff]
      %v285 = vld [vmem:[%s213 + $0x1a0] sm:$0xff]
      %v286 = vld [vmem:[%s213 + $0x1a8] sm:$0xff]
      %v287 = vld [vmem:[%s213 + $0x1b0] sm:$0xff]
      %v288 = vld [vmem:[%s213 + $0x1b8] sm:$0xff]
      %v289 = vld [vmem:[%s213 + $0x1c0] sm:$0xff]
      %v290 = vld [vmem:[%s213 + $0x1c8] sm:$0xff]
      %v291 = vld [vmem:[%s213 + $0x1d0] sm:$0xff]
      %v292 = vld [vmem:[%s213 + $0x1d8] sm:$0xff]
      %v293 = vld [vmem:[%s213 + $0x1e0] sm:$0xff]
      %v294 = vld [vmem:[%s213 + $0x1e8] sm:$0xff]
      %v295 = vld [vmem:[%s213 + $0x1f0] sm:$0xff]
      %v296 = vld [vmem:[%s213 + $0x1f8] sm:$0xff]
      %v297 = vld [vmem:[%s213 + $0x200] sm:$0xff]
      %v298 = vld [vmem:[%s213 + $0x208] sm:$0xff]
      %v299 = vld [vmem:[%s213 + $0x210] sm:$0xff]
      %v300 = vld [vmem:[%s213 + $0x218] sm:$0xff]
      %v301 = vld [vmem:[%s213 + $0x220] sm:$0xff]
      %v302 = vld [vmem:[%s213 + $0x228] sm:$0xff]
      %v303 = vld [vmem:[%s213 + $0x230] sm:$0xff]
      %v304 = vld [vmem:[%s213 + $0x238] sm:$0xff]
      %v305 = vld [vmem:[%s213 + $0x240] sm:$0xff]
      %v306 = vld [vmem:[%s213 + $0x248] sm:$0xff]
      %v307 = vld [vmem:[%s213 + $0x250] sm:$0xff]
      %v308 = vld [vmem:[%s213 + $0x258] sm:$0xff]
      %v309 = vld [vmem:[%s213 + $0x260] sm:$0xff]
      %v310 = vld [vmem:[%s213 + $0x268] sm:$0xff]
      %v311 = vld [vmem:[%s213 + $0x270] sm:$0xff]
      %v312 = vld [vmem:[%s213 + $0x278] sm:$0xff]
      %v313 = vld [vmem:[%s213 + $0x280] sm:$0xff]
      %v314 = vld [vmem:[%s213 + $0x288] sm:$0xff]
      %v315 = vld [vmem:[%s213 + $0x290] sm:$0xff]
      %v316 = vld [vmem:[%s213 + $0x298] sm:$0xff]
      %v317 = vld [vmem:[%s213 + $0x2a0] sm:$0xff]
      %v318 = vld [vmem:[%s213 + $0x2a8] sm:$0xff]
      %v319 = vld [vmem:[%s213 + $0x2b0] sm:$0xff]
      %v320 = vld [vmem:[%s213 + $0x2b8] sm:$0xff]
      %v321 = vld [vmem:[%s213 + $0x2c0] sm:$0xff]
      %v322 = vld [vmem:[%s213 + $0x2c8] sm:$0xff]
      %v323 = vld [vmem:[%s213 + $0x2d0] sm:$0xff]
      %v324 = vld [vmem:[%s213 + $0x2d8] sm:$0xff]
      %v325 = vld [vmem:[%s213 + $0x2e0] sm:$0xff]
      %v326 = vld [vmem:[%s213 + $0x2e8] sm:$0xff]
      %v327 = vld [vmem:[%s213 + $0x2f0] sm:$0xff]
      %v328 = vld [vmem:[%s213 + $0x2f8] sm:$0xff]
      %v329 = vld [vmem:[%s213 + $0x300] sm:$0xff]
      %v330 = vld [vmem:[%s213 + $0x308] sm:$0xff]
      %v331 = vld [vmem:[%s213 + $0x310] sm:$0xff]
      %v332 = vld [vmem:[%s213 + $0x318] sm:$0xff]
      %v333 = vld [vmem:[%s213 + $0x320] sm:$0xff]
      %v334 = vld [vmem:[%s213 + $0x328] sm:$0xff]
      %v335 = vld [vmem:[%s213 + $0x330] sm:$0xff]
      %v336 = vld [vmem:[%s213 + $0x338] sm:$0xff]
      %v337 = vld [vmem:[%s213 + $0x340] sm:$0xff]
      %v338 = vld [vmem:[%s213 + $0x348] sm:$0xff]
      %v339 = vld [vmem:[%s213 + $0x350] sm:$0xff]
      %v340 = vld [vmem:[%s213 + $0x358] sm:$0xff]
      %v341 = vld [vmem:[%s213 + $0x360] sm:$0xff]
      %v342 = vld [vmem:[%s213 + $0x368] sm:$0xff]
      %v343 = vld [vmem:[%s213 + $0x370] sm:$0xff]
      %v344 = vld [vmem:[%s213 + $0x378] sm:$0xff]
      %v345 = vld [vmem:[%s213 + $0x380] sm:$0xff]
      %v346 = vld [vmem:[%s213 + $0x388] sm:$0xff]
      %v347 = vld [vmem:[%s213 + $0x390] sm:$0xff]
      %v348 = vld [vmem:[%s213 + $0x398] sm:$0xff]
      %v349 = vld [vmem:[%s213 + $0x3a0] sm:$0xff]
      %v350 = vld [vmem:[%s213 + $0x3a8] sm:$0xff]
      %v351 = vld [vmem:[%s213 + $0x3b0] sm:$0xff]
      %v352 = vld [vmem:[%s213 + $0x3b8] sm:$0xff]
      %v353 = vld [vmem:[%s213 + $0x3c0] sm:$0xff]
      %v354 = vld [vmem:[%s213 + $0x3c8] sm:$0xff]
      %v355 = vld [vmem:[%s213 + $0x3d0] sm:$0xff]
      %v356 = vld [vmem:[%s213 + $0x3d8] sm:$0xff]
      %v357 = vld [vmem:[%s213 + $0x3e0] sm:$0xff]
      %v358 = vld [vmem:[%s213 + $0x3e8] sm:$0xff]
      %v359 = vld [vmem:[%s213 + $0x3f0] sm:$0xff]
      %v360 = vld [vmem:[%s213 + $0x3f8] sm:$0xff]
      %v361 = vld [vmem:[%s2] sm:$0xff]
      %v362 = vld [vmem:[%s2 + $0x8] sm:$0xff]
      %364 = vset.pattern.permute.xlu0 0
      %365 = vperm.xlu0 %364, %v361
      %v366 = vpop.permute.xlu0 %365
      %369 = vset.pattern.permute.xlu0 0
      %370 = vperm.xlu0 %369, %v362
      %v371 = vpop.permute.xlu0 %370
      %v375 = vunpack.c.l.b16 %v231
      %v376 = vunpack.c.l.b16 %v232
      %v377 = vpack.c.b16 %v376, %v375
      %v507 = vunpack.c.l.b16 %v233
      %v508 = vunpack.c.h.b16 %v233
      %v509 = vunpack.c.l.b16 %v234
      %v510 = vunpack.c.h.b16 %v234
      %v511 = vunpack.c.l.b16 %v235
      %v512 = vunpack.c.h.b16 %v235
      %v513 = vunpack.c.l.b16 %v236
      %v514 = vunpack.c.h.b16 %v236
      %v515 = vunpack.c.l.b16 %v237
      %v516 = vunpack.c.h.b16 %v237
      %v517 = vunpack.c.l.b16 %v238
      %v518 = vunpack.c.h.b16 %v238
      %v519 = vunpack.c.l.b16 %v239
      %v520 = vunpack.c.h.b16 %v239
      %v521 = vunpack.c.l.b16 %v240
      %v522 = vunpack.c.h.b16 %v240
      %v523 = vunpack.c.l.b16 %v241
      %v524 = vunpack.c.h.b16 %v241
      %v525 = vunpack.c.l.b16 %v242
      %v526 = vunpack.c.h.b16 %v242
      %v527 = vunpack.c.l.b16 %v243
      %v528 = vunpack.c.h.b16 %v243
      %v529 = vunpack.c.l.b16 %v244
      %v530 = vunpack.c.h.b16 %v244
      %v531 = vunpack.c.l.b16 %v245
      %v532 = vunpack.c.h.b16 %v245
      %v533 = vunpack.c.l.b16 %v246
      %v534 = vunpack.c.h.b16 %v246
      %v535 = vunpack.c.l.b16 %v247
      %v536 = vunpack.c.h.b16 %v247
      %v537 = vunpack.c.l.b16 %v248
      %v538 = vunpack.c.h.b16 %v248
      %v539 = vunpack.c.l.b16 %v249
      %v540 = vunpack.c.h.b16 %v249
      %v541 = vunpack.c.l.b16 %v250
      %v542 = vunpack.c.h.b16 %v250
      %v543 = vunpack.c.l.b16 %v251
      %v544 = vunpack.c.h.b16 %v251
      %v545 = vunpack.c.l.b16 %v252
      %v546 = vunpack.c.h.b16 %v252
      %v547 = vunpack.c.l.b16 %v253
      %v548 = vunpack.c.h.b16 %v253
      %v549 = vunpack.c.l.b16 %v254
      %v550 = vunpack.c.h.b16 %v254
      %v551 = vunpack.c.l.b16 %v255
      %v552 = vunpack.c.h.b16 %v255
      %v553 = vunpack.c.l.b16 %v256
      %v554 = vunpack.c.h.b16 %v256
      %v555 = vunpack.c.l.b16 %v257
      %v556 = vunpack.c.h.b16 %v257
      %v557 = vunpack.c.l.b16 %v258
      %v558 = vunpack.c.h.b16 %v258
      %v559 = vunpack.c.l.b16 %v259
      %v560 = vunpack.c.h.b16 %v259
      %v561 = vunpack.c.l.b16 %v260
      %v562 = vunpack.c.h.b16 %v260
      %v563 = vunpack.c.l.b16 %v261
      %v564 = vunpack.c.h.b16 %v261
      %v565 = vunpack.c.l.b16 %v262
      %v566 = vunpack.c.h.b16 %v262
      %v567 = vunpack.c.l.b16 %v263
      %v568 = vunpack.c.h.b16 %v263
      %v569 = vunpack.c.l.b16 %v264
      %v570 = vunpack.c.h.b16 %v264
      %v571 = vunpack.c.l.b16 %v265
      %v572 = vunpack.c.h.b16 %v265
      %v573 = vunpack.c.l.b16 %v266
      %v574 = vunpack.c.h.b16 %v266
      %v575 = vunpack.c.l.b16 %v267
      %v576 = vunpack.c.h.b16 %v267
      %v577 = vunpack.c.l.b16 %v268
      %v578 = vunpack.c.h.b16 %v268
      %v579 = vunpack.c.l.b16 %v269
      %v580 = vunpack.c.h.b16 %v269
      %v581 = vunpack.c.l.b16 %v270
      %v582 = vunpack.c.h.b16 %v270
      %v583 = vunpack.c.l.b16 %v271
      %v584 = vunpack.c.h.b16 %v271
      %v585 = vunpack.c.l.b16 %v272
      %v586 = vunpack.c.h.b16 %v272
      %v587 = vunpack.c.l.b16 %v273
      %v588 = vunpack.c.h.b16 %v273
      %v589 = vunpack.c.l.b16 %v274
      %v590 = vunpack.c.h.b16 %v274
      %v591 = vunpack.c.l.b16 %v275
      %v592 = vunpack.c.h.b16 %v275
      %v593 = vunpack.c.l.b16 %v276
      %v594 = vunpack.c.h.b16 %v276
      %v595 = vunpack.c.l.b16 %v277
      %v596 = vunpack.c.h.b16 %v277
      %v597 = vunpack.c.l.b16 %v278
      %v598 = vunpack.c.h.b16 %v278
      %v599 = vunpack.c.l.b16 %v279
      %v600 = vunpack.c.h.b16 %v279
      %v601 = vunpack.c.l.b16 %v280
      %v602 = vunpack.c.h.b16 %v280
      %v603 = vunpack.c.l.b16 %v281
      %v604 = vunpack.c.h.b16 %v281
      %v605 = vunpack.c.l.b16 %v282
      %v606 = vunpack.c.h.b16 %v282
      %v607 = vunpack.c.l.b16 %v283
      %v608 = vunpack.c.h.b16 %v283
      %v609 = vunpack.c.l.b16 %v284
      %v610 = vunpack.c.h.b16 %v284
      %v611 = vunpack.c.l.b16 %v285
      %v612 = vunpack.c.h.b16 %v285
      %v613 = vunpack.c.l.b16 %v286
      %v614 = vunpack.c.h.b16 %v286
      %v615 = vunpack.c.l.b16 %v287
      %v616 = vunpack.c.h.b16 %v287
      %v617 = vunpack.c.l.b16 %v288
      %v618 = vunpack.c.h.b16 %v288
      %v619 = vunpack.c.l.b16 %v289
      %v620 = vunpack.c.h.b16 %v289
      %v621 = vunpack.c.l.b16 %v290
      %v622 = vunpack.c.h.b16 %v290
      %v623 = vunpack.c.l.b16 %v291
      %v624 = vunpack.c.h.b16 %v291
      %v625 = vunpack.c.l.b16 %v292
      %v626 = vunpack.c.h.b16 %v292
      %v627 = vunpack.c.l.b16 %v293
      %v628 = vunpack.c.h.b16 %v293
      %v629 = vunpack.c.l.b16 %v294
      %v630 = vunpack.c.h.b16 %v294
      %v631 = vunpack.c.l.b16 %v295
      %v632 = vunpack.c.h.b16 %v295
      %v633 = vunpack.c.l.b16 %v296
      %v634 = vunpack.c.h.b16 %v296
      %v635 = vunpack.c.l.b16 %v297
      %v636 = vunpack.c.h.b16 %v297
      %v637 = vunpack.c.l.b16 %v298
      %v638 = vunpack.c.h.b16 %v298
      %v639 = vunpack.c.l.b16 %v299
      %v640 = vunpack.c.h.b16 %v299
      %v641 = vunpack.c.l.b16 %v300
      %v642 = vunpack.c.h.b16 %v300
      %v643 = vunpack.c.l.b16 %v301
      %v644 = vunpack.c.h.b16 %v301
      %v645 = vunpack.c.l.b16 %v302
      %v646 = vunpack.c.h.b16 %v302
      %v647 = vunpack.c.l.b16 %v303
      %v648 = vunpack.c.h.b16 %v303
      %v649 = vunpack.c.l.b16 %v304
      %v650 = vunpack.c.h.b16 %v304
      %v651 = vunpack.c.l.b16 %v305
      %v652 = vunpack.c.h.b16 %v305
      %v653 = vunpack.c.l.b16 %v306
      %v654 = vunpack.c.h.b16 %v306
      %v655 = vunpack.c.l.b16 %v307
      %v656 = vunpack.c.h.b16 %v307
      %v657 = vunpack.c.l.b16 %v308
      %v658 = vunpack.c.h.b16 %v308
      %v659 = vunpack.c.l.b16 %v309
      %v660 = vunpack.c.h.b16 %v309
      %v661 = vunpack.c.l.b16 %v310
      %v662 = vunpack.c.h.b16 %v310
      %v663 = vunpack.c.l.b16 %v311
      %v664 = vunpack.c.h.b16 %v311
      %v665 = vunpack.c.l.b16 %v312
      %v666 = vunpack.c.h.b16 %v312
      %v667 = vunpack.c.l.b16 %v313
      %v668 = vunpack.c.h.b16 %v313
      %v669 = vunpack.c.l.b16 %v314
      %v670 = vunpack.c.h.b16 %v314
      %v671 = vunpack.c.l.b16 %v315
      %v672 = vunpack.c.h.b16 %v315
      %v673 = vunpack.c.l.b16 %v316
      %v674 = vunpack.c.h.b16 %v316
      %v675 = vunpack.c.l.b16 %v317
      %v676 = vunpack.c.h.b16 %v317
      %v677 = vunpack.c.l.b16 %v318
      %v678 = vunpack.c.h.b16 %v318
      %v679 = vunpack.c.l.b16 %v319
      %v680 = vunpack.c.h.b16 %v319
      %v681 = vunpack.c.l.b16 %v320
      %v682 = vunpack.c.h.b16 %v320
      %v683 = vunpack.c.l.b16 %v321
      %v684 = vunpack.c.h.b16 %v321
      %v685 = vunpack.c.l.b16 %v322
      %v686 = vunpack.c.h.b16 %v322
      %v687 = vunpack.c.l.b16 %v323
      %v688 = vunpack.c.h.b16 %v323
      %v689 = vunpack.c.l.b16 %v324
      %v690 = vunpack.c.h.b16 %v324
      %v691 = vunpack.c.l.b16 %v325
      %v692 = vunpack.c.h.b16 %v325
      %v693 = vunpack.c.l.b16 %v326
      %v694 = vunpack.c.h.b16 %v326
      %v695 = vunpack.c.l.b16 %v327
      %v696 = vunpack.c.h.b16 %v327
      %v697 = vunpack.c.l.b16 %v328
      %v698 = vunpack.c.h.b16 %v328
      %v699 = vunpack.c.l.b16 %v329
      %v700 = vunpack.c.h.b16 %v329
      %v701 = vunpack.c.l.b16 %v330
      %v702 = vunpack.c.h.b16 %v330
      %v703 = vunpack.c.l.b16 %v331
      %v704 = vunpack.c.h.b16 %v331
      %v705 = vunpack.c.l.b16 %v332
      %v706 = vunpack.c.h.b16 %v332
      %v707 = vunpack.c.l.b16 %v333
      %v708 = vunpack.c.h.b16 %v333
      %v709 = vunpack.c.l.b16 %v334
      %v710 = vunpack.c.h.b16 %v334
      %v711 = vunpack.c.l.b16 %v335
      %v712 = vunpack.c.h.b16 %v335
      %v713 = vunpack.c.l.b16 %v336
      %v714 = vunpack.c.h.b16 %v336
      %v715 = vunpack.c.l.b16 %v337
      %v716 = vunpack.c.h.b16 %v337
      %v717 = vunpack.c.l.b16 %v338
      %v718 = vunpack.c.h.b16 %v338
      %v719 = vunpack.c.l.b16 %v339
      %v720 = vunpack.c.h.b16 %v339
      %v721 = vunpack.c.l.b16 %v340
      %v722 = vunpack.c.h.b16 %v340
      %v723 = vunpack.c.l.b16 %v341
      %v724 = vunpack.c.h.b16 %v341
      %v725 = vunpack.c.l.b16 %v342
      %v726 = vunpack.c.h.b16 %v342
      %v727 = vunpack.c.l.b16 %v343
      %v728 = vunpack.c.h.b16 %v343
      %v729 = vunpack.c.l.b16 %v344
      %v730 = vunpack.c.h.b16 %v344
      %v731 = vunpack.c.l.b16 %v345
      %v732 = vunpack.c.h.b16 %v345
      %v733 = vunpack.c.l.b16 %v346
      %v734 = vunpack.c.h.b16 %v346
      %v735 = vunpack.c.l.b16 %v347
      %v736 = vunpack.c.h.b16 %v347
      %v737 = vunpack.c.l.b16 %v348
      %v738 = vunpack.c.h.b16 %v348
      %v739 = vunpack.c.l.b16 %v349
      %v740 = vunpack.c.h.b16 %v349
      %v741 = vunpack.c.l.b16 %v350
      %v742 = vunpack.c.h.b16 %v350
      %v743 = vunpack.c.l.b16 %v351
      %v744 = vunpack.c.h.b16 %v351
      %v745 = vunpack.c.l.b16 %v352
      %v746 = vunpack.c.h.b16 %v352
      %v747 = vunpack.c.l.b16 %v353
      %v748 = vunpack.c.h.b16 %v353
      %v749 = vunpack.c.l.b16 %v354
      %v750 = vunpack.c.h.b16 %v354
      %v751 = vunpack.c.l.b16 %v355
      %v752 = vunpack.c.h.b16 %v355
      %v753 = vunpack.c.l.b16 %v356
      %v754 = vunpack.c.h.b16 %v356
      %v755 = vunpack.c.l.b16 %v357
      %v756 = vunpack.c.h.b16 %v357
      %v757 = vunpack.c.l.b16 %v358
      %v758 = vunpack.c.h.b16 %v358
      %v759 = vunpack.c.l.b16 %v359
      %v760 = vunpack.c.h.b16 %v359
      %v761 = vunpack.c.l.b16 %v360
      %v762 = vunpack.c.h.b16 %v360
      %v763 = vpack.c.b16 %v523, %v507
      %v764 = vpack.c.b16 %v524, %v508
      %v765 = vpack.c.b16 %v525, %v509
      %v766 = vpack.c.b16 %v526, %v510
      %v767 = vpack.c.b16 %v527, %v511
      %v768 = vpack.c.b16 %v528, %v512
      %v769 = vpack.c.b16 %v529, %v513
      %v770 = vpack.c.b16 %v530, %v514
      %v771 = vpack.c.b16 %v531, %v515
      %v772 = vpack.c.b16 %v532, %v516
      %v773 = vpack.c.b16 %v533, %v517
      %v774 = vpack.c.b16 %v534, %v518
      %v775 = vpack.c.b16 %v535, %v519
      %v776 = vpack.c.b16 %v536, %v520
      %v777 = vpack.c.b16 %v537, %v521
      %v778 = vpack.c.b16 %v538, %v522
      %v779 = vpack.c.b16 %v555, %v539
      %v780 = vpack.c.b16 %v556, %v540
      %v781 = vpack.c.b16 %v557, %v541
      %v782 = vpack.c.b16 %v558, %v542
      %v783 = vpack.c.b16 %v559, %v543
      %v784 = vpack.c.b16 %v560, %v544
      %v785 = vpack.c.b16 %v561, %v545
      %v786 = vpack.c.b16 %v562, %v546
      %v787 = vpack.c.b16 %v563, %v547
      %v788 = vpack.c.b16 %v564, %v548
      %v789 = vpack.c.b16 %v565, %v549
      %v790 = vpack.c.b16 %v566, %v550
      %v791 = vpack.c.b16 %v567, %v551
      %v792 = vpack.c.b16 %v568, %v552
      %v793 = vpack.c.b16 %v569, %v553
      %v794 = vpack.c.b16 %v570, %v554
      %v795 = vpack.c.b16 %v587, %v571
      %v796 = vpack.c.b16 %v588, %v572
      %v797 = vpack.c.b16 %v589, %v573
      %v798 = vpack.c.b16 %v590, %v574
      %v799 = vpack.c.b16 %v591, %v575
      %v800 = vpack.c.b16 %v592, %v576
      %v801 = vpack.c.b16 %v593, %v577
      %v802 = vpack.c.b16 %v594, %v578
      %v803 = vpack.c.b16 %v595, %v579
      %v804 = vpack.c.b16 %v596, %v580
      %v805 = vpack.c.b16 %v597, %v581
      %v806 = vpack.c.b16 %v598, %v582
      %v807 = vpack.c.b16 %v599, %v583
      %v808 = vpack.c.b16 %v600, %v584
      %v809 = vpack.c.b16 %v601, %v585
      %v810 = vpack.c.b16 %v602, %v586
      %v811 = vpack.c.b16 %v619, %v603
      %v812 = vpack.c.b16 %v620, %v604
      %v813 = vpack.c.b16 %v621, %v605
      %v814 = vpack.c.b16 %v622, %v606
      %v815 = vpack.c.b16 %v623, %v607
      %v816 = vpack.c.b16 %v624, %v608
      %v817 = vpack.c.b16 %v625, %v609
      %v818 = vpack.c.b16 %v626, %v610
      %v819 = vpack.c.b16 %v627, %v611
      %v820 = vpack.c.b16 %v628, %v612
      %v821 = vpack.c.b16 %v629, %v613
      %v822 = vpack.c.b16 %v630, %v614
      %v823 = vpack.c.b16 %v631, %v615
      %v824 = vpack.c.b16 %v632, %v616
      %v825 = vpack.c.b16 %v633, %v617
      %v826 = vpack.c.b16 %v634, %v618
      %v827 = vpack.c.b16 %v651, %v635
      %v828 = vpack.c.b16 %v652, %v636
      %v829 = vpack.c.b16 %v653, %v637
      %v830 = vpack.c.b16 %v654, %v638
      %v831 = vpack.c.b16 %v655, %v639
      %v832 = vpack.c.b16 %v656, %v640
      %v833 = vpack.c.b16 %v657, %v641
      %v834 = vpack.c.b16 %v658, %v642
      %v835 = vpack.c.b16 %v659, %v643
      %v836 = vpack.c.b16 %v660, %v644
      %v837 = vpack.c.b16 %v661, %v645
      %v838 = vpack.c.b16 %v662, %v646
      %v839 = vpack.c.b16 %v663, %v647
      %v840 = vpack.c.b16 %v664, %v648
      %v841 = vpack.c.b16 %v665, %v649
      %v842 = vpack.c.b16 %v666, %v650
      %v843 = vpack.c.b16 %v683, %v667
      %v844 = vpack.c.b16 %v684, %v668
      %v845 = vpack.c.b16 %v685, %v669
      %v846 = vpack.c.b16 %v686, %v670
      %v847 = vpack.c.b16 %v687, %v671
      %v848 = vpack.c.b16 %v688, %v672
      %v849 = vpack.c.b16 %v689, %v673
      %v850 = vpack.c.b16 %v690, %v674
      %v851 = vpack.c.b16 %v691, %v675
      %v852 = vpack.c.b16 %v692, %v676
      %v853 = vpack.c.b16 %v693, %v677
      %v854 = vpack.c.b16 %v694, %v678
      %v855 = vpack.c.b16 %v695, %v679
      %v856 = vpack.c.b16 %v696, %v680
      %v857 = vpack.c.b16 %v697, %v681
      %v858 = vpack.c.b16 %v698, %v682
      %v859 = vpack.c.b16 %v715, %v699
      %v860 = vpack.c.b16 %v716, %v700
      %v861 = vpack.c.b16 %v717, %v701
      %v862 = vpack.c.b16 %v718, %v702
      %v863 = vpack.c.b16 %v719, %v703
      %v864 = vpack.c.b16 %v720, %v704
      %v865 = vpack.c.b16 %v721, %v705
      %v866 = vpack.c.b16 %v722, %v706
      %v867 = vpack.c.b16 %v723, %v707
      %v868 = vpack.c.b16 %v724, %v708
      %v869 = vpack.c.b16 %v725, %v709
      %v870 = vpack.c.b16 %v726, %v710
      %v871 = vpack.c.b16 %v727, %v711
      %v872 = vpack.c.b16 %v728, %v712
      %v873 = vpack.c.b16 %v729, %v713
      %v874 = vpack.c.b16 %v730, %v714
      %v875 = vpack.c.b16 %v747, %v731
      %v876 = vpack.c.b16 %v748, %v732
      %v877 = vpack.c.b16 %v749, %v733
      %v878 = vpack.c.b16 %v750, %v734
      %v879 = vpack.c.b16 %v751, %v735
      %v880 = vpack.c.b16 %v752, %v736
      %v881 = vpack.c.b16 %v753, %v737
      %v882 = vpack.c.b16 %v754, %v738
      %v883 = vpack.c.b16 %v755, %v739
      %v884 = vpack.c.b16 %v756, %v740
      %v885 = vpack.c.b16 %v757, %v741
      %v886 = vpack.c.b16 %v758, %v742
      %v887 = vpack.c.b16 %v759, %v743
      %v888 = vpack.c.b16 %v760, %v744
      %v889 = vpack.c.b16 %v761, %v745
      %v890 = vpack.c.b16 %v762, %v746
      %1019 = vmatprep.subr.bf16.mxu0 %v764
      %1020 = vmatpush1.bf16.msra.mxu0 %v763
      %1021 = vmatprep.subr.bf16.mxu0 %v780
      %1022 = vmatpush1.bf16.msra.mxu0 %v779
      %1023 = vmatprep.subr.bf16.mxu0 %v796
      %1024 = vmatpush1.bf16.msra.mxu0 %v795
      %1025 = vmatprep.subr.bf16.mxu0 %v812
      %1026 = vmatpush1.bf16.msra.mxu0 %v811
      %1027 = vmatprep.subr.bf16.mxu0 %v828
      %1028 = vmatpush1.bf16.msra.mxu0 %v827
      %1029 = vmatprep.subr.bf16.mxu0 %v844
      %1030 = vmatpush1.bf16.msra.mxu0 %v843
      %1031 = vmatprep.subr.bf16.mxu0 %v860
      %1032 = vmatpush1.bf16.msra.mxu0 %v859
      %1033 = vmatprep.subr.bf16.mxu0 %v876
      %1034 = vmatpush1.bf16.msra.mxu0 %v875
      %1035 = vmatprep.subr.bf16.mxu0 0
      %1036 = vmatpush1.bf16.msra.mxu0 0
      %1037 = vmatprep.subr.bf16.mxu0 0
      %1038 = vmatpush1.bf16.msra.mxu0 0
      %1039 = vmatprep.subr.bf16.mxu0 0
      %1040 = vmatpush1.bf16.msra.mxu0 0
      %1041 = vmatprep.subr.bf16.mxu0 0
      %1042 = vmatpush1.bf16.msra.mxu0 0
      %1043 = vmatprep.subr.bf16.mxu0 0
      %1044 = vmatpush1.bf16.msra.mxu0 0
      %1045 = vmatprep.subr.bf16.mxu0 0
      %1046 = vmatpush1.bf16.msra.mxu0 0
      %1047 = vmatprep.subr.bf16.mxu0 0
      %1048 = vmatpush1.bf16.msra.mxu0 0
      %1049 = vmatprep.subr.bf16.mxu0 0
      %1050 = vmatpush1.bf16.msra.mxu0 0
      %1051 = vmatprep.mubr.bf16.mxu0 0
      %1052 = vmatmul.mubr.bf16.gmra.mrb[0].mxu0 %v377
      %v1053 = vpop.f32.mrb[0].mxu0
      %v1054 = vadd.f32 %v366, %v1053
      %v1055 = vpop.f32.mrb[0].mxu0
      %v1056 = vadd.f32 %v366, %v1055
      %v1057 = vpop.f32.mrb[0].mxu0
      %v1058 = vadd.f32 %v371, %v1057
      %v1059 = vpop.f32.mrb[0].mxu0
      %v1060 = vadd.f32 %v371, %v1059
      %1061 = vdwg.mxu0
      %1062 = vmatprep.subr.bf16.mxu0 %v766
      %1063 = vmatpush1.bf16.msra.mxu0 %v765
      %1064 = vmatprep.subr.bf16.mxu0 %v782
      %1065 = vmatpush1.bf16.msra.mxu0 %v781
      %1066 = vmatprep.subr.bf16.mxu0 %v798
      %1067 = vmatpush1.bf16.msra.mxu0 %v797
      %1068 = vmatprep.subr.bf16.mxu0 %v814
      %1069 = vmatpush1.bf16.msra.mxu0 %v813
      %1070 = vmatprep.subr.bf16.mxu0 %v830
      %1071 = vmatpush1.bf16.msra.mxu0 %v829
      %1072 = vmatprep.subr.bf16.mxu0 %v846
      %1073 = vmatpush1.bf16.msra.mxu0 %v845
      %1074 = vmatprep.subr.bf16.mxu0 %v862
      %1075 = vmatpush1.bf16.msra.mxu0 %v861
      %1076 = vmatprep.subr.bf16.mxu0 %v878
      %1077 = vmatpush1.bf16.msra.mxu0 %v877
      %1078 = vmatprep.subr.bf16.mxu0 0
      %1079 = vmatpush1.bf16.msra.mxu0 0
      %1080 = vmatprep.subr.bf16.mxu0 0
      %1081 = vmatpush1.bf16.msra.mxu0 0
      %1082 = vmatprep.subr.bf16.mxu0 0
      %1083 = vmatpush1.bf16.msra.mxu0 0
      %1084 = vmatprep.subr.bf16.mxu0 0
      %1085 = vmatpush1.bf16.msra.mxu0 0
      %1086 = vmatprep.subr.bf16.mxu0 0
      %1087 = vmatpush1.bf16.msra.mxu0 0
      %1088 = vmatprep.subr.bf16.mxu0 0
      %1089 = vmatpush1.bf16.msra.mxu0 0
      %1090 = vmatprep.subr.bf16.mxu0 0
      %1091 = vmatpush1.bf16.msra.mxu0 0
      %1092 = vmatprep.subr.bf16.mxu0 0
      %1093 = vmatpush1.bf16.msra.mxu0 0
      %1094 = vmatprep.mubr.bf16.mxu0 0
      %1095 = vmatmul.mubr.bf16.gmra.mrb[0].mxu0 %v377
      %v1096 = vpop.f32.mrb[0].mxu0
      %v1097 = vadd.f32 %v366, %v1096
      %v1098 = vpop.f32.mrb[0].mxu0
      %v1099 = vadd.f32 %v366, %v1098
      %v1100 = vpop.f32.mrb[0].mxu0
      %v1101 = vadd.f32 %v371, %v1100
      %v1102 = vpop.f32.mrb[0].mxu0
      %v1103 = vadd.f32 %v371, %v1102
      %1104 = vdwg.mxu0
      %1105 = vmatprep.subr.bf16.mxu0 %v768
      %1106 = vmatpush1.bf16.msra.mxu0 %v767
      %1107 = vmatprep.subr.bf16.mxu0 %v784
      %1108 = vmatpush1.bf16.msra.mxu0 %v783
      %1109 = vmatprep.subr.bf16.mxu0 %v800
      %1110 = vmatpush1.bf16.msra.mxu0 %v799
      %1111 = vmatprep.subr.bf16.mxu0 %v816
      %1112 = vmatpush1.bf16.msra.mxu0 %v815
      %1113 = vmatprep.subr.bf16.mxu0 %v832
      %1114 = vmatpush1.bf16.msra.mxu0 %v831
      %1115 = vmatprep.subr.bf16.mxu0 %v848
      %1116 = vmatpush1.bf16.msra.mxu0 %v847
      %1117 = vmatprep.subr.bf16.mxu0 %v864
      %1118 = vmatpush1.bf16.msra.mxu0 %v863
      %1119 = vmatprep.subr.bf16.mxu0 %v880
      %1120 = vmatpush1.bf16.msra.mxu0 %v879
      %1121 = vmatprep.subr.bf16.mxu0 0
      %1122 = vmatpush1.bf16.msra.mxu0 0
      %1123 = vmatprep.subr.bf16.mxu0 0
      %1124 = vmatpush1.bf16.msra.mxu0 0
      %1125 = vmatprep.subr.bf16.mxu0 0
      %1126 = vmatpush1.bf16.msra.mxu0 0
      %1127 = vmatprep.subr.bf16.mxu0 0
      %1128 = vmatpush1.bf16.msra.mxu0 0
      %1129 = vmatprep.subr.bf16.mxu0 0
      %1130 = vmatpush1.bf16.msra.mxu0 0
      %1131 = vmatprep.subr.bf16.mxu0 0
      %1132 = vmatpush1.bf16.msra.mxu0 0
      %1133 = vmatprep.subr.bf16.mxu0 0
      %1134 = vmatpush1.bf16.msra.mxu0 0
      %1135 = vmatprep.subr.bf16.mxu0 0
      %1136 = vmatpush1.bf16.msra.mxu0 0
      %1137 = vmatprep.mubr.bf16.mxu0 0
      %1138 = vmatmul.mubr.bf16.gmra.mrb[0].mxu0 %v377
      %v1139 = vpop.f32.mrb[0].mxu0
      %v1140 = vadd.f32 %v366, %v1139
      %v1141 = vpop.f32.mrb[0].mxu0
      %v1142 = vadd.f32 %v366, %v1141
      %v1143 = vpop.f32.mrb[0].mxu0
      %v1144 = vadd.f32 %v371, %v1143
      %v1145 = vpop.f32.mrb[0].mxu0
      %v1146 = vadd.f32 %v371, %v1145
      %1147 = vdwg.mxu0
      %1148 = vmatprep.subr.bf16.mxu0 %v770
      %1149 = vmatpush1.bf16.msra.mxu0 %v769
      %1150 = vmatprep.subr.bf16.mxu0 %v786
      %1151 = vmatpush1.bf16.msra.mxu0 %v785
      %1152 = vmatprep.subr.bf16.mxu0 %v802
      %1153 = vmatpush1.bf16.msra.mxu0 %v801
      %1154 = vmatprep.subr.bf16.mxu0 %v818
      %1155 = vmatpush1.bf16.msra.mxu0 %v817
      %1156 = vmatprep.subr.bf16.mxu0 %v834
      %1157 = vmatpush1.bf16.msra.mxu0 %v833
      %1158 = vmatprep.subr.bf16.mxu0 %v850
      %1159 = vmatpush1.bf16.msra.mxu0 %v849
      %1160 = vmatprep.subr.bf16.mxu0 %v866
      %1161 = vmatpush1.bf16.msra.mxu0 %v865
      %1162 = vmatprep.subr.bf16.mxu0 %v882
      %1163 = vmatpush1.bf16.msra.mxu0 %v881
      %1164 = vmatprep.subr.bf16.mxu0 0
      %1165 = vmatpush1.bf16.msra.mxu0 0
      %1166 = vmatprep.subr.bf16.mxu0 0
      %1167 = vmatpush1.bf16.msra.mxu0 0
      %1168 = vmatprep.subr.bf16.mxu0 0
      %1169 = vmatpush1.bf16.msra.mxu0 0
      %1170 = vmatprep.subr.bf16.mxu0 0
      %1171 = vmatpush1.bf16.msra.mxu0 0
      %1172 = vmatprep.subr.bf16.mxu0 0
      %1173 = vmatpush1.bf16.msra.mxu0 0
      %1174 = vmatprep.subr.bf16.mxu0 0
      %1175 = vmatpush1.bf16.msra.mxu0 0
      %1176 = vmatprep.subr.bf16.mxu0 0
      %1177 = vmatpush1.bf16.msra.mxu0 0
      %1178 = vmatprep.subr.bf16.mxu0 0
      %1179 = vmatpush1.bf16.msra.mxu0 0
      %1180 = vmatprep.mubr.bf16.mxu0 0
      %1181 = vmatmul.mubr.bf16.gmra.mrb[0].mxu0 %v377
      %v1182 = vpop.f32.mrb[0].mxu0
      %v1183 = vadd.f32 %v366, %v1182
      %v1184 = vpop.f32.mrb[0].mxu0
      %v1185 = vadd.f32 %v366, %v1184
      %v1186 = vpop.f32.mrb[0].mxu0
      %v1187 = vadd.f32 %v371, %v1186
      %v1188 = vpop.f32.mrb[0].mxu0
      %v1189 = vadd.f32 %v371, %v1188
      %1190 = vdwg.mxu0
      %1191 = vmatprep.subr.bf16.mxu0 %v772
      %1192 = vmatpush1.bf16.msra.mxu0 %v771
      %1193 = vmatprep.subr.bf16.mxu0 %v788
      %1194 = vmatpush1.bf16.msra.mxu0 %v787
      %1195 = vmatprep.subr.bf16.mxu0 %v804
      %1196 = vmatpush1.bf16.msra.mxu0 %v803
      %1197 = vmatprep.subr.bf16.mxu0 %v820
      %1198 = vmatpush1.bf16.msra.mxu0 %v819
      %1199 = vmatprep.subr.bf16.mxu0 %v836
      %1200 = vmatpush1.bf16.msra.mxu0 %v835
      %1201 = vmatprep.subr.bf16.mxu0 %v852
      %1202 = vmatpush1.bf16.msra.mxu0 %v851
      %1203 = vmatprep.subr.bf16.mxu0 %v868
      %1204 = vmatpush1.bf16.msra.mxu0 %v867
      %1205 = vmatprep.subr.bf16.mxu0 %v884
      %1206 = vmatpush1.bf16.msra.mxu0 %v883
      %1207 = vmatprep.subr.bf16.mxu0 0
      %1208 = vmatpush1.bf16.msra.mxu0 0
      %1209 = vmatprep.subr.bf16.mxu0 0
      %1210 = vmatpush1.bf16.msra.mxu0 0
      %1211 = vmatprep.subr.bf16.mxu0 0
      %1212 = vmatpush1.bf16.msra.mxu0 0
      %1213 = vmatprep.subr.bf16.mxu0 0
      %1214 = vmatpush1.bf16.msra.mxu0 0
      %1215 = vmatprep.subr.bf16.mxu0 0
      %1216 = vmatpush1.bf16.msra.mxu0 0
      %1217 = vmatprep.subr.bf16.mxu0 0
      %1218 = vmatpush1.bf16.msra.mxu0 0
      %1219 = vmatprep.subr.bf16.mxu0 0
      %1220 = vmatpush1.bf16.msra.mxu0 0
      %1221 = vmatprep.subr.bf16.mxu0 0
      %1222 = vmatpush1.bf16.msra.mxu0 0
      %1223 = vmatprep.mubr.bf16.mxu0 0
      %1224 = vmatmul.mubr.bf16.gmra.mrb[0].mxu0 %v377
      %v1225 = vpop.f32.mrb[0].mxu0
      %v1226 = vadd.f32 %v366, %v1225
      %v1227 = vpop.f32.mrb[0].mxu0
      %v1228 = vadd.f32 %v366, %v1227
      %v1229 = vpop.f32.mrb[0].mxu0
      %v1230 = vadd.f32 %v371, %v1229
      %v1231 = vpop.f32.mrb[0].mxu0
      %v1232 = vadd.f32 %v371, %v1231
      %1233 = vdwg.mxu0
      %1234 = vmatprep.subr.bf16.mxu0 %v774
      %1235 = vmatpush1.bf16.msra.mxu0 %v773
      %1236 = vmatprep.subr.bf16.mxu0 %v790
      %1237 = vmatpush1.bf16.msra.mxu0 %v789
      %1238 = vmatprep.subr.bf16.mxu0 %v806
      %1239 = vmatpush1.bf16.msra.mxu0 %v805
      %1240 = vmatprep.subr.bf16.mxu0 %v822
      %1241 = vmatpush1.bf16.msra.mxu0 %v821
      %1242 = vmatprep.subr.bf16.mxu0 %v838
      %1243 = vmatpush1.bf16.msra.mxu0 %v837
      %1244 = vmatprep.subr.bf16.mxu0 %v854
      %1245 = vmatpush1.bf16.msra.mxu0 %v853
      %1246 = vmatprep.subr.bf16.mxu0 %v870
      %1247 = vmatpush1.bf16.msra.mxu0 %v869
      %1248 = vmatprep.subr.bf16.mxu0 %v886
      %1249 = vmatpush1.bf16.msra.mxu0 %v885
      %1250 = vmatprep.subr.bf16.mxu0 0
      %1251 = vmatpush1.bf16.msra.mxu0 0
      %1252 = vmatprep.subr.bf16.mxu0 0
      %1253 = vmatpush1.bf16.msra.mxu0 0
      %1254 = vmatprep.subr.bf16.mxu0 0
      %1255 = vmatpush1.bf16.msra.mxu0 0
      %1256 = vmatprep.subr.bf16.mxu0 0
      %1257 = vmatpush1.bf16.msra.mxu0 0
      %1258 = vmatprep.subr.bf16.mxu0 0
      %1259 = vmatpush1.bf16.msra.mxu0 0
      %1260 = vmatprep.subr.bf16.mxu0 0
      %1261 = vmatpush1.bf16.msra.mxu0 0
      %1262 = vmatprep.subr.bf16.mxu0 0
      %1263 = vmatpush1.bf16.msra.mxu0 0
      %1264 = vmatprep.subr.bf16.mxu0 0
      %1265 = vmatpush1.bf16.msra.mxu0 0
      %1266 = vmatprep.mubr.bf16.mxu0 0
      %1267 = vmatmul.mubr.bf16.gmra.mrb[0].mxu0 %v377
      %v1268 = vpop.f32.mrb[0].mxu0
      %v1269 = vadd.f32 %v366, %v1268
      %v1270 = vpop.f32.mrb[0].mxu0
      %v1271 = vadd.f32 %v366, %v1270
      %v1272 = vpop.f32.mrb[0].mxu0
      %v1273 = vadd.f32 %v371, %v1272
      %v1274 = vpop.f32.mrb[0].mxu0
      %v1275 = vadd.f32 %v371, %v1274
      %1276 = vdwg.mxu0
      %1277 = vmatprep.subr.bf16.mxu0 %v776
      %1278 = vmatpush1.bf16.msra.mxu0 %v775
      %1279 = vmatprep.subr.bf16.mxu0 %v792
      %1280 = vmatpush1.bf16.msra.mxu0 %v791
      %1281 = vmatprep.subr.bf16.mxu0 %v808
      %1282 = vmatpush1.bf16.msra.mxu0 %v807
      %1283 = vmatprep.subr.bf16.mxu0 %v824
      %1284 = vmatpush1.bf16.msra.mxu0 %v823
      %1285 = vmatprep.subr.bf16.mxu0 %v840
      %1286 = vmatpush1.bf16.msra.mxu0 %v839
      %1287 = vmatprep.subr.bf16.mxu0 %v856
      %1288 = vmatpush1.bf16.msra.mxu0 %v855
      %1289 = vmatprep.subr.bf16.mxu0 %v872
      %1290 = vmatpush1.bf16.msra.mxu0 %v871
      %1291 = vmatprep.subr.bf16.mxu0 %v888
      %1292 = vmatpush1.bf16.msra.mxu0 %v887
      %1293 = vmatprep.subr.bf16.mxu0 0
      %1294 = vmatpush1.bf16.msra.mxu0 0
      %1295 = vmatprep.subr.bf16.mxu0 0
      %1296 = vmatpush1.bf16.msra.mxu0 0
      %1297 = vmatprep.subr.bf16.mxu0 0
      %1298 = vmatpush1.bf16.msra.mxu0 0
      %1299 = vmatprep.subr.bf16.mxu0 0
      %1300 = vmatpush1.bf16.msra.mxu0 0
      %1301 = vmatprep.subr.bf16.mxu0 0
      %1302 = vmatpush1.bf16.msra.mxu0 0
      %1303 = vmatprep.subr.bf16.mxu0 0
      %1304 = vmatpush1.bf16.msra.mxu0 0
      %1305 = vmatprep.subr.bf16.mxu0 0
      %1306 = vmatpush1.bf16.msra.mxu0 0
      %1307 = vmatprep.subr.bf16.mxu0 0
      %1308 = vmatpush1.bf16.msra.mxu0 0
      %1309 = vmatprep.mubr.bf16.mxu0 0
      %1310 = vmatmul.mubr.bf16.gmra.mrb[0].mxu0 %v377
      %v1311 = vpop.f32.mrb[0].mxu0
      %v1312 = vadd.f32 %v366, %v1311
      %v1313 = vpop.f32.mrb[0].mxu0
      %v1314 = vadd.f32 %v366, %v1313
      %v1315 = vpop.f32.mrb[0].mxu0
      %v1316 = vadd.f32 %v371, %v1315
      %v1317 = vpop.f32.mrb[0].mxu0
      %v1318 = vadd.f32 %v371, %v1317
      %1319 = vdwg.mxu0
      %1320 = vmatprep.subr.bf16.mxu0 %v778
      %1321 = vmatpush1.bf16.msra.mxu0 %v777
      %1322 = vmatprep.subr.bf16.mxu0 %v794
      %1323 = vmatpush1.bf16.msra.mxu0 %v793
      %1324 = vmatprep.subr.bf16.mxu0 %v810
      %1325 = vmatpush1.bf16.msra.mxu0 %v809
      %1326 = vmatprep.subr.bf16.mxu0 %v826
      %1327 = vmatpush1.bf16.msra.mxu0 %v825
      %1328 = vmatprep.subr.bf16.mxu0 %v842
      %1329 = vmatpush1.bf16.msra.mxu0 %v841
      %1330 = vmatprep.subr.bf16.mxu0 %v858
      %1331 = vmatpush1.bf16.msra.mxu0 %v857
      %1332 = vmatprep.subr.bf16.mxu0 %v874
      %1333 = vmatpush1.bf16.msra.mxu0 %v873
      %1334 = vmatprep.subr.bf16.mxu0 %v890
      %1335 = vmatpush1.bf16.msra.mxu0 %v889
      %1336 = vmatprep.subr.bf16.mxu0 0
      %1337 = vmatpush1.bf16.msra.mxu0 0
      %1338 = vmatprep.subr.bf16.mxu0 0
      %1339 = vmatpush1.bf16.msra.mxu0 0
      %1340 = vmatprep.subr.bf16.mxu0 0
      %1341 = vmatpush1.bf16.msra.mxu0 0
      %1342 = vmatprep.subr.bf16.mxu0 0
      %1343 = vmatpush1.bf16.msra.mxu0 0
      %1344 = vmatprep.subr.bf16.mxu0 0
      %1345 = vmatpush1.bf16.msra.mxu0 0
      %1346 = vmatprep.subr.bf16.mxu0 0
      %1347 = vmatpush1.bf16.msra.mxu0 0
      %1348 = vmatprep.subr.bf16.mxu0 0
      %1349 = vmatpush1.bf16.msra.mxu0 0
      %1350 = vmatprep.subr.bf16.mxu0 0
      %1351 = vmatpush1.bf16.msra.mxu0 0
      %1352 = vmatprep.mubr.bf16.mxu0 0
      %1353 = vmatmul.mubr.bf16.gmra.mrb[0].mxu0 %v377
      %v1354 = vpop.f32.mrb[0].mxu0
      %v1355 = vadd.f32 %v366, %v1354
      %v1356 = vpop.f32.mrb[0].mxu0
      %v1357 = vadd.f32 %v366, %v1356
      %v1358 = vpop.f32.mrb[0].mxu0
      %v1359 = vadd.f32 %v371, %v1358
      %v1360 = vpop.f32.mrb[0].mxu0
      %v1361 = vadd.f32 %v371, %v1360
      %1362 = vdwg.mxu0
      %v1363 = vmax.f32 %v1054, 0.0
      %v1364 = vmax.f32 %v1056, 0.0
      %v1365 = vmax.f32 %v1097, 0.0
      %v1366 = vmax.f32 %v1099, 0.0
      %v1367 = vmax.f32 %v1140, 0.0
      %v1368 = vmax.f32 %v1142, 0.0
      %v1369 = vmax.f32 %v1183, 0.0
      %v1370 = vmax.f32 %v1185, 0.0
      %v1371 = vmax.f32 %v1226, 0.0
      %v1372 = vmax.f32 %v1228, 0.0
      %v1373 = vmax.f32 %v1269, 0.0
      %v1374 = vmax.f32 %v1271, 0.0
      %v1375 = vmax.f32 %v1312, 0.0
      %v1376 = vmax.f32 %v1314, 0.0
      %v1377 = vmax.f32 %v1355, 0.0
      %v1378 = vmax.f32 %v1357, 0.0
      %v1379 = vmax.f32 %v1058, 0.0
      %v1380 = vmax.f32 %v1060, 0.0
      %v1381 = vmax.f32 %v1101, 0.0
      %v1382 = vmax.f32 %v1103, 0.0
      %v1383 = vmax.f32 %v1144, 0.0
      %v1384 = vmax.f32 %v1146, 0.0
      %v1385 = vmax.f32 %v1187, 0.0
      %v1386 = vmax.f32 %v1189, 0.0
      %v1387 = vmax.f32 %v1230, 0.0
      %v1388 = vmax.f32 %v1232, 0.0
      %v1389 = vmax.f32 %v1273, 0.0
      %v1390 = vmax.f32 %v1275, 0.0
      %v1391 = vmax.f32 %v1316, 0.0
      %v1392 = vmax.f32 %v1318, 0.0
      %v1393 = vmax.f32 %v1359, 0.0
      %v1394 = vmax.f32 %v1361, 0.0
      %1395 = vst [vmem:[%s228] sm:$0xff] %v1363
      %1396 = vst [vmem:[%s228 + $0x8] sm:$0xff] %v1364
      %1397 = vst [vmem:[%s228 + $0x10] sm:$0xff] %v1365
      %1398 = vst [vmem:[%s228 + $0x18] sm:$0xff] %v1366
      %1399 = vst [vmem:[%s228 + $0x20] sm:$0xff] %v1367
      %1400 = vst [vmem:[%s228 + $0x28] sm:$0xff] %v1368
      %1401 = vst [vmem:[%s228 + $0x30] sm:$0xff] %v1369
      %1402 = vst [vmem:[%s228 + $0x38] sm:$0xff] %v1370
      %1403 = vst [vmem:[%s228 + $0x40] sm:$0xff] %v1371
      %1404 = vst [vmem:[%s228 + $0x48] sm:$0xff] %v1372
      %1405 = vst [vmem:[%s228 + $0x50] sm:$0xff] %v1373
      %1406 = vst [vmem:[%s228 + $0x58] sm:$0xff] %v1374
      %1407 = vst [vmem:[%s228 + $0x60] sm:$0xff] %v1375
      %1408 = vst [vmem:[%s228 + $0x68] sm:$0xff] %v1376
      %1409 = vst [vmem:[%s228 + $0x70] sm:$0xff] %v1377
      %1410 = vst [vmem:[%s228 + $0x78] sm:$0xff] %v1378
      %1411 = vst [vmem:[%s228 + $0x80] sm:$0xff] %v1379
      %1412 = vst [vmem:[%s228 + $0x88] sm:$0xff] %v1380
      %1413 = vst [vmem:[%s228 + $0x90] sm:$0xff] %v1381
      %1414 = vst [vmem:[%s228 + $0x98] sm:$0xff] %v1382
      %1415 = vst [vmem:[%s228 + $0xa0] sm:$0xff] %v1383
      %1416 = vst [vmem:[%s228 + $0xa8] sm:$0xff] %v1384
      %1417 = vst [vmem:[%s228 + $0xb0] sm:$0xff] %v1385
      %1418 = vst [vmem:[%s228 + $0xb8] sm:$0xff] %v1386
      %1419 = vst [vmem:[%s228 + $0xc0] sm:$0xff] %v1387
      %1420 = vst [vmem:[%s228 + $0xc8] sm:$0xff] %v1388
      %1421 = vst [vmem:[%s228 + $0xd0] sm:$0xff] %v1389
      %1422 = vst [vmem:[%s228 + $0xd8] sm:$0xff] %v1390
      %1423 = vst [vmem:[%s228 + $0xe0] sm:$0xff] %v1391
      %1424 = vst [vmem:[%s228 + $0xe8] sm:$0xff] %v1392
      %1425 = vst [vmem:[%s228 + $0xf0] sm:$0xff] %v1393
      %1426 = vst [vmem:[%s228 + $0xf8] sm:$0xff] %v1394
      %s1427 = smul.u32 16, %s19
      %p1428 = scmp.lt.s32.totalorder %s18, 3
      %s1429 = scalar_select %p1428, %s18, 3
      %p1430 = scmp.lt.s32.totalorder %s1427, 15
      %s1431 = scalar_select %p1430, %s1427, 15
      %s1432 = smul.addr %s1429, 32
      %s1433 = sadd.s32 %s1431, %s1432
      %s1434 = smul.addr %s1433, 8
      %s1435 = scalar_lea.vmem %s3, %s1434
      // Predicated region
      $region33: #{retina_forward.18} parent=31 // pred_check
        %p1436 = pneg %p121
      $region34: #{retina_forward.18} parent=31 // pred_check_branch
        %1438 = sbr.rel (%p1436) target = $region36
      $region35: #{retina_forward.18} parent=31 // pred_region
        %s1439 = smul.u32 16, %s19
      $region36: #{retina_forward.18} parent=31 // pred_fallthru
        _
    $region32: #{retina_forward.18} parent=5 // pred_fallthru
      _
    %p1440 = scmp.le.s32.totalorder 2, %s9
    // Predicated region
    $region37: #{retina_forward.18} parent=5 // pred_check
      %p1441 = pneg %p1440
    $region38: #{retina_forward.18} parent=5 // pred_check_branch
      %1443 = sbr.rel (%p1441) target = $region40
    $region39: #{retina_forward.18} parent=5 // pred_region
      %s1444 = ssub.s32 %s9, 2
      // Predicated region
      $region41: #{retina_forward.18} parent=39 // pred_check
        %p1445 = pneg %p127
      $region42: #{retina_forward.18} parent=39 // pred_check_branch
        %1447 = sbr.rel (%p1445) target = $region44
      $region43: #{retina_forward.18} parent=39 // pred_region
        %s1448 = smul.u32 16, %s21
        %p1449 = scmp.lt.s32.totalorder %s20, 3
        %s1450 = scalar_select %p1449, %s20, 3
        %p1451 = scmp.lt.s32.totalorder %s1448, 15
        %s1452 = scalar_select %p1451, %s1448, 15
        %s1453 = smul.addr %s1450, 32
        %s1454 = sadd.s32 %s1452, %s1453
        %s1455 = smul.addr %s1454, 8
        %s1456 = scalar_lea.vmem %s3, %s1455
      $region44: #{retina_forward.18} parent=39 // pred_fallthru
        _
    $region40: #{retina_forward.18} parent=5 // pred_fallthru
      _
  $region6: #{retina_forward.18} parent=0 // loop_footer
    %s13 = sadd.s32 1, %s9
  $region7: #{retina_forward.18} parent=0 // loop_footer_branch
    %8 = sbr.rel target = $region3
  $region8: #{retina_forward.18} parent=0 // loop_exit
    _

// kernel: retina_forward.19
$region0: #{retina_forward.19}
  #allocation0 [shape = 'u32[]', space=smem, size = 0x4, offset = 0x4, fixed_abs, tag = 'smem constant byte address 0x4 - core index']
  #allocation1 [shape = 'u32[144,128]{1,0:T(1,128)}', space=vmem, size = 0x12000, scoped, tag = 'internal scratch']
  %s0 = inlined_call_operand.vmem [shape: bf16[4,64,8192], index: 0, kind: input, shape index: {}]
  %s1 = inlined_call_operand.vmem [shape: bf16[4,3,64], index: 1, kind: input, shape index: {}]
  %s2 = inlined_call_operand.vmem [shape: f32[3,1], index: 2, kind: input, shape index: {}]
  %s3 = inlined_call_operand.vmem [shape: f32[4,3,8192], index: 3, kind: output, shape index: {}]
  %s4 = sld [smem:[#allocation0]]
  $region68: #{retina_forward.19} parent=0
    _
  %s6 = ssub.s32 1, %s4
  %s7 = scalar_select 0, %s6, %s4
  $region1: #{retina_forward.19} parent=0
    #allocation2 [shape = 'u8[1048576]{0}', space=vmem, size = 0x100000, scoped, tag = 'input window, operand 0']
    loop: start=0, step=1, limit=10
    $region2: #{retina_forward.19} parent=1 // loop_pre_header
      _
    $region3: #{retina_forward.19} parent=1 // loop_header
      %s9 = sphi 0, %s13
      %p10 = scmp.ge.s32.totalorder %s9, 10
      %s16 = sphi 0, %s28
      %s17 = sphi 0, %s24
      %s18 = sphi 0, %s16
      %s19 = sphi 0, %s17
      %s20 = sphi 0, %s18
      %s21 = sphi 0, %s19
      %s33 = sphi 0, %s35
      %s36 = sphi 0, %s33
      %s37 = sphi 0, %s36
      %s53 = sphi 0, %s37
      %s59 = sphi 0, %s61
      %s62 = sphi 0, %s59
      %s63 = sphi 0, %s62
      %s79 = sphi 0, %s63
      %s83 = sphi 0, %s83
      %s85 = sphi 0, %s83
      %s86 = sphi 0, %s85
      %s100 = sphi 0, %s86
      %s108 = sphi 0, %s110
      %s111 = sphi 0, %s108
      %s112 = sphi 0, %s111
      %s128 = sphi 0, %s112
    $region4: #{retina_forward.19} parent=1 // loop_header_branch
      %12 = sbr.rel (%p10) target = $region8
    $region5: #{retina_forward.19} parent=1 // loop_body
      %s14 = ssub.s32 %s9, 1
      %s15 = ssub.s32 %s9, 2
      %s22 = sadd.s32 1, %s17
      %p23 = scmp.ge.s32.totalorder %s22, 2
      %s24 = scalar_select %p23, 0, %s22
      %s25 = sadd.s32 1, %s16
      %s26 = scalar_select %p23, %s25, %s16
      %p27 = scmp.ge.s32.totalorder %s26, 4
      %s28 = scalar_select %p27, 0, %s26
      %s29 = ssub.s32 %s16, %s28
      %s30 = ssub.s32 %s17, %s24
      %s31 = sor.u32 %s29, %s30
      %p32 = scmp.eq.s32.totalorder %s31, 0
      %s34 = sadd.s32 %s33, 1
      %s35 = scalar_select %p32, %s33, %s34
      %p38 = pneg %p32
      %p39 = scmp.eq.s32.totalorder %s9, 7
      %p40 = por %p38, %p39
      %p41 = scmp.ne.s32.totalorder %s33, %s36
      %p42 = scmp.eq.s32.totalorder %s9, 0
      %p43 = por %p41, %p42
      %p44 = scmp.ne.s32.totalorder %s33, %s36
      %p45 = scmp.eq.s32.totalorder %s14, 7
      %p46 = por %p44, %p45
      %p47 = scmp.ne.s32.totalorder %s36, %s37
      %p48 = scmp.eq.s32.totalorder %s14, 0
      %p49 = por %p47, %p48
      %p50 = scmp.ne.s32.totalorder %s36, %s37
      %p51 = scmp.eq.s32.totalorder %s15, 7
      %p52 = por %p50, %p51
      %p54 = scmp.ne.s32.totalorder %s37, %s53
      %p55 = scmp.eq.s32.totalorder %s15, 0
      %p56 = por %p54, %p55
      %s57 = ssub.s32 %s16, %s28
      %p58 = scmp.eq.s32.totalorder %s57, 0
      %s60 = sadd.s32 %s59, 1
      %s61 = scalar_select %p58, %s59, %s60
      %p64 = pneg %p58
      %p65 = scmp.eq.s32.totalorder %s9, 7
      %p66 = por %p64, %p65
      %p67 = scmp.ne.s32.totalorder %s59, %s62
      %p68 = scmp.eq.s32.totalorder %s9, 0
      %p69 = por %p67, %p68
      %p70 = scmp.ne.s32.totalorder %s59, %s62
      %p71 = scmp.eq.s32.totalorder %s14, 7
      %p72 = por %p70, %p71
      %p73 = scmp.ne.s32.totalorder %s62, %s63
      %p74 = scmp.eq.s32.totalorder %s14, 0
      %p75 = por %p73, %p74
      %p76 = scmp.ne.s32.totalorder %s62, %s63
      %p77 = scmp.eq.s32.totalorder %s15, 7
      %p78 = por %p76, %p77
      %p80 = scmp.ne.s32.totalorder %s63, %s79
      %p81 = scmp.eq.s32.totalorder %s15, 0
      %p82 = por %p80, %p81
      %s84 = sadd.s32 %s83, 1
      %p87 = scmp.eq.s32.totalorder %s9, 7
      %p88 = scmp.ne.s32.totalorder %s83, %s85
      %p89 = scmp.eq.s32.totalorder %s9, 0
      %p90 = por %p88, %p89
      %p91 = scmp.ne.s32.totalorder %s83, %s85
      %p92 = scmp.eq.s32.totalorder %s14, 7
      %p93 = por %p91, %p92
      %p94 = scmp.ne.s32.totalorder %s85, %s86
      %p95 = scmp.eq.s32.totalorder %s14, 0
      %p96 = por %p94, %p95
      %p97 = scmp.ne.s32.totalorder %s85, %s86
      %p98 = scmp.eq.s32.totalorder %s15, 7
      %p99 = por %p97, %p98
      %p101 = scmp.ne.s32.totalorder %s86, %s100
      %p102 = scmp.eq.s32.totalorder %s15, 0
      %p103 = por %p101, %p102
      %s104 = ssub.s32 %s16, %s28
      %s105 = ssub.s32 %s17, %s24
      %s106 = sor.u32 %s104, %s105
      %p107 = scmp.eq.s32.totalorder %s106, 0
      %s109 = sadd.s32 %s108, 1
      %s110 = scalar_select %p107, %s108, %s109
      %p113 = pneg %p107
      %p114 = scmp.eq.s32.totalorder %s9, 7
      %p115 = por %p113, %p114
      %p116 = scmp.ne.s32.totalorder %s108, %s111
      %p117 = scmp.eq.s32.totalorder %s9, 0
      %p118 = por %p116, %p117
      %p119 = scmp.ne.s32.totalorder %s108, %s111
      %p120 = scmp.eq.s32.totalorder %s14, 7
      %p121 = por %p119, %p120
      %p122 = scmp.ne.s32.totalorder %s111, %s112
      %p123 = scmp.eq.s32.totalorder %s14, 0
      %p124 = por %p122, %p123
      %p125 = scmp.ne.s32.totalorder %s111, %s112
      %p126 = scmp.eq.s32.totalorder %s15, 7
      %p127 = por %p125, %p126
      %p129 = scmp.ne.s32.totalorder %s112, %s128
      %p130 = scmp.eq.s32.totalorder %s15, 0
      %p131 = por %p129, %p130
      %p132 = scmp.le.s32.totalorder 1, %s9
      %p133 = scmp.lt.s32.totalorder %s9, 9
      %p134 = pnand %p132, %p133
      %p135 = pneg %p134
      // Predicated region
      $region9: #{retina_forward.19} parent=5 // pred_check
        _
      $region10: #{retina_forward.19} parent=5 // pred_check_branch
        %137 = sbr.rel (%p134) target = $region12
      $region11: #{retina_forward.19} parent=5 // pred_region
        %s138 = ssub.s32 %s9, 1
        // Predicated region
        $region13: #{retina_forward.19} parent=11 // pred_check
          %p139 = pneg %p96
        $region14: #{retina_forward.19} parent=11 // pred_check_branch
          %141 = sbr.rel (%p139) target = $region16
        $region15: #{retina_forward.19} parent=11 // pred_region
          _
        $region16: #{retina_forward.19} parent=11 // pred_fallthru
          _
      $region12: #{retina_forward.19} parent=5 // pred_fallthru
        _
      %p142 = scmp.lt.s32.totalorder %s9, 8
      // Predicated region
      $region17: #{retina_forward.19} parent=5 // pred_check
        %p143 = pneg %p142
      $region18: #{retina_forward.19} parent=5 // pred_check_branch
        %145 = sbr.rel (%p143) target = $region20
      $region19: #{retina_forward.19} parent=5 // pred_region
        // Predicated region
        $region21: #{retina_forward.19} parent=19 // pred_check
          %p146 = pneg %p43
        $region22: #{retina_forward.19} parent=19 // pred_check_branch
          %148 = sbr.rel (%p146) target = $region24
        $region23: #{retina_forward.19} parent=19 // pred_region
          %s149 = sand.u32 %s33, 1
          %s150 = sand.u32 %s33, 1
          %s151 = smul.addr %s150, 1024
          %s152 = scalar_lea.vmem [#allocation2], %s151
          %s153 = smul.u32 32, %s17
          %s154 = smul.addr %s16, 512
          %s155 = sadd.s32 %s153, %s154
          %s156 = smul.addr %s155, 4
          %s157 = scalar_lea.vmem %s0, %s156
          // Predicated region
          $region25: #{retina_forward.19} parent=23 // pred_check
            _
          $region26: #{retina_forward.19} parent=23 // pred_check_branch
            %159 = sbr.rel (0) target = $region28
          $region27: #{retina_forward.19} parent=23 // pred_region
            // Predicated region
            $region29: #{retina_forward.19} parent=27 // pred_check
              _
            $region30: #{retina_forward.19} parent=27 // pred_check_branch
              %161 = sbr.rel (0) target = $region32
            $region31: #{retina_forward.19} parent=27 // pred_region
              loop: start=0, step=1, limit=1
              $region33: #{retina_forward.19} parent=31 // loop_pre_header
                _
              $region34: #{retina_forward.19} parent=31 // loop_header
                %s163 = sphi 0, %s167
                %p164 = scmp.ge.s32.totalorder %s163, 1
                %s168 = sphi %s157, %s157
                %s169 = sphi %s152, %s152
              $region35: #{retina_forward.19} parent=31 // loop_header_branch
                %166 = sbr.rel (%p164) target = $region39
              $region36: #{retina_forward.19} parent=31 // loop_body
                %v170 = vld [vmem:[%s168] sm:$0xff]
                %171 = vst [vmem:[%s169] sm:$0xff] %v170
                %v172 = vld [vmem:[%s168 + $0x8] sm:$0xff]
                %173 = vst [vmem:[%s169 + $0x8] sm:$0xff] %v172
                %v174 = vld [vmem:[%s168 + $0x10] sm:$0xff]
                %175 = vst [vmem:[%s169 + $0x10] sm:$0xff] %v174
                %v176 = vld [vmem:[%s168 + $0x18] sm:$0xff]
                %177 = vst [vmem:[%s169 + $0x18] sm:$0xff] %v176
                %v178 = vld [vmem:[%s168 + $0x20] sm:$0xff]
                %179 = vst [vmem:[%s169 + $0x20] sm:$0xff] %v178
                %v180 = vld [vmem:[%s168 + $0x28] sm:$0xff]
                %181 = vst [vmem:[%s169 + $0x28] sm:$0xff] %v180
                %v182 = vld [vmem:[%s168 + $0x30] sm:$0xff]
                %183 = vst [vmem:[%s169 + $0x30] sm:$0xff] %v182
                %v184 = vld [vmem:[%s168 + $0x38] sm:$0xff]
                %185 = vst [vmem:[%s169 + $0x38] sm:$0xff] %v184
                %v186 = vld [vmem:[%s168 + $0x40] sm:$0xff]
                %187 = vst [vmem:[%s169 + $0x40] sm:$0xff] %v186
                %v188 = vld [vmem:[%s168 + $0x48] sm:$0xff]
                %189 = vst [vmem:[%s169 + $0x48] sm:$0xff] %v188
                %v190 = vld [vmem:[%s168 + $0x50] sm:$0xff]
                %191 = vst [vmem:[%s169 + $0x50] sm:$0xff] %v190
                %v192 = vld [vmem:[%s168 + $0x58] sm:$0xff]
                %193 = vst [vmem:[%s169 + $0x58] sm:$0xff] %v192
                %v194 = vld [vmem:[%s168 + $0x60] sm:$0xff]
                %195 = vst [vmem:[%s169 + $0x60] sm:$0xff] %v194
                %v196 = vld [vmem:[%s168 + $0x68] sm:$0xff]
                %197 = vst [vmem:[%s169 + $0x68] sm:$0xff] %v196
                %v198 = vld [vmem:[%s168 + $0x70] sm:$0xff]
                %199 = vst [vmem:[%s169 + $0x70] sm:$0xff] %v198
                %v200 = vld [vmem:[%s168 + $0x78] sm:$0xff]
                %201 = vst [vmem:[%s169 + $0x78] sm:$0xff] %v200
                %v202 = vld [vmem:[%s168 + $0x100] sm:$0xff]
                %203 = vst [vmem:[%s169 + $0x80] sm:$0xff] %v202
                %v204 = vld [vmem:[%s168 + $0x108] sm:$0xff]
                %205 = vst [vmem:[%s169 + $0x88] sm:$0xff] %v204
                %v206 = vld [vmem:[%s168 + $0x110] sm:$0xff]
                %207 = vst [vmem:[%s169 + $0x90] sm:$0xff] %v206
                %v208 = vld [vmem:[%s168 + $0x118] sm:$0xff]
                %209 = vst [vmem:[%s169 + $0x98] sm:$0xff] %v208
                %v210 = vld [vmem:[%s168 + $0x120] sm:$0xff]
                %211 = vst [vmem:[%s169 + $0xa0] sm:$0xff] %v210
                %v212 = vld [vmem:[%s168 + $0x128] sm:$0xff]
                %213 = vst [vmem:[%s169 + $0xa8] sm:$0xff] %v212
                %v214 = vld [vmem:[%s168 + $0x130] sm:$0xff]
                %215 = vst [vmem:[%s169 + $0xb0] sm:$0xff] %v214
                %v216 = vld [vmem:[%s168 + $0x138] sm:$0xff]
                %217 = vst [vmem:[%s169 + $0xb8] sm:$0xff] %v216
                %v218 = vld [vmem:[%s168 + $0x140] sm:$0xff]
                %219 = vst [vmem:[%s169 + $0xc0] sm:$0xff] %v218
                %v220 = vld [vmem:[%s168 + $0x148] sm:$0xff]
                %221 = vst [vmem:[%s169 + $0xc8] sm:$0xff] %v220
                %v222 = vld [vmem:[%s168 + $0x150] sm:$0xff]
                %223 = vst [vmem:[%s169 + $0xd0] sm:$0xff] %v222
                %v224 = vld [vmem:[%s168 + $0x158] sm:$0xff]
                %225 = vst [vmem:[%s169 + $0xd8] sm:$0xff] %v224
                %v226 = vld [vmem:[%s168 + $0x160] sm:$0xff]
                %227 = vst [vmem:[%s169 + $0xe0] sm:$0xff] %v226
                %v228 = vld [vmem:[%s168 + $0x168] sm:$0xff]
                %229 = vst [vmem:[%s169 + $0xe8] sm:$0xff] %v228
                %v230 = vld [vmem:[%s168 + $0x170] sm:$0xff]
                %231 = vst [vmem:[%s169 + $0xf0] sm:$0xff] %v230
                %v232 = vld [vmem:[%s168 + $0x178] sm:$0xff]
                %233 = vst [vmem:[%s169 + $0xf8] sm:$0xff] %v232
                %v234 = vld [vmem:[%s168 + $0x200] sm:$0xff]
                %235 = vst [vmem:[%s169 + $0x100] sm:$0xff] %v234
                %v236 = vld [vmem:[%s168 + $0x208] sm:$0xff]
                %237 = vst [vmem:[%s169 + $0x108] sm:$0xff] %v236
                %v238 = vld [vmem:[%s168 + $0x210] sm:$0xff]
                %239 = vst [vmem:[%s169 + $0x110] sm:$0xff] %v238
                %v240 = vld [vmem:[%s168 + $0x218] sm:$0xff]
                %241 = vst [vmem:[%s169 + $0x118] sm:$0xff] %v240
                %v242 = vld [vmem:[%s168 + $0x220] sm:$0xff]
                %243 = vst [vmem:[%s169 + $0x120] sm:$0xff] %v242
                %v244 = vld [vmem:[%s168 + $0x228] sm:$0xff]
                %245 = vst [vmem:[%s169 + $0x128] sm:$0xff] %v244
                %v246 = vld [vmem:[%s168 + $0x230] sm:$0xff]
                %247 = vst [vmem:[%s169 + $0x130] sm:$0xff] %v246
                %v248 = vld [vmem:[%s168 + $0x238] sm:$0xff]
                %249 = vst [vmem:[%s169 + $0x138] sm:$0xff] %v248
                %v250 = vld [vmem:[%s168 + $0x240] sm:$0xff]
                %251 = vst [vmem:[%s169 + $0x140] sm:$0xff] %v250
                %v252 = vld [vmem:[%s168 + $0x248] sm:$0xff]
                %253 = vst [vmem:[%s169 + $0x148] sm:$0xff] %v252
                %v254 = vld [vmem:[%s168 + $0x250] sm:$0xff]
                %255 = vst [vmem:[%s169 + $0x150] sm:$0xff] %v254
                %v256 = vld [vmem:[%s168 + $0x258] sm:$0xff]
                %257 = vst [vmem:[%s169 + $0x158] sm:$0xff] %v256
                %v258 = vld [vmem:[%s168 + $0x260] sm:$0xff]
                %259 = vst [vmem:[%s169 + $0x160] sm:$0xff] %v258
                %v260 = vld [vmem:[%s168 + $0x268] sm:$0xff]
                %261 = vst [vmem:[%s169 + $0x168] sm:$0xff] %v260
                %v262 = vld [vmem:[%s168 + $0x270] sm:$0xff]
                %263 = vst [vmem:[%s169 + $0x170] sm:$0xff] %v262
                %v264 = vld [vmem:[%s168 + $0x278] sm:$0xff]
                %265 = vst [vmem:[%s169 + $0x178] sm:$0xff] %v264
                %v266 = vld [vmem:[%s168 + $0x300] sm:$0xff]
                %267 = vst [vmem:[%s169 + $0x180] sm:$0xff] %v266
                %v268 = vld [vmem:[%s168 + $0x308] sm:$0xff]
                %269 = vst [vmem:[%s169 + $0x188] sm:$0xff] %v268
                %v270 = vld [vmem:[%s168 + $0x310] sm:$0xff]
                %271 = vst [vmem:[%s169 + $0x190] sm:$0xff] %v270
                %v272 = vld [vmem:[%s168 + $0x318] sm:$0xff]
                %273 = vst [vmem:[%s169 + $0x198] sm:$0xff] %v272
                %v274 = vld [vmem:[%s168 + $0x320] sm:$0xff]
                %275 = vst [vmem:[%s169 + $0x1a0] sm:$0xff] %v274
                %v276 = vld [vmem:[%s168 + $0x328] sm:$0xff]
                %277 = vst [vmem:[%s169 + $0x1a8] sm:$0xff] %v276
                %v278 = vld [vmem:[%s168 + $0x330] sm:$0xff]
                %279 = vst [vmem:[%s169 + $0x1b0] sm:$0xff] %v278
                %v280 = vld [vmem:[%s168 + $0x338] sm:$0xff]
                %281 = vst [vmem:[%s169 + $0x1b8] sm:$0xff] %v280
                %v282 = vld [vmem:[%s168 + $0x340] sm:$0xff]
                %283 = vst [vmem:[%s169 + $0x1c0] sm:$0xff] %v282
                %v284 = vld [vmem:[%s168 + $0x348] sm:$0xff]
                %285 = vst [vmem:[%s169 + $0x1c8] sm:$0xff] %v284
                %v286 = vld [vmem:[%s168 + $0x350] sm:$0xff]
                %287 = vst [vmem:[%s169 + $0x1d0] sm:$0xff] %v286
                %v288 = vld [vmem:[%s168 + $0x358] sm:$0xff]
                %289 = vst [vmem:[%s169 + $0x1d8] sm:$0xff] %v288
                %v290 = vld [vmem:[%s168 + $0x360] sm:$0xff]
                %291 = vst [vmem:[%s169 + $0x1e0] sm:$0xff] %v290
                %v292 = vld [vmem:[%s168 + $0x368] sm:$0xff]
                %293 = vst [vmem:[%s169 + $0x1e8] sm:$0xff] %v292
                %v294 = vld [vmem:[%s168 + $0x370] sm:$0xff]
                %295 = vst [vmem:[%s169 + $0x1f0] sm:$0xff] %v294
                %v296 = vld [vmem:[%s168 + $0x378] sm:$0xff]
                %297 = vst [vmem:[%s169 + $0x1f8] sm:$0xff] %v296
                %v298 = vld [vmem:[%s168 + $0x400] sm:$0xff]
                %299 = vst [vmem:[%s169 + $0x200] sm:$0xff] %v298
                %v300 = vld [vmem:[%s168 + $0x408] sm:$0xff]
                %301 = vst [vmem:[%s169 + $0x208] sm:$0xff] %v300
                %v302 = vld [vmem:[%s168 + $0x410] sm:$0xff]
                %303 = vst [vmem:[%s169 + $0x210] sm:$0xff] %v302
                %v304 = vld [vmem:[%s168 + $0x418] sm:$0xff]
                %305 = vst [vmem:[%s169 + $0x218] sm:$0xff] %v304
                %v306 = vld [vmem:[%s168 + $0x420] sm:$0xff]
                %307 = vst [vmem:[%s169 + $0x220] sm:$0xff] %v306
                %v308 = vld [vmem:[%s168 + $0x428] sm:$0xff]
                %309 = vst [vmem:[%s169 + $0x228] sm:$0xff] %v308
                %v310 = vld [vmem:[%s168 + $0x430] sm:$0xff]
                %311 = vst [vmem:[%s169 + $0x230] sm:$0xff] %v310
                %v312 = vld [vmem:[%s168 + $0x438] sm:$0xff]
                %313 = vst [vmem:[%s169 + $0x238] sm:$0xff] %v312
                %v314 = vld [vmem:[%s168 + $0x440] sm:$0xff]
                %315 = vst [vmem:[%s169 + $0x240] sm:$0xff] %v314
                %v316 = vld [vmem:[%s168 + $0x448] sm:$0xff]
                %317 = vst [vmem:[%s169 + $0x248] sm:$0xff] %v316
                %v318 = vld [vmem:[%s168 + $0x450] sm:$0xff]
                %319 = vst [vmem:[%s169 + $0x250] sm:$0xff] %v318
                %v320 = vld [vmem:[%s168 + $0x458] sm:$0xff]
                %321 = vst [vmem:[%s169 + $0x258] sm:$0xff] %v320
                %v322 = vld [vmem:[%s168 + $0x460] sm:$0xff]
                %323 = vst [vmem:[%s169 + $0x260] sm:$0xff] %v322
                %v324 = vld [vmem:[%s168 + $0x468] sm:$0xff]
                %325 = vst [vmem:[%s169 + $0x268] sm:$0xff] %v324
                %v326 = vld [vmem:[%s168 + $0x470] sm:$0xff]
                %327 = vst [vmem:[%s169 + $0x270] sm:$0xff] %v326
                %v328 = vld [vmem:[%s168 + $0x478] sm:$0xff]
                %329 = vst [vmem:[%s169 + $0x278] sm:$0xff] %v328
                %v330 = vld [vmem:[%s168 + $0x500] sm:$0xff]
                %331 = vst [vmem:[%s169 + $0x280] sm:$0xff] %v330
                %v332 = vld [vmem:[%s168 + $0x508] sm:$0xff]
                %333 = vst [vmem:[%s169 + $0x288] sm:$0xff] %v332
                %v334 = vld [vmem:[%s168 + $0x510] sm:$0xff]
                %335 = vst [vmem:[%s169 + $0x290] sm:$0xff] %v334
                %v336 = vld [vmem:[%s168 + $0x518] sm:$0xff]
                %337 = vst [vmem:[%s169 + $0x298] sm:$0xff] %v336
                %v338 = vld [vmem:[%s168 + $0x520] sm:$0xff]
                %339 = vst [vmem:[%s169 + $0x2a0] sm:$0xff] %v338
                %v340 = vld [vmem:[%s168 + $0x528] sm:$0xff]
                %341 = vst [vmem:[%s169 + $0x2a8] sm:$0xff] %v340
                %v342 = vld [vmem:[%s168 + $0x530] sm:$0xff]
                %343 = vst [vmem:[%s169 + $0x2b0] sm:$0xff] %v342
                %v344 = vld [vmem:[%s168 + $0x538] sm:$0xff]
                %345 = vst [vmem:[%s169 + $0x2b8] sm:$0xff] %v344
                %v346 = vld [vmem:[%s168 + $0x540] sm:$0xff]
                %347 = vst [vmem:[%s169 + $0x2c0] sm:$0xff] %v346
                %v348 = vld [vmem:[%s168 + $0x548] sm:$0xff]
                %349 = vst [vmem:[%s169 + $0x2c8] sm:$0xff] %v348
                %v350 = vld [vmem:[%s168 + $0x550] sm:$0xff]
                %351 = vst [vmem:[%s169 + $0x2d0] sm:$0xff] %v350
                %v352 = vld [vmem:[%s168 + $0x558] sm:$0xff]
                %353 = vst [vmem:[%s169 + $0x2d8] sm:$0xff] %v352
                %v354 = vld [vmem:[%s168 + $0x560] sm:$0xff]
                %355 = vst [vmem:[%s169 + $0x2e0] sm:$0xff] %v354
                %v356 = vld [vmem:[%s168 + $0x568] sm:$0xff]
                %357 = vst [vmem:[%s169 + $0x2e8] sm:$0xff] %v356
                %v358 = vld [vmem:[%s168 + $0x570] sm:$0xff]
                %359 = vst [vmem:[%s169 + $0x2f0] sm:$0xff] %v358
                %v360 = vld [vmem:[%s168 + $0x578] sm:$0xff]
                %361 = vst [vmem:[%s169 + $0x2f8] sm:$0xff] %v360
                %v362 = vld [vmem:[%s168 + $0x600] sm:$0xff]
                %363 = vst [vmem:[%s169 + $0x300] sm:$0xff] %v362
                %v364 = vld [vmem:[%s168 + $0x608] sm:$0xff]
                %365 = vst [vmem:[%s169 + $0x308] sm:$0xff] %v364
                %v366 = vld [vmem:[%s168 + $0x610] sm:$0xff]
                %367 = vst [vmem:[%s169 + $0x310] sm:$0xff] %v366
                %v368 = vld [vmem:[%s168 + $0x618] sm:$0xff]
                %369 = vst [vmem:[%s169 + $0x318] sm:$0xff] %v368
                %v370 = vld [vmem:[%s168 + $0x620] sm:$0xff]
                %371 = vst [vmem:[%s169 + $0x320] sm:$0xff] %v370
                %v372 = vld [vmem:[%s168 + $0x628] sm:$0xff]
                %373 = vst [vmem:[%s169 + $0x328] sm:$0xff] %v372
                %v374 = vld [vmem:[%s168 + $0x630] sm:$0xff]
                %375 = vst [vmem:[%s169 + $0x330] sm:$0xff] %v374
                %v376 = vld [vmem:[%s168 + $0x638] sm:$0xff]
                %377 = vst [vmem:[%s169 + $0x338] sm:$0xff] %v376
                %v378 = vld [vmem:[%s168 + $0x640] sm:$0xff]
                %379 = vst [vmem:[%s169 + $0x340] sm:$0xff] %v378
                %v380 = vld [vmem:[%s168 + $0x648] sm:$0xff]
                %381 = vst [vmem:[%s169 + $0x348] sm:$0xff] %v380
                %v382 = vld [vmem:[%s168 + $0x650] sm:$0xff]
                %383 = vst [vmem:[%s169 + $0x350] sm:$0xff] %v382
                %v384 = vld [vmem:[%s168 + $0x658] sm:$0xff]
                %385 = vst [vmem:[%s169 + $0x358] sm:$0xff] %v384
                %v386 = vld [vmem:[%s168 + $0x660] sm:$0xff]
                %387 = vst [vmem:[%s169 + $0x360] sm:$0xff] %v386
                %v388 = vld [vmem:[%s168 + $0x668] sm:$0xff]
                %389 = vst [vmem:[%s169 + $0x368] sm:$0xff] %v388
                %v390 = vld [vmem:[%s168 + $0x670] sm:$0xff]
                %391 = vst [vmem:[%s169 + $0x370] sm:$0xff] %v390
                %v392 = vld [vmem:[%s168 + $0x678] sm:$0xff]
                %393 = vst [vmem:[%s169 + $0x378] sm:$0xff] %v392
                %v394 = vld [vmem:[%s168 + $0x700] sm:$0xff]
                %395 = vst [vmem:[%s169 + $0x380] sm:$0xff] %v394
                %v396 = vld [vmem:[%s168 + $0x708] sm:$0xff]
                %397 = vst [vmem:[%s169 + $0x388] sm:$0xff] %v396
                %v398 = vld [vmem:[%s168 + $0x710] sm:$0xff]
                %399 = vst [vmem:[%s169 + $0x390] sm:$0xff] %v398
                %v400 = vld [vmem:[%s168 + $0x718] sm:$0xff]
                %401 = vst [vmem:[%s169 + $0x398] sm:$0xff] %v400
                %v402 = vld [vmem:[%s168 + $0x720] sm:$0xff]
                %403 = vst [vmem:[%s169 + $0x3a0] sm:$0xff] %v402
                %v404 = vld [vmem:[%s168 + $0x728] sm:$0xff]
                %405 = vst [vmem:[%s169 + $0x3a8] sm:$0xff] %v404
                %v406 = vld [vmem:[%s168 + $0x730] sm:$0xff]
                %407 = vst [vmem:[%s169 + $0x3b0] sm:$0xff] %v406
                %v408 = vld [vmem:[%s168 + $0x738] sm:$0xff]
                %409 = vst [vmem:[%s169 + $0x3b8] sm:$0xff] %v408
                %v410 = vld [vmem:[%s168 + $0x740] sm:$0xff]
                %411 = vst [vmem:[%s169 + $0x3c0] sm:$0xff] %v410
                %v412 = vld [vmem:[%s168 + $0x748] sm:$0xff]
                %413 = vst [vmem:[%s169 + $0x3c8] sm:$0xff] %v412
                %v414 = vld [vmem:[%s168 + $0x750] sm:$0xff]
                %415 = vst [vmem:[%s169 + $0x3d0] sm:$0xff] %v414
                %v416 = vld [vmem:[%s168 + $0x758] sm:$0xff]
                %417 = vst [vmem:[%s169 + $0x3d8] sm:$0xff] %v416
                %v418 = vld [vmem:[%s168 + $0x760] sm:$0xff]
                %419 = vst [vmem:[%s169 + $0x3e0] sm:$0xff] %v418
                %v420 = vld [vmem:[%s168 + $0x768] sm:$0xff]
                %421 = vst [vmem:[%s169 + $0x3e8] sm:$0xff] %v420
                %v422 = vld [vmem:[%s168 + $0x770] sm:$0xff]
                %423 = vst [vmem:[%s169 + $0x3f0] sm:$0xff] %v422
                %v424 = vld [vmem:[%s168 + $0x778] sm:$0xff]
                %425 = vst [vmem:[%s169 + $0x3f8] sm:$0xff] %v424
              $region37: #{retina_forward.19} parent=31 // loop_footer
                %s167 = sadd.s32 1, %s163
              $region38: #{retina_forward.19} parent=31 // loop_footer_branch
                %162 = sbr.rel target = $region34
              $region39: #{retina_forward.19} parent=31 // loop_exit
                _
            $region32: #{retina_forward.19} parent=27 // pred_fallthru
              _
            // Predicated region
            $region40: #{retina_forward.19} parent=27 // pred_check
              _
            $region41: #{retina_forward.19} parent=27 // pred_check_branch
              %427 = sbr.rel target = $region43
            $region42: #{retina_forward.19} parent=27 // pred_region
              _
            $region43: #{retina_forward.19} parent=27 // pred_fallthru
              _
          $region28: #{retina_forward.19} parent=23 // pred_fallthru
            _
          %428 = vnop
        $region24: #{retina_forward.19} parent=19 // pred_fallthru
          _
        // Predicated region
        $region44: #{retina_forward.19} parent=19 // pred_check
          %p429 = pneg %p69
        $region45: #{retina_forward.19} parent=19 // pred_check_branch
          %431 = sbr.rel (%p429) target = $region47
        $region46: #{retina_forward.19} parent=19 // pred_region
          %p432 = scmp.lt.s32.totalorder %s16, 3
          %s433 = scalar_select %p432, %s16, 3
          %s434 = smul.addr %s433, 2
          %s435 = scalar_lea.vmem %s1, %s434
        $region47: #{retina_forward.19} parent=19 // pred_fallthru
          _
      $region20: #{retina_forward.19} parent=5 // pred_fallthru
        _
      %p436 = scmp.le.s32.totalorder 1, %s9
      %p437 = scmp.lt.s32.totalorder %s9, 9
      %p438 = pnand %p436, %p437
      %p439 = pneg %p438
      // Predicated region
      $region48: #{retina_forward.19} parent=5 // pred_check
        _
      $region49: #{retina_forward.19} parent=5 // pred_check_branch
        %441 = sbr.rel (%p438) target = $region51
      $region50: #{retina_forward.19} parent=5 // pred_region
        %s442 = ssub.s32 %s9, 1
        %s443 = sand.u32 %s36, 1
        %s444 = sand.u32 %s36, 1
        %s445 = smul.addr %s444, 1024
        %s446 = scalar_lea.vmem [#allocation2], %s445
        // Predicated region
        $region52: #{retina_forward.19} parent=50 // pred_check
          %p447 = pneg %p49
        $region53: #{retina_forward.19} parent=50 // pred_check_branch
          %449 = sbr.rel (%p447) target = $region55
        $region54: #{retina_forward.19} parent=50 // pred_region
          _
        $region55: #{retina_forward.19} parent=50 // pred_fallthru
          _
        %s450 = sand.u32 %s36, 1
        %s451 = sand.u32 %s36, 1
        %s452 = smul.addr %s451, 1024
        %s453 = scalar_lea.vmem [#allocation2], %s452
        %p454 = pneg %p49
        %p455 = pneg %p46
        %p456 = scmp.lt.s32.totalorder %s18, 3
        %s457 = scalar_select %p456, %s18, 3
        %s458 = smul.addr %s457, 2
        %s459 = scalar_lea.vmem %s1, %s458
        %p460 = pneg %p75
        %p461 = pneg %p72
        %p462 = pneg %p96
        %p463 = pneg %p93
        %p464 = pneg %p124
        %p465 = pneg %p121
        %s466 = smul.u32 32, %s19
        %p467 = scmp.lt.s32.totalorder %s18, 3
        %s468 = scalar_select %p467, %s18, 3
        %p469 = scmp.lt.s32.totalorder %s466, 63
        %s470 = scalar_select %p469, %s466, 63
        %s471 = smul.addr %s468, 64
        %s472 = sadd.s32 %s470, %s471
        %s473 = smul.addr %s472, 4
        %s474 = scalar_lea.vmem %s3, %s473
        %s475 = smul.u32 32, %s19
        %p476 = scmp.lt.s32.totalorder %s18, 3
        %s477 = scalar_select %p476, %s18, 3
        %s478 = smul.addr %s477, 2
        %s479 = scalar_lea.vmem %s1, %s478
        %s480 = smul.u32 32, %s19
        %p481 = scmp.lt.s32.totalorder %s18, 3
        %s482 = scalar_select %p481, %s18, 3
        %p483 = scmp.lt.s32.totalorder %s480, 63
        %s484 = scalar_select %p483, %s480, 63
        %s485 = smul.addr %s482, 64
        %s486 = sadd.s32 %s484, %s485
        %s487 = smul.addr %s486, 4
        %s488 = scalar_lea.vmem %s3, %s487
        %s489 = smul.u32 32, %s19
        %v491 = vld [vmem:[%s479] sm:$0x3]
        %v492 = vld [vmem:[%s446] sm:$0xff]
        %v493 = vld [vmem:[%s446 + $0x8] sm:$0xff]
        %v494 = vld [vmem:[%s446 + $0x10] sm:$0xff]
        %v495 = vld [vmem:[%s446 + $0x18] sm:$0xff]
        %v496 = vld [vmem:[%s446 + $0x20] sm:$0xff]
        %v497 = vld [vmem:[%s446 + $0x28] sm:$0xff]
        %v498 = vld [vmem:[%s446 + $0x30] sm:$0xff]
        %v499 = vld [vmem:[%s446 + $0x38] sm:$0xff]
        %v500 = vld [vmem:[%s446 + $0x40] sm:$0xff]
        %v501 = vld [vmem:[%s446 + $0x48] sm:$0xff]
        %v502 = vld [vmem:[%s446 + $0x50] sm:$0xff]
        %v503 = vld [vmem:[%s446 + $0x58] sm:$0xff]
        %v504 = vld [vmem:[%s446 + $0x60] sm:$0xff]
        %v505 = vld [vmem:[%s446 + $0x68] sm:$0xff]
        %v506 = vld [vmem:[%s446 + $0x70] sm:$0xff]
        %v507 = vld [vmem:[%s446 + $0x78] sm:$0xff]
        %v508 = vld [vmem:[%s446 + $0x80] sm:$0xff]
        %v509 = vld [vmem:[%s446 + $0x88] sm:$0xff]
        %v510 = vld [vmem:[%s446 + $0x90] sm:$0xff]
        %v511 = vld [vmem:[%s446 + $0x98] sm:$0xff]
        %v512 = vld [vmem:[%s446 + $0xa0] sm:$0xff]
        %v513 = vld [vmem:[%s446 + $0xa8] sm:$0xff]
        %v514 = vld [vmem:[%s446 + $0xb0] sm:$0xff]
        %v515 = vld [vmem:[%s446 + $0xb8] sm:$0xff]
        %v516 = vld [vmem:[%s446 + $0xc0] sm:$0xff]
        %v517 = vld [vmem:[%s446 + $0xc8] sm:$0xff]
        %v518 = vld [vmem:[%s446 + $0xd0] sm:$0xff]
        %v519 = vld [vmem:[%s446 + $0xd8] sm:$0xff]
        %v520 = vld [vmem:[%s446 + $0xe0] sm:$0xff]
        %v521 = vld [vmem:[%s446 + $0xe8] sm:$0xff]
        %v522 = vld [vmem:[%s446 + $0xf0] sm:$0xff]
        %v523 = vld [vmem:[%s446 + $0xf8] sm:$0xff]
        %v524 = vld [vmem:[%s446 + $0x100] sm:$0xff]
        %v525 = vld [vmem:[%s446 + $0x108] sm:$0xff]
        %v526 = vld [vmem:[%s446 + $0x110] sm:$0xff]
        %v527 = vld [vmem:[%s446 + $0x118] sm:$0xff]
        %v528 = vld [vmem:[%s446 + $0x120] sm:$0xff]
        %v529 = vld [vmem:[%s446 + $0x128] sm:$0xff]
        %v530 = vld [vmem:[%s446 + $0x130] sm:$0xff]
        %v531 = vld [vmem:[%s446 + $0x138] sm:$0xff]
        %v532 = vld [vmem:[%s446 + $0x140] sm:$0xff]
        %v533 = vld [vmem:[%s446 + $0x148] sm:$0xff]
        %v534 = vld [vmem:[%s446 + $0x150] sm:$0xff]
        %v535 = vld [vmem:[%s446 + $0x158] sm:$0xff]
        %v536 = vld [vmem:[%s446 + $0x160] sm:$0xff]
        %v537 = vld [vmem:[%s446 + $0x168] sm:$0xff]
        %v538 = vld [vmem:[%s446 + $0x170] sm:$0xff]
        %v539 = vld [vmem:[%s446 + $0x178] sm:$0xff]
        %v540 = vld [vmem:[%s446 + $0x180] sm:$0xff]
        %v541 = vld [vmem:[%s446 + $0x188] sm:$0xff]
        %v542 = vld [vmem:[%s446 + $0x190] sm:$0xff]
        %v543 = vld [vmem:[%s446 + $0x198] sm:$0xff]
        %v544 = vld [vmem:[%s446 + $0x1a0] sm:$0xff]
        %v545 = vld [vmem:[%s446 + $0x1a8] sm:$0xff]
        %v546 = vld [vmem:[%s446 + $0x1b0] sm:$0xff]
        %v547 = vld [vmem:[%s446 + $0x1b8] sm:$0xff]
        %v548 = vld [vmem:[%s446 + $0x1c0] sm:$0xff]
        %v549 = vld [vmem:[%s446 + $0x1c8] sm:$0xff]
        %v550 = vld [vmem:[%s446 + $0x1d0] sm:$0xff]
        %v551 = vld [vmem:[%s446 + $0x1d8] sm:$0xff]
        %v552 = vld [vmem:[%s446 + $0x1e0] sm:$0xff]
        %v553 = vld [vmem:[%s446 + $0x1e8] sm:$0xff]
        %v554 = vld [vmem:[%s446 + $0x1f0] sm:$0xff]
        %v555 = vld [vmem:[%s446 + $0x1f8] sm:$0xff]
        %v556 = vld [vmem:[%s446 + $0x200] sm:$0xff]
        %v557 = vld [vmem:[%s446 + $0x208] sm:$0xff]
        %v558 = vld [vmem:[%s446 + $0x210] sm:$0xff]
        %v559 = vld [vmem:[%s446 + $0x218] sm:$0xff]
        %v560 = vld [vmem:[%s446 + $0x220] sm:$0xff]
        %v561 = vld [vmem:[%s446 + $0x228] sm:$0xff]
        %v562 = vld [vmem:[%s446 + $0x230] sm:$0xff]
        %v563 = vld [vmem:[%s446 + $0x238] sm:$0xff]
        %v564 = vld [vmem:[%s446 + $0x240] sm:$0xff]
        %v565 = vld [vmem:[%s446 + $0x248] sm:$0xff]
        %v566 = vld [vmem:[%s446 + $0x250] sm:$0xff]
        %v567 = vld [vmem:[%s446 + $0x258] sm:$0xff]
        %v568 = vld [vmem:[%s446 + $0x260] sm:$0xff]
        %v569 = vld [vmem:[%s446 + $0x268] sm:$0xff]
        %v570 = vld [vmem:[%s446 + $0x270] sm:$0xff]
        %v571 = vld [vmem:[%s446 + $0x278] sm:$0xff]
        %v572 = vld [vmem:[%s446 + $0x280] sm:$0xff]
        %v573 = vld [vmem:[%s446 + $0x288] sm:$0xff]
        %v574 = vld [vmem:[%s446 + $0x290] sm:$0xff]
        %v575 = vld [vmem:[%s446 + $0x298] sm:$0xff]
        %v576 = vld [vmem:[%s446 + $0x2a0] sm:$0xff]
        %v577 = vld [vmem:[%s446 + $0x2a8] sm:$0xff]
        %v578 = vld [vmem:[%s446 + $0x2b0] sm:$0xff]
        %v579 = vld [vmem:[%s446 + $0x2b8] sm:$0xff]
        %v580 = vld [vmem:[%s446 + $0x2c0] sm:$0xff]
        %v581 = vld [vmem:[%s446 + $0x2c8] sm:$0xff]
        %v582 = vld [vmem:[%s446 + $0x2d0] sm:$0xff]
        %v583 = vld [vmem:[%s446 + $0x2d8] sm:$0xff]
        %v584 = vld [vmem:[%s446 + $0x2e0] sm:$0xff]
        %v585 = vld [vmem:[%s446 + $0x2e8] sm:$0xff]
        %v586 = vld [vmem:[%s446 + $0x2f0] sm:$0xff]
        %v587 = vld [vmem:[%s446 + $0x2f8] sm:$0xff]
        %v588 = vld [vmem:[%s446 + $0x300] sm:$0xff]
        %v589 = vld [vmem:[%s446 + $0x308] sm:$0xff]
        %v590 = vld [vmem:[%s446 + $0x310] sm:$0xff]
        %v591 = vld [vmem:[%s446 + $0x318] sm:$0xff]
        %v592 = vld [vmem:[%s446 + $0x320] sm:$0xff]
        %v593 = vld [vmem:[%s446 + $0x328] sm:$0xff]
        %v594 = vld [vmem:[%s446 + $0x330] sm:$0xff]
        %v595 = vld [vmem:[%s446 + $0x338] sm:$0xff]
        %v596 = vld [vmem:[%s446 + $0x340] sm:$0xff]
        %v597 = vld [vmem:[%s446 + $0x348] sm:$0xff]
        %v598 = vld [vmem:[%s446 + $0x350] sm:$0xff]
        %v599 = vld [vmem:[%s446 + $0x358] sm:$0xff]
        %v600 = vld [vmem:[%s446 + $0x360] sm:$0xff]
        %v601 = vld [vmem:[%s446 + $0x368] sm:$0xff]
        %v602 = vld [vmem:[%s446 + $0x370] sm:$0xff]
        %v603 = vld [vmem:[%s446 + $0x378] sm:$0xff]
        %v604 = vld [vmem:[%s446 + $0x380] sm:$0xff]
        %v605 = vld [vmem:[%s446 + $0x388] sm:$0xff]
        %v606 = vld [vmem:[%s446 + $0x390] sm:$0xff]
        %v607 = vld [vmem:[%s446 + $0x398] sm:$0xff]
        %v608 = vld [vmem:[%s446 + $0x3a0] sm:$0xff]
        %v609 = vld [vmem:[%s446 + $0x3a8] sm:$0xff]
        %v610 = vld [vmem:[%s446 + $0x3b0] sm:$0xff]
        %v611 = vld [vmem:[%s446 + $0x3b8] sm:$0xff]
        %v612 = vld [vmem:[%s446 + $0x3c0] sm:$0xff]
        %v613 = vld [vmem:[%s446 + $0x3c8] sm:$0xff]
        %v614 = vld [vmem:[%s446 + $0x3d0] sm:$0xff]
        %v615 = vld [vmem:[%s446 + $0x3d8] sm:$0xff]
        %v616 = vld [vmem:[%s446 + $0x3e0] sm:$0xff]
        %v617 = vld [vmem:[%s446 + $0x3e8] sm:$0xff]
        %v618 = vld [vmem:[%s446 + $0x3f0] sm:$0xff]
        %v619 = vld [vmem:[%s446 + $0x3f8] sm:$0xff]
        %v620 = vld [vmem:[%s2] sm:$0x7]
        %622 = vset.pattern.permute.xlu0 0
        %623 = vperm.xlu0 %622, %v620
        %v624 = vpop.permute.xlu0 %623
        %v754 = vunpack.c.l.b16 %v492
        %v755 = vunpack.c.h.b16 %v492
        %v756 = vunpack.c.l.b16 %v493
        %v757 = vunpack.c.h.b16 %v493
        %v758 = vunpack.c.l.b16 %v494
        %v759 = vunpack.c.h.b16 %v494
        %v760 = vunpack.c.l.b16 %v495
        %v761 = vunpack.c.h.b16 %v495
        %v762 = vunpack.c.l.b16 %v496
        %v763 = vunpack.c.h.b16 %v496
        %v764 = vunpack.c.l.b16 %v497
        %v765 = vunpack.c.h.b16 %v497
        %v766 = vunpack.c.l.b16 %v498
        %v767 = vunpack.c.h.b16 %v498
        %v768 = vunpack.c.l.b16 %v499
        %v769 = vunpack.c.h.b16 %v499
        %v770 = vunpack.c.l.b16 %v500
        %v771 = vunpack.c.h.b16 %v500
        %v772 = vunpack.c.l.b16 %v501
        %v773 = vunpack.c.h.b16 %v501
        %v774 = vunpack.c.l.b16 %v502
        %v775 = vunpack.c.h.b16 %v502
        %v776 = vunpack.c.l.b16 %v503
        %v777 = vunpack.c.h.b16 %v503
        %v778 = vunpack.c.l.b16 %v504
        %v779 = vunpack.c.h.b16 %v504
        %v780 = vunpack.c.l.b16 %v505
        %v781 = vunpack.c.h.b16 %v505
        %v782 = vunpack.c.l.b16 %v506
        %v783 = vunpack.c.h.b16 %v506
        %v784 = vunpack.c.l.b16 %v507
        %v785 = vunpack.c.h.b16 %v507
        %v786 = vunpack.c.l.b16 %v508
        %v787 = vunpack.c.h.b16 %v508
        %v788 = vunpack.c.l.b16 %v509
        %v789 = vunpack.c.h.b16 %v509
        %v790 = vunpack.c.l.b16 %v510
        %v791 = vunpack.c.h.b16 %v510
        %v792 = vunpack.c.l.b16 %v511
        %v793 = vunpack.c.h.b16 %v511
        %v794 = vunpack.c.l.b16 %v512
        %v795 = vunpack.c.h.b16 %v512
        %v796 = vunpack.c.l.b16 %v513
        %v797 = vunpack.c.h.b16 %v513
        %v798 = vunpack.c.l.b16 %v514
        %v799 = vunpack.c.h.b16 %v514
        %v800 = vunpack.c.l.b16 %v515
        %v801 = vunpack.c.h.b16 %v515
        %v802 = vunpack.c.l.b16 %v516
        %v803 = vunpack.c.h.b16 %v516
        %v804 = vunpack.c.l.b16 %v517
        %v805 = vunpack.c.h.b16 %v517
        %v806 = vunpack.c.l.b16 %v518
        %v807 = vunpack.c.h.b16 %v518
        %v808 = vunpack.c.l.b16 %v519
        %v809 = vunpack.c.h.b16 %v519
        %v810 = vunpack.c.l.b16 %v520
        %v811 = vunpack.c.h.b16 %v520
        %v812 = vunpack.c.l.b16 %v521
        %v813 = vunpack.c.h.b16 %v521
        %v814 = vunpack.c.l.b16 %v522
        %v815 = vunpack.c.h.b16 %v522
        %v816 = vunpack.c.l.b16 %v523
        %v817 = vunpack.c.h.b16 %v523
        %v818 = vunpack.c.l.b16 %v524
        %v819 = vunpack.c.h.b16 %v524
        %v820 = vunpack.c.l.b16 %v525
        %v821 = vunpack.c.h.b16 %v525
        %v822 = vunpack.c.l.b16 %v526
        %v823 = vunpack.c.h.b16 %v526
        %v824 = vunpack.c.l.b16 %v527
        %v825 = vunpack.c.h.b16 %v527
        %v826 = vunpack.c.l.b16 %v528
        %v827 = vunpack.c.h.b16 %v528
        %v828 = vunpack.c.l.b16 %v529
        %v829 = vunpack.c.h.b16 %v529
        %v830 = vunpack.c.l.b16 %v530
        %v831 = vunpack.c.h.b16 %v530
        %v832 = vunpack.c.l.b16 %v531
        %v833 = vunpack.c.h.b16 %v531
        %v834 = vunpack.c.l.b16 %v532
        %v835 = vunpack.c.h.b16 %v532
        %v836 = vunpack.c.l.b16 %v533
        %v837 = vunpack.c.h.b16 %v533
        %v838 = vunpack.c.l.b16 %v534
        %v839 = vunpack.c.h.b16 %v534
        %v840 = vunpack.c.l.b16 %v535
        %v841 = vunpack.c.h.b16 %v535
        %v842 = vunpack.c.l.b16 %v536
        %v843 = vunpack.c.h.b16 %v536
        %v844 = vunpack.c.l.b16 %v537
        %v845 = vunpack.c.h.b16 %v537
        %v846 = vunpack.c.l.b16 %v538
        %v847 = vunpack.c.h.b16 %v538
        %v848 = vunpack.c.l.b16 %v539
        %v849 = vunpack.c.h.b16 %v539
        %v850 = vunpack.c.l.b16 %v540
        %v851 = vunpack.c.h.b16 %v540
        %v852 = vunpack.c.l.b16 %v541
        %v853 = vunpack.c.h.b16 %v541
        %v854 = vunpack.c.l.b16 %v542
        %v855 = vunpack.c.h.b16 %v542
        %v856 = vunpack.c.l.b16 %v543
        %v857 = vunpack.c.h.b16 %v543
        %v858 = vunpack.c.l.b16 %v544
        %v859 = vunpack.c.h.b16 %v544
        %v860 = vunpack.c.l.b16 %v545
        %v861 = vunpack.c.h.b16 %v545
        %v862 = vunpack.c.l.b16 %v546
        %v863 = vunpack.c.h.b16 %v546
        %v864 = vunpack.c.l.b16 %v547
        %v865 = vunpack.c.h.b16 %v547
        %v866 = vunpack.c.l.b16 %v548
        %v867 = vunpack.c.h.b16 %v548
        %v868 = vunpack.c.l.b16 %v549
        %v869 = vunpack.c.h.b16 %v549
        %v870 = vunpack.c.l.b16 %v550
        %v871 = vunpack.c.h.b16 %v550
        %v872 = vunpack.c.l.b16 %v551
        %v873 = vunpack.c.h.b16 %v551
        %v874 = vunpack.c.l.b16 %v552
        %v875 = vunpack.c.h.b16 %v552
        %v876 = vunpack.c.l.b16 %v553
        %v877 = vunpack.c.h.b16 %v553
        %v878 = vunpack.c.l.b16 %v554
        %v879 = vunpack.c.h.b16 %v554
        %v880 = vunpack.c.l.b16 %v555
        %v881 = vunpack.c.h.b16 %v555
        %v882 = vunpack.c.l.b16 %v556
        %v883 = vunpack.c.h.b16 %v556
        %v884 = vunpack.c.l.b16 %v557
        %v885 = vunpack.c.h.b16 %v557
        %v886 = vunpack.c.l.b16 %v558
        %v887 = vunpack.c.h.b16 %v558
        %v888 = vunpack.c.l.b16 %v559
        %v889 = vunpack.c.h.b16 %v559
        %v890 = vunpack.c.l.b16 %v560
        %v891 = vunpack.c.h.b16 %v560
        %v892 = vunpack.c.l.b16 %v561
        %v893 = vunpack.c.h.b16 %v561
        %v894 = vunpack.c.l.b16 %v562
        %v895 = vunpack.c.h.b16 %v562
        %v896 = vunpack.c.l.b16 %v563
        %v897 = vunpack.c.h.b16 %v563
        %v898 = vunpack.c.l.b16 %v564
        %v899 = vunpack.c.h.b16 %v564
        %v900 = vunpack.c.l.b16 %v565
        %v901 = vunpack.c.h.b16 %v565
        %v902 = vunpack.c.l.b16 %v566
        %v903 = vunpack.c.h.b16 %v566
        %v904 = vunpack.c.l.b16 %v567
        %v905 = vunpack.c.h.b16 %v567
        %v906 = vunpack.c.l.b16 %v568
        %v907 = vunpack.c.h.b16 %v568
        %v908 = vunpack.c.l.b16 %v569
        %v909 = vunpack.c.h.b16 %v569
        %v910 = vunpack.c.l.b16 %v570
        %v911 = vunpack.c.h.b16 %v570
        %v912 = vunpack.c.l.b16 %v571
        %v913 = vunpack.c.h.b16 %v571
        %v914 = vunpack.c.l.b16 %v572
        %v915 = vunpack.c.h.b16 %v572
        %v916 = vunpack.c.l.b16 %v573
        %v917 = vunpack.c.h.b16 %v573
        %v918 = vunpack.c.l.b16 %v574
        %v919 = vunpack.c.h.b16 %v574
        %v920 = vunpack.c.l.b16 %v575
        %v921 = vunpack.c.h.b16 %v575
        %v922 = vunpack.c.l.b16 %v576
        %v923 = vunpack.c.h.b16 %v576
        %v924 = vunpack.c.l.b16 %v577
        %v925 = vunpack.c.h.b16 %v577
        %v926 = vunpack.c.l.b16 %v578
        %v927 = vunpack.c.h.b16 %v578
        %v928 = vunpack.c.l.b16 %v579
        %v929 = vunpack.c.h.b16 %v579
        %v930 = vunpack.c.l.b16 %v580
        %v931 = vunpack.c.h.b16 %v580
        %v932 = vunpack.c.l.b16 %v581
        %v933 = vunpack.c.h.b16 %v581
        %v934 = vunpack.c.l.b16 %v582
        %v935 = vunpack.c.h.b16 %v582
        %v936 = vunpack.c.l.b16 %v583
        %v937 = vunpack.c.h.b16 %v583
        %v938 = vunpack.c.l.b16 %v584
        %v939 = vunpack.c.h.b16 %v584
        %v940 = vunpack.c.l.b16 %v585
        %v941 = vunpack.c.h.b16 %v585
        %v942 = vunpack.c.l.b16 %v586
        %v943 = vunpack.c.h.b16 %v586
        %v944 = vunpack.c.l.b16 %v587
        %v945 = vunpack.c.h.b16 %v587
        %v946 = vunpack.c.l.b16 %v588
        %v947 = vunpack.c.h.b16 %v588
        %v948 = vunpack.c.l.b16 %v589
        %v949 = vunpack.c.h.b16 %v589
        %v950 = vunpack.c.l.b16 %v590
        %v951 = vunpack.c.h.b16 %v590
        %v952 = vunpack.c.l.b16 %v591
        %v953 = vunpack.c.h.b16 %v591
        %v954 = vunpack.c.l.b16 %v592
        %v955 = vunpack.c.h.b16 %v592
        %v956 = vunpack.c.l.b16 %v593
        %v957 = vunpack.c.h.b16 %v593
        %v958 = vunpack.c.l.b16 %v594
        %v959 = vunpack.c.h.b16 %v594
        %v960 = vunpack.c.l.b16 %v595
        %v961 = vunpack.c.h.b16 %v595
        %v962 = vunpack.c.l.b16 %v596
        %v963 = vunpack.c.h.b16 %v596
        %v964 = vunpack.c.l.b16 %v597
        %v965 = vunpack.c.h.b16 %v597
        %v966 = vunpack.c.l.b16 %v598
        %v967 = vunpack.c.h.b16 %v598
        %v968 = vunpack.c.l.b16 %v599
        %v969 = vunpack.c.h.b16 %v599
        %v970 = vunpack.c.l.b16 %v600
        %v971 = vunpack.c.h.b16 %v600
        %v972 = vunpack.c.l.b16 %v601
        %v973 = vunpack.c.h.b16 %v601
        %v974 = vunpack.c.l.b16 %v602
        %v975 = vunpack.c.h.b16 %v602
        %v976 = vunpack.c.l.b16 %v603
        %v977 = vunpack.c.h.b16 %v603
        %v978 = vunpack.c.l.b16 %v604
        %v979 = vunpack.c.h.b16 %v604
        %v980 = vunpack.c.l.b16 %v605
        %v981 = vunpack.c.h.b16 %v605
        %v982 = vunpack.c.l.b16 %v606
        %v983 = vunpack.c.h.b16 %v606
        %v984 = vunpack.c.l.b16 %v607
        %v985 = vunpack.c.h.b16 %v607
        %v986 = vunpack.c.l.b16 %v608
        %v987 = vunpack.c.h.b16 %v608
        %v988 = vunpack.c.l.b16 %v609
        %v989 = vunpack.c.h.b16 %v609
        %v990 = vunpack.c.l.b16 %v610
        %v991 = vunpack.c.h.b16 %v610
        %v992 = vunpack.c.l.b16 %v611
        %v993 = vunpack.c.h.b16 %v611
        %v994 = vunpack.c.l.b16 %v612
        %v995 = vunpack.c.h.b16 %v612
        %v996 = vunpack.c.l.b16 %v613
        %v997 = vunpack.c.h.b16 %v613
        %v998 = vunpack.c.l.b16 %v614
        %v999 = vunpack.c.h.b16 %v614
        %v1000 = vunpack.c.l.b16 %v615
        %v1001 = vunpack.c.h.b16 %v615
        %v1002 = vunpack.c.l.b16 %v616
        %v1003 = vunpack.c.h.b16 %v616
        %v1004 = vunpack.c.l.b16 %v617
        %v1005 = vunpack.c.h.b16 %v617
        %v1006 = vunpack.c.l.b16 %v618
        %v1007 = vunpack.c.h.b16 %v618
        %v1008 = vunpack.c.l.b16 %v619
        %v1009 = vunpack.c.h.b16 %v619
        %v1010 = vpack.c.b16 %v786, %v754
        %v1011 = vpack.c.b16 %v787, %v755
        %v1012 = vpack.c.b16 %v788, %v756
        %v1013 = vpack.c.b16 %v789, %v757
        %v1014 = vpack.c.b16 %v790, %v758
        %v1015 = vpack.c.b16 %v791, %v759
        %v1016 = vpack.c.b16 %v792, %v760
        %v1017 = vpack.c.b16 %v793, %v761
        %v1018 = vpack.c.b16 %v794, %v762
        %v1019 = vpack.c.b16 %v795, %v763
        %v1020 = vpack.c.b16 %v796, %v764
        %v1021 = vpack.c.b16 %v797, %v765
        %v1022 = vpack.c.b16 %v798, %v766
        %v1023 = vpack.c.b16 %v799, %v767
        %v1024 = vpack.c.b16 %v800, %v768
        %v1025 = vpack.c.b16 %v801, %v769
        %v1026 = vpack.c.b16 %v802, %v770
        %v1027 = vpack.c.b16 %v803, %v771
        %v1028 = vpack.c.b16 %v804, %v772
        %v1029 = vpack.c.b16 %v805, %v773
        %v1030 = vpack.c.b16 %v806, %v774
        %v1031 = vpack.c.b16 %v807, %v775
        %v1032 = vpack.c.b16 %v808, %v776
        %v1033 = vpack.c.b16 %v809, %v777
        %v1034 = vpack.c.b16 %v810, %v778
        %v1035 = vpack.c.b16 %v811, %v779
        %v1036 = vpack.c.b16 %v812, %v780
        %v1037 = vpack.c.b16 %v813, %v781
        %v1038 = vpack.c.b16 %v814, %v782
        %v1039 = vpack.c.b16 %v815, %v783
        %v1040 = vpack.c.b16 %v816, %v784
        %v1041 = vpack.c.b16 %v817, %v785
        %v1042 = vpack.c.b16 %v850, %v818
        %v1043 = vpack.c.b16 %v851, %v819
        %v1044 = vpack.c.b16 %v852, %v820
        %v1045 = vpack.c.b16 %v853, %v821
        %v1046 = vpack.c.b16 %v854, %v822
        %v1047 = vpack.c.b16 %v855, %v823
        %v1048 = vpack.c.b16 %v856, %v824
        %v1049 = vpack.c.b16 %v857, %v825
        %v1050 = vpack.c.b16 %v858, %v826
        %v1051 = vpack.c.b16 %v859, %v827
        %v1052 = vpack.c.b16 %v860, %v828
        %v1053 = vpack.c.b16 %v861, %v829
        %v1054 = vpack.c.b16 %v862, %v830
        %v1055 = vpack.c.b16 %v863, %v831
        %v1056 = vpack.c.b16 %v864, %v832
        %v1057 = vpack.c.b16 %v865, %v833
        %v1058 = vpack.c.b16 %v866, %v834
        %v1059 = vpack.c.b16 %v867, %v835
        %v1060 = vpack.c.b16 %v868, %v836
        %v1061 = vpack.c.b16 %v869, %v837
        %v1062 = vpack.c.b16 %v870, %v838
        %v1063 = vpack.c.b16 %v871, %v839
        %v1064 = vpack.c.b16 %v872, %v840
        %v1065 = vpack.c.b16 %v873, %v841
        %v1066 = vpack.c.b16 %v874, %v842
        %v1067 = vpack.c.b16 %v875, %v843
        %v1068 = vpack.c.b16 %v876, %v844
        %v1069 = vpack.c.b16 %v877, %v845
        %v1070 = vpack.c.b16 %v878, %v846
        %v1071 = vpack.c.b16 %v879, %v847
        %v1072 = vpack.c.b16 %v880, %v848
        %v1073 = vpack.c.b16 %v881, %v849
        %v1074 = vpack.c.b16 %v914, %v882
        %v1075 = vpack.c.b16 %v915, %v883
        %v1076 = vpack.c.b16 %v916, %v884
        %v1077 = vpack.c.b16 %v917, %v885
        %v1078 = vpack.c.b16 %v918, %v886
        %v1079 = vpack.c.b16 %v919, %v887
        %v1080 = vpack.c.b16 %v920, %v888
        %v1081 = vpack.c.b16 %v921, %v889
        %v1082 = vpack.c.b16 %v922, %v890
        %v1083 = vpack.c.b16 %v923, %v891
        %v1084 = vpack.c.b16 %v924, %v892
        %v1085 = vpack.c.b16 %v925, %v893
        %v1086 = vpack.c.b16 %v926, %v894
        %v1087 = vpack.c.b16 %v927, %v895
        %v1088 = vpack.c.b16 %v928, %v896
        %v1089 = vpack.c.b16 %v929, %v897
        %v1090 = vpack.c.b16 %v930, %v898
        %v1091 = vpack.c.b16 %v931, %v899
        %v1092 = vpack.c.b16 %v932, %v900
        %v1093 = vpack.c.b16 %v933, %v901
        %v1094 = vpack.c.b16 %v934, %v902
        %v1095 = vpack.c.b16 %v935, %v903
        %v1096 = vpack.c.b16 %v936, %v904
        %v1097 = vpack.c.b16 %v937, %v905
        %v1098 = vpack.c.b16 %v938, %v906
        %v1099 = vpack.c.b16 %v939, %v907
        %v1100 = vpack.c.b16 %v940, %v908
        %v1101 = vpack.c.b16 %v941, %v909
        %v1102 = vpack.c.b16 %v942, %v910
        %v1103 = vpack.c.b16 %v943, %v911
        %v1104 = vpack.c.b16 %v944, %v912
        %v1105 = vpack.c.b16 %v945, %v913
        %v1106 = vpack.c.b16 %v978, %v946
        %v1107 = vpack.c.b16 %v979, %v947
        %v1108 = vpack.c.b16 %v980, %v948
        %v1109 = vpack.c.b16 %v981, %v949
        %v1110 = vpack.c.b16 %v982, %v950
        %v1111 = vpack.c.b16 %v983, %v951
        %v1112 = vpack.c.b16 %v984, %v952
        %v1113 = vpack.c.b16 %v985, %v953
        %v1114 = vpack.c.b16 %v986, %v954
        %v1115 = vpack.c.b16 %v987, %v955
        %v1116 = vpack.c.b16 %v988, %v956
        %v1117 = vpack.c.b16 %v989, %v957
        %v1118 = vpack.c.b16 %v990, %v958
        %v1119 = vpack.c.b16 %v991, %v959
        %v1120 = vpack.c.b16 %v992, %v960
        %v1121 = vpack.c.b16 %v993, %v961
        %v1122 = vpack.c.b16 %v994, %v962
        %v1123 = vpack.c.b16 %v995, %v963
        %v1124 = vpack.c.b16 %v996, %v964
        %v1125 = vpack.c.b16 %v997, %v965
        %v1126 = vpack.c.b16 %v998, %v966
        %v1127 = vpack.c.b16 %v999, %v967
        %v1128 = vpack.c.b16 %v1000, %v968
        %v1129 = vpack.c.b16 %v1001, %v969
        %v1130 = vpack.c.b16 %v1002, %v970
        %v1131 = vpack.c.b16 %v1003, %v971
        %v1132 = vpack.c.b16 %v1004, %v972
        %v1133 = vpack.c.b16 %v1005, %v973
        %v1134 = vpack.c.b16 %v1006, %v974
        %v1135 = vpack.c.b16 %v1007, %v975
        %v1136 = vpack.c.b16 %v1008, %v976
        %v1137 = vpack.c.b16 %v1009, %v977
        %vm1266 = vcmask 523264
        %v1268 = vsel %vm1266, %v491, 0
        %1270 = vmatprep.subr.bf16.mxu0 %v1011
        %1271 = vmatpush1.bf16.msra.mxu0 %v1010
        %1272 = vmatprep.subr.bf16.mxu0 %v1043
        %1273 = vmatpush1.bf16.msra.mxu0 %v1042
        %1274 = vmatprep.subr.bf16.mxu0 %v1075
        %1275 = vmatpush1.bf16.msra.mxu0 %v1074
        %1276 = vmatprep.subr.bf16.mxu0 %v1107
        %1277 = vmatpush1.bf16.msra.mxu0 %v1106
        %1278 = vmatprep.subr.bf16.mxu0 0
        %1279 = vmatpush1.bf16.msra.mxu0 0
        %1280 = vmatprep.subr.bf16.mxu0 0
        %1281 = vmatpush1.bf16.msra.mxu0 0
        %1282 = vmatprep.subr.bf16.mxu0 0
        %1283 = vmatpush1.bf16.msra.mxu0 0
        %1284 = vmatprep.subr.bf16.mxu0 0
        %1285 = vmatpush1.bf16.msra.mxu0 0
        %1286 = vmatprep.subr.bf16.mxu0 0
        %1287 = vmatpush1.bf16.msra.mxu0 0
        %1288 = vmatprep.subr.bf16.mxu0 0
        %1289 = vmatpush1.bf16.msra.mxu0 0
        %1290 = vmatprep.subr.bf16.mxu0 0
        %1291 = vmatpush1.bf16.msra.mxu0 0
        %1292 = vmatprep.subr.bf16.mxu0 0
        %1293 = vmatpush1.bf16.msra.mxu0 0
        %1294 = vmatprep.subr.bf16.mxu0 0
        %1295 = vmatpush1.bf16.msra.mxu0 0
        %1296 = vmatprep.subr.bf16.mxu0 0
        %1297 = vmatpush1.bf16.msra.mxu0 0
        %1298 = vmatprep.subr.bf16.mxu0 0
        %1299 = vmatpush1.bf16.msra.mxu0 0
        %1300 = vmatprep.subr.bf16.mxu0 0
        %1301 = vmatpush1.bf16.msra.mxu0 0
        %1302 = vmatprep.mubr.bf16.mxu0 0
        %1303 = vmatmul.mubr.bf16.gmra.mrb[0].mxu0 %v1268
        %v1304 = vpop.f32.mrb[0].mxu0
        %v1305 = vadd.f32 %v624, %v1304
        %v1306 = vpop.f32.mrb[0].mxu0
        %v1307 = vadd.f32 %v624, %v1306
        %v1308 = vpop.f32.mrb[0].mxu0
        %v1309 = vpop.f32.mrb[0].mxu0
        %1310 = vdwg.mxu0
        %1311 = vmatprep.subr.bf16.mxu0 %v1013
        %1312 = vmatpush1.bf16.msra.mxu0 %v1012
        %1313 = vmatprep.subr.bf16.mxu0 %v1045
        %1314 = vmatpush1.bf16.msra.mxu0 %v1044
        %1315 = vmatprep.subr.bf16.mxu0 %v1077
        %1316 = vmatpush1.bf16.msra.mxu0 %v1076
        %1317 = vmatprep.subr.bf16.mxu0 %v1109
        %1318 = vmatpush1.bf16.msra.mxu0 %v1108
        %1319 = vmatprep.subr.bf16.mxu0 0
        %1320 = vmatpush1.bf16.msra.mxu0 0
        %1321 = vmatprep.subr.bf16.mxu0 0
        %1322 = vmatpush1.bf16.msra.mxu0 0
        %1323 = vmatprep.subr.bf16.mxu0 0
        %1324 = vmatpush1.bf16.msra.mxu0 0
        %1325 = vmatprep.subr.bf16.mxu0 0
        %1326 = vmatpush1.bf16.msra.mxu0 0
        %1327 = vmatprep.subr.bf16.mxu0 0
        %1328 = vmatpush1.bf16.msra.mxu0 0
        %1329 = vmatprep.subr.bf16.mxu0 0
        %1330 = vmatpush1.bf16.msra.mxu0 0
        %1331 = vmatprep.subr.bf16.mxu0 0
        %1332 = vmatpush1.bf16.msra.mxu0 0
        %1333 = vmatprep.subr.bf16.mxu0 0
        %1334 = vmatpush1.bf16.msra.mxu0 0
        %1335 = vmatprep.subr.bf16.mxu0 0
        %1336 = vmatpush1.bf16.msra.mxu0 0
        %1337 = vmatprep.subr.bf16.mxu0 0
        %1338 = vmatpush1.bf16.msra.mxu0 0
        %1339 = vmatprep.subr.bf16.mxu0 0
        %1340 = vmatpush1.bf16.msra.mxu0 0
        %1341 = vmatprep.subr.bf16.mxu0 0
        %1342 = vmatpush1.bf16.msra.mxu0 0
        %1343 = vmatprep.mubr.bf16.mxu0 0
        %1344 = vmatmul.mubr.bf16.gmra.mrb[0].mxu0 %v1268
        %v1345 = vpop.f32.mrb[0].mxu0
        %v1346 = vadd.f32 %v624, %v1345
        %v1347 = vpop.f32.mrb[0].mxu0
        %v1348 = vadd.f32 %v624, %v1347
        %v1349 = vpop.f32.mrb[0].mxu0
        %v1350 = vpop.f32.mrb[0].mxu0
        %1351 = vdwg.mxu0
        %1352 = vmatprep.subr.bf16.mxu0 %v1015
        %1353 = vmatpush1.bf16.msra.mxu0 %v1014
        %1354 = vmatprep.subr.bf16.mxu0 %v1047
        %1355 = vmatpush1.bf16.msra.mxu0 %v1046
        %1356 = vmatprep.subr.bf16.mxu0 %v1079
        %1357 = vmatpush1.bf16.msra.mxu0 %v1078
        %1358 = vmatprep.subr.bf16.mxu0 %v1111
        %1359 = vmatpush1.bf16.msra.mxu0 %v1110
        %1360 = vmatprep.subr.bf16.mxu0 0
        %1361 = vmatpush1.bf16.msra.mxu0 0
        %1362 = vmatprep.subr.bf16.mxu0 0
        %1363 = vmatpush1.bf16.msra.mxu0 0
        %1364 = vmatprep.subr.bf16.mxu0 0
        %1365 = vmatpush1.bf16.msra.mxu0 0
        %1366 = vmatprep.subr.bf16.mxu0 0
        %1367 = vmatpush1.bf16.msra.mxu0 0
        %1368 = vmatprep.subr.bf16.mxu0 0
        %1369 = vmatpush1.bf16.msra.mxu0 0
        %1370 = vmatprep.subr.bf16.mxu0 0
        %1371 = vmatpush1.bf16.msra.mxu0 0
        %1372 = vmatprep.subr.bf16.mxu0 0
        %1373 = vmatpush1.bf16.msra.mxu0 0
        %1374 = vmatprep.subr.bf16.mxu0 0
        %1375 = vmatpush1.bf16.msra.mxu0 0
        %1376 = vmatprep.subr.bf16.mxu0 0
        %1377 = vmatpush1.bf16.msra.mxu0 0
        %1378 = vmatprep.subr.bf16.mxu0 0
        %1379 = vmatpush1.bf16.msra.mxu0 0
        %1380 = vmatprep.subr.bf16.mxu0 0
        %1381 = vmatpush1.bf16.msra.mxu0 0
        %1382 = vmatprep.subr.bf16.mxu0 0
        %1383 = vmatpush1.bf16.msra.mxu0 0
        %1384 = vmatprep.mubr.bf16.mxu0 0
        %1385 = vmatmul.mubr.bf16.gmra.mrb[0].mxu0 %v1268
        %v1386 = vpop.f32.mrb[0].mxu0
        %v1387 = vadd.f32 %v624, %v1386
        %v1388 = vpop.f32.mrb[0].mxu0
        %v1389 = vadd.f32 %v624, %v1388
        %v1390 = vpop.f32.mrb[0].mxu0
        %v1391 = vpop.f32.mrb[0].mxu0
        %1392 = vdwg.mxu0
        %1393 = vmatprep.subr.bf16.mxu0 %v1017
        %1394 = vmatpush1.bf16.msra.mxu0 %v1016
        %1395 = vmatprep.subr.bf16.mxu0 %v1049
        %1396 = vmatpush1.bf16.msra.mxu0 %v1048
        %1397 = vmatprep.subr.bf16.mxu0 %v1081
        %1398 = vmatpush1.bf16.msra.mxu0 %v1080
        %1399 = vmatprep.subr.bf16.mxu0 %v1113
        %1400 = vmatpush1.bf16.msra.mxu0 %v1112
        %1401 = vmatprep.subr.bf16.mxu0 0
        %1402 = vmatpush1.bf16.msra.mxu0 0
        %1403 = vmatprep.subr.bf16.mxu0 0
        %1404 = vmatpush1.bf16.msra.mxu0 0
        %1405 = vmatprep.subr.bf16.mxu0 0
        %1406 = vmatpush1.bf16.msra.mxu0 0
        %1407 = vmatprep.subr.bf16.mxu0 0
        %1408 = vmatpush1.bf16.msra.mxu0 0
        %1409 = vmatprep.subr.bf16.mxu0 0
        %1410 = vmatpush1.bf16.msra.mxu0 0
        %1411 = vmatprep.subr.bf16.mxu0 0
        %1412 = vmatpush1.bf16.msra.mxu0 0
        %1413 = vmatprep.subr.bf16.mxu0 0
        %1414 = vmatpush1.bf16.msra.mxu0 0
        %1415 = vmatprep.subr.bf16.mxu0 0
        %1416 = vmatpush1.bf16.msra.mxu0 0
        %1417 = vmatprep.subr.bf16.mxu0 0
        %1418 = vmatpush1.bf16.msra.mxu0 0
        %1419 = vmatprep.subr.bf16.mxu0 0
        %1420 = vmatpush1.bf16.msra.mxu0 0
        %1421 = vmatprep.subr.bf16.mxu0 0
        %1422 = vmatpush1.bf16.msra.mxu0 0
        %1423 = vmatprep.subr.bf16.mxu0 0
        %1424 = vmatpush1.bf16.msra.mxu0 0
        %1425 = vmatprep.mubr.bf16.mxu0 0
        %1426 = vmatmul.mubr.bf16.gmra.mrb[0].mxu0 %v1268
        %v1427 = vpop.f32.mrb[0].mxu0
        %v1428 = vadd.f32 %v624, %v1427
        %v1429 = vpop.f32.mrb[0].mxu0
        %v1430 = vadd.f32 %v624, %v1429
        %v1431 = vpop.f32.mrb[0].mxu0
        %v1432 = vpop.f32.mrb[0].mxu0
        %1433 = vdwg.mxu0
        %1434 = vmatprep.subr.bf16.mxu0 %v1019
        %1435 = vmatpush1.bf16.msra.mxu0 %v1018
        %1436 = vmatprep.subr.bf16.mxu0 %v1051
        %1437 = vmatpush1.bf16.msra.mxu0 %v1050
        %1438 = vmatprep.subr.bf16.mxu0 %v1083
        %1439 = vmatpush1.bf16.msra.mxu0 %v1082
        %1440 = vmatprep.subr.bf16.mxu0 %v1115
        %1441 = vmatpush1.bf16.msra.mxu0 %v1114
        %1442 = vmatprep.subr.bf16.mxu0 0
        %1443 = vmatpush1.bf16.msra.mxu0 0
        %1444 = vmatprep.subr.bf16.mxu0 0
        %1445 = vmatpush1.bf16.msra.mxu0 0
        %1446 = vmatprep.subr.bf16.mxu0 0
        %1447 = vmatpush1.bf16.msra.mxu0 0
        %1448 = vmatprep.subr.bf16.mxu0 0
        %1449 = vmatpush1.bf16.msra.mxu0 0
        %1450 = vmatprep.subr.bf16.mxu0 0
        %1451 = vmatpush1.bf16.msra.mxu0 0
        %1452 = vmatprep.subr.bf16.mxu0 0
        %1453 = vmatpush1.bf16.msra.mxu0 0
        %1454 = vmatprep.subr.bf16.mxu0 0
        %1455 = vmatpush1.bf16.msra.mxu0 0
        %1456 = vmatprep.subr.bf16.mxu0 0
        %1457 = vmatpush1.bf16.msra.mxu0 0
        %1458 = vmatprep.subr.bf16.mxu0 0
        %1459 = vmatpush1.bf16.msra.mxu0 0
        %1460 = vmatprep.subr.bf16.mxu0 0
        %1461 = vmatpush1.bf16.msra.mxu0 0
        %1462 = vmatprep.subr.bf16.mxu0 0
        %1463 = vmatpush1.bf16.msra.mxu0 0
        %1464 = vmatprep.subr.bf16.mxu0 0
        %1465 = vmatpush1.bf16.msra.mxu0 0
        %1466 = vmatprep.mubr.bf16.mxu0 0
        %1467 = vmatmul.mubr.bf16.gmra.mrb[0].mxu0 %v1268
        %v1468 = vpop.f32.mrb[0].mxu0
        %v1469 = vadd.f32 %v624, %v1468
        %v1470 = vpop.f32.mrb[0].mxu0
        %v1471 = vadd.f32 %v624, %v1470
        %v1472 = vpop.f32.mrb[0].mxu0
        %v1473 = vpop.f32.mrb[0].mxu0
        %1474 = vdwg.mxu0
        %1475 = vmatprep.subr.bf16.mxu0 %v1021
        %1476 = vmatpush1.bf16.msra.mxu0 %v1020
        %1477 = vmatprep.subr.bf16.mxu0 %v1053
        %1478 = vmatpush1.bf16.msra.mxu0 %v1052
        %1479 = vmatprep.subr.bf16.mxu0 %v1085
        %1480 = vmatpush1.bf16.msra.mxu0 %v1084
        %1481 = vmatprep.subr.bf16.mxu0 %v1117
        %1482 = vmatpush1.bf16.msra.mxu0 %v1116
        %1483 = vmatprep.subr.bf16.mxu0 0
        %1484 = vmatpush1.bf16.msra.mxu0 0
        %1485 = vmatprep.subr.bf16.mxu0 0
        %1486 = vmatpush1.bf16.msra.mxu0 0
        %1487 = vmatprep.subr.bf16.mxu0 0
        %1488 = vmatpush1.bf16.msra.mxu0 0
        %1489 = vmatprep.subr.bf16.mxu0 0
        %1490 = vmatpush1.bf16.msra.mxu0 0
        %1491 = vmatprep.subr.bf16.mxu0 0
        %1492 = vmatpush1.bf16.msra.mxu0 0
        %1493 = vmatprep.subr.bf16.mxu0 0
        %1494 = vmatpush1.bf16.msra.mxu0 0
        %1495 = vmatprep.subr.bf16.mxu0 0
        %1496 = vmatpush1.bf16.msra.mxu0 0
        %1497 = vmatprep.subr.bf16.mxu0 0
        %1498 = vmatpush1.bf16.msra.mxu0 0
        %1499 = vmatprep.subr.bf16.mxu0 0
        %1500 = vmatpush1.bf16.msra.mxu0 0
        %1501 = vmatprep.subr.bf16.mxu0 0
        %1502 = vmatpush1.bf16.msra.mxu0 0
        %1503 = vmatprep.subr.bf16.mxu0 0
        %1504 = vmatpush1.bf16.msra.mxu0 0
        %1505 = vmatprep.subr.bf16.mxu0 0
        %1506 = vmatpush1.bf16.msra.mxu0 0
        %1507 = vmatprep.mubr.bf16.mxu0 0
        %1508 = vmatmul.mubr.bf16.gmra.mrb[0].mxu0 %v1268
        %v1509 = vpop.f32.mrb[0].mxu0
        %v1510 = vadd.f32 %v624, %v1509
        %v1511 = vpop.f32.mrb[0].mxu0
        %v1512 = vadd.f32 %v624, %v1511
        %v1513 = vpop.f32.mrb[0].mxu0
        %v1514 = vpop.f32.mrb[0].mxu0
        %1515 = vdwg.mxu0
        %1516 = vmatprep.subr.bf16.mxu0 %v1023
        %1517 = vmatpush1.bf16.msra.mxu0 %v1022
        %1518 = vmatprep.subr.bf16.mxu0 %v1055
        %1519 = vmatpush1.bf16.msra.mxu0 %v1054
        %1520 = vmatprep.subr.bf16.mxu0 %v1087
        %1521 = vmatpush1.bf16.msra.mxu0 %v1086
        %1522 = vmatprep.subr.bf16.mxu0 %v1119
        %1523 = vmatpush1.bf16.msra.mxu0 %v1118
        %1524 = vmatprep.subr.bf16.mxu0 0
        %1525 = vmatpush1.bf16.msra.mxu0 0
        %1526 = vmatprep.subr.bf16.mxu0 0
        %1527 = vmatpush1.bf16.msra.mxu0 0
        %1528 = vmatprep.subr.bf16.mxu0 0
        %1529 = vmatpush1.bf16.msra.mxu0 0
        %1530 = vmatprep.subr.bf16.mxu0 0
        %1531 = vmatpush1.bf16.msra.mxu0 0
        %1532 = vmatprep.subr.bf16.mxu0 0
        %1533 = vmatpush1.bf16.msra.mxu0 0
        %1534 = vmatprep.subr.bf16.mxu0 0
        %1535 = vmatpush1.bf16.msra.mxu0 0
        %1536 = vmatprep.subr.bf16.mxu0 0
        %1537 = vmatpush1.bf16.msra.mxu0 0
        %1538 = vmatprep.subr.bf16.mxu0 0
        %1539 = vmatpush1.bf16.msra.mxu0 0
        %1540 = vmatprep.subr.bf16.mxu0 0
        %1541 = vmatpush1.bf16.msra.mxu0 0
        %1542 = vmatprep.subr.bf16.mxu0 0
        %1543 = vmatpush1.bf16.msra.mxu0 0
        %1544 = vmatprep.subr.bf16.mxu0 0
        %1545 = vmatpush1.bf16.msra.mxu0 0
        %1546 = vmatprep.subr.bf16.mxu0 0
        %1547 = vmatpush1.bf16.msra.mxu0 0
        %1548 = vmatprep.mubr.bf16.mxu0 0
        %1549 = vmatmul.mubr.bf16.gmra.mrb[0].mxu0 %v1268
        %v1550 = vpop.f32.mrb[0].mxu0
        %v1551 = vadd.f32 %v624, %v1550
        %v1552 = vpop.f32.mrb[0].mxu0
        %v1553 = vadd.f32 %v624, %v1552
        %v1554 = vpop.f32.mrb[0].mxu0
        %v1555 = vpop.f32.mrb[0].mxu0
        %1556 = vdwg.mxu0
        %1557 = vmatprep.subr.bf16.mxu0 %v1025
        %1558 = vmatpush1.bf16.msra.mxu0 %v1024
        %1559 = vmatprep.subr.bf16.mxu0 %v1057
        %1560 = vmatpush1.bf16.msra.mxu0 %v1056
        %1561 = vmatprep.subr.bf16.mxu0 %v1089
        %1562 = vmatpush1.bf16.msra.mxu0 %v1088
        %1563 = vmatprep.subr.bf16.mxu0 %v1121
        %1564 = vmatpush1.bf16.msra.mxu0 %v1120
        %1565 = vmatprep.subr.bf16.mxu0 0
        %1566 = vmatpush1.bf16.msra.mxu0 0
        %1567 = vmatprep.subr.bf16.mxu0 0
        %1568 = vmatpush1.bf16.msra.mxu0 0
        %1569 = vmatprep.subr.bf16.mxu0 0
        %1570 = vmatpush1.bf16.msra.mxu0 0
        %1571 = vmatprep.subr.bf16.mxu0 0
        %1572 = vmatpush1.bf16.msra.mxu0 0
        %1573 = vmatprep.subr.bf16.mxu0 0
        %1574 = vmatpush1.bf16.msra.mxu0 0
        %1575 = vmatprep.subr.bf16.mxu0 0
        %1576 = vmatpush1.bf16.msra.mxu0 0
        %1577 = vmatprep.subr.bf16.mxu0 0
        %1578 = vmatpush1.bf16.msra.mxu0 0
        %1579 = vmatprep.subr.bf16.mxu0 0
        %1580 = vmatpush1.bf16.msra.mxu0 0
        %1581 = vmatprep.subr.bf16.mxu0 0
        %1582 = vmatpush1.bf16.msra.mxu0 0
        %1583 = vmatprep.subr.bf16.mxu0 0
        %1584 = vmatpush1.bf16.msra.mxu0 0
        %1585 = vmatprep.subr.bf16.mxu0 0
        %1586 = vmatpush1.bf16.msra.mxu0 0
        %1587 = vmatprep.subr.bf16.mxu0 0
        %1588 = vmatpush1.bf16.msra.mxu0 0
        %1589 = vmatprep.mubr.bf16.mxu0 0
        %1590 = vmatmul.mubr.bf16.gmra.mrb[0].mxu0 %v1268
        %v1591 = vpop.f32.mrb[0].mxu0
        %v1592 = vadd.f32 %v624, %v1591
        %v1593 = vpop.f32.mrb[0].mxu0
        %v1594 = vadd.f32 %v624, %v1593
        %v1595 = vpop.f32.mrb[0].mxu0
        %v1596 = vpop.f32.mrb[0].mxu0
        %1597 = vdwg.mxu0
        %1598 = vmatprep.subr.bf16.mxu0 %v1027
        %1599 = vmatpush1.bf16.msra.mxu0 %v1026
        %1600 = vmatprep.subr.bf16.mxu0 %v1059
        %1601 = vmatpush1.bf16.msra.mxu0 %v1058
        %1602 = vmatprep.subr.bf16.mxu0 %v1091
        %1603 = vmatpush1.bf16.msra.mxu0 %v1090
        %1604 = vmatprep.subr.bf16.mxu0 %v1123
        %1605 = vmatpush1.bf16.msra.mxu0 %v1122
        %1606 = vmatprep.subr.bf16.mxu0 0
        %1607 = vmatpush1.bf16.msra.mxu0 0
        %1608 = vmatprep.subr.bf16.mxu0 0
        %1609 = vmatpush1.bf16.msra.mxu0 0
        %1610 = vmatprep.subr.bf16.mxu0 0
        %1611 = vmatpush1.bf16.msra.mxu0 0
        %1612 = vmatprep.subr.bf16.mxu0 0
        %1613 = vmatpush1.bf16.msra.mxu0 0
        %1614 = vmatprep.subr.bf16.mxu0 0
        %1615 = vmatpush1.bf16.msra.mxu0 0
        %1616 = vmatprep.subr.bf16.mxu0 0
        %1617 = vmatpush1.bf16.msra.mxu0 0
        %1618 = vmatprep.subr.bf16.mxu0 0
        %1619 = vmatpush1.bf16.msra.mxu0 0
        %1620 = vmatprep.subr.bf16.mxu0 0
        %1621 = vmatpush1.bf16.msra.mxu0 0
        %1622 = vmatprep.subr.bf16.mxu0 0
        %1623 = vmatpush1.bf16.msra.mxu0 0
        %1624 = vmatprep.subr.bf16.mxu0 0
        %1625 = vmatpush1.bf16.msra.mxu0 0
        %1626 = vmatprep.subr.bf16.mxu0 0
        %1627 = vmatpush1.bf16.msra.mxu0 0
        %1628 = vmatprep.subr.bf16.mxu0 0
        %1629 = vmatpush1.bf16.msra.mxu0 0
        %1630 = vmatprep.mubr.bf16.mxu0 0
        %1631 = vmatmul.mubr.bf16.gmra.mrb[0].mxu0 %v1268
        %v1632 = vpop.f32.mrb[0].mxu0
        %v1633 = vadd.f32 %v624, %v1632
        %v1634 = vpop.f32.mrb[0].mxu0
        %v1635 = vadd.f32 %v624, %v1634
        %v1636 = vpop.f32.mrb[0].mxu0
        %v1637 = vpop.f32.mrb[0].mxu0
        %1638 = vdwg.mxu0
        %1639 = vmatprep.subr.bf16.mxu0 %v1029
        %1640 = vmatpush1.bf16.msra.mxu0 %v1028
        %1641 = vmatprep.subr.bf16.mxu0 %v1061
        %1642 = vmatpush1.bf16.msra.mxu0 %v1060
        %1643 = vmatprep.subr.bf16.mxu0 %v1093
        %1644 = vmatpush1.bf16.msra.mxu0 %v1092
        %1645 = vmatprep.subr.bf16.mxu0 %v1125
        %1646 = vmatpush1.bf16.msra.mxu0 %v1124
        %1647 = vmatprep.subr.bf16.mxu0 0
        %1648 = vmatpush1.bf16.msra.mxu0 0
        %1649 = vmatprep.subr.bf16.mxu0 0
        %1650 = vmatpush1.bf16.msra.mxu0 0
        %1651 = vmatprep.subr.bf16.mxu0 0
        %1652 = vmatpush1.bf16.msra.mxu0 0
        %1653 = vmatprep.subr.bf16.mxu0 0
        %1654 = vmatpush1.bf16.msra.mxu0 0
        %1655 = vmatprep.subr.bf16.mxu0 0
        %1656 = vmatpush1.bf16.msra.mxu0 0
        %1657 = vmatprep.subr.bf16.mxu0 0
        %1658 = vmatpush1.bf16.msra.mxu0 0
        %1659 = vmatprep.subr.bf16.mxu0 0
        %1660 = vmatpush1.bf16.msra.mxu0 0
        %1661 = vmatprep.subr.bf16.mxu0 0
        %1662 = vmatpush1.bf16.msra.mxu0 0
        %1663 = vmatprep.subr.bf16.mxu0 0
        %1664 = vmatpush1.bf16.msra.mxu0 0
        %1665 = vmatprep.subr.bf16.mxu0 0
        %1666 = vmatpush1.bf16.msra.mxu0 0
        %1667 = vmatprep.subr.bf16.mxu0 0
        %1668 = vmatpush1.bf16.msra.mxu0 0
        %1669 = vmatprep.subr.bf16.mxu0 0
        %1670 = vmatpush1.bf16.msra.mxu0 0
        %1671 = vmatprep.mubr.bf16.mxu0 0
        %1672 = vmatmul.mubr.bf16.gmra.mrb[0].mxu0 %v1268
        %v1673 = vpop.f32.mrb[0].mxu0
        %v1674 = vadd.f32 %v624, %v1673
        %v1675 = vpop.f32.mrb[0].mxu0
        %v1676 = vadd.f32 %v624, %v1675
        %v1677 = vpop.f32.mrb[0].mxu0
        %v1678 = vpop.f32.mrb[0].mxu0
        %1679 = vdwg.mxu0
        %1680 = vmatprep.subr.bf16.mxu0 %v1031
        %1681 = vmatpush1.bf16.msra.mxu0 %v1030
        %1682 = vmatprep.subr.bf16.mxu0 %v1063
        %1683 = vmatpush1.bf16.msra.mxu0 %v1062
        %1684 = vmatprep.subr.bf16.mxu0 %v1095
        %1685 = vmatpush1.bf16.msra.mxu0 %v1094
        %1686 = vmatprep.subr.bf16.mxu0 %v1127
        %1687 = vmatpush1.bf16.msra.mxu0 %v1126
        %1688 = vmatprep.subr.bf16.mxu0 0
        %1689 = vmatpush1.bf16.msra.mxu0 0
        %1690 = vmatprep.subr.bf16.mxu0 0
        %1691 = vmatpush1.bf16.msra.mxu0 0
        %1692 = vmatprep.subr.bf16.mxu0 0
        %1693 = vmatpush1.bf16.msra.mxu0 0
        %1694 = vmatprep.subr.bf16.mxu0 0
        %1695 = vmatpush1.bf16.msra.mxu0 0
        %1696 = vmatprep.subr.bf16.mxu0 0
        %1697 = vmatpush1.bf16.msra.mxu0 0
        %1698 = vmatprep.subr.bf16.mxu0 0
        %1699 = vmatpush1.bf16.msra.mxu0 0
        %1700 = vmatprep.subr.bf16.mxu0 0
        %1701 = vmatpush1.bf16.msra.mxu0 0
        %1702 = vmatprep.subr.bf16.mxu0 0
        %1703 = vmatpush1.bf16.msra.mxu0 0
        %1704 = vmatprep.subr.bf16.mxu0 0
        %1705 = vmatpush1.bf16.msra.mxu0 0
        %1706 = vmatprep.subr.bf16.mxu0 0
        %1707 = vmatpush1.bf16.msra.mxu0 0
        %1708 = vmatprep.subr.bf16.mxu0 0
        %1709 = vmatpush1.bf16.msra.mxu0 0
        %1710 = vmatprep.subr.bf16.mxu0 0
        %1711 = vmatpush1.bf16.msra.mxu0 0
        %1712 = vmatprep.mubr.bf16.mxu0 0
        %1713 = vmatmul.mubr.bf16.gmra.mrb[0].mxu0 %v1268
        %v1714 = vpop.f32.mrb[0].mxu0
        %v1715 = vadd.f32 %v624, %v1714
        %v1716 = vpop.f32.mrb[0].mxu0
        %v1717 = vadd.f32 %v624, %v1716
        %v1718 = vpop.f32.mrb[0].mxu0
        %v1719 = vpop.f32.mrb[0].mxu0
        %1720 = vdwg.mxu0
        %1721 = vmatprep.subr.bf16.mxu0 %v1033
        %1722 = vmatpush1.bf16.msra.mxu0 %v1032
        %1723 = vmatprep.subr.bf16.mxu0 %v1065
        %1724 = vmatpush1.bf16.msra.mxu0 %v1064
        %1725 = vmatprep.subr.bf16.mxu0 %v1097
        %1726 = vmatpush1.bf16.msra.mxu0 %v1096
        %1727 = vmatprep.subr.bf16.mxu0 %v1129
        %1728 = vmatpush1.bf16.msra.mxu0 %v1128
        %1729 = vmatprep.subr.bf16.mxu0 0
        %1730 = vmatpush1.bf16.msra.mxu0 0
        %1731 = vmatprep.subr.bf16.mxu0 0
        %1732 = vmatpush1.bf16.msra.mxu0 0
        %1733 = vmatprep.subr.bf16.mxu0 0
        %1734 = vmatpush1.bf16.msra.mxu0 0
        %1735 = vmatprep.subr.bf16.mxu0 0
        %1736 = vmatpush1.bf16.msra.mxu0 0
        %1737 = vmatprep.subr.bf16.mxu0 0
        %1738 = vmatpush1.bf16.msra.mxu0 0
        %1739 = vmatprep.subr.bf16.mxu0 0
        %1740 = vmatpush1.bf16.msra.mxu0 0
        %1741 = vmatprep.subr.bf16.mxu0 0
        %1742 = vmatpush1.bf16.msra.mxu0 0
        %1743 = vmatprep.subr.bf16.mxu0 0
        %1744 = vmatpush1.bf16.msra.mxu0 0
        %1745 = vmatprep.subr.bf16.mxu0 0
        %1746 = vmatpush1.bf16.msra.mxu0 0
        %1747 = vmatprep.subr.bf16.mxu0 0
        %1748 = vmatpush1.bf16.msra.mxu0 0
        %1749 = vmatprep.subr.bf16.mxu0 0
        %1750 = vmatpush1.bf16.msra.mxu0 0
        %1751 = vmatprep.subr.bf16.mxu0 0
        %1752 = vmatpush1.bf16.msra.mxu0 0
        %1753 = vmatprep.mubr.bf16.mxu0 0
        %1754 = vmatmul.mubr.bf16.gmra.mrb[0].mxu0 %v1268
        %v1755 = vpop.f32.mrb[0].mxu0
        %v1756 = vadd.f32 %v624, %v1755
        %v1757 = vpop.f32.mrb[0].mxu0
        %v1758 = vadd.f32 %v624, %v1757
        %v1759 = vpop.f32.mrb[0].mxu0
        %v1760 = vpop.f32.mrb[0].mxu0
        %1761 = vdwg.mxu0
        %1762 = vmatprep.subr.bf16.mxu0 %v1035
        %1763 = vmatpush1.bf16.msra.mxu0 %v1034
        %1764 = vmatprep.subr.bf16.mxu0 %v1067
        %1765 = vmatpush1.bf16.msra.mxu0 %v1066
        %1766 = vmatprep.subr.bf16.mxu0 %v1099
        %1767 = vmatpush1.bf16.msra.mxu0 %v1098
        %1768 = vmatprep.subr.bf16.mxu0 %v1131
        %1769 = vmatpush1.bf16.msra.mxu0 %v1130
        %1770 = vmatprep.subr.bf16.mxu0 0
        %1771 = vmatpush1.bf16.msra.mxu0 0
        %1772 = vmatprep.subr.bf16.mxu0 0
        %1773 = vmatpush1.bf16.msra.mxu0 0
        %1774 = vmatprep.subr.bf16.mxu0 0
        %1775 = vmatpush1.bf16.msra.mxu0 0
        %1776 = vmatprep.subr.bf16.mxu0 0
        %1777 = vmatpush1.bf16.msra.mxu0 0
        %1778 = vmatprep.subr.bf16.mxu0 0
        %1779 = vmatpush1.bf16.msra.mxu0 0
        %1780 = vmatprep.subr.bf16.mxu0 0
        %1781 = vmatpush1.bf16.msra.mxu0 0
        %1782 = vmatprep.subr.bf16.mxu0 0
        %1783 = vmatpush1.bf16.msra.mxu0 0
        %1784 = vmatprep.subr.bf16.mxu0 0
        %1785 = vmatpush1.bf16.msra.mxu0 0
        %1786 = vmatprep.subr.bf16.mxu0 0
        %1787 = vmatpush1.bf16.msra.mxu0 0
        %1788 = vmatprep.subr.bf16.mxu0 0
        %1789 = vmatpush1.bf16.msra.mxu0 0
        %1790 = vmatprep.subr.bf16.mxu0 0
        %1791 = vmatpush1.bf16.msra.mxu0 0
        %1792 = vmatprep.subr.bf16.mxu0 0
        %1793 = vmatpush1.bf16.msra.mxu0 0
        %1794 = vmatprep.mubr.bf16.mxu0 0
        %1795 = vmatmul.mubr.bf16.gmra.mrb[0].mxu0 %v1268
        %v1796 = vpop.f32.mrb[0].mxu0
        %v1797 = vadd.f32 %v624, %v1796
        %v1798 = vpop.f32.mrb[0].mxu0
        %v1799 = vadd.f32 %v624, %v1798
        %v1800 = vpop.f32.mrb[0].mxu0
        %v1801 = vpop.f32.mrb[0].mxu0
        %1802 = vdwg.mxu0
        %1803 = vmatprep.subr.bf16.mxu0 %v1037
        %1804 = vmatpush1.bf16.msra.mxu0 %v1036
        %1805 = vmatprep.subr.bf16.mxu0 %v1069
        %1806 = vmatpush1.bf16.msra.mxu0 %v1068
        %1807 = vmatprep.subr.bf16.mxu0 %v1101
        %1808 = vmatpush1.bf16.msra.mxu0 %v1100
        %1809 = vmatprep.subr.bf16.mxu0 %v1133
        %1810 = vmatpush1.bf16.msra.mxu0 %v1132
        %1811 = vmatprep.subr.bf16.mxu0 0
        %1812 = vmatpush1.bf16.msra.mxu0 0
        %1813 = vmatprep.subr.bf16.mxu0 0
        %1814 = vmatpush1.bf16.msra.mxu0 0
        %1815 = vmatprep.subr.bf16.mxu0 0
        %1816 = vmatpush1.bf16.msra.mxu0 0
        %1817 = vmatprep.subr.bf16.mxu0 0
        %1818 = vmatpush1.bf16.msra.mxu0 0
        %1819 = vmatprep.subr.bf16.mxu0 0
        %1820 = vmatpush1.bf16.msra.mxu0 0
        %1821 = vmatprep.subr.bf16.mxu0 0
        %1822 = vmatpush1.bf16.msra.mxu0 0
        %1823 = vmatprep.subr.bf16.mxu0 0
        %1824 = vmatpush1.bf16.msra.mxu0 0
        %1825 = vmatprep.subr.bf16.mxu0 0
        %1826 = vmatpush1.bf16.msra.mxu0 0
        %1827 = vmatprep.subr.bf16.mxu0 0
        %1828 = vmatpush1.bf16.msra.mxu0 0
        %1829 = vmatprep.subr.bf16.mxu0 0
        %1830 = vmatpush1.bf16.msra.mxu0 0
        %1831 = vmatprep.subr.bf16.mxu0 0
        %1832 = vmatpush1.bf16.msra.mxu0 0
        %1833 = vmatprep.subr.bf16.mxu0 0
        %1834 = vmatpush1.bf16.msra.mxu0 0
        %1835 = vmatprep.mubr.bf16.mxu0 0
        %1836 = vmatmul.mubr.bf16.gmra.mrb[0].mxu0 %v1268
        %v1837 = vpop.f32.mrb[0].mxu0
        %v1838 = vadd.f32 %v624, %v1837
        %v1839 = vpop.f32.mrb[0].mxu0
        %v1840 = vadd.f32 %v624, %v1839
        %v1841 = vpop.f32.mrb[0].mxu0
        %v1842 = vpop.f32.mrb[0].mxu0
        %1843 = vdwg.mxu0
        %1844 = vmatprep.subr.bf16.mxu0 %v1039
        %1845 = vmatpush1.bf16.msra.mxu0 %v1038
        %1846 = vmatprep.subr.bf16.mxu0 %v1071
        %1847 = vmatpush1.bf16.msra.mxu0 %v1070
        %1848 = vmatprep.subr.bf16.mxu0 %v1103
        %1849 = vmatpush1.bf16.msra.mxu0 %v1102
        %1850 = vmatprep.subr.bf16.mxu0 %v1135
        %1851 = vmatpush1.bf16.msra.mxu0 %v1134
        %1852 = vmatprep.subr.bf16.mxu0 0
        %1853 = vmatpush1.bf16.msra.mxu0 0
        %1854 = vmatprep.subr.bf16.mxu0 0
        %1855 = vmatpush1.bf16.msra.mxu0 0
        %1856 = vmatprep.subr.bf16.mxu0 0
        %1857 = vmatpush1.bf16.msra.mxu0 0
        %1858 = vmatprep.subr.bf16.mxu0 0
        %1859 = vmatpush1.bf16.msra.mxu0 0
        %1860 = vmatprep.subr.bf16.mxu0 0
        %1861 = vmatpush1.bf16.msra.mxu0 0
        %1862 = vmatprep.subr.bf16.mxu0 0
        %1863 = vmatpush1.bf16.msra.mxu0 0
        %1864 = vmatprep.subr.bf16.mxu0 0
        %1865 = vmatpush1.bf16.msra.mxu0 0
        %1866 = vmatprep.subr.bf16.mxu0 0
        %1867 = vmatpush1.bf16.msra.mxu0 0
        %1868 = vmatprep.subr.bf16.mxu0 0
        %1869 = vmatpush1.bf16.msra.mxu0 0
        %1870 = vmatprep.subr.bf16.mxu0 0
        %1871 = vmatpush1.bf16.msra.mxu0 0
        %1872 = vmatprep.subr.bf16.mxu0 0
        %1873 = vmatpush1.bf16.msra.mxu0 0
        %1874 = vmatprep.subr.bf16.mxu0 0
        %1875 = vmatpush1.bf16.msra.mxu0 0
        %1876 = vmatprep.mubr.bf16.mxu0 0
        %1877 = vmatmul.mubr.bf16.gmra.mrb[0].mxu0 %v1268
        %v1878 = vpop.f32.mrb[0].mxu0
        %v1879 = vadd.f32 %v624, %v1878
        %v1880 = vpop.f32.mrb[0].mxu0
        %v1881 = vadd.f32 %v624, %v1880
        %v1882 = vpop.f32.mrb[0].mxu0
        %v1883 = vpop.f32.mrb[0].mxu0
        %1884 = vdwg.mxu0
        %1885 = vmatprep.subr.bf16.mxu0 %v1041
        %1886 = vmatpush1.bf16.msra.mxu0 %v1040
        %1887 = vmatprep.subr.bf16.mxu0 %v1073
        %1888 = vmatpush1.bf16.msra.mxu0 %v1072
        %1889 = vmatprep.subr.bf16.mxu0 %v1105
        %1890 = vmatpush1.bf16.msra.mxu0 %v1104
        %1891 = vmatprep.subr.bf16.mxu0 %v1137
        %1892 = vmatpush1.bf16.msra.mxu0 %v1136
        %1893 = vmatprep.subr.bf16.mxu0 0
        %1894 = vmatpush1.bf16.msra.mxu0 0
        %1895 = vmatprep.subr.bf16.mxu0 0
        %1896 = vmatpush1.bf16.msra.mxu0 0
        %1897 = vmatprep.subr.bf16.mxu0 0
        %1898 = vmatpush1.bf16.msra.mxu0 0
        %1899 = vmatprep.subr.bf16.mxu0 0
        %1900 = vmatpush1.bf16.msra.mxu0 0
        %1901 = vmatprep.subr.bf16.mxu0 0
        %1902 = vmatpush1.bf16.msra.mxu0 0
        %1903 = vmatprep.subr.bf16.mxu0 0
        %1904 = vmatpush1.bf16.msra.mxu0 0
        %1905 = vmatprep.subr.bf16.mxu0 0
        %1906 = vmatpush1.bf16.msra.mxu0 0
        %1907 = vmatprep.subr.bf16.mxu0 0
        %1908 = vmatpush1.bf16.msra.mxu0 0
        %1909 = vmatprep.subr.bf16.mxu0 0
        %1910 = vmatpush1.bf16.msra.mxu0 0
        %1911 = vmatprep.subr.bf16.mxu0 0
        %1912 = vmatpush1.bf16.msra.mxu0 0
        %1913 = vmatprep.subr.bf16.mxu0 0
        %1914 = vmatpush1.bf16.msra.mxu0 0
        %1915 = vmatprep.subr.bf16.mxu0 0
        %1916 = vmatpush1.bf16.msra.mxu0 0
        %1917 = vmatprep.mubr.bf16.mxu0 0
        %1918 = vmatmul.mubr.bf16.gmra.mrb[0].mxu0 %v1268
        %v1919 = vpop.f32.mrb[0].mxu0
        %v1920 = vadd.f32 %v624, %v1919
        %v1921 = vpop.f32.mrb[0].mxu0
        %v1922 = vadd.f32 %v624, %v1921
        %v1923 = vpop.f32.mrb[0].mxu0
        %v1924 = vpop.f32.mrb[0].mxu0
        %1925 = vdwg.mxu0
        %v1958 = vcombine.low %v1305, %v1307
        %v1959 = vcombine.low %v1346, %v1348
        %v1960 = vcombine.low %v1387, %v1389
        %v1961 = vcombine.low %v1428, %v1430
        %v1962 = vcombine.low %v1469, %v1471
        %v1963 = vcombine.low %v1510, %v1512
        %v1964 = vcombine.low %v1551, %v1553
        %v1965 = vcombine.low %v1592, %v1594
        %v1966 = vcombine.low %v1633, %v1635
        %v1967 = vcombine.low %v1674, %v1676
        %v1968 = vcombine.low %v1715, %v1717
        %v1969 = vcombine.low %v1756, %v1758
        %v1970 = vcombine.low %v1797, %v1799
        %v1971 = vcombine.low %v1838, %v1840
        %v1972 = vcombine.low %v1879, %v1881
        %v1973 = vcombine.low %v1920, %v1922
        %1990 = vst [vmem:[%s488] sm:$0x77] %v1958
        %1991 = vst [vmem:[%s488 + $0x8] sm:$0x77] %v1959
        %1992 = vst [vmem:[%s488 + $0x10] sm:$0x77] %v1960
        %1993 = vst [vmem:[%s488 + $0x18] sm:$0x77] %v1961
        %1994 = vst [vmem:[%s488 + $0x20] sm:$0x77] %v1962
        %1995 = vst [vmem:[%s488 + $0x28] sm:$0x77] %v1963
        %1996 = vst [vmem:[%s488 + $0x30] sm:$0x77] %v1964
        %1997 = vst [vmem:[%s488 + $0x38] sm:$0x77] %v1965
        %1998 = vst [vmem:[%s488 + $0x40] sm:$0x77] %v1966
        %1999 = vst [vmem:[%s488 + $0x48] sm:$0x77] %v1967
        %2000 = vst [vmem:[%s488 + $0x50] sm:$0x77] %v1968
        %2001 = vst [vmem:[%s488 + $0x58] sm:$0x77] %v1969
        %2002 = vst [vmem:[%s488 + $0x60] sm:$0x77] %v1970
        %2003 = vst [vmem:[%s488 + $0x68] sm:$0x77] %v1971
        %2004 = vst [vmem:[%s488 + $0x70] sm:$0x77] %v1972
        %2005 = vst [vmem:[%s488 + $0x78] sm:$0x77] %v1973
        %s2006 = smul.u32 32, %s19
        %p2007 = scmp.lt.s32.totalorder %s18, 3
        %s2008 = scalar_select %p2007, %s18, 3
        %p2009 = scmp.lt.s32.totalorder %s2006, 63
        %s2010 = scalar_select %p2009, %s2006, 63
        %s2011 = smul.addr %s2008, 64
        %s2012 = sadd.s32 %s2010, %s2011
        %s2013 = smul.addr %s2012, 4
        %s2014 = scalar_lea.vmem %s3, %s2013
        // Predicated region
        $region56: #{retina_forward.19} parent=50 // pred_check
          %p2015 = pneg %p121
        $region57: #{retina_forward.19} parent=50 // pred_check_branch
          %2017 = sbr.rel (%p2015) target = $region59
        $region58: #{retina_forward.19} parent=50 // pred_region
          %s2018 = smul.u32 32, %s19
        $region59: #{retina_forward.19} parent=50 // pred_fallthru
          _
      $region51: #{retina_forward.19} parent=5 // pred_fallthru
        _
      %p2019 = scmp.le.s32.totalorder 2, %s9
      // Predicated region
      $region60: #{retina_forward.19} parent=5 // pred_check
        %p2020 = pneg %p2019
      $region61: #{retina_forward.19} parent=5 // pred_check_branch
        %2022 = sbr.rel (%p2020) target = $region63
      $region62: #{retina_forward.19} parent=5 // pred_region
        %s2023 = ssub.s32 %s9, 2
        // Predicated region
        $region64: #{retina_forward.19} parent=62 // pred_check
          %p2024 = pneg %p127
        $region65: #{retina_forward.19} parent=62 // pred_check_branch
          %2026 = sbr.rel (%p2024) target = $region67
        $region66: #{retina_forward.19} parent=62 // pred_region
          %s2027 = smul.u32 32, %s21
          %p2028 = scmp.lt.s32.totalorder %s20, 3
          %s2029 = scalar_select %p2028, %s20, 3
          %p2030 = scmp.lt.s32.totalorder %s2027, 63
          %s2031 = scalar_select %p2030, %s2027, 63
          %s2032 = smul.addr %s2029, 64
          %s2033 = sadd.s32 %s2031, %s2032
          %s2034 = smul.addr %s2033, 4
          %s2035 = scalar_lea.vmem %s3, %s2034
        $region67: #{retina_forward.19} parent=62 // pred_fallthru
          _
      $region63: #{retina_forward.19} parent=5 // pred_fallthru
        _
    $region6: #{retina_forward.19} parent=1 // loop_footer
      %s13 = sadd.s32 1, %s9
    $region7: #{retina_forward.19} parent=1 // loop_footer_branch
      %8 = sbr.rel target = $region3
    $region8: #{retina_forward.19} parent=1 // loop_exit
      _

</llo_original>
